<compile_context>
chip_gen: v6e
topology: v6e:2x2x1
jax: 0.10.0
libtpu: 0.0.40
codegen_flags: <defaults>
</compile_context>

<pallas_src>
import functools

import numpy as np
import jax
import jax.numpy as jnp
from jax.experimental import pallas as pl
from jax.experimental.pallas import tpu as pltpu


# ----------------------------- Pallas kernels ------------------------------

def _full2(shape):
    """BlockSpec covering a full 2-D array (grid is 1-D)."""
    return pl.BlockSpec(tuple(int(s) for s in shape), lambda i: (0, 0))


def _cls_matmul_kernel(x_ref, w_ref, b_ref, o_ref):
    # x:(M,K) f32 -> bf16 for the MXU, w:(K,bn) bf16, b:(1,bn) f32
    o_ref[...] = (jnp.dot(x_ref[...].astype(jnp.bfloat16), w_ref[...],
                          preferred_element_type=jnp.float32) + b_ref[...])


def pallas_cls_matmul(x, w_bf16, b, *, bn=1024):
    """out = x @ w + b with bf16 weights, N-blocked (weight-streaming bound)."""
    M, K = x.shape
    _, N = w_bf16.shape
    assert N % bn == 0
    # bn=1024 bf16 weight block = 2 MiB (4 MiB double-buffered): safe on v5e's
    # 16 MiB scoped-VMEM default and lets v7x's 2 TCs split the parallel axis.
    return pl.pallas_call(
        _cls_matmul_kernel,
        out_shape=jax.ShapeDtypeStruct((M, N), jnp.float32),
        grid_spec=pltpu.PrefetchScalarGridSpec(
            num_scalar_prefetch=0,
            grid=(N // bn,),
            in_specs=[pl.BlockSpec((M, K), lambda j: (0, 0)),
                      pl.BlockSpec((K, bn), lambda j: (0, j)),
                      pl.BlockSpec((1, bn), lambda j: (0, j))],
            out_specs=pl.BlockSpec((M, bn), lambda j: (0, j)),
        ),
        compiler_params=pltpu.CompilerParams(dimension_semantics=("parallel",)),
    )(x, w_bf16, b)


def _dr_branches_kernel(p1_ref, w1_ref, b1_ref, p2_ref, w2_ref, b2_ref,
                        o1_ref, o2_ref, *, kk1, kk2, g):
    """Both DR branches: conv matmul + max-pool (rows pre-grouped per window)
    + bias.  Patch rows are ordered (pool_tap, batch, pool_position)."""
    def branch(p_ref, w_ref, b_ref, o_ref, kk):
        y = jnp.dot(p_ref[...], w_ref[...],
                    preferred_element_type=jnp.float32)     # (kk*g, 128)
        acc = y[0:g, :]
        for t in range(1, kk):                               # g multiple of 8
            acc = jnp.maximum(acc, y[t * g:(t + 1) * g, :])
        o_ref[...] = acc + b_ref[...]    # per-channel bias commutes with max

    branch(p1_ref, w1_ref, b1_ref, o1_ref, kk1)
    branch(p2_ref, w2_ref, b2_ref, o2_ref, kk2)


def pallas_dr_branches(p1, w1, b1, p2, w2, b2, g):
    kk1 = p1.shape[0] // g
    kk2 = p2.shape[0] // g
    kern = functools.partial(_dr_branches_kernel, kk1=kk1, kk2=kk2, g=g)
    cpad = w1.shape[1]
    return pl.pallas_call(
        kern,
        out_shape=(jax.ShapeDtypeStruct((g, cpad), jnp.float32),
                   jax.ShapeDtypeStruct((g, cpad), jnp.float32)),
        grid_spec=pltpu.PrefetchScalarGridSpec(
            num_scalar_prefetch=0, grid=(1,),
            in_specs=[_full2(p1.shape), _full2(w1.shape), _full2(b1.shape),
                      _full2(p2.shape), _full2(w2.shape), _full2(b2.shape)],
            out_specs=[_full2((g, cpad)), _full2((g, cpad))],
        ),
        compiler_params=pltpu.CompilerParams(dimension_semantics=("arbitrary",)),
    )(p1, w1, b1, p2, w2, b2)


def _head_kernel(t1_ref, t23_ref, wa_ref, wb_ref, b_ref, o_ref):
    """norm(t1), norm(t2|t3), final Linear (bf16 weights) and output norm."""
    eps2 = 1e-24  # (1e-12)**2 -> matches torch.nn.functional.normalize eps

    def l2n(v):
        ss = jnp.sum(v * v, axis=-1, keepdims=True)
        return v * jax.lax.rsqrt(jnp.maximum(ss, eps2))

    t1 = l2n(t1_ref[...])
    t4 = l2n(t23_ref[...])     # zero-padded channels contribute exactly 0
    z = (jnp.dot(t1.astype(jnp.bfloat16), wa_ref[...],
                 preferred_element_type=jnp.float32)
         + jnp.dot(t4.astype(jnp.bfloat16), wb_ref[...],
                   preferred_element_type=jnp.float32)
         + b_ref[...])
    o_ref[...] = l2n(z)


def pallas_head(t1, t23, wa, wb, b):
    M = t1.shape[0]
    NF = wa.shape[1]
    return pl.pallas_call(
        _head_kernel,
        out_shape=jax.ShapeDtypeStruct((M, NF), jnp.float32),
        grid_spec=pltpu.PrefetchScalarGridSpec(
            num_scalar_prefetch=0, grid=(1,),
            in_specs=[_full2(t1.shape), _full2(t23.shape),
                      _full2(wa.shape), _full2(wb.shape), _full2(b.shape)],
            out_specs=_full2((M, NF)),
        ),
        compiler_params=pltpu.CompilerParams(dimension_semantics=("arbitrary",)),
    )(t1, t23, wa, wb, b)


# ------------------- im2col + pool-window expansion (XLA) -------------------

def _pool_tap_indices(ohc, owc, pk, ps, pp):
    """Static (kk, G) tap indices into the conv-output grid for each pool
    window; out-of-range taps duplicate a valid tap (max unaffected)."""
    poh = (ohc + 2 * pp - pk) // ps + 1
    pow_ = (owc + 2 * pp - pk) // ps + 1
    kk = pk * pk
    ih = np.zeros((kk, poh * pow_), np.int32)
    iw = np.zeros((kk, poh * pow_), np.int32)
    for ph in range(poh):
        for pw in range(pow_):
            hs = [h for h in range(ph * ps - pp, ph * ps - pp + pk) if 0 <= h < ohc]
            ws = [w for w in range(pw * ps - pp, pw * ps - pp + pk) if 0 <= w < owc]
            taps = [(h, w) for h in hs for w in ws]
            while len(taps) < kk:
                taps.append(taps[0])
            gidx = ph * pow_ + pw
            for t, (h, w) in enumerate(taps):
                ih[t, gidx] = h
                iw[t, gidx] = w
    return ih, iw, poh, pow_


def _conv_pool_patches(x_nhwc, ck, cs, cp, pk, ps, pp, k_pad):
    """im2col patches expanded per pool window; rows ordered (tap, b, pos)."""
    B, H, W, C = x_nhwc.shape
    ohc = (H + 2 * cp - ck) // cs + 1
    owc = (W + 2 * cp - ck) // cs + 1
    xp = jnp.pad(x_nhwc, ((0, 0), (cp, cp), (cp, cp), (0, 0)))
    cols = []
    for kh in range(ck):
        for kw in range(ck):
            cols.append(xp[:, kh:kh + cs * (ohc - 1) + 1:cs,
                              kw:kw + cs * (owc - 1) + 1:cs, :])
    K = ck * ck * C
    if k_pad > K:   # pad contraction dim to a multiple of 128 (clean MXU tiles)
        cols.append(jnp.zeros((B, ohc, owc, k_pad - K), jnp.float32))
    patches = jnp.concatenate(cols, axis=-1)          # (B, ohc, owc, k_pad)
    ih, iw, poh, pow_ = _pool_tap_indices(ohc, owc, pk, ps, pp)
    kk = pk * pk
    exp = patches[:, ih, iw, :]                       # (B, kk, G, k_pad)
    exp = jnp.transpose(exp, (1, 0, 2, 3))            # (kk, B, G, k_pad)
    g = B * poh * pow_
    return exp.reshape(kk * g, k_pad), g


# ------------------------------ parameters ---------------------------------

def init_params(key, num_features=128):
    ks = jax.random.split(key, 10)
    s = 0.02
    return {
        "fc1_w": jax.random.normal(ks[0], (96, 3, 8, 8), jnp.float32) * s,
        "fc1_b": jax.random.normal(ks[1], (96,), jnp.float32) * s,
        "sc1_w": jax.random.normal(ks[2], (96, 3, 7, 7), jnp.float32) * s,
        "sc1_b": jax.random.normal(ks[3], (96,), jnp.float32) * s,
        "lin_w": jax.random.normal(ks[4], (7168, num_features), jnp.float32) * s,
        "lin_b": jax.random.normal(ks[5], (num_features,), jnp.float32) * s,
        "cls_w": jax.random.normal(ks[6], (1024, 4096), jnp.float32) * s,  # densenet classifier -> 4096
        "cls_b": jax.random.normal(ks[7], (4096,), jnp.float32) * s,
        "bb_w": jax.random.normal(ks[8], (3, 1024), jnp.float32) * s,      # backbone stand-in
        "bb_b": jax.random.normal(ks[9], (1024,), jnp.float32) * s,
    }


def _conv_w_mat(w_oihw, k_pad, n_pad):
    O, C, KH, KW = w_oihw.shape
    m = jnp.transpose(w_oihw, (2, 3, 1, 0)).reshape(KH * KW * C, O)
    return jnp.pad(m, ((0, k_pad - KH * KW * C), (0, n_pad - O)))


def prepare_params(p, num_features=128):
    """One-time offline weight prep: matmul layouts, bf16 big weights,
    channel/contraction padding, and the final-linear row permutation that
    makes the NHWC / 128-channel-padded flatten feed it directly."""
    CPAD, KPAD, G, nf = 128, 256, 16, num_features
    new_rows, old_rows = [], []
    for br in range(2):
        for g in range(G):
            for c in range(96):
                new_rows.append(br * G * CPAD + g * CPAD + c)   # (h*4+w)*128+c
                old_rows.append(4096 + br * 1536 + c * G + g)   # torch c*16+h*4+w
    new_rows = np.asarray(new_rows, np.int32)
    old_rows = np.asarray(old_rows, np.int32)
    wb = jnp.zeros((2 * G * CPAD, nf), jnp.float32)
    wb = wb.at[new_rows].set(p["lin_w"][old_rows])
    return {
        "bb_w": p["bb_w"], "bb_b": p["bb_b"],
        "cls_w": p["cls_w"].astype(jnp.bfloat16),       # 16 MiB -> 8 MiB stream
        "cls_b": p["cls_b"].reshape(1, -1),
        "w1": _conv_w_mat(p["fc1_w"], KPAD, CPAD),
        "b1": jnp.pad(p["fc1_b"], (0, CPAD - 96)).reshape(1, CPAD),
        "w2": _conv_w_mat(p["sc1_w"], KPAD, CPAD),
        "b2": jnp.pad(p["sc1_b"], (0, CPAD - 96)).reshape(1, CPAD),
        "wa": p["lin_w"][:4096].astype(jnp.bfloat16),
        "wb": wb.astype(jnp.bfloat16),
        "lin_b": p["lin_b"].reshape(1, -1),
    }


# ------------------------------ model forward ------------------------------

def forward(prep, x_nchw):
    """Equivalent of Model.forward_conv with use_dr=True (densenet variant)."""
    B = x_nchw.shape[0]
    x_nhwc = jnp.transpose(x_nchw, (0, 2, 3, 1))

    # ---- conv_net branch: densenet121 trunk + replaced classifier Linear ----
    # TODO(synk): the pretrained densenet121 feature trunk (hundreds of layers,
    # checkpoint-dependent) has no clean in-script equivalent; stood in by a
    # deterministic GAP -> Linear(3,1024) -> ReLU producing the 1024-d feature.
    gap = jnp.mean(x_nchw, axis=(2, 3))                               # (B, 3)
    feat = jax.nn.relu(gap @ prep["bb_w"] + prep["bb_b"])             # (B, 1024)
    t1_raw = pallas_cls_matmul(feat, prep["cls_w"], prep["cls_b"])    # (B, 4096)

    # ---- both DR branches fused into one Pallas kernel ----
    # branch 1: Conv2d(3,96,k=8,p=1,s=16) -> MaxPool2d(3,4,1) -> 4x4x96
    # branch 2: Conv2d(3,96,k=7,p=4,s=32) -> MaxPool2d(7,2,3) -> 4x4x96
    p1, g1 = _conv_pool_patches(x_nhwc, 8, 16, 1, 3, 4, 1, 256)
    p2, g2 = _conv_pool_patches(x_nhwc, 7, 32, 4, 7, 2, 3, 256)
    assert g1 == g2 == B * 16
    pooled1, pooled2 = pallas_dr_branches(p1, prep["w1"], prep["b1"],
                                          p2, prep["w2"], prep["b2"], g1)
    # NHWC flatten with 128-ch padding (padded channels are exactly 0); the
    # matching row permutation / zero rows are baked into prep["wb"].
    t23 = jnp.concatenate([pooled1.reshape(B, -1),
                           pooled2.reshape(B, -1)], axis=1)           # (B, 4096)

    # ---- all L2-norms + Linear(7168,128) fused into one head kernel ----
    return pallas_head(t1_raw, t23, prep["wa"], prep["wb"], prep["lin_b"])


if __name__ == "__main__":
    key = jax.random.PRNGKey(0)
    pkey, xkey = jax.random.split(key)
    params = init_params(pkey, num_features=128)
    prep = prepare_params(params, num_features=128)
    # 224x224 input is required so that 4096 + 2*1536 == 7168 (Linear in-features).
    x = jax.random.normal(xkey, (2, 3, 224, 224), jnp.float32)
    out = jax.jit(forward)(prep, x)
    out = jax.block_until_ready(out)
    assert out.shape == (2, 128), out.shape
    print("KERNEL_OK")
</pallas_src>

<mosaic_0001>
module attributes {stable_mosaic.version = 11 : i64} {
  func.func @_cls_matmul_kernel(%arg0: i32, %arg1: memref<2x1024xf32, #tpu.memory_space<vmem>>, %arg2: memref<1024x1024xbf16, #tpu.memory_space<vmem>>, %arg3: memref<1x1024xf32, #tpu.memory_space<vmem>>, %arg4: memref<2x1024xf32, #tpu.memory_space<vmem>>) attributes {dimension_semantics = [#tpu.dimension_semantics<parallel>], iteration_bounds = array<i64: 4>, scalar_prefetch = 0 : i64, scratch_operands = 0 : i64, tpu.core_type = #tpu.core_type<tc>, window_params = [{pipeline_mode = #tpu.pipeline_mode<synchronous>, transform_indices = @transform_0, window_bounds = array<i64: 2, 1024>}, {transform_indices = @transform_1, window_bounds = array<i64: 1024, 1024>}, {transform_indices = @transform_2, window_bounds = array<i64: 1, 1024>}, {transform_indices = @transform_3, window_bounds = array<i64: 2, 1024>}]} {
    %c0 = arith.constant 0 : index
    %c0_0 = arith.constant 0 : index
    %0 = vector.load %arg1[%c0, %c0_0] : memref<2x1024xf32, #tpu.memory_space<vmem>>, vector<2x1024xf32>
    %1 = arith.truncf %0 : vector<2x1024xf32> to vector<2x1024xbf16>
    %c0_1 = arith.constant 0 : index
    %c0_2 = arith.constant 0 : index
    %2 = vector.load %arg2[%c0_1, %c0_2] : memref<1024x1024xbf16, #tpu.memory_space<vmem>>, vector<1024x1024xbf16>
    %cst = arith.constant dense<0.000000e+00> : vector<2x1024xf32>
    %3 = tpu.matmul %1, %2, %cst {dimension_numbers = #tpu.dot_dimension_numbers<[1], [0], [0], [1], [0, 0, 1, 1], [], []>} : vector<2x1024xbf16>, vector<1024x1024xbf16>, vector<2x1024xf32> -> vector<2x1024xf32>
    %c0_3 = arith.constant 0 : index
    %c0_4 = arith.constant 0 : index
    %4 = vector.load %arg3[%c0_3, %c0_4] : memref<1x1024xf32, #tpu.memory_space<vmem>>, vector<1x1024xf32>
    %5 = vector.broadcast %4 : vector<1x1024xf32> to vector<2x1024xf32>
    %6 = arith.addf %3, %5 : vector<2x1024xf32>
    %c0_5 = arith.constant 0 : index
    %c0_6 = arith.constant 0 : index
    %7 = vector.load %arg4[%c0_5, %c0_6] : memref<2x1024xf32, #tpu.memory_space<vmem>>, vector<2x1024xf32>
    tpu.vector_store %arg4[%c0_5, %c0_6], %6 {strides = array<i32>} : memref<2x1024xf32, #tpu.memory_space<vmem>>, vector<2x1024xf32>,
    return
  }
  func.func @transform_0(%arg0: i32) -> (i32, i32) {
    %c0_i32 = arith.constant 0 : i32
    %c0_i32_0 = arith.constant 0 : i32
    %c0_i32_1 = arith.constant 0 : i32
    return %c0_i32, %c0_i32_0 : i32, i32
  }
  func.func @transform_1(%arg0: i32) -> (i32, i32) {
    %c0_i32 = arith.constant 0 : i32
    %c0_i32_0 = arith.constant 0 : i32
    return %c0_i32, %arg0 : i32, i32
  }
  func.func @transform_2(%arg0: i32) -> (i32, i32) {
    %c0_i32 = arith.constant 0 : i32
    %c0_i32_0 = arith.constant 0 : i32
    return %c0_i32, %arg0 : i32, i32
  }
  func.func @transform_3(%arg0: i32) -> (i32, i32) {
    %c0_i32 = arith.constant 0 : i32
    %c0_i32_0 = arith.constant 0 : i32
    return %c0_i32, %arg0 : i32, i32
  }
}

module attributes {stable_mosaic.version = 11 : i64} {
  func.func @_dr_branches_kernel(%arg0: i32, %arg1: memref<288x256xf32, #tpu.memory_space<vmem>>, %arg2: memref<256x128xf32, #tpu.memory_space<vmem>>, %arg3: memref<1x128xf32, #tpu.memory_space<vmem>>, %arg4: memref<1568x256xf32, #tpu.memory_space<vmem>>, %arg5: memref<256x128xf32, #tpu.memory_space<vmem>>, %arg6: memref<1x128xf32, #tpu.memory_space<vmem>>, %arg7: memref<32x128xf32, #tpu.memory_space<vmem>>, %arg8: memref<32x128xf32, #tpu.memory_space<vmem>>) attributes {dimension_semantics = [#tpu.dimension_semantics<arbitrary>], iteration_bounds = array<i64: 1>, scalar_prefetch = 0 : i64, scratch_operands = 0 : i64, tpu.core_type = #tpu.core_type<tc>, window_params = [{pipeline_mode = #tpu.pipeline_mode<synchronous>, transform_indices = @transform_0, window_bounds = array<i64: 288, 256>}, {pipeline_mode = #tpu.pipeline_mode<synchronous>, transform_indices = @transform_1, window_bounds = array<i64: 256, 128>}, {pipeline_mode = #tpu.pipeline_mode<synchronous>, transform_indices = @transform_2, window_bounds = array<i64: 1, 128>}, {pipeline_mode = #tpu.pipeline_mode<synchronous>, transform_indices = @transform_3, window_bounds = array<i64: 1568, 256>}, {pipeline_mode = #tpu.pipeline_mode<synchronous>, transform_indices = @transform_4, window_bounds = array<i64: 256, 128>}, {pipeline_mode = #tpu.pipeline_mode<synchronous>, transform_indices = @transform_5, window_bounds = array<i64: 1, 128>}, {pipeline_mode = #tpu.pipeline_mode<synchronous>, transform_indices = @transform_6, window_bounds = array<i64: 32, 128>}, {pipeline_mode = #tpu.pipeline_mode<synchronous>, transform_indices = @transform_7, window_bounds = array<i64: 32, 128>}]} {
    %c0 = arith.constant 0 : index
    %c0_0 = arith.constant 0 : index
    %0 = vector.load %arg1[%c0, %c0_0] : memref<288x256xf32, #tpu.memory_space<vmem>>, vector<288x256xf32>
    %c0_1 = arith.constant 0 : index
    %c0_2 = arith.constant 0 : index
    %1 = vector.load %arg2[%c0_1, %c0_2] : memref<256x128xf32, #tpu.memory_space<vmem>>, vector<256x128xf32>
    %cst = arith.constant dense<0.000000e+00> : vector<288x128xf32>
    %2 = tpu.matmul %0, %1, %cst {dimension_numbers = #tpu.dot_dimension_numbers<[1], [0], [0], [1], [0, 0, 1, 1], [], []>} : vector<288x256xf32>, vector<256x128xf32>, vector<288x128xf32> -> vector<288x128xf32>
    %3 = vector.extract_strided_slice %2 {offsets = [0, 0], sizes = [32, 128], strides = [1, 1]} : vector<288x128xf32> to vector<32x128xf32>
    %4 = vector.extract_strided_slice %2 {offsets = [32, 0], sizes = [32, 128], strides = [1, 1]} : vector<288x128xf32> to vector<32x128xf32>
    %5 = arith.maximumf %3, %4 : vector<32x128xf32>
    %6 = vector.extract_strided_slice %2 {offsets = [64, 0], sizes = [32, 128], strides = [1, 1]} : vector<288x128xf32> to vector<32x128xf32>
    %7 = arith.maximumf %5, %6 : vector<32x128xf32>
    %8 = vector.extract_strided_slice %2 {offsets = [96, 0], sizes = [32, 128], strides = [1, 1]} : vector<288x128xf32> to vector<32x128xf32>
    %9 = arith.maximumf %7, %8 : vector<32x128xf32>
    %10 = vector.extract_strided_slice %2 {offsets = [128, 0], sizes = [32, 128], strides = [1, 1]} : vector<288x128xf32> to vector<32x128xf32>
    %11 = arith.maximumf %9, %10 : vector<32x128xf32>
    %12 = vector.extract_strided_slice %2 {offsets = [160, 0], sizes = [32, 128], strides = [1, 1]} : vector<288x128xf32> to vector<32x128xf32>
    %13 = arith.maximumf %11, %12 : vector<32x128xf32>
    %14 = vector.extract_strided_slice %2 {offsets = [192, 0], sizes = [32, 128], strides = [1, 1]} : vector<288x128xf32> to vector<32x128xf32>
    %15 = arith.maximumf %13, %14 : vector<32x128xf32>
    %16 = vector.extract_strided_slice %2 {offsets = [224, 0], sizes = [32, 128], strides = [1, 1]} : vector<288x128xf32> to vector<32x128xf32>
    %17 = arith.maximumf %15, %16 : vector<32x128xf32>
    %18 = vector.extract_strided_slice %2 {offsets = [256, 0], sizes = [32, 128], strides = [1, 1]} : vector<288x128xf32> to vector<32x128xf32>
    %19 = arith.maximumf %17, %18 : vector<32x128xf32>
    %c0_3 = arith.constant 0 : index
    %c0_4 = arith.constant 0 : index
    %20 = vector.load %arg3[%c0_3, %c0_4] : memref<1x128xf32, #tpu.memory_space<vmem>>, vector<1x128xf32>
    %21 = vector.broadcast %20 : vector<1x128xf32> to vector<32x128xf32>
    %22 = arith.addf %19, %21 : vector<32x128xf32>
    %c0_5 = arith.constant 0 : index
    %c0_6 = arith.constant 0 : index
    %23 = vector.load %arg7[%c0_5, %c0_6] : memref<32x128xf32, #tpu.memory_space<vmem>>, vector<32x128xf32>
    tpu.vector_store %arg7[%c0_5, %c0_6], %22 {strides = array<i32>} : memref<32x128xf32, #tpu.memory_space<vmem>>, vector<32x128xf32>,
    %c0_7 = arith.constant 0 : index
    %c0_8 = arith.constant 0 : index
    %24 = vector.load %arg4[%c0_7, %c0_8] : memref<1568x256xf32, #tpu.memory_space<vmem>>, vector<1568x256xf32>
    %c0_9 = arith.constant 0 : index
    %c0_10 = arith.constant 0 : index
    %25 = vector.load %arg5[%c0_9, %c0_10] : memref<256x128xf32, #tpu.memory_space<vmem>>, vector<256x128xf32>
    %cst_11 = arith.constant dense<0.000000e+00> : vector<1568x128xf32>
    %26 = tpu.matmul %24, %25, %cst_11 {dimension_numbers = #tpu.dot_dimension_numbers<[1], [0], [0], [1], [0, 0, 1, 1], [], []>} : vector<1568x256xf32>, vector<256x128xf32>, vector<1568x128xf32> -> vector<1568x128xf32>
    %27 = vector.extract_strided_slice %26 {offsets = [0, 0], sizes = [32, 128], strides = [1, 1]} : vector<1568x128xf32> to vector<32x128xf32>
    %28 = vector.extract_strided_slice %26 {offsets = [32, 0], sizes = [32, 128], strides = [1, 1]} : vector<1568x128xf32> to vector<32x128xf32>
    %29 = arith.maximumf %27, %28 : vector<32x128xf32>
    %30 = vector.extract_strided_slice %26 {offsets = [64, 0], sizes = [32, 128], strides = [1, 1]} : vector<1568x128xf32> to vector<32x128xf32>
    %31 = arith.maximumf %29, %30 : vector<32x128xf32>
    %32 = vector.extract_strided_slice %26 {offsets = [96, 0], sizes = [32, 128], strides = [1, 1]} : vector<1568x128xf32> to vector<32x128xf32>
    %33 = arith.maximumf %31, %32 : vector<32x128xf32>
    %34 = vector.extract_strided_slice %26 {offsets = [128, 0], sizes = [32, 128], strides = [1, 1]} : vector<1568x128xf32> to vector<32x128xf32>
    %35 = arith.maximumf %33, %34 : vector<32x128xf32>
    %36 = vector.extract_strided_slice %26 {offsets = [160, 0], sizes = [32, 128], strides = [1, 1]} : vector<1568x128xf32> to vector<32x128xf32>
    %37 = arith.maximumf %35, %36 : vector<32x128xf32>
    %38 = vector.extract_strided_slice %26 {offsets = [192, 0], sizes = [32, 128], strides = [1, 1]} : vector<1568x128xf32> to vector<32x128xf32>
    %39 = arith.maximumf %37, %38 : vector<32x128xf32>
    %40 = vector.extract_strided_slice %26 {offsets = [224, 0], sizes = [32, 128], strides = [1, 1]} : vector<1568x128xf32> to vector<32x128xf32>
    %41 = arith.maximumf %39, %40 : vector<32x128xf32>
    %42 = vector.extract_strided_slice %26 {offsets = [256, 0], sizes = [32, 128], strides = [1, 1]} : vector<1568x128xf32> to vector<32x128xf32>
    %43 = arith.maximumf %41, %42 : vector<32x128xf32>
    %44 = vector.extract_strided_slice %26 {offsets = [288, 0], sizes = [32, 128], strides = [1, 1]} : vector<1568x128xf32> to vector<32x128xf32>
    %45 = arith.maximumf %43, %44 : vector<32x128xf32>
    %46 = vector.extract_strided_slice %26 {offsets = [320, 0], sizes = [32, 128], strides = [1, 1]} : vector<1568x128xf32> to vector<32x128xf32>
    %47 = arith.maximumf %45, %46 : vector<32x128xf32>
    %48 = vector.extract_strided_slice %26 {offsets = [352, 0], sizes = [32, 128], strides = [1, 1]} : vector<1568x128xf32> to vector<32x128xf32>
    %49 = arith.maximumf %47, %48 : vector<32x128xf32>
    %50 = vector.extract_strided_slice %26 {offsets = [384, 0], sizes = [32, 128], strides = [1, 1]} : vector<1568x128xf32> to vector<32x128xf32>
    %51 = arith.maximumf %49, %50 : vector<32x128xf32>
    %52 = vector.extract_strided_slice %26 {offsets = [416, 0], sizes = [32, 128], strides = [1, 1]} : vector<1568x128xf32> to vector<32x128xf32>
    %53 = arith.maximumf %51, %52 : vector<32x128xf32>
    %54 = vector.extract_strided_slice %26 {offsets = [448, 0], sizes = [32, 128], strides = [1, 1]} : vector<1568x128xf32> to vector<32x128xf32>
    %55 = arith.maximumf %53, %54 : vector<32x128xf32>
    %56 = vector.extract_strided_slice %26 {offsets = [480, 0], sizes = [32, 128], strides = [1, 1]} : vector<1568x128xf32> to vector<32x128xf32>
    %57 = arith.maximumf %55, %56 : vector<32x128xf32>
    %58 = vector.extract_strided_slice %26 {offsets = [512, 0], sizes = [32, 128], strides = [1, 1]} : vector<1568x128xf32> to vector<32x128xf32>
    %59 = arith.maximumf %57, %58 : vector<32x128xf32>
    %60 = vector.extract_strided_slice %26 {offsets = [544, 0], sizes = [32, 128], strides = [1, 1]} : vector<1568x128xf32> to vector<32x128xf32>
    %61 = arith.maximumf %59, %60 : vector<32x128xf32>
    %62 = vector.extract_strided_slice %26 {offsets = [576, 0], sizes = [32, 128], strides = [1, 1]} : vector<1568x128xf32> to vector<32x128xf32>
    %63 = arith.maximumf %61, %62 : vector<32x128xf32>
    %64 = vector.extract_strided_slice %26 {offsets = [608, 0], sizes = [32, 128], strides = [1, 1]} : vector<1568x128xf32> to vector<32x128xf32>
    %65 = arith.maximumf %63, %64 : vector<32x128xf32>
    %66 = vector.extract_strided_slice %26 {offsets = [640, 0], sizes = [32, 128], strides = [1, 1]} : vector<1568x128xf32> to vector<32x128xf32>
    %67 = arith.maximumf %65, %66 : vector<32x128xf32>
    %68 = vector.extract_strided_slice %26 {offsets = [672, 0], sizes = [32, 128], strides = [1, 1]} : vector<1568x128xf32> to vector<32x128xf32>
    %69 = arith.maximumf %67, %68 : vector<32x128xf32>
    %70 = vector.extract_strided_slice %26 {offsets = [704, 0], sizes = [32, 128], strides = [1, 1]} : vector<1568x128xf32> to vector<32x128xf32>
    %71 = arith.maximumf %69, %70 : vector<32x128xf32>
    %72 = vector.extract_strided_slice %26 {offsets = [736, 0], sizes = [32, 128], strides = [1, 1]} : vector<1568x128xf32> to vector<32x128xf32>
    %73 = arith.maximumf %71, %72 : vector<32x128xf32>
    %74 = vector.extract_strided_slice %26 {offsets = [768, 0], sizes = [32, 128], strides = [1, 1]} : vector<1568x128xf32> to vector<32x128xf32>
    %75 = arith.maximumf %73, %74 : vector<32x128xf32>
    %76 = vector.extract_strided_slice %26 {offsets = [800, 0], sizes = [32, 128], strides = [1, 1]} : vector<1568x128xf32> to vector<32x128xf32>
    %77 = arith.maximumf %75, %76 : vector<32x128xf32>
    %78 = vector.extract_strided_slice %26 {offsets = [832, 0], sizes = [32, 128], strides = [1, 1]} : vector<1568x128xf32> to vector<32x128xf32>
    %79 = arith.maximumf %77, %78 : vector<32x128xf32>
    %80 = vector.extract_strided_slice %26 {offsets = [864, 0], sizes = [32, 128], strides = [1, 1]} : vector<1568x128xf32> to vector<32x128xf32>
    %81 = arith.maximumf %79, %80 : vector<32x128xf32>
    %82 = vector.extract_strided_slice %26 {offsets = [896, 0], sizes = [32, 128], strides = [1, 1]} : vector<1568x128xf32> to vector<32x128xf32>
    %83 = arith.maximumf %81, %82 : vector<32x128xf32>
    %84 = vector.extract_strided_slice %26 {offsets = [928, 0], sizes = [32, 128], strides = [1, 1]} : vector<1568x128xf32> to vector<32x128xf32>
    %85 = arith.maximumf %83, %84 : vector<32x128xf32>
    %86 = vector.extract_strided_slice %26 {offsets = [960, 0], sizes = [32, 128], strides = [1, 1]} : vector<1568x128xf32> to vector<32x128xf32>
    %87 = arith.maximumf %85, %86 : vector<32x128xf32>
    %88 = vector.extract_strided_slice %26 {offsets = [992, 0], sizes = [32, 128], strides = [1, 1]} : vector<1568x128xf32> to vector<32x128xf32>
    %89 = arith.maximumf %87, %88 : vector<32x128xf32>
    %90 = vector.extract_strided_slice %26 {offsets = [1024, 0], sizes = [32, 128], strides = [1, 1]} : vector<1568x128xf32> to vector<32x128xf32>
    %91 = arith.maximumf %89, %90 : vector<32x128xf32>
    %92 = vector.extract_strided_slice %26 {offsets = [1056, 0], sizes = [32, 128], strides = [1, 1]} : vector<1568x128xf32> to vector<32x128xf32>
    %93 = arith.maximumf %91, %92 : vector<32x128xf32>
    %94 = vector.extract_strided_slice %26 {offsets = [1088, 0], sizes = [32, 128], strides = [1, 1]} : vector<1568x128xf32> to vector<32x128xf32>
    %95 = arith.maximumf %93, %94 : vector<32x128xf32>
    %96 = vector.extract_strided_slice %26 {offsets = [1120, 0], sizes = [32, 128], strides = [1, 1]} : vector<1568x128xf32> to vector<32x128xf32>
    %97 = arith.maximumf %95, %96 : vector<32x128xf32>
    %98 = vector.extract_strided_slice %26 {offsets = [1152, 0], sizes = [32, 128], strides = [1, 1]} : vector<1568x128xf32> to vector<32x128xf32>
    %99 = arith.maximumf %97, %98 : vector<32x128xf32>
    %100 = vector.extract_strided_slice %26 {offsets = [1184, 0], sizes = [32, 128], strides = [1, 1]} : vector<1568x128xf32> to vector<32x128xf32>
    %101 = arith.maximumf %99, %100 : vector<32x128xf32>
    %102 = vector.extract_strided_slice %26 {offsets = [1216, 0], sizes = [32, 128], strides = [1, 1]} : vector<1568x128xf32> to vector<32x128xf32>
    %103 = arith.maximumf %101, %102 : vector<32x128xf32>
    %104 = vector.extract_strided_slice %26 {offsets = [1248, 0], sizes = [32, 128], strides = [1, 1]} : vector<1568x128xf32> to vector<32x128xf32>
    %105 = arith.maximumf %103, %104 : vector<32x128xf32>
    %106 = vector.extract_strided_slice %26 {offsets = [1280, 0], sizes = [32, 128], strides = [1, 1]} : vector<1568x128xf32> to vector<32x128xf32>
    %107 = arith.maximumf %105, %106 : vector<32x128xf32>
    %108 = vector.extract_strided_slice %26 {offsets = [1312, 0], sizes = [32, 128], strides = [1, 1]} : vector<1568x128xf32> to vector<32x128xf32>
    %109 = arith.maximumf %107, %108 : vector<32x128xf32>
    %110 = vector.extract_strided_slice %26 {offsets = [1344, 0], sizes = [32, 128], strides = [1, 1]} : vector<1568x128xf32> to vector<32x128xf32>
    %111 = arith.maximumf %109, %110 : vector<32x128xf32>
    %112 = vector.extract_strided_slice %26 {offsets = [1376, 0], sizes = [32, 128], strides = [1, 1]} : vector<1568x128xf32> to vector<32x128xf32>
    %113 = arith.maximumf %111, %112 : vector<32x128xf32>
    %114 = vector.extract_strided_slice %26 {offsets = [1408, 0], sizes = [32, 128], strides = [1, 1]} : vector<1568x128xf32> to vector<32x128xf32>
    %115 = arith.maximumf %113, %114 : vector<32x128xf32>
    %116 = vector.extract_strided_slice %26 {offsets = [1440, 0], sizes = [32, 128], strides = [1, 1]} : vector<1568x128xf32> to vector<32x128xf32>
    %117 = arith.maximumf %115, %116 : vector<32x128xf32>
    %118 = vector.extract_strided_slice %26 {offsets = [1472, 0], sizes = [32, 128], strides = [1, 1]} : vector<1568x128xf32> to vector<32x128xf32>
    %119 = arith.maximumf %117, %118 : vector<32x128xf32>
    %120 = vector.extract_strided_slice %26 {offsets = [1504, 0], sizes = [32, 128], strides = [1, 1]} : vector<1568x128xf32> to vector<32x128xf32>
    %121 = arith.maximumf %119, %120 : vector<32x128xf32>
    %122 = vector.extract_strided_slice %26 {offsets = [1536, 0], sizes = [32, 128], strides = [1, 1]} : vector<1568x128xf32> to vector<32x128xf32>
    %123 = arith.maximumf %121, %122 : vector<32x128xf32>
    %c0_12 = arith.constant 0 : index
    %c0_13 = arith.constant 0 : index
    %124 = vector.load %arg6[%c0_12, %c0_13] : memref<1x128xf32, #tpu.memory_space<vmem>>, vector<1x128xf32>
    %125 = vector.broadcast %124 : vector<1x128xf32> to vector<32x128xf32>
    %126 = arith.addf %123, %125 : vector<32x128xf32>
    %c0_14 = arith.constant 0 : index
    %c0_15 = arith.constant 0 : index
    %127 = vector.load %arg8[%c0_14, %c0_15] : memref<32x128xf32, #tpu.memory_space<vmem>>, vector<32x128xf32>
    tpu.vector_store %arg8[%c0_14, %c0_15], %126 {strides = array<i32>} : memref<32x128xf32, #tpu.memory_space<vmem>>, vector<32x128xf32>,
    return
  }
  func.func @transform_0(%arg0: i32) -> (i32, i32) {
    %c0_i32 = arith.constant 0 : i32
    %c0_i32_0 = arith.constant 0 : i32
    %c0_i32_1 = arith.constant 0 : i32
    return %c0_i32, %c0_i32_0 : i32, i32
  }
  func.func @transform_1(%arg0: i32) -> (i32, i32) {
    %c0_i32 = arith.constant 0 : i32
    %c0_i32_0 = arith.constant 0 : i32
    %c0_i32_1 = arith.constant 0 : i32
    return %c0_i32, %c0_i32_0 : i32, i32
  }
  func.func @transform_2(%arg0: i32) -> (i32, i32) {
    %c0_i32 = arith.constant 0 : i32
    %c0_i32_0 = arith.constant 0 : i32
    %c0_i32_1 = arith.constant 0 : i32
    return %c0_i32, %c0_i32_0 : i32, i32
  }
  func.func @transform_3(%arg0: i32) -> (i32, i32) {
    %c0_i32 = arith.constant 0 : i32
    %c0_i32_0 = arith.constant 0 : i32
    %c0_i32_1 = arith.constant 0 : i32
    return %c0_i32, %c0_i32_0 : i32, i32
  }
  func.func @transform_4(%arg0: i32) -> (i32, i32) {
    %c0_i32 = arith.constant 0 : i32
    %c0_i32_0 = arith.constant 0 : i32
    %c0_i32_1 = arith.constant 0 : i32
    return %c0_i32, %c0_i32_0 : i32, i32
  }
  func.func @transform_5(%arg0: i32) -> (i32, i32) {
    %c0_i32 = arith.constant 0 : i32
    %c0_i32_0 = arith.constant 0 : i32
    %c0_i32_1 = arith.constant 0 : i32
    return %c0_i32, %c0_i32_0 : i32, i32
  }
  func.func @transform_6(%arg0: i32) -> (i32, i32) {
    %c0_i32 = arith.constant 0 : i32
    %c0_i32_0 = arith.constant 0 : i32
    %c0_i32_1 = arith.constant 0 : i32
    return %c0_i32, %c0_i32_0 : i32, i32
  }
  func.func @transform_7(%arg0: i32) -> (i32, i32) {
    %c0_i32 = arith.constant 0 : i32
    %c0_i32_0 = arith.constant 0 : i32
    %c0_i32_1 = arith.constant 0 : i32
    return %c0_i32, %c0_i32_0 : i32, i32
  }
}

module attributes {stable_mosaic.version = 11 : i64} {
  func.func @_head_kernel(%arg0: i32, %arg1: memref<2x4096xf32, #tpu.memory_space<vmem>>, %arg2: memref<2x4096xf32, #tpu.memory_space<vmem>>, %arg3: memref<4096x128xbf16, #tpu.memory_space<vmem>>, %arg4: memref<4096x128xbf16, #tpu.memory_space<vmem>>, %arg5: memref<1x128xf32, #tpu.memory_space<vmem>>, %arg6: memref<2x128xf32, #tpu.memory_space<vmem>>) attributes {dimension_semantics = [#tpu.dimension_semantics<arbitrary>], iteration_bounds = array<i64: 1>, scalar_prefetch = 0 : i64, scratch_operands = 0 : i64, tpu.core_type = #tpu.core_type<tc>, window_params = [{pipeline_mode = #tpu.pipeline_mode<synchronous>, transform_indices = @transform_0, window_bounds = array<i64: 2, 4096>}, {pipeline_mode = #tpu.pipeline_mode<synchronous>, transform_indices = @transform_1, window_bounds = array<i64: 2, 4096>}, {pipeline_mode = #tpu.pipeline_mode<synchronous>, transform_indices = @transform_2, window_bounds = array<i64: 4096, 128>}, {pipeline_mode = #tpu.pipeline_mode<synchronous>, transform_indices = @transform_3, window_bounds = array<i64: 4096, 128>}, {pipeline_mode = #tpu.pipeline_mode<synchronous>, transform_indices = @transform_4, window_bounds = array<i64: 1, 128>}, {pipeline_mode = #tpu.pipeline_mode<synchronous>, transform_indices = @transform_5, window_bounds = array<i64: 2, 128>}]} {
    %c0 = arith.constant 0 : index
    %c0_0 = arith.constant 0 : index
    %0 = vector.load %arg1[%c0, %c0_0] : memref<2x4096xf32, #tpu.memory_space<vmem>>, vector<2x4096xf32>
    %1 = arith.mulf %0, %0 : vector<2x4096xf32>
    %cst = arith.constant dense<0.000000e+00> : vector<2xf32>
    %2 = vector.multi_reduction <add>, %1, %cst [1] : vector<2x4096xf32> to vector<2xf32>
    %3 = vector.shape_cast %2 : vector<2xf32> to vector<2x1xf32>
    %cst_1 = arith.constant 1.000000e-24 : f32
    %4 = vector.broadcast %cst_1 : f32 to vector<2x1xf32>
    %5 = arith.maximumf %3, %4 : vector<2x1xf32>
    %6 = math.rsqrt %5 : vector<2x1xf32>
    %7 = vector.broadcast %6 : vector<2x1xf32> to vector<2x4096xf32>
    %8 = arith.mulf %0, %7 : vector<2x4096xf32>
    %c0_2 = arith.constant 0 : index
    %c0_3 = arith.constant 0 : index
    %9 = vector.load %arg2[%c0_2, %c0_3] : memref<2x4096xf32, #tpu.memory_space<vmem>>, vector<2x4096xf32>
    %10 = arith.mulf %9, %9 : vector<2x4096xf32>
    %cst_4 = arith.constant dense<0.000000e+00> : vector<2xf32>
    %11 = vector.multi_reduction <add>, %10, %cst_4 [1] : vector<2x4096xf32> to vector<2xf32>
    %12 = vector.shape_cast %11 : vector<2xf32> to vector<2x1xf32>
    %cst_5 = arith.constant 1.000000e-24 : f32
    %13 = vector.broadcast %cst_5 : f32 to vector<2x1xf32>
    %14 = arith.maximumf %12, %13 : vector<2x1xf32>
    %15 = math.rsqrt %14 : vector<2x1xf32>
    %16 = vector.broadcast %15 : vector<2x1xf32> to vector<2x4096xf32>
    %17 = arith.mulf %9, %16 : vector<2x4096xf32>
    %18 = arith.truncf %8 : vector<2x4096xf32> to vector<2x4096xbf16>
    %c0_6 = arith.constant 0 : index
    %c0_7 = arith.constant 0 : index
    %19 = vector.load %arg3[%c0_6, %c0_7] : memref<4096x128xbf16, #tpu.memory_space<vmem>>, vector<4096x128xbf16>
    %cst_8 = arith.constant dense<0.000000e+00> : vector<2x128xf32>
    %20 = tpu.matmul %18, %19, %cst_8 {dimension_numbers = #tpu.dot_dimension_numbers<[1], [0], [0], [1], [0, 0, 1, 1], [], []>} : vector<2x4096xbf16>, vector<4096x128xbf16>, vector<2x128xf32> -> vector<2x128xf32>
    %21 = arith.truncf %17 : vector<2x4096xf32> to vector<2x4096xbf16>
    %c0_9 = arith.constant 0 : index
    %c0_10 = arith.constant 0 : index
    %22 = vector.load %arg4[%c0_9, %c0_10] : memref<4096x128xbf16, #tpu.memory_space<vmem>>, vector<4096x128xbf16>
    %cst_11 = arith.constant dense<0.000000e+00> : vector<2x128xf32>
    %23 = tpu.matmul %21, %22, %cst_11 {dimension_numbers = #tpu.dot_dimension_numbers<[1], [0], [0], [1], [0, 0, 1, 1], [], []>} : vector<2x4096xbf16>, vector<4096x128xbf16>, vector<2x128xf32> -> vector<2x128xf32>
    %24 = arith.addf %20, %23 : vector<2x128xf32>
    %c0_12 = arith.constant 0 : index
    %c0_13 = arith.constant 0 : index
    %25 = vector.load %arg5[%c0_12, %c0_13] : memref<1x128xf32, #tpu.memory_space<vmem>>, vector<1x128xf32>
    %26 = vector.broadcast %25 : vector<1x128xf32> to vector<2x128xf32>
    %27 = arith.addf %24, %26 : vector<2x128xf32>
    %28 = arith.mulf %27, %27 : vector<2x128xf32>
    %cst_14 = arith.constant dense<0.000000e+00> : vector<2xf32>
    %29 = vector.multi_reduction <add>, %28, %cst_14 [1] : vector<2x128xf32> to vector<2xf32>
    %30 = vector.shape_cast %29 : vector<2xf32> to vector<2x1xf32>
    %cst_15 = arith.constant 1.000000e-24 : f32
    %31 = vector.broadcast %cst_15 : f32 to vector<2x1xf32>
    %32 = arith.maximumf %30, %31 : vector<2x1xf32>
    %33 = math.rsqrt %32 : vector<2x1xf32>
    %34 = vector.broadcast %33 : vector<2x1xf32> to vector<2x128xf32>
    %35 = arith.mulf %27, %34 : vector<2x128xf32>
    %c0_16 = arith.constant 0 : index
    %c0_17 = arith.constant 0 : index
    %36 = vector.load %arg6[%c0_16, %c0_17] : memref<2x128xf32, #tpu.memory_space<vmem>>, vector<2x128xf32>
    tpu.vector_store %arg6[%c0_16, %c0_17], %35 {strides = array<i32>} : memref<2x128xf32, #tpu.memory_space<vmem>>, vector<2x128xf32>,
    return
  }
  func.func @transform_0(%arg0: i32) -> (i32, i32) {
    %c0_i32 = arith.constant 0 : i32
    %c0_i32_0 = arith.constant 0 : i32
    %c0_i32_1 = arith.constant 0 : i32
    return %c0_i32, %c0_i32_0 : i32, i32
  }
  func.func @transform_1(%arg0: i32) -> (i32, i32) {
    %c0_i32 = arith.constant 0 : i32
    %c0_i32_0 = arith.constant 0 : i32
    %c0_i32_1 = arith.constant 0 : i32
    return %c0_i32, %c0_i32_0 : i32, i32
  }
  func.func @transform_2(%arg0: i32) -> (i32, i32) {
    %c0_i32 = arith.constant 0 : i32
    %c0_i32_0 = arith.constant 0 : i32
    %c0_i32_1 = arith.constant 0 : i32
    return %c0_i32, %c0_i32_0 : i32, i32
  }
  func.func @transform_3(%arg0: i32) -> (i32, i32) {
    %c0_i32 = arith.constant 0 : i32
    %c0_i32_0 = arith.constant 0 : i32
    %c0_i32_1 = arith.constant 0 : i32
    return %c0_i32, %c0_i32_0 : i32, i32
  }
  func.func @transform_4(%arg0: i32) -> (i32, i32) {
    %c0_i32 = arith.constant 0 : i32
    %c0_i32_0 = arith.constant 0 : i32
    %c0_i32_1 = arith.constant 0 : i32
    return %c0_i32, %c0_i32_0 : i32, i32
  }
  func.func @transform_5(%arg0: i32) -> (i32, i32) {
    %c0_i32 = arith.constant 0 : i32
    %c0_i32_0 = arith.constant 0 : i32
    %c0_i32_1 = arith.constant 0 : i32
    return %c0_i32, %c0_i32_0 : i32, i32
  }
}

</mosaic_0001>

<llo_original>
// kernel: forward.3
$region0: #{forward.3}
  #allocation0 [shape = 'u32[]', space=smem, size = 0x4, offset = 0x4, fixed_abs, tag = 'smem constant byte address 0x4 - core index']
  #allocation1 [shape = 'u32[144,128]{1,0:T(1,128)}', space=vmem, size = 0x12000, scoped, tag = 'internal scratch']
  %s0 = inlined_call_operand.vmem [shape: f32[2,1024], index: 0, kind: input, shape index: {}]
  %s1 = inlined_call_operand.hbm [shape: bf16[1024,4096], index: 1, kind: input, shape index: {}]
  %s2 = inlined_call_operand.hbm [shape: f32[1,4096], index: 2, kind: input, shape index: {}]
  %s3 = inlined_call_operand.vmem [shape: f32[2,4096], index: 3, kind: output, shape index: {}]
  %s4 = sld [smem:[#allocation0]]
  $region53: #{forward.3} parent=0
    _
  %s6 = ssub.s32 1, %s4
  %s7 = scalar_select 0, %s6, %s4
  $region1: #{forward.3} parent=0
    #allocation2 [shape = 'u8[4194304]{0}', space=vmem, size = 0x400000, scoped, tag = 'input window, operand 1']
    #allocation3 [shape = 's32[2]{0}', space=sflag, size = 0x8, scoped, tag = 'scoped memory for forward.3']
    #allocation4 [shape = 'u8[8192]{0}', space=vmem, size = 0x2000, scoped, tag = 'input window, operand 2']
    #allocation5 [shape = 's32[2]{0}', space=sflag, size = 0x8, scoped, tag = 'scoped memory for forward.3']
    %8 = vsyncpa [#allocation3], 0
    %s9 = scalar_lea.sflag [#allocation3], 1
    %10 = vsyncpa %s9, 0
    %11 = vsyncpa [#allocation5], 0
    %s12 = scalar_lea.sflag [#allocation5], 1
    %13 = vsyncpa %s12, 0
    loop: start=0, step=1, limit=6
    $region2: #{forward.3} parent=1 // loop_pre_header
      _
    $region3: #{forward.3} parent=1 // loop_header
      %s15 = sphi 0, %s19
      %p16 = scmp.ge.s32.totalorder %s15, 6
      %s23 = sphi 0, %s23
      %s25 = sphi 0, %s23
      %s26 = sphi 0, %s25
      %s40 = sphi 0, %s26
      %s46 = sphi 0, %s48
      %s49 = sphi 0, %s46
      %s50 = sphi 0, %s49
      %s66 = sphi 0, %s50
      %s72 = sphi 0, %s74
      %s75 = sphi 0, %s72
      %s76 = sphi 0, %s75
      %s92 = sphi 0, %s76
      %s98 = sphi 0, %s100
      %s101 = sphi 0, %s98
      %s102 = sphi 0, %s101
      %s118 = sphi 0, %s102
    $region4: #{forward.3} parent=1 // loop_header_branch
      %18 = sbr.rel (%p16) target = $region8
    $region5: #{forward.3} parent=1 // loop_body
      %s20 = ssub.s32 %s15, 1
      %s21 = ssub.s32 %s15, 2
      %s22 = sadd.s32 %s15, 1
      %s24 = sadd.s32 %s23, 1
      %p27 = scmp.eq.s32.totalorder %s15, 3
      %p28 = scmp.ne.s32.totalorder %s23, %s25
      %p29 = scmp.eq.s32.totalorder %s15, 0
      %p30 = por %p28, %p29
      %p31 = scmp.ne.s32.totalorder %s23, %s25
      %p32 = scmp.eq.s32.totalorder %s20, 3
      %p33 = por %p31, %p32
      %p34 = scmp.ne.s32.totalorder %s25, %s26
      %p35 = scmp.eq.s32.totalorder %s20, 0
      %p36 = por %p34, %p35
      %p37 = scmp.ne.s32.totalorder %s25, %s26
      %p38 = scmp.eq.s32.totalorder %s21, 3
      %p39 = por %p37, %p38
      %p41 = scmp.ne.s32.totalorder %s26, %s40
      %p42 = scmp.eq.s32.totalorder %s21, 0
      %p43 = por %p41, %p42
      %s44 = ssub.s32 %s15, %s22
      %p45 = scmp.eq.s32.totalorder %s44, 0
      %s47 = sadd.s32 %s46, 1
      %s48 = scalar_select %p45, %s46, %s47
      %p51 = pneg %p45
      %p52 = scmp.eq.s32.totalorder %s15, 3
      %p53 = por %p51, %p52
      %p54 = scmp.ne.s32.totalorder %s46, %s49
      %p55 = scmp.eq.s32.totalorder %s15, 0
      %p56 = por %p54, %p55
      %p57 = scmp.ne.s32.totalorder %s46, %s49
      %p58 = scmp.eq.s32.totalorder %s20, 3
      %p59 = por %p57, %p58
      %p60 = scmp.ne.s32.totalorder %s49, %s50
      %p61 = scmp.eq.s32.totalorder %s20, 0
      %p62 = por %p60, %p61
      %p63 = scmp.ne.s32.totalorder %s49, %s50
      %p64 = scmp.eq.s32.totalorder %s21, 3
      %p65 = por %p63, %p64
      %p67 = scmp.ne.s32.totalorder %s50, %s66
      %p68 = scmp.eq.s32.totalorder %s21, 0
      %p69 = por %p67, %p68
      %s70 = ssub.s32 %s15, %s22
      %p71 = scmp.eq.s32.totalorder %s70, 0
      %s73 = sadd.s32 %s72, 1
      %s74 = scalar_select %p71, %s72, %s73
      %p77 = pneg %p71
      %p78 = scmp.eq.s32.totalorder %s15, 3
      %p79 = por %p77, %p78
      %p80 = scmp.ne.s32.totalorder %s72, %s75
      %p81 = scmp.eq.s32.totalorder %s15, 0
      %p82 = por %p80, %p81
      %p83 = scmp.ne.s32.totalorder %s72, %s75
      %p84 = scmp.eq.s32.totalorder %s20, 3
      %p85 = por %p83, %p84
      %p86 = scmp.ne.s32.totalorder %s75, %s76
      %p87 = scmp.eq.s32.totalorder %s20, 0
      %p88 = por %p86, %p87
      %p89 = scmp.ne.s32.totalorder %s75, %s76
      %p90 = scmp.eq.s32.totalorder %s21, 3
      %p91 = por %p89, %p90
      %p93 = scmp.ne.s32.totalorder %s76, %s92
      %p94 = scmp.eq.s32.totalorder %s21, 0
      %p95 = por %p93, %p94
      %s96 = ssub.s32 %s15, %s22
      %p97 = scmp.eq.s32.totalorder %s96, 0
      %s99 = sadd.s32 %s98, 1
      %s100 = scalar_select %p97, %s98, %s99
      %p103 = pneg %p97
      %p104 = scmp.eq.s32.totalorder %s15, 3
      %p105 = por %p103, %p104
      %p106 = scmp.ne.s32.totalorder %s98, %s101
      %p107 = scmp.eq.s32.totalorder %s15, 0
      %p108 = por %p106, %p107
      %p109 = scmp.ne.s32.totalorder %s98, %s101
      %p110 = scmp.eq.s32.totalorder %s20, 3
      %p111 = por %p109, %p110
      %p112 = scmp.ne.s32.totalorder %s101, %s102
      %p113 = scmp.eq.s32.totalorder %s20, 0
      %p114 = por %p112, %p113
      %p115 = scmp.ne.s32.totalorder %s101, %s102
      %p116 = scmp.eq.s32.totalorder %s21, 3
      %p117 = por %p115, %p116
      %p119 = scmp.ne.s32.totalorder %s102, %s118
      %p120 = scmp.eq.s32.totalorder %s21, 0
      %p121 = por %p119, %p120
      %p122 = scmp.le.s32.totalorder 1, %s15
      %p123 = scmp.lt.s32.totalorder %s15, 5
      %p124 = pnand %p122, %p123
      %p125 = pneg %p124
      // Predicated region
      $region9: #{forward.3} parent=5 // pred_check
        _
      $region10: #{forward.3} parent=5 // pred_check_branch
        %127 = sbr.rel (%p124) target = $region12
      $region11: #{forward.3} parent=5 // pred_region
        %s128 = ssub.s32 %s15, 1
        // Predicated region
        $region13: #{forward.3} parent=11 // pred_check
          %p129 = pneg %p36
        $region14: #{forward.3} parent=11 // pred_check_branch
          %131 = sbr.rel (%p129) target = $region16
        $region15: #{forward.3} parent=11 // pred_region
          _
        $region16: #{forward.3} parent=11 // pred_fallthru
          _
      $region12: #{forward.3} parent=5 // pred_fallthru
        _
      %p132 = scmp.lt.s32.totalorder %s15, 4
      // Predicated region
      $region17: #{forward.3} parent=5 // pred_check
        %p133 = pneg %p132
      $region18: #{forward.3} parent=5 // pred_check_branch
        %135 = sbr.rel (%p133) target = $region20
      $region19: #{forward.3} parent=5 // pred_region
        // Predicated region
        $region21: #{forward.3} parent=19 // pred_check
          %p136 = pneg %p56
        $region22: #{forward.3} parent=19 // pred_check_branch
          %138 = sbr.rel (%p136) target = $region24
        $region23: #{forward.3} parent=19 // pred_region
          %s139 = sand.u32 %s46, 1
          %s140 = scalar_lea.sflag [#allocation3], %s139
          %s141 = sand.u32 %s46, 1
          %s142 = smul.addr %s141, 4096
          %s143 = scalar_lea.vmem [#allocation2], %s142
          %s144 = smul.u32 8, %s15
          %s146 = ssub.s32 65536, 65536
          %147 = vsyncadd %s140, %s146
          %s148 = smul.addr %s144, 64
          %s149 = scalar_lea.hbm %s1, %s148
          %s150 = sshll.u32 %s143, 4
          %s151 = int_to_ptr.vmem [resolvable:$true] %s150
          %156 = dma.hbm_to_vmem [thread:$0]  %s149, 65536, %s151, %s140, 2048, 512, 32
        $region24: #{forward.3} parent=19 // pred_fallthru
          _
        // Predicated region
        $region25: #{forward.3} parent=19 // pred_check
          %p157 = pneg %p82
        $region26: #{forward.3} parent=19 // pred_check_branch
          %159 = sbr.rel (%p157) target = $region28
        $region27: #{forward.3} parent=19 // pred_region
          %s160 = sand.u32 %s72, 1
          %s161 = scalar_lea.sflag [#allocation5], %s160
          %s162 = sand.u32 %s72, 1
          %s163 = smul.addr %s162, 8
          %s164 = scalar_lea.vmem [#allocation4], %s163
          %s165 = smul.u32 8, %s15
          %s167 = ssub.s32 128, 128
          %168 = vsyncadd %s161, %s167
          %s169 = smul.addr %s165, 16
          %s170 = scalar_lea.hbm %s2, %s169
          %s172 = sshll.u32 %s164, 4
          %s173 = int_to_ptr.vmem [resolvable:$true] %s172
          %175 = dma.hbm_to_vmem [thread:$0]  %s170, 128, %s173, %s161
        $region28: #{forward.3} parent=19 // pred_fallthru
          _
      $region20: #{forward.3} parent=5 // pred_fallthru
        _
      %p176 = scmp.le.s32.totalorder 1, %s15
      %p177 = scmp.lt.s32.totalorder %s15, 5
      %p178 = pnand %p176, %p177
      %p179 = pneg %p178
      // Predicated region
      $region29: #{forward.3} parent=5 // pred_check
        _
      $region30: #{forward.3} parent=5 // pred_check_branch
        %181 = sbr.rel (%p178) target = $region32
      $region31: #{forward.3} parent=5 // pred_region
        %s182 = ssub.s32 %s15, 1
        %s183 = sand.u32 %s49, 1
        %s184 = scalar_lea.sflag [#allocation3], %s183
        %s185 = sand.u32 %s49, 1
        %s186 = smul.addr %s185, 4096
        %s187 = scalar_lea.vmem [#allocation2], %s186
        // Predicated region
        $region33: #{forward.3} parent=31 // pred_check
          %p188 = pneg %p62
        $region34: #{forward.3} parent=31 // pred_check_branch
          %190 = sbr.rel (%p188) target = $region36
        $region35: #{forward.3} parent=31 // pred_region
          %191 = dma.done %s184, 65536
        $region36: #{forward.3} parent=31 // pred_fallthru
          _
        %s192 = sand.u32 %s75, 1
        %s193 = scalar_lea.sflag [#allocation5], %s192
        %s194 = sand.u32 %s75, 1
        %s195 = smul.addr %s194, 8
        %s196 = scalar_lea.vmem [#allocation4], %s195
        // Predicated region
        $region37: #{forward.3} parent=31 // pred_check
          %p197 = pneg %p88
        $region38: #{forward.3} parent=31 // pred_check_branch
          %199 = sbr.rel (%p197) target = $region40
        $region39: #{forward.3} parent=31 // pred_region
          %200 = dma.done %s193, 128
        $region40: #{forward.3} parent=31 // pred_fallthru
          _
        %p201 = pneg %p36
        %p202 = pneg %p33
        %s203 = sand.u32 %s49, 1
        %s204 = scalar_lea.sflag [#allocation3], %s203
        %s205 = sand.u32 %s49, 1
        %s206 = smul.addr %s205, 4096
        %s207 = scalar_lea.vmem [#allocation2], %s206
        %p208 = pneg %p62
        %p209 = pneg %p59
        %s210 = sand.u32 %s75, 1
        %s211 = scalar_lea.sflag [#allocation5], %s210
        %s212 = sand.u32 %s75, 1
        %s213 = smul.addr %s212, 8
        %s214 = scalar_lea.vmem [#allocation4], %s213
        %p215 = pneg %p88
        %p216 = pneg %p85
        %p217 = pneg %p114
        %p218 = pneg %p111
        %s219 = smul.u32 8, %s20
        %p220 = scmp.lt.s32.totalorder %s219, 31
        %s221 = scalar_select %p220, %s219, 31
        %s222 = smul.addr %s221, 2
        %s223 = scalar_lea.vmem %s3, %s222
        %s224 = smul.u32 8, %s20
        %s225 = smul.u32 8, %s20
        %s226 = smul.u32 8, %s20
        %p227 = scmp.lt.s32.totalorder %s226, 31
        %s228 = scalar_select %p227, %s226, 31
        %s229 = smul.addr %s228, 2
        %s230 = scalar_lea.vmem %s3, %s229
        %s231 = smul.u32 8, %s20
        %v232 = vld [vmem:[%s0] sm:$0xff]
        %v233 = vld [vmem:[%s0 + $0x8] sm:$0xff]
        %v236 = vcombine.high %v232, %v232
        %v238 = vunpack.c.l.s4 1983009808
        %v239 = vunpack.c.0.s8 %v238
        %v240 = vlaneseq
        %v241 = vshrl.u32 %v240, 7
        %v242 = vsub.s32 %v239, %v241
        %v243 = vrot.slane %v232, %v242
        %v245 = vunpack.c.l.s4 1983009808
        %v246 = vunpack.c.0.s8 %v245
        %v247 = vlaneseq
        %v248 = vshrl.u32 %v247, 7
        %v249 = vsub.s32 %v246, %v248
        %v250 = vrot.slane %v236, %v249
        %v251 = vcombine.high %v243, %v243
        %v252 = vcombine.high %v250, %v250
        %v253 = vcombine.high %v233, %v233
        %v255 = vunpack.c.l.s4 1983009808
        %v256 = vunpack.c.0.s8 %v255
        %v257 = vlaneseq
        %v258 = vshrl.u32 %v257, 7
        %v259 = vsub.s32 %v256, %v258
        %v260 = vrot.slane %v233, %v259
        %v262 = vunpack.c.l.s4 1983009808
        %v263 = vunpack.c.0.s8 %v262
        %v264 = vlaneseq
        %v265 = vshrl.u32 %v264, 7
        %v266 = vsub.s32 %v263, %v265
        %v267 = vrot.slane %v253, %v266
        %v268 = vcombine.high %v260, %v260
        %v269 = vcombine.high %v267, %v267
        %v278 = vpack.c.bf16 %v243, %v243
        %v279 = vpack.c.bf16 %v251, %v251
        %v280 = vpack.c.bf16 %v250, %v250
        %v281 = vpack.c.bf16 %v252, %v252
        %v282 = vpack.c.bf16 %v260, %v260
        %v283 = vpack.c.bf16 %v268, %v268
        %v284 = vpack.c.bf16 %v267, %v267
        %v285 = vpack.c.bf16 %v269, %v269
        %v286 = vld [vmem:[%s187] sm:$0xff]
        %v287 = vld [vmem:[%s187 + $0x8] sm:$0xff]
        %v288 = vld [vmem:[%s187 + $0x10] sm:$0xff]
        %v289 = vld [vmem:[%s187 + $0x18] sm:$0xff]
        %v290 = vld [vmem:[%s187 + $0x20] sm:$0xff]
        %v291 = vld [vmem:[%s187 + $0x28] sm:$0xff]
        %v292 = vld [vmem:[%s187 + $0x30] sm:$0xff]
        %v293 = vld [vmem:[%s187 + $0x38] sm:$0xff]
        %v294 = vld [vmem:[%s187 + $0x40] sm:$0xff]
        %v295 = vld [vmem:[%s187 + $0x48] sm:$0xff]
        %v296 = vld [vmem:[%s187 + $0x50] sm:$0xff]
        %v297 = vld [vmem:[%s187 + $0x58] sm:$0xff]
        %v298 = vld [vmem:[%s187 + $0x60] sm:$0xff]
        %v299 = vld [vmem:[%s187 + $0x68] sm:$0xff]
        %v300 = vld [vmem:[%s187 + $0x70] sm:$0xff]
        %v301 = vld [vmem:[%s187 + $0x78] sm:$0xff]
        %v302 = vld [vmem:[%s187 + $0x80] sm:$0xff]
        %v303 = vld [vmem:[%s187 + $0x88] sm:$0xff]
        %v304 = vld [vmem:[%s187 + $0x90] sm:$0xff]
        %v305 = vld [vmem:[%s187 + $0x98] sm:$0xff]
        %v306 = vld [vmem:[%s187 + $0xa0] sm:$0xff]
        %v307 = vld [vmem:[%s187 + $0xa8] sm:$0xff]
        %v308 = vld [vmem:[%s187 + $0xb0] sm:$0xff]
        %v309 = vld [vmem:[%s187 + $0xb8] sm:$0xff]
        %v310 = vld [vmem:[%s187 + $0xc0] sm:$0xff]
        %v311 = vld [vmem:[%s187 + $0xc8] sm:$0xff]
        %v312 = vld [vmem:[%s187 + $0xd0] sm:$0xff]
        %v313 = vld [vmem:[%s187 + $0xd8] sm:$0xff]
        %v314 = vld [vmem:[%s187 + $0xe0] sm:$0xff]
        %v315 = vld [vmem:[%s187 + $0xe8] sm:$0xff]
        %v316 = vld [vmem:[%s187 + $0xf0] sm:$0xff]
        %v317 = vld [vmem:[%s187 + $0xf8] sm:$0xff]
        %v318 = vld [vmem:[%s187 + $0x100] sm:$0xff]
        %v319 = vld [vmem:[%s187 + $0x108] sm:$0xff]
        %v320 = vld [vmem:[%s187 + $0x110] sm:$0xff]
        %v321 = vld [vmem:[%s187 + $0x118] sm:$0xff]
        %v322 = vld [vmem:[%s187 + $0x120] sm:$0xff]
        %v323 = vld [vmem:[%s187 + $0x128] sm:$0xff]
        %v324 = vld [vmem:[%s187 + $0x130] sm:$0xff]
        %v325 = vld [vmem:[%s187 + $0x138] sm:$0xff]
        %v326 = vld [vmem:[%s187 + $0x140] sm:$0xff]
        %v327 = vld [vmem:[%s187 + $0x148] sm:$0xff]
        %v328 = vld [vmem:[%s187 + $0x150] sm:$0xff]
        %v329 = vld [vmem:[%s187 + $0x158] sm:$0xff]
        %v330 = vld [vmem:[%s187 + $0x160] sm:$0xff]
        %v331 = vld [vmem:[%s187 + $0x168] sm:$0xff]
        %v332 = vld [vmem:[%s187 + $0x170] sm:$0xff]
        %v333 = vld [vmem:[%s187 + $0x178] sm:$0xff]
        %v334 = vld [vmem:[%s187 + $0x180] sm:$0xff]
        %v335 = vld [vmem:[%s187 + $0x188] sm:$0xff]
        %v336 = vld [vmem:[%s187 + $0x190] sm:$0xff]
        %v337 = vld [vmem:[%s187 + $0x198] sm:$0xff]
        %v338 = vld [vmem:[%s187 + $0x1a0] sm:$0xff]
        %v339 = vld [vmem:[%s187 + $0x1a8] sm:$0xff]
        %v340 = vld [vmem:[%s187 + $0x1b0] sm:$0xff]
        %v341 = vld [vmem:[%s187 + $0x1b8] sm:$0xff]
        %v342 = vld [vmem:[%s187 + $0x1c0] sm:$0xff]
        %v343 = vld [vmem:[%s187 + $0x1c8] sm:$0xff]
        %v344 = vld [vmem:[%s187 + $0x1d0] sm:$0xff]
        %v345 = vld [vmem:[%s187 + $0x1d8] sm:$0xff]
        %v346 = vld [vmem:[%s187 + $0x1e0] sm:$0xff]
        %v347 = vld [vmem:[%s187 + $0x1e8] sm:$0xff]
        %v348 = vld [vmem:[%s187 + $0x1f0] sm:$0xff]
        %v349 = vld [vmem:[%s187 + $0x1f8] sm:$0xff]
        %v350 = vld [vmem:[%s187 + $0x200] sm:$0xff]
        %v351 = vld [vmem:[%s187 + $0x208] sm:$0xff]
        %v352 = vld [vmem:[%s187 + $0x210] sm:$0xff]
        %v353 = vld [vmem:[%s187 + $0x218] sm:$0xff]
        %v354 = vld [vmem:[%s187 + $0x220] sm:$0xff]
        %v355 = vld [vmem:[%s187 + $0x228] sm:$0xff]
        %v356 = vld [vmem:[%s187 + $0x230] sm:$0xff]
        %v357 = vld [vmem:[%s187 + $0x238] sm:$0xff]
        %v358 = vld [vmem:[%s187 + $0x240] sm:$0xff]
        %v359 = vld [vmem:[%s187 + $0x248] sm:$0xff]
        %v360 = vld [vmem:[%s187 + $0x250] sm:$0xff]
        %v361 = vld [vmem:[%s187 + $0x258] sm:$0xff]
        %v362 = vld [vmem:[%s187 + $0x260] sm:$0xff]
        %v363 = vld [vmem:[%s187 + $0x268] sm:$0xff]
        %v364 = vld [vmem:[%s187 + $0x270] sm:$0xff]
        %v365 = vld [vmem:[%s187 + $0x278] sm:$0xff]
        %v366 = vld [vmem:[%s187 + $0x280] sm:$0xff]
        %v367 = vld [vmem:[%s187 + $0x288] sm:$0xff]
        %v368 = vld [vmem:[%s187 + $0x290] sm:$0xff]
        %v369 = vld [vmem:[%s187 + $0x298] sm:$0xff]
        %v370 = vld [vmem:[%s187 + $0x2a0] sm:$0xff]
        %v371 = vld [vmem:[%s187 + $0x2a8] sm:$0xff]
        %v372 = vld [vmem:[%s187 + $0x2b0] sm:$0xff]
        %v373 = vld [vmem:[%s187 + $0x2b8] sm:$0xff]
        %v374 = vld [vmem:[%s187 + $0x2c0] sm:$0xff]
        %v375 = vld [vmem:[%s187 + $0x2c8] sm:$0xff]
        %v376 = vld [vmem:[%s187 + $0x2d0] sm:$0xff]
        %v377 = vld [vmem:[%s187 + $0x2d8] sm:$0xff]
        %v378 = vld [vmem:[%s187 + $0x2e0] sm:$0xff]
        %v379 = vld [vmem:[%s187 + $0x2e8] sm:$0xff]
        %v380 = vld [vmem:[%s187 + $0x2f0] sm:$0xff]
        %v381 = vld [vmem:[%s187 + $0x2f8] sm:$0xff]
        %v382 = vld [vmem:[%s187 + $0x300] sm:$0xff]
        %v383 = vld [vmem:[%s187 + $0x308] sm:$0xff]
        %v384 = vld [vmem:[%s187 + $0x310] sm:$0xff]
        %v385 = vld [vmem:[%s187 + $0x318] sm:$0xff]
        %v386 = vld [vmem:[%s187 + $0x320] sm:$0xff]
        %v387 = vld [vmem:[%s187 + $0x328] sm:$0xff]
        %v388 = vld [vmem:[%s187 + $0x330] sm:$0xff]
        %v389 = vld [vmem:[%s187 + $0x338] sm:$0xff]
        %v390 = vld [vmem:[%s187 + $0x340] sm:$0xff]
        %v391 = vld [vmem:[%s187 + $0x348] sm:$0xff]
        %v392 = vld [vmem:[%s187 + $0x350] sm:$0xff]
        %v393 = vld [vmem:[%s187 + $0x358] sm:$0xff]
        %v394 = vld [vmem:[%s187 + $0x360] sm:$0xff]
        %v395 = vld [vmem:[%s187 + $0x368] sm:$0xff]
        %v396 = vld [vmem:[%s187 + $0x370] sm:$0xff]
        %v397 = vld [vmem:[%s187 + $0x378] sm:$0xff]
        %v398 = vld [vmem:[%s187 + $0x380] sm:$0xff]
        %v399 = vld [vmem:[%s187 + $0x388] sm:$0xff]
        %v400 = vld [vmem:[%s187 + $0x390] sm:$0xff]
        %v401 = vld [vmem:[%s187 + $0x398] sm:$0xff]
        %v402 = vld [vmem:[%s187 + $0x3a0] sm:$0xff]
        %v403 = vld [vmem:[%s187 + $0x3a8] sm:$0xff]
        %v404 = vld [vmem:[%s187 + $0x3b0] sm:$0xff]
        %v405 = vld [vmem:[%s187 + $0x3b8] sm:$0xff]
        %v406 = vld [vmem:[%s187 + $0x3c0] sm:$0xff]
        %v407 = vld [vmem:[%s187 + $0x3c8] sm:$0xff]
        %v408 = vld [vmem:[%s187 + $0x3d0] sm:$0xff]
        %v409 = vld [vmem:[%s187 + $0x3d8] sm:$0xff]
        %v410 = vld [vmem:[%s187 + $0x3e0] sm:$0xff]
        %v411 = vld [vmem:[%s187 + $0x3e8] sm:$0xff]
        %v412 = vld [vmem:[%s187 + $0x3f0] sm:$0xff]
        %v413 = vld [vmem:[%s187 + $0x3f8] sm:$0xff]
        %v414 = vld [vmem:[%s187 + $0x400] sm:$0xff]
        %v415 = vld [vmem:[%s187 + $0x408] sm:$0xff]
        %v416 = vld [vmem:[%s187 + $0x410] sm:$0xff]
        %v417 = vld [vmem:[%s187 + $0x418] sm:$0xff]
        %v418 = vld [vmem:[%s187 + $0x420] sm:$0xff]
        %v419 = vld [vmem:[%s187 + $0x428] sm:$0xff]
        %v420 = vld [vmem:[%s187 + $0x430] sm:$0xff]
        %v421 = vld [vmem:[%s187 + $0x438] sm:$0xff]
        %v422 = vld [vmem:[%s187 + $0x440] sm:$0xff]
        %v423 = vld [vmem:[%s187 + $0x448] sm:$0xff]
        %v424 = vld [vmem:[%s187 + $0x450] sm:$0xff]
        %v425 = vld [vmem:[%s187 + $0x458] sm:$0xff]
        %v426 = vld [vmem:[%s187 + $0x460] sm:$0xff]
        %v427 = vld [vmem:[%s187 + $0x468] sm:$0xff]
        %v428 = vld [vmem:[%s187 + $0x470] sm:$0xff]
        %v429 = vld [vmem:[%s187 + $0x478] sm:$0xff]
        %v430 = vld [vmem:[%s187 + $0x480] sm:$0xff]
        %v431 = vld [vmem:[%s187 + $0x488] sm:$0xff]
        %v432 = vld [vmem:[%s187 + $0x490] sm:$0xff]
        %v433 = vld [vmem:[%s187 + $0x498] sm:$0xff]
        %v434 = vld [vmem:[%s187 + $0x4a0] sm:$0xff]
        %v435 = vld [vmem:[%s187 + $0x4a8] sm:$0xff]
        %v436 = vld [vmem:[%s187 + $0x4b0] sm:$0xff]
        %v437 = vld [vmem:[%s187 + $0x4b8] sm:$0xff]
        %v438 = vld [vmem:[%s187 + $0x4c0] sm:$0xff]
        %v439 = vld [vmem:[%s187 + $0x4c8] sm:$0xff]
        %v440 = vld [vmem:[%s187 + $0x4d0] sm:$0xff]
        %v441 = vld [vmem:[%s187 + $0x4d8] sm:$0xff]
        %v442 = vld [vmem:[%s187 + $0x4e0] sm:$0xff]
        %v443 = vld [vmem:[%s187 + $0x4e8] sm:$0xff]
        %v444 = vld [vmem:[%s187 + $0x4f0] sm:$0xff]
        %v445 = vld [vmem:[%s187 + $0x4f8] sm:$0xff]
        %v446 = vld [vmem:[%s187 + $0x500] sm:$0xff]
        %v447 = vld [vmem:[%s187 + $0x508] sm:$0xff]
        %v448 = vld [vmem:[%s187 + $0x510] sm:$0xff]
        %v449 = vld [vmem:[%s187 + $0x518] sm:$0xff]
        %v450 = vld [vmem:[%s187 + $0x520] sm:$0xff]
        %v451 = vld [vmem:[%s187 + $0x528] sm:$0xff]
        %v452 = vld [vmem:[%s187 + $0x530] sm:$0xff]
        %v453 = vld [vmem:[%s187 + $0x538] sm:$0xff]
        %v454 = vld [vmem:[%s187 + $0x540] sm:$0xff]
        %v455 = vld [vmem:[%s187 + $0x548] sm:$0xff]
        %v456 = vld [vmem:[%s187 + $0x550] sm:$0xff]
        %v457 = vld [vmem:[%s187 + $0x558] sm:$0xff]
        %v458 = vld [vmem:[%s187 + $0x560] sm:$0xff]
        %v459 = vld [vmem:[%s187 + $0x568] sm:$0xff]
        %v460 = vld [vmem:[%s187 + $0x570] sm:$0xff]
        %v461 = vld [vmem:[%s187 + $0x578] sm:$0xff]
        %v462 = vld [vmem:[%s187 + $0x580] sm:$0xff]
        %v463 = vld [vmem:[%s187 + $0x588] sm:$0xff]
        %v464 = vld [vmem:[%s187 + $0x590] sm:$0xff]
        %v465 = vld [vmem:[%s187 + $0x598] sm:$0xff]
        %v466 = vld [vmem:[%s187 + $0x5a0] sm:$0xff]
        %v467 = vld [vmem:[%s187 + $0x5a8] sm:$0xff]
        %v468 = vld [vmem:[%s187 + $0x5b0] sm:$0xff]
        %v469 = vld [vmem:[%s187 + $0x5b8] sm:$0xff]
        %v470 = vld [vmem:[%s187 + $0x5c0] sm:$0xff]
        %v471 = vld [vmem:[%s187 + $0x5c8] sm:$0xff]
        %v472 = vld [vmem:[%s187 + $0x5d0] sm:$0xff]
        %v473 = vld [vmem:[%s187 + $0x5d8] sm:$0xff]
        %v474 = vld [vmem:[%s187 + $0x5e0] sm:$0xff]
        %v475 = vld [vmem:[%s187 + $0x5e8] sm:$0xff]
        %v476 = vld [vmem:[%s187 + $0x5f0] sm:$0xff]
        %v477 = vld [vmem:[%s187 + $0x5f8] sm:$0xff]
        %v478 = vld [vmem:[%s187 + $0x600] sm:$0xff]
        %v479 = vld [vmem:[%s187 + $0x608] sm:$0xff]
        %v480 = vld [vmem:[%s187 + $0x610] sm:$0xff]
        %v481 = vld [vmem:[%s187 + $0x618] sm:$0xff]
        %v482 = vld [vmem:[%s187 + $0x620] sm:$0xff]
        %v483 = vld [vmem:[%s187 + $0x628] sm:$0xff]
        %v484 = vld [vmem:[%s187 + $0x630] sm:$0xff]
        %v485 = vld [vmem:[%s187 + $0x638] sm:$0xff]
        %v486 = vld [vmem:[%s187 + $0x640] sm:$0xff]
        %v487 = vld [vmem:[%s187 + $0x648] sm:$0xff]
        %v488 = vld [vmem:[%s187 + $0x650] sm:$0xff]
        %v489 = vld [vmem:[%s187 + $0x658] sm:$0xff]
        %v490 = vld [vmem:[%s187 + $0x660] sm:$0xff]
        %v491 = vld [vmem:[%s187 + $0x668] sm:$0xff]
        %v492 = vld [vmem:[%s187 + $0x670] sm:$0xff]
        %v493 = vld [vmem:[%s187 + $0x678] sm:$0xff]
        %v494 = vld [vmem:[%s187 + $0x680] sm:$0xff]
        %v495 = vld [vmem:[%s187 + $0x688] sm:$0xff]
        %v496 = vld [vmem:[%s187 + $0x690] sm:$0xff]
        %v497 = vld [vmem:[%s187 + $0x698] sm:$0xff]
        %v498 = vld [vmem:[%s187 + $0x6a0] sm:$0xff]
        %v499 = vld [vmem:[%s187 + $0x6a8] sm:$0xff]
        %v500 = vld [vmem:[%s187 + $0x6b0] sm:$0xff]
        %v501 = vld [vmem:[%s187 + $0x6b8] sm:$0xff]
        %v502 = vld [vmem:[%s187 + $0x6c0] sm:$0xff]
        %v503 = vld [vmem:[%s187 + $0x6c8] sm:$0xff]
        %v504 = vld [vmem:[%s187 + $0x6d0] sm:$0xff]
        %v505 = vld [vmem:[%s187 + $0x6d8] sm:$0xff]
        %v506 = vld [vmem:[%s187 + $0x6e0] sm:$0xff]
        %v507 = vld [vmem:[%s187 + $0x6e8] sm:$0xff]
        %v508 = vld [vmem:[%s187 + $0x6f0] sm:$0xff]
        %v509 = vld [vmem:[%s187 + $0x6f8] sm:$0xff]
        %v510 = vld [vmem:[%s187 + $0x700] sm:$0xff]
        %v511 = vld [vmem:[%s187 + $0x708] sm:$0xff]
        %v512 = vld [vmem:[%s187 + $0x710] sm:$0xff]
        %v513 = vld [vmem:[%s187 + $0x718] sm:$0xff]
        %v514 = vld [vmem:[%s187 + $0x720] sm:$0xff]
        %v515 = vld [vmem:[%s187 + $0x728] sm:$0xff]
        %v516 = vld [vmem:[%s187 + $0x730] sm:$0xff]
        %v517 = vld [vmem:[%s187 + $0x738] sm:$0xff]
        %v518 = vld [vmem:[%s187 + $0x740] sm:$0xff]
        %v519 = vld [vmem:[%s187 + $0x748] sm:$0xff]
        %v520 = vld [vmem:[%s187 + $0x750] sm:$0xff]
        %v521 = vld [vmem:[%s187 + $0x758] sm:$0xff]
        %v522 = vld [vmem:[%s187 + $0x760] sm:$0xff]
        %v523 = vld [vmem:[%s187 + $0x768] sm:$0xff]
        %v524 = vld [vmem:[%s187 + $0x770] sm:$0xff]
        %v525 = vld [vmem:[%s187 + $0x778] sm:$0xff]
        %v526 = vld [vmem:[%s187 + $0x780] sm:$0xff]
        %v527 = vld [vmem:[%s187 + $0x788] sm:$0xff]
        %v528 = vld [vmem:[%s187 + $0x790] sm:$0xff]
        %v529 = vld [vmem:[%s187 + $0x798] sm:$0xff]
        %v530 = vld [vmem:[%s187 + $0x7a0] sm:$0xff]
        %v531 = vld [vmem:[%s187 + $0x7a8] sm:$0xff]
        %v532 = vld [vmem:[%s187 + $0x7b0] sm:$0xff]
        %v533 = vld [vmem:[%s187 + $0x7b8] sm:$0xff]
        %v534 = vld [vmem:[%s187 + $0x7c0] sm:$0xff]
        %v535 = vld [vmem:[%s187 + $0x7c8] sm:$0xff]
        %v536 = vld [vmem:[%s187 + $0x7d0] sm:$0xff]
        %v537 = vld [vmem:[%s187 + $0x7d8] sm:$0xff]
        %v538 = vld [vmem:[%s187 + $0x7e0] sm:$0xff]
        %v539 = vld [vmem:[%s187 + $0x7e8] sm:$0xff]
        %v540 = vld [vmem:[%s187 + $0x7f0] sm:$0xff]
        %v541 = vld [vmem:[%s187 + $0x7f8] sm:$0xff]
        %v542 = vld [vmem:[%s187 + $0x800] sm:$0xff]
        %v543 = vld [vmem:[%s187 + $0x808] sm:$0xff]
        %v544 = vld [vmem:[%s187 + $0x810] sm:$0xff]
        %v545 = vld [vmem:[%s187 + $0x818] sm:$0xff]
        %v546 = vld [vmem:[%s187 + $0x820] sm:$0xff]
        %v547 = vld [vmem:[%s187 + $0x828] sm:$0xff]
        %v548 = vld [vmem:[%s187 + $0x830] sm:$0xff]
        %v549 = vld [vmem:[%s187 + $0x838] sm:$0xff]
        %v550 = vld [vmem:[%s187 + $0x840] sm:$0xff]
        %v551 = vld [vmem:[%s187 + $0x848] sm:$0xff]
        %v552 = vld [vmem:[%s187 + $0x850] sm:$0xff]
        %v553 = vld [vmem:[%s187 + $0x858] sm:$0xff]
        %v554 = vld [vmem:[%s187 + $0x860] sm:$0xff]
        %v555 = vld [vmem:[%s187 + $0x868] sm:$0xff]
        %v556 = vld [vmem:[%s187 + $0x870] sm:$0xff]
        %v557 = vld [vmem:[%s187 + $0x878] sm:$0xff]
        %v558 = vld [vmem:[%s187 + $0x880] sm:$0xff]
        %v559 = vld [vmem:[%s187 + $0x888] sm:$0xff]
        %v560 = vld [vmem:[%s187 + $0x890] sm:$0xff]
        %v561 = vld [vmem:[%s187 + $0x898] sm:$0xff]
        %v562 = vld [vmem:[%s187 + $0x8a0] sm:$0xff]
        %v563 = vld [vmem:[%s187 + $0x8a8] sm:$0xff]
        %v564 = vld [vmem:[%s187 + $0x8b0] sm:$0xff]
        %v565 = vld [vmem:[%s187 + $0x8b8] sm:$0xff]
        %v566 = vld [vmem:[%s187 + $0x8c0] sm:$0xff]
        %v567 = vld [vmem:[%s187 + $0x8c8] sm:$0xff]
        %v568 = vld [vmem:[%s187 + $0x8d0] sm:$0xff]
        %v569 = vld [vmem:[%s187 + $0x8d8] sm:$0xff]
        %v570 = vld [vmem:[%s187 + $0x8e0] sm:$0xff]
        %v571 = vld [vmem:[%s187 + $0x8e8] sm:$0xff]
        %v572 = vld [vmem:[%s187 + $0x8f0] sm:$0xff]
        %v573 = vld [vmem:[%s187 + $0x8f8] sm:$0xff]
        %v574 = vld [vmem:[%s187 + $0x900] sm:$0xff]
        %v575 = vld [vmem:[%s187 + $0x908] sm:$0xff]
        %v576 = vld [vmem:[%s187 + $0x910] sm:$0xff]
        %v577 = vld [vmem:[%s187 + $0x918] sm:$0xff]
        %v578 = vld [vmem:[%s187 + $0x920] sm:$0xff]
        %v579 = vld [vmem:[%s187 + $0x928] sm:$0xff]
        %v580 = vld [vmem:[%s187 + $0x930] sm:$0xff]
        %v581 = vld [vmem:[%s187 + $0x938] sm:$0xff]
        %v582 = vld [vmem:[%s187 + $0x940] sm:$0xff]
        %v583 = vld [vmem:[%s187 + $0x948] sm:$0xff]
        %v584 = vld [vmem:[%s187 + $0x950] sm:$0xff]
        %v585 = vld [vmem:[%s187 + $0x958] sm:$0xff]
        %v586 = vld [vmem:[%s187 + $0x960] sm:$0xff]
        %v587 = vld [vmem:[%s187 + $0x968] sm:$0xff]
        %v588 = vld [vmem:[%s187 + $0x970] sm:$0xff]
        %v589 = vld [vmem:[%s187 + $0x978] sm:$0xff]
        %v590 = vld [vmem:[%s187 + $0x980] sm:$0xff]
        %v591 = vld [vmem:[%s187 + $0x988] sm:$0xff]
        %v592 = vld [vmem:[%s187 + $0x990] sm:$0xff]
        %v593 = vld [vmem:[%s187 + $0x998] sm:$0xff]
        %v594 = vld [vmem:[%s187 + $0x9a0] sm:$0xff]
        %v595 = vld [vmem:[%s187 + $0x9a8] sm:$0xff]
        %v596 = vld [vmem:[%s187 + $0x9b0] sm:$0xff]
        %v597 = vld [vmem:[%s187 + $0x9b8] sm:$0xff]
        %v598 = vld [vmem:[%s187 + $0x9c0] sm:$0xff]
        %v599 = vld [vmem:[%s187 + $0x9c8] sm:$0xff]
        %v600 = vld [vmem:[%s187 + $0x9d0] sm:$0xff]
        %v601 = vld [vmem:[%s187 + $0x9d8] sm:$0xff]
        %v602 = vld [vmem:[%s187 + $0x9e0] sm:$0xff]
        %v603 = vld [vmem:[%s187 + $0x9e8] sm:$0xff]
        %v604 = vld [vmem:[%s187 + $0x9f0] sm:$0xff]
        %v605 = vld [vmem:[%s187 + $0x9f8] sm:$0xff]
        %v606 = vld [vmem:[%s187 + $0xa00] sm:$0xff]
        %v607 = vld [vmem:[%s187 + $0xa08] sm:$0xff]
        %v608 = vld [vmem:[%s187 + $0xa10] sm:$0xff]
        %v609 = vld [vmem:[%s187 + $0xa18] sm:$0xff]
        %v610 = vld [vmem:[%s187 + $0xa20] sm:$0xff]
        %v611 = vld [vmem:[%s187 + $0xa28] sm:$0xff]
        %v612 = vld [vmem:[%s187 + $0xa30] sm:$0xff]
        %v613 = vld [vmem:[%s187 + $0xa38] sm:$0xff]
        %v614 = vld [vmem:[%s187 + $0xa40] sm:$0xff]
        %v615 = vld [vmem:[%s187 + $0xa48] sm:$0xff]
        %v616 = vld [vmem:[%s187 + $0xa50] sm:$0xff]
        %v617 = vld [vmem:[%s187 + $0xa58] sm:$0xff]
        %v618 = vld [vmem:[%s187 + $0xa60] sm:$0xff]
        %v619 = vld [vmem:[%s187 + $0xa68] sm:$0xff]
        %v620 = vld [vmem:[%s187 + $0xa70] sm:$0xff]
        %v621 = vld [vmem:[%s187 + $0xa78] sm:$0xff]
        %v622 = vld [vmem:[%s187 + $0xa80] sm:$0xff]
        %v623 = vld [vmem:[%s187 + $0xa88] sm:$0xff]
        %v624 = vld [vmem:[%s187 + $0xa90] sm:$0xff]
        %v625 = vld [vmem:[%s187 + $0xa98] sm:$0xff]
        %v626 = vld [vmem:[%s187 + $0xaa0] sm:$0xff]
        %v627 = vld [vmem:[%s187 + $0xaa8] sm:$0xff]
        %v628 = vld [vmem:[%s187 + $0xab0] sm:$0xff]
        %v629 = vld [vmem:[%s187 + $0xab8] sm:$0xff]
        %v630 = vld [vmem:[%s187 + $0xac0] sm:$0xff]
        %v631 = vld [vmem:[%s187 + $0xac8] sm:$0xff]
        %v632 = vld [vmem:[%s187 + $0xad0] sm:$0xff]
        %v633 = vld [vmem:[%s187 + $0xad8] sm:$0xff]
        %v634 = vld [vmem:[%s187 + $0xae0] sm:$0xff]
        %v635 = vld [vmem:[%s187 + $0xae8] sm:$0xff]
        %v636 = vld [vmem:[%s187 + $0xaf0] sm:$0xff]
        %v637 = vld [vmem:[%s187 + $0xaf8] sm:$0xff]
        %v638 = vld [vmem:[%s187 + $0xb00] sm:$0xff]
        %v639 = vld [vmem:[%s187 + $0xb08] sm:$0xff]
        %v640 = vld [vmem:[%s187 + $0xb10] sm:$0xff]
        %v641 = vld [vmem:[%s187 + $0xb18] sm:$0xff]
        %v642 = vld [vmem:[%s187 + $0xb20] sm:$0xff]
        %v643 = vld [vmem:[%s187 + $0xb28] sm:$0xff]
        %v644 = vld [vmem:[%s187 + $0xb30] sm:$0xff]
        %v645 = vld [vmem:[%s187 + $0xb38] sm:$0xff]
        %v646 = vld [vmem:[%s187 + $0xb40] sm:$0xff]
        %v647 = vld [vmem:[%s187 + $0xb48] sm:$0xff]
        %v648 = vld [vmem:[%s187 + $0xb50] sm:$0xff]
        %v649 = vld [vmem:[%s187 + $0xb58] sm:$0xff]
        %v650 = vld [vmem:[%s187 + $0xb60] sm:$0xff]
        %v651 = vld [vmem:[%s187 + $0xb68] sm:$0xff]
        %v652 = vld [vmem:[%s187 + $0xb70] sm:$0xff]
        %v653 = vld [vmem:[%s187 + $0xb78] sm:$0xff]
        %v654 = vld [vmem:[%s187 + $0xb80] sm:$0xff]
        %v655 = vld [vmem:[%s187 + $0xb88] sm:$0xff]
        %v656 = vld [vmem:[%s187 + $0xb90] sm:$0xff]
        %v657 = vld [vmem:[%s187 + $0xb98] sm:$0xff]
        %v658 = vld [vmem:[%s187 + $0xba0] sm:$0xff]
        %v659 = vld [vmem:[%s187 + $0xba8] sm:$0xff]
        %v660 = vld [vmem:[%s187 + $0xbb0] sm:$0xff]
        %v661 = vld [vmem:[%s187 + $0xbb8] sm:$0xff]
        %v662 = vld [vmem:[%s187 + $0xbc0] sm:$0xff]
        %v663 = vld [vmem:[%s187 + $0xbc8] sm:$0xff]
        %v664 = vld [vmem:[%s187 + $0xbd0] sm:$0xff]
        %v665 = vld [vmem:[%s187 + $0xbd8] sm:$0xff]
        %v666 = vld [vmem:[%s187 + $0xbe0] sm:$0xff]
        %v667 = vld [vmem:[%s187 + $0xbe8] sm:$0xff]
        %v668 = vld [vmem:[%s187 + $0xbf0] sm:$0xff]
        %v669 = vld [vmem:[%s187 + $0xbf8] sm:$0xff]
        %v670 = vld [vmem:[%s187 + $0xc00] sm:$0xff]
        %v671 = vld [vmem:[%s187 + $0xc08] sm:$0xff]
        %v672 = vld [vmem:[%s187 + $0xc10] sm:$0xff]
        %v673 = vld [vmem:[%s187 + $0xc18] sm:$0xff]
        %v674 = vld [vmem:[%s187 + $0xc20] sm:$0xff]
        %v675 = vld [vmem:[%s187 + $0xc28] sm:$0xff]
        %v676 = vld [vmem:[%s187 + $0xc30] sm:$0xff]
        %v677 = vld [vmem:[%s187 + $0xc38] sm:$0xff]
        %v678 = vld [vmem:[%s187 + $0xc40] sm:$0xff]
        %v679 = vld [vmem:[%s187 + $0xc48] sm:$0xff]
        %v680 = vld [vmem:[%s187 + $0xc50] sm:$0xff]
        %v681 = vld [vmem:[%s187 + $0xc58] sm:$0xff]
        %v682 = vld [vmem:[%s187 + $0xc60] sm:$0xff]
        %v683 = vld [vmem:[%s187 + $0xc68] sm:$0xff]
        %v684 = vld [vmem:[%s187 + $0xc70] sm:$0xff]
        %v685 = vld [vmem:[%s187 + $0xc78] sm:$0xff]
        %v686 = vld [vmem:[%s187 + $0xc80] sm:$0xff]
        %v687 = vld [vmem:[%s187 + $0xc88] sm:$0xff]
        %v688 = vld [vmem:[%s187 + $0xc90] sm:$0xff]
        %v689 = vld [vmem:[%s187 + $0xc98] sm:$0xff]
        %v690 = vld [vmem:[%s187 + $0xca0] sm:$0xff]
        %v691 = vld [vmem:[%s187 + $0xca8] sm:$0xff]
        %v692 = vld [vmem:[%s187 + $0xcb0] sm:$0xff]
        %v693 = vld [vmem:[%s187 + $0xcb8] sm:$0xff]
        %v694 = vld [vmem:[%s187 + $0xcc0] sm:$0xff]
        %v695 = vld [vmem:[%s187 + $0xcc8] sm:$0xff]
        %v696 = vld [vmem:[%s187 + $0xcd0] sm:$0xff]
        %v697 = vld [vmem:[%s187 + $0xcd8] sm:$0xff]
        %v698 = vld [vmem:[%s187 + $0xce0] sm:$0xff]
        %v699 = vld [vmem:[%s187 + $0xce8] sm:$0xff]
        %v700 = vld [vmem:[%s187 + $0xcf0] sm:$0xff]
        %v701 = vld [vmem:[%s187 + $0xcf8] sm:$0xff]
        %v702 = vld [vmem:[%s187 + $0xd00] sm:$0xff]
        %v703 = vld [vmem:[%s187 + $0xd08] sm:$0xff]
        %v704 = vld [vmem:[%s187 + $0xd10] sm:$0xff]
        %v705 = vld [vmem:[%s187 + $0xd18] sm:$0xff]
        %v706 = vld [vmem:[%s187 + $0xd20] sm:$0xff]
        %v707 = vld [vmem:[%s187 + $0xd28] sm:$0xff]
        %v708 = vld [vmem:[%s187 + $0xd30] sm:$0xff]
        %v709 = vld [vmem:[%s187 + $0xd38] sm:$0xff]
        %v710 = vld [vmem:[%s187 + $0xd40] sm:$0xff]
        %v711 = vld [vmem:[%s187 + $0xd48] sm:$0xff]
        %v712 = vld [vmem:[%s187 + $0xd50] sm:$0xff]
        %v713 = vld [vmem:[%s187 + $0xd58] sm:$0xff]
        %v714 = vld [vmem:[%s187 + $0xd60] sm:$0xff]
        %v715 = vld [vmem:[%s187 + $0xd68] sm:$0xff]
        %v716 = vld [vmem:[%s187 + $0xd70] sm:$0xff]
        %v717 = vld [vmem:[%s187 + $0xd78] sm:$0xff]
        %v718 = vld [vmem:[%s187 + $0xd80] sm:$0xff]
        %v719 = vld [vmem:[%s187 + $0xd88] sm:$0xff]
        %v720 = vld [vmem:[%s187 + $0xd90] sm:$0xff]
        %v721 = vld [vmem:[%s187 + $0xd98] sm:$0xff]
        %v722 = vld [vmem:[%s187 + $0xda0] sm:$0xff]
        %v723 = vld [vmem:[%s187 + $0xda8] sm:$0xff]
        %v724 = vld [vmem:[%s187 + $0xdb0] sm:$0xff]
        %v725 = vld [vmem:[%s187 + $0xdb8] sm:$0xff]
        %v726 = vld [vmem:[%s187 + $0xdc0] sm:$0xff]
        %v727 = vld [vmem:[%s187 + $0xdc8] sm:$0xff]
        %v728 = vld [vmem:[%s187 + $0xdd0] sm:$0xff]
        %v729 = vld [vmem:[%s187 + $0xdd8] sm:$0xff]
        %v730 = vld [vmem:[%s187 + $0xde0] sm:$0xff]
        %v731 = vld [vmem:[%s187 + $0xde8] sm:$0xff]
        %v732 = vld [vmem:[%s187 + $0xdf0] sm:$0xff]
        %v733 = vld [vmem:[%s187 + $0xdf8] sm:$0xff]
        %v734 = vld [vmem:[%s187 + $0xe00] sm:$0xff]
        %v735 = vld [vmem:[%s187 + $0xe08] sm:$0xff]
        %v736 = vld [vmem:[%s187 + $0xe10] sm:$0xff]
        %v737 = vld [vmem:[%s187 + $0xe18] sm:$0xff]
        %v738 = vld [vmem:[%s187 + $0xe20] sm:$0xff]
        %v739 = vld [vmem:[%s187 + $0xe28] sm:$0xff]
        %v740 = vld [vmem:[%s187 + $0xe30] sm:$0xff]
        %v741 = vld [vmem:[%s187 + $0xe38] sm:$0xff]
        %v742 = vld [vmem:[%s187 + $0xe40] sm:$0xff]
        %v743 = vld [vmem:[%s187 + $0xe48] sm:$0xff]
        %v744 = vld [vmem:[%s187 + $0xe50] sm:$0xff]
        %v745 = vld [vmem:[%s187 + $0xe58] sm:$0xff]
        %v746 = vld [vmem:[%s187 + $0xe60] sm:$0xff]
        %v747 = vld [vmem:[%s187 + $0xe68] sm:$0xff]
        %v748 = vld [vmem:[%s187 + $0xe70] sm:$0xff]
        %v749 = vld [vmem:[%s187 + $0xe78] sm:$0xff]
        %v750 = vld [vmem:[%s187 + $0xe80] sm:$0xff]
        %v751 = vld [vmem:[%s187 + $0xe88] sm:$0xff]
        %v752 = vld [vmem:[%s187 + $0xe90] sm:$0xff]
        %v753 = vld [vmem:[%s187 + $0xe98] sm:$0xff]
        %v754 = vld [vmem:[%s187 + $0xea0] sm:$0xff]
        %v755 = vld [vmem:[%s187 + $0xea8] sm:$0xff]
        %v756 = vld [vmem:[%s187 + $0xeb0] sm:$0xff]
        %v757 = vld [vmem:[%s187 + $0xeb8] sm:$0xff]
        %v758 = vld [vmem:[%s187 + $0xec0] sm:$0xff]
        %v759 = vld [vmem:[%s187 + $0xec8] sm:$0xff]
        %v760 = vld [vmem:[%s187 + $0xed0] sm:$0xff]
        %v761 = vld [vmem:[%s187 + $0xed8] sm:$0xff]
        %v762 = vld [vmem:[%s187 + $0xee0] sm:$0xff]
        %v763 = vld [vmem:[%s187 + $0xee8] sm:$0xff]
        %v764 = vld [vmem:[%s187 + $0xef0] sm:$0xff]
        %v765 = vld [vmem:[%s187 + $0xef8] sm:$0xff]
        %v766 = vld [vmem:[%s187 + $0xf00] sm:$0xff]
        %v767 = vld [vmem:[%s187 + $0xf08] sm:$0xff]
        %v768 = vld [vmem:[%s187 + $0xf10] sm:$0xff]
        %v769 = vld [vmem:[%s187 + $0xf18] sm:$0xff]
        %v770 = vld [vmem:[%s187 + $0xf20] sm:$0xff]
        %v771 = vld [vmem:[%s187 + $0xf28] sm:$0xff]
        %v772 = vld [vmem:[%s187 + $0xf30] sm:$0xff]
        %v773 = vld [vmem:[%s187 + $0xf38] sm:$0xff]
        %v774 = vld [vmem:[%s187 + $0xf40] sm:$0xff]
        %v775 = vld [vmem:[%s187 + $0xf48] sm:$0xff]
        %v776 = vld [vmem:[%s187 + $0xf50] sm:$0xff]
        %v777 = vld [vmem:[%s187 + $0xf58] sm:$0xff]
        %v778 = vld [vmem:[%s187 + $0xf60] sm:$0xff]
        %v779 = vld [vmem:[%s187 + $0xf68] sm:$0xff]
        %v780 = vld [vmem:[%s187 + $0xf70] sm:$0xff]
        %v781 = vld [vmem:[%s187 + $0xf78] sm:$0xff]
        %v782 = vld [vmem:[%s187 + $0xf80] sm:$0xff]
        %v783 = vld [vmem:[%s187 + $0xf88] sm:$0xff]
        %v784 = vld [vmem:[%s187 + $0xf90] sm:$0xff]
        %v785 = vld [vmem:[%s187 + $0xf98] sm:$0xff]
        %v786 = vld [vmem:[%s187 + $0xfa0] sm:$0xff]
        %v787 = vld [vmem:[%s187 + $0xfa8] sm:$0xff]
        %v788 = vld [vmem:[%s187 + $0xfb0] sm:$0xff]
        %v789 = vld [vmem:[%s187 + $0xfb8] sm:$0xff]
        %v790 = vld [vmem:[%s187 + $0xfc0] sm:$0xff]
        %v791 = vld [vmem:[%s187 + $0xfc8] sm:$0xff]
        %v792 = vld [vmem:[%s187 + $0xfd0] sm:$0xff]
        %v793 = vld [vmem:[%s187 + $0xfd8] sm:$0xff]
        %v794 = vld [vmem:[%s187 + $0xfe0] sm:$0xff]
        %v795 = vld [vmem:[%s187 + $0xfe8] sm:$0xff]
        %v796 = vld [vmem:[%s187 + $0xff0] sm:$0xff]
        %v797 = vld [vmem:[%s187 + $0xff8] sm:$0xff]
        %v798 = vld [vmem:[%s196] sm:$0xff]
        %v800 = vlaneseq
        %v801 = vshrl.u32 %v800, 7
        %v802 = vsub.s32 0, %v801
        %v803 = vrot.slane %v798, %v802
        %v804 = vlaneseq
        %v805 = vshrl.u32 %v804, 7
        %v806 = vsub.s32 1, %v805
        %v807 = vrot.slane %v798, %v806
        %v808 = vlaneseq
        %v809 = vshrl.u32 %v808, 7
        %v810 = vsub.s32 2, %v809
        %v811 = vrot.slane %v798, %v810
        %v812 = vlaneseq
        %v813 = vshrl.u32 %v812, 7
        %v814 = vsub.s32 3, %v813
        %v815 = vrot.slane %v798, %v814
        %v816 = vlaneseq
        %v817 = vshrl.u32 %v816, 7
        %v818 = vsub.s32 4, %v817
        %v819 = vrot.slane %v798, %v818
        %v820 = vlaneseq
        %v821 = vshrl.u32 %v820, 7
        %v822 = vsub.s32 5, %v821
        %v823 = vrot.slane %v798, %v822
        %v824 = vlaneseq
        %v825 = vshrl.u32 %v824, 7
        %v826 = vsub.s32 6, %v825
        %v827 = vrot.slane %v798, %v826
        %v828 = vlaneseq
        %v829 = vshrl.u32 %v828, 7
        %v830 = vsub.s32 7, %v829
        %v831 = vrot.slane %v798, %v830
        %v1352 = vunpack.c.l.b16 %v286
        %v1353 = vunpack.c.h.b16 %v286
        %v1354 = vunpack.c.l.b16 %v287
        %v1355 = vunpack.c.h.b16 %v287
        %v1356 = vunpack.c.l.b16 %v288
        %v1357 = vunpack.c.h.b16 %v288
        %v1358 = vunpack.c.l.b16 %v289
        %v1359 = vunpack.c.h.b16 %v289
        %v1360 = vunpack.c.l.b16 %v290
        %v1361 = vunpack.c.h.b16 %v290
        %v1362 = vunpack.c.l.b16 %v291
        %v1363 = vunpack.c.h.b16 %v291
        %v1364 = vunpack.c.l.b16 %v292
        %v1365 = vunpack.c.h.b16 %v292
        %v1366 = vunpack.c.l.b16 %v293
        %v1367 = vunpack.c.h.b16 %v293
        %v1368 = vunpack.c.l.b16 %v294
        %v1369 = vunpack.c.h.b16 %v294
        %v1370 = vunpack.c.l.b16 %v295
        %v1371 = vunpack.c.h.b16 %v295
        %v1372 = vunpack.c.l.b16 %v296
        %v1373 = vunpack.c.h.b16 %v296
        %v1374 = vunpack.c.l.b16 %v297
        %v1375 = vunpack.c.h.b16 %v297
        %v1376 = vunpack.c.l.b16 %v298
        %v1377 = vunpack.c.h.b16 %v298
        %v1378 = vunpack.c.l.b16 %v299
        %v1379 = vunpack.c.h.b16 %v299
        %v1380 = vunpack.c.l.b16 %v300
        %v1381 = vunpack.c.h.b16 %v300
        %v1382 = vunpack.c.l.b16 %v301
        %v1383 = vunpack.c.h.b16 %v301
        %v1384 = vunpack.c.l.b16 %v302
        %v1385 = vunpack.c.h.b16 %v302
        %v1386 = vunpack.c.l.b16 %v303
        %v1387 = vunpack.c.h.b16 %v303
        %v1388 = vunpack.c.l.b16 %v304
        %v1389 = vunpack.c.h.b16 %v304
        %v1390 = vunpack.c.l.b16 %v305
        %v1391 = vunpack.c.h.b16 %v305
        %v1392 = vunpack.c.l.b16 %v306
        %v1393 = vunpack.c.h.b16 %v306
        %v1394 = vunpack.c.l.b16 %v307
        %v1395 = vunpack.c.h.b16 %v307
        %v1396 = vunpack.c.l.b16 %v308
        %v1397 = vunpack.c.h.b16 %v308
        %v1398 = vunpack.c.l.b16 %v309
        %v1399 = vunpack.c.h.b16 %v309
        %v1400 = vunpack.c.l.b16 %v310
        %v1401 = vunpack.c.h.b16 %v310
        %v1402 = vunpack.c.l.b16 %v311
        %v1403 = vunpack.c.h.b16 %v311
        %v1404 = vunpack.c.l.b16 %v312
        %v1405 = vunpack.c.h.b16 %v312
        %v1406 = vunpack.c.l.b16 %v313
        %v1407 = vunpack.c.h.b16 %v313
        %v1408 = vunpack.c.l.b16 %v314
        %v1409 = vunpack.c.h.b16 %v314
        %v1410 = vunpack.c.l.b16 %v315
        %v1411 = vunpack.c.h.b16 %v315
        %v1412 = vunpack.c.l.b16 %v316
        %v1413 = vunpack.c.h.b16 %v316
        %v1414 = vunpack.c.l.b16 %v317
        %v1415 = vunpack.c.h.b16 %v317
        %v1416 = vunpack.c.l.b16 %v318
        %v1417 = vunpack.c.h.b16 %v318
        %v1418 = vunpack.c.l.b16 %v319
        %v1419 = vunpack.c.h.b16 %v319
        %v1420 = vunpack.c.l.b16 %v320
        %v1421 = vunpack.c.h.b16 %v320
        %v1422 = vunpack.c.l.b16 %v321
        %v1423 = vunpack.c.h.b16 %v321
        %v1424 = vunpack.c.l.b16 %v322
        %v1425 = vunpack.c.h.b16 %v322
        %v1426 = vunpack.c.l.b16 %v323
        %v1427 = vunpack.c.h.b16 %v323
        %v1428 = vunpack.c.l.b16 %v324
        %v1429 = vunpack.c.h.b16 %v324
        %v1430 = vunpack.c.l.b16 %v325
        %v1431 = vunpack.c.h.b16 %v325
        %v1432 = vunpack.c.l.b16 %v326
        %v1433 = vunpack.c.h.b16 %v326
        %v1434 = vunpack.c.l.b16 %v327
        %v1435 = vunpack.c.h.b16 %v327
        %v1436 = vunpack.c.l.b16 %v328
        %v1437 = vunpack.c.h.b16 %v328
        %v1438 = vunpack.c.l.b16 %v329
        %v1439 = vunpack.c.h.b16 %v329
        %v1440 = vunpack.c.l.b16 %v330
        %v1441 = vunpack.c.h.b16 %v330
        %v1442 = vunpack.c.l.b16 %v331
        %v1443 = vunpack.c.h.b16 %v331
        %v1444 = vunpack.c.l.b16 %v332
        %v1445 = vunpack.c.h.b16 %v332
        %v1446 = vunpack.c.l.b16 %v333
        %v1447 = vunpack.c.h.b16 %v333
        %v1448 = vunpack.c.l.b16 %v334
        %v1449 = vunpack.c.h.b16 %v334
        %v1450 = vunpack.c.l.b16 %v335
        %v1451 = vunpack.c.h.b16 %v335
        %v1452 = vunpack.c.l.b16 %v336
        %v1453 = vunpack.c.h.b16 %v336
        %v1454 = vunpack.c.l.b16 %v337
        %v1455 = vunpack.c.h.b16 %v337
        %v1456 = vunpack.c.l.b16 %v338
        %v1457 = vunpack.c.h.b16 %v338
        %v1458 = vunpack.c.l.b16 %v339
        %v1459 = vunpack.c.h.b16 %v339
        %v1460 = vunpack.c.l.b16 %v340
        %v1461 = vunpack.c.h.b16 %v340
        %v1462 = vunpack.c.l.b16 %v341
        %v1463 = vunpack.c.h.b16 %v341
        %v1464 = vunpack.c.l.b16 %v342
        %v1465 = vunpack.c.h.b16 %v342
        %v1466 = vunpack.c.l.b16 %v343
        %v1467 = vunpack.c.h.b16 %v343
        %v1468 = vunpack.c.l.b16 %v344
        %v1469 = vunpack.c.h.b16 %v344
        %v1470 = vunpack.c.l.b16 %v345
        %v1471 = vunpack.c.h.b16 %v345
        %v1472 = vunpack.c.l.b16 %v346
        %v1473 = vunpack.c.h.b16 %v346
        %v1474 = vunpack.c.l.b16 %v347
        %v1475 = vunpack.c.h.b16 %v347
        %v1476 = vunpack.c.l.b16 %v348
        %v1477 = vunpack.c.h.b16 %v348
        %v1478 = vunpack.c.l.b16 %v349
        %v1479 = vunpack.c.h.b16 %v349
        %v1480 = vunpack.c.l.b16 %v350
        %v1481 = vunpack.c.h.b16 %v350
        %v1482 = vunpack.c.l.b16 %v351
        %v1483 = vunpack.c.h.b16 %v351
        %v1484 = vunpack.c.l.b16 %v352
        %v1485 = vunpack.c.h.b16 %v352
        %v1486 = vunpack.c.l.b16 %v353
        %v1487 = vunpack.c.h.b16 %v353
        %v1488 = vunpack.c.l.b16 %v354
        %v1489 = vunpack.c.h.b16 %v354
        %v1490 = vunpack.c.l.b16 %v355
        %v1491 = vunpack.c.h.b16 %v355
        %v1492 = vunpack.c.l.b16 %v356
        %v1493 = vunpack.c.h.b16 %v356
        %v1494 = vunpack.c.l.b16 %v357
        %v1495 = vunpack.c.h.b16 %v357
        %v1496 = vunpack.c.l.b16 %v358
        %v1497 = vunpack.c.h.b16 %v358
        %v1498 = vunpack.c.l.b16 %v359
        %v1499 = vunpack.c.h.b16 %v359
        %v1500 = vunpack.c.l.b16 %v360
        %v1501 = vunpack.c.h.b16 %v360
        %v1502 = vunpack.c.l.b16 %v361
        %v1503 = vunpack.c.h.b16 %v361
        %v1504 = vunpack.c.l.b16 %v362
        %v1505 = vunpack.c.h.b16 %v362
        %v1506 = vunpack.c.l.b16 %v363
        %v1507 = vunpack.c.h.b16 %v363
        %v1508 = vunpack.c.l.b16 %v364
        %v1509 = vunpack.c.h.b16 %v364
        %v1510 = vunpack.c.l.b16 %v365
        %v1511 = vunpack.c.h.b16 %v365
        %v1512 = vunpack.c.l.b16 %v366
        %v1513 = vunpack.c.h.b16 %v366
        %v1514 = vunpack.c.l.b16 %v367
        %v1515 = vunpack.c.h.b16 %v367
        %v1516 = vunpack.c.l.b16 %v368
        %v1517 = vunpack.c.h.b16 %v368
        %v1518 = vunpack.c.l.b16 %v369
        %v1519 = vunpack.c.h.b16 %v369
        %v1520 = vunpack.c.l.b16 %v370
        %v1521 = vunpack.c.h.b16 %v370
        %v1522 = vunpack.c.l.b16 %v371
        %v1523 = vunpack.c.h.b16 %v371
        %v1524 = vunpack.c.l.b16 %v372
        %v1525 = vunpack.c.h.b16 %v372
        %v1526 = vunpack.c.l.b16 %v373
        %v1527 = vunpack.c.h.b16 %v373
        %v1528 = vunpack.c.l.b16 %v374
        %v1529 = vunpack.c.h.b16 %v374
        %v1530 = vunpack.c.l.b16 %v375
        %v1531 = vunpack.c.h.b16 %v375
        %v1532 = vunpack.c.l.b16 %v376
        %v1533 = vunpack.c.h.b16 %v376
        %v1534 = vunpack.c.l.b16 %v377
        %v1535 = vunpack.c.h.b16 %v377
        %v1536 = vunpack.c.l.b16 %v378
        %v1537 = vunpack.c.h.b16 %v378
        %v1538 = vunpack.c.l.b16 %v379
        %v1539 = vunpack.c.h.b16 %v379
        %v1540 = vunpack.c.l.b16 %v380
        %v1541 = vunpack.c.h.b16 %v380
        %v1542 = vunpack.c.l.b16 %v381
        %v1543 = vunpack.c.h.b16 %v381
        %v1544 = vunpack.c.l.b16 %v382
        %v1545 = vunpack.c.h.b16 %v382
        %v1546 = vunpack.c.l.b16 %v383
        %v1547 = vunpack.c.h.b16 %v383
        %v1548 = vunpack.c.l.b16 %v384
        %v1549 = vunpack.c.h.b16 %v384
        %v1550 = vunpack.c.l.b16 %v385
        %v1551 = vunpack.c.h.b16 %v385
        %v1552 = vunpack.c.l.b16 %v386
        %v1553 = vunpack.c.h.b16 %v386
        %v1554 = vunpack.c.l.b16 %v387
        %v1555 = vunpack.c.h.b16 %v387
        %v1556 = vunpack.c.l.b16 %v388
        %v1557 = vunpack.c.h.b16 %v388
        %v1558 = vunpack.c.l.b16 %v389
        %v1559 = vunpack.c.h.b16 %v389
        %v1560 = vunpack.c.l.b16 %v390
        %v1561 = vunpack.c.h.b16 %v390
        %v1562 = vunpack.c.l.b16 %v391
        %v1563 = vunpack.c.h.b16 %v391
        %v1564 = vunpack.c.l.b16 %v392
        %v1565 = vunpack.c.h.b16 %v392
        %v1566 = vunpack.c.l.b16 %v393
        %v1567 = vunpack.c.h.b16 %v393
        %v1568 = vunpack.c.l.b16 %v394
        %v1569 = vunpack.c.h.b16 %v394
        %v1570 = vunpack.c.l.b16 %v395
        %v1571 = vunpack.c.h.b16 %v395
        %v1572 = vunpack.c.l.b16 %v396
        %v1573 = vunpack.c.h.b16 %v396
        %v1574 = vunpack.c.l.b16 %v397
        %v1575 = vunpack.c.h.b16 %v397
        %v1576 = vunpack.c.l.b16 %v398
        %v1577 = vunpack.c.h.b16 %v398
        %v1578 = vunpack.c.l.b16 %v399
        %v1579 = vunpack.c.h.b16 %v399
        %v1580 = vunpack.c.l.b16 %v400
        %v1581 = vunpack.c.h.b16 %v400
        %v1582 = vunpack.c.l.b16 %v401
        %v1583 = vunpack.c.h.b16 %v401
        %v1584 = vunpack.c.l.b16 %v402
        %v1585 = vunpack.c.h.b16 %v402
        %v1586 = vunpack.c.l.b16 %v403
        %v1587 = vunpack.c.h.b16 %v403
        %v1588 = vunpack.c.l.b16 %v404
        %v1589 = vunpack.c.h.b16 %v404
        %v1590 = vunpack.c.l.b16 %v405
        %v1591 = vunpack.c.h.b16 %v405
        %v1592 = vunpack.c.l.b16 %v406
        %v1593 = vunpack.c.h.b16 %v406
        %v1594 = vunpack.c.l.b16 %v407
        %v1595 = vunpack.c.h.b16 %v407
        %v1596 = vunpack.c.l.b16 %v408
        %v1597 = vunpack.c.h.b16 %v408
        %v1598 = vunpack.c.l.b16 %v409
        %v1599 = vunpack.c.h.b16 %v409
        %v1600 = vunpack.c.l.b16 %v410
        %v1601 = vunpack.c.h.b16 %v410
        %v1602 = vunpack.c.l.b16 %v411
        %v1603 = vunpack.c.h.b16 %v411
        %v1604 = vunpack.c.l.b16 %v412
        %v1605 = vunpack.c.h.b16 %v412
        %v1606 = vunpack.c.l.b16 %v413
        %v1607 = vunpack.c.h.b16 %v413
        %v1608 = vunpack.c.l.b16 %v414
        %v1609 = vunpack.c.h.b16 %v414
        %v1610 = vunpack.c.l.b16 %v415
        %v1611 = vunpack.c.h.b16 %v415
        %v1612 = vunpack.c.l.b16 %v416
        %v1613 = vunpack.c.h.b16 %v416
        %v1614 = vunpack.c.l.b16 %v417
        %v1615 = vunpack.c.h.b16 %v417
        %v1616 = vunpack.c.l.b16 %v418
        %v1617 = vunpack.c.h.b16 %v418
        %v1618 = vunpack.c.l.b16 %v419
        %v1619 = vunpack.c.h.b16 %v419
        %v1620 = vunpack.c.l.b16 %v420
        %v1621 = vunpack.c.h.b16 %v420
        %v1622 = vunpack.c.l.b16 %v421
        %v1623 = vunpack.c.h.b16 %v421
        %v1624 = vunpack.c.l.b16 %v422
        %v1625 = vunpack.c.h.b16 %v422
        %v1626 = vunpack.c.l.b16 %v423
        %v1627 = vunpack.c.h.b16 %v423
        %v1628 = vunpack.c.l.b16 %v424
        %v1629 = vunpack.c.h.b16 %v424
        %v1630 = vunpack.c.l.b16 %v425
        %v1631 = vunpack.c.h.b16 %v425
        %v1632 = vunpack.c.l.b16 %v426
        %v1633 = vunpack.c.h.b16 %v426
        %v1634 = vunpack.c.l.b16 %v427
        %v1635 = vunpack.c.h.b16 %v427
        %v1636 = vunpack.c.l.b16 %v428
        %v1637 = vunpack.c.h.b16 %v428
        %v1638 = vunpack.c.l.b16 %v429
        %v1639 = vunpack.c.h.b16 %v429
        %v1640 = vunpack.c.l.b16 %v430
        %v1641 = vunpack.c.h.b16 %v430
        %v1642 = vunpack.c.l.b16 %v431
        %v1643 = vunpack.c.h.b16 %v431
        %v1644 = vunpack.c.l.b16 %v432
        %v1645 = vunpack.c.h.b16 %v432
        %v1646 = vunpack.c.l.b16 %v433
        %v1647 = vunpack.c.h.b16 %v433
        %v1648 = vunpack.c.l.b16 %v434
        %v1649 = vunpack.c.h.b16 %v434
        %v1650 = vunpack.c.l.b16 %v435
        %v1651 = vunpack.c.h.b16 %v435
        %v1652 = vunpack.c.l.b16 %v436
        %v1653 = vunpack.c.h.b16 %v436
        %v1654 = vunpack.c.l.b16 %v437
        %v1655 = vunpack.c.h.b16 %v437
        %v1656 = vunpack.c.l.b16 %v438
        %v1657 = vunpack.c.h.b16 %v438
        %v1658 = vunpack.c.l.b16 %v439
        %v1659 = vunpack.c.h.b16 %v439
        %v1660 = vunpack.c.l.b16 %v440
        %v1661 = vunpack.c.h.b16 %v440
        %v1662 = vunpack.c.l.b16 %v441
        %v1663 = vunpack.c.h.b16 %v441
        %v1664 = vunpack.c.l.b16 %v442
        %v1665 = vunpack.c.h.b16 %v442
        %v1666 = vunpack.c.l.b16 %v443
        %v1667 = vunpack.c.h.b16 %v443
        %v1668 = vunpack.c.l.b16 %v444
        %v1669 = vunpack.c.h.b16 %v444
        %v1670 = vunpack.c.l.b16 %v445
        %v1671 = vunpack.c.h.b16 %v445
        %v1672 = vunpack.c.l.b16 %v446
        %v1673 = vunpack.c.h.b16 %v446
        %v1674 = vunpack.c.l.b16 %v447
        %v1675 = vunpack.c.h.b16 %v447
        %v1676 = vunpack.c.l.b16 %v448
        %v1677 = vunpack.c.h.b16 %v448
        %v1678 = vunpack.c.l.b16 %v449
        %v1679 = vunpack.c.h.b16 %v449
        %v1680 = vunpack.c.l.b16 %v450
        %v1681 = vunpack.c.h.b16 %v450
        %v1682 = vunpack.c.l.b16 %v451
        %v1683 = vunpack.c.h.b16 %v451
        %v1684 = vunpack.c.l.b16 %v452
        %v1685 = vunpack.c.h.b16 %v452
        %v1686 = vunpack.c.l.b16 %v453
        %v1687 = vunpack.c.h.b16 %v453
        %v1688 = vunpack.c.l.b16 %v454
        %v1689 = vunpack.c.h.b16 %v454
        %v1690 = vunpack.c.l.b16 %v455
        %v1691 = vunpack.c.h.b16 %v455
        %v1692 = vunpack.c.l.b16 %v456
        %v1693 = vunpack.c.h.b16 %v456
        %v1694 = vunpack.c.l.b16 %v457
        %v1695 = vunpack.c.h.b16 %v457
        %v1696 = vunpack.c.l.b16 %v458
        %v1697 = vunpack.c.h.b16 %v458
        %v1698 = vunpack.c.l.b16 %v459
        %v1699 = vunpack.c.h.b16 %v459
        %v1700 = vunpack.c.l.b16 %v460
        %v1701 = vunpack.c.h.b16 %v460
        %v1702 = vunpack.c.l.b16 %v461
        %v1703 = vunpack.c.h.b16 %v461
        %v1704 = vunpack.c.l.b16 %v462
        %v1705 = vunpack.c.h.b16 %v462
        %v1706 = vunpack.c.l.b16 %v463
        %v1707 = vunpack.c.h.b16 %v463
        %v1708 = vunpack.c.l.b16 %v464
        %v1709 = vunpack.c.h.b16 %v464
        %v1710 = vunpack.c.l.b16 %v465
        %v1711 = vunpack.c.h.b16 %v465
        %v1712 = vunpack.c.l.b16 %v466
        %v1713 = vunpack.c.h.b16 %v466
        %v1714 = vunpack.c.l.b16 %v467
        %v1715 = vunpack.c.h.b16 %v467
        %v1716 = vunpack.c.l.b16 %v468
        %v1717 = vunpack.c.h.b16 %v468
        %v1718 = vunpack.c.l.b16 %v469
        %v1719 = vunpack.c.h.b16 %v469
        %v1720 = vunpack.c.l.b16 %v470
        %v1721 = vunpack.c.h.b16 %v470
        %v1722 = vunpack.c.l.b16 %v471
        %v1723 = vunpack.c.h.b16 %v471
        %v1724 = vunpack.c.l.b16 %v472
        %v1725 = vunpack.c.h.b16 %v472
        %v1726 = vunpack.c.l.b16 %v473
        %v1727 = vunpack.c.h.b16 %v473
        %v1728 = vunpack.c.l.b16 %v474
        %v1729 = vunpack.c.h.b16 %v474
        %v1730 = vunpack.c.l.b16 %v475
        %v1731 = vunpack.c.h.b16 %v475
        %v1732 = vunpack.c.l.b16 %v476
        %v1733 = vunpack.c.h.b16 %v476
        %v1734 = vunpack.c.l.b16 %v477
        %v1735 = vunpack.c.h.b16 %v477
        %v1736 = vunpack.c.l.b16 %v478
        %v1737 = vunpack.c.h.b16 %v478
        %v1738 = vunpack.c.l.b16 %v479
        %v1739 = vunpack.c.h.b16 %v479
        %v1740 = vunpack.c.l.b16 %v480
        %v1741 = vunpack.c.h.b16 %v480
        %v1742 = vunpack.c.l.b16 %v481
        %v1743 = vunpack.c.h.b16 %v481
        %v1744 = vunpack.c.l.b16 %v482
        %v1745 = vunpack.c.h.b16 %v482
        %v1746 = vunpack.c.l.b16 %v483
        %v1747 = vunpack.c.h.b16 %v483
        %v1748 = vunpack.c.l.b16 %v484
        %v1749 = vunpack.c.h.b16 %v484
        %v1750 = vunpack.c.l.b16 %v485
        %v1751 = vunpack.c.h.b16 %v485
        %v1752 = vunpack.c.l.b16 %v486
        %v1753 = vunpack.c.h.b16 %v486
        %v1754 = vunpack.c.l.b16 %v487
        %v1755 = vunpack.c.h.b16 %v487
        %v1756 = vunpack.c.l.b16 %v488
        %v1757 = vunpack.c.h.b16 %v488
        %v1758 = vunpack.c.l.b16 %v489
        %v1759 = vunpack.c.h.b16 %v489
        %v1760 = vunpack.c.l.b16 %v490
        %v1761 = vunpack.c.h.b16 %v490
        %v1762 = vunpack.c.l.b16 %v491
        %v1763 = vunpack.c.h.b16 %v491
        %v1764 = vunpack.c.l.b16 %v492
        %v1765 = vunpack.c.h.b16 %v492
        %v1766 = vunpack.c.l.b16 %v493
        %v1767 = vunpack.c.h.b16 %v493
        %v1768 = vunpack.c.l.b16 %v494
        %v1769 = vunpack.c.h.b16 %v494
        %v1770 = vunpack.c.l.b16 %v495
        %v1771 = vunpack.c.h.b16 %v495
        %v1772 = vunpack.c.l.b16 %v496
        %v1773 = vunpack.c.h.b16 %v496
        %v1774 = vunpack.c.l.b16 %v497
        %v1775 = vunpack.c.h.b16 %v497
        %v1776 = vunpack.c.l.b16 %v498
        %v1777 = vunpack.c.h.b16 %v498
        %v1778 = vunpack.c.l.b16 %v499
        %v1779 = vunpack.c.h.b16 %v499
        %v1780 = vunpack.c.l.b16 %v500
        %v1781 = vunpack.c.h.b16 %v500
        %v1782 = vunpack.c.l.b16 %v501
        %v1783 = vunpack.c.h.b16 %v501
        %v1784 = vunpack.c.l.b16 %v502
        %v1785 = vunpack.c.h.b16 %v502
        %v1786 = vunpack.c.l.b16 %v503
        %v1787 = vunpack.c.h.b16 %v503
        %v1788 = vunpack.c.l.b16 %v504
        %v1789 = vunpack.c.h.b16 %v504
        %v1790 = vunpack.c.l.b16 %v505
        %v1791 = vunpack.c.h.b16 %v505
        %v1792 = vunpack.c.l.b16 %v506
        %v1793 = vunpack.c.h.b16 %v506
        %v1794 = vunpack.c.l.b16 %v507
        %v1795 = vunpack.c.h.b16 %v507
        %v1796 = vunpack.c.l.b16 %v508
        %v1797 = vunpack.c.h.b16 %v508
        %v1798 = vunpack.c.l.b16 %v509
        %v1799 = vunpack.c.h.b16 %v509
        %v1800 = vunpack.c.l.b16 %v510
        %v1801 = vunpack.c.h.b16 %v510
        %v1802 = vunpack.c.l.b16 %v511
        %v1803 = vunpack.c.h.b16 %v511
        %v1804 = vunpack.c.l.b16 %v512
        %v1805 = vunpack.c.h.b16 %v512
        %v1806 = vunpack.c.l.b16 %v513
        %v1807 = vunpack.c.h.b16 %v513
        %v1808 = vunpack.c.l.b16 %v514
        %v1809 = vunpack.c.h.b16 %v514
        %v1810 = vunpack.c.l.b16 %v515
        %v1811 = vunpack.c.h.b16 %v515
        %v1812 = vunpack.c.l.b16 %v516
        %v1813 = vunpack.c.h.b16 %v516
        %v1814 = vunpack.c.l.b16 %v517
        %v1815 = vunpack.c.h.b16 %v517
        %v1816 = vunpack.c.l.b16 %v518
        %v1817 = vunpack.c.h.b16 %v518
        %v1818 = vunpack.c.l.b16 %v519
        %v1819 = vunpack.c.h.b16 %v519
        %v1820 = vunpack.c.l.b16 %v520
        %v1821 = vunpack.c.h.b16 %v520
        %v1822 = vunpack.c.l.b16 %v521
        %v1823 = vunpack.c.h.b16 %v521
        %v1824 = vunpack.c.l.b16 %v522
        %v1825 = vunpack.c.h.b16 %v522
        %v1826 = vunpack.c.l.b16 %v523
        %v1827 = vunpack.c.h.b16 %v523
        %v1828 = vunpack.c.l.b16 %v524
        %v1829 = vunpack.c.h.b16 %v524
        %v1830 = vunpack.c.l.b16 %v525
        %v1831 = vunpack.c.h.b16 %v525
        %v1832 = vunpack.c.l.b16 %v526
        %v1833 = vunpack.c.h.b16 %v526
        %v1834 = vunpack.c.l.b16 %v527
        %v1835 = vunpack.c.h.b16 %v527
        %v1836 = vunpack.c.l.b16 %v528
        %v1837 = vunpack.c.h.b16 %v528
        %v1838 = vunpack.c.l.b16 %v529
        %v1839 = vunpack.c.h.b16 %v529
        %v1840 = vunpack.c.l.b16 %v530
        %v1841 = vunpack.c.h.b16 %v530
        %v1842 = vunpack.c.l.b16 %v531
        %v1843 = vunpack.c.h.b16 %v531
        %v1844 = vunpack.c.l.b16 %v532
        %v1845 = vunpack.c.h.b16 %v532
        %v1846 = vunpack.c.l.b16 %v533
        %v1847 = vunpack.c.h.b16 %v533
        %v1848 = vunpack.c.l.b16 %v534
        %v1849 = vunpack.c.h.b16 %v534
        %v1850 = vunpack.c.l.b16 %v535
        %v1851 = vunpack.c.h.b16 %v535
        %v1852 = vunpack.c.l.b16 %v536
        %v1853 = vunpack.c.h.b16 %v536
        %v1854 = vunpack.c.l.b16 %v537
        %v1855 = vunpack.c.h.b16 %v537
        %v1856 = vunpack.c.l.b16 %v538
        %v1857 = vunpack.c.h.b16 %v538
        %v1858 = vunpack.c.l.b16 %v539
        %v1859 = vunpack.c.h.b16 %v539
        %v1860 = vunpack.c.l.b16 %v540
        %v1861 = vunpack.c.h.b16 %v540
        %v1862 = vunpack.c.l.b16 %v541
        %v1863 = vunpack.c.h.b16 %v541
        %v1864 = vunpack.c.l.b16 %v542
        %v1865 = vunpack.c.h.b16 %v542
        %v1866 = vunpack.c.l.b16 %v543
        %v1867 = vunpack.c.h.b16 %v543
        %v1868 = vunpack.c.l.b16 %v544
        %v1869 = vunpack.c.h.b16 %v544
        %v1870 = vunpack.c.l.b16 %v545
        %v1871 = vunpack.c.h.b16 %v545
        %v1872 = vunpack.c.l.b16 %v546
        %v1873 = vunpack.c.h.b16 %v546
        %v1874 = vunpack.c.l.b16 %v547
        %v1875 = vunpack.c.h.b16 %v547
        %v1876 = vunpack.c.l.b16 %v548
        %v1877 = vunpack.c.h.b16 %v548
        %v1878 = vunpack.c.l.b16 %v549
        %v1879 = vunpack.c.h.b16 %v549
        %v1880 = vunpack.c.l.b16 %v550
        %v1881 = vunpack.c.h.b16 %v550
        %v1882 = vunpack.c.l.b16 %v551
        %v1883 = vunpack.c.h.b16 %v551
        %v1884 = vunpack.c.l.b16 %v552
        %v1885 = vunpack.c.h.b16 %v552
        %v1886 = vunpack.c.l.b16 %v553
        %v1887 = vunpack.c.h.b16 %v553
        %v1888 = vunpack.c.l.b16 %v554
        %v1889 = vunpack.c.h.b16 %v554
        %v1890 = vunpack.c.l.b16 %v555
        %v1891 = vunpack.c.h.b16 %v555
        %v1892 = vunpack.c.l.b16 %v556
        %v1893 = vunpack.c.h.b16 %v556
        %v1894 = vunpack.c.l.b16 %v557
        %v1895 = vunpack.c.h.b16 %v557
        %v1896 = vunpack.c.l.b16 %v558
        %v1897 = vunpack.c.h.b16 %v558
        %v1898 = vunpack.c.l.b16 %v559
        %v1899 = vunpack.c.h.b16 %v559
        %v1900 = vunpack.c.l.b16 %v560
        %v1901 = vunpack.c.h.b16 %v560
        %v1902 = vunpack.c.l.b16 %v561
        %v1903 = vunpack.c.h.b16 %v561
        %v1904 = vunpack.c.l.b16 %v562
        %v1905 = vunpack.c.h.b16 %v562
        %v1906 = vunpack.c.l.b16 %v563
        %v1907 = vunpack.c.h.b16 %v563
        %v1908 = vunpack.c.l.b16 %v564
        %v1909 = vunpack.c.h.b16 %v564
        %v1910 = vunpack.c.l.b16 %v565
        %v1911 = vunpack.c.h.b16 %v565
        %v1912 = vunpack.c.l.b16 %v566
        %v1913 = vunpack.c.h.b16 %v566
        %v1914 = vunpack.c.l.b16 %v567
        %v1915 = vunpack.c.h.b16 %v567
        %v1916 = vunpack.c.l.b16 %v568
        %v1917 = vunpack.c.h.b16 %v568
        %v1918 = vunpack.c.l.b16 %v569
        %v1919 = vunpack.c.h.b16 %v569
        %v1920 = vunpack.c.l.b16 %v570
        %v1921 = vunpack.c.h.b16 %v570
        %v1922 = vunpack.c.l.b16 %v571
        %v1923 = vunpack.c.h.b16 %v571
        %v1924 = vunpack.c.l.b16 %v572
        %v1925 = vunpack.c.h.b16 %v572
        %v1926 = vunpack.c.l.b16 %v573
        %v1927 = vunpack.c.h.b16 %v573
        %v1928 = vunpack.c.l.b16 %v574
        %v1929 = vunpack.c.h.b16 %v574
        %v1930 = vunpack.c.l.b16 %v575
        %v1931 = vunpack.c.h.b16 %v575
        %v1932 = vunpack.c.l.b16 %v576
        %v1933 = vunpack.c.h.b16 %v576
        %v1934 = vunpack.c.l.b16 %v577
        %v1935 = vunpack.c.h.b16 %v577
        %v1936 = vunpack.c.l.b16 %v578
        %v1937 = vunpack.c.h.b16 %v578
        %v1938 = vunpack.c.l.b16 %v579
        %v1939 = vunpack.c.h.b16 %v579
        %v1940 = vunpack.c.l.b16 %v580
        %v1941 = vunpack.c.h.b16 %v580
        %v1942 = vunpack.c.l.b16 %v581
        %v1943 = vunpack.c.h.b16 %v581
        %v1944 = vunpack.c.l.b16 %v582
        %v1945 = vunpack.c.h.b16 %v582
        %v1946 = vunpack.c.l.b16 %v583
        %v1947 = vunpack.c.h.b16 %v583
        %v1948 = vunpack.c.l.b16 %v584
        %v1949 = vunpack.c.h.b16 %v584
        %v1950 = vunpack.c.l.b16 %v585
        %v1951 = vunpack.c.h.b16 %v585
        %v1952 = vunpack.c.l.b16 %v586
        %v1953 = vunpack.c.h.b16 %v586
        %v1954 = vunpack.c.l.b16 %v587
        %v1955 = vunpack.c.h.b16 %v587
        %v1956 = vunpack.c.l.b16 %v588
        %v1957 = vunpack.c.h.b16 %v588
        %v1958 = vunpack.c.l.b16 %v589
        %v1959 = vunpack.c.h.b16 %v589
        %v1960 = vunpack.c.l.b16 %v590
        %v1961 = vunpack.c.h.b16 %v590
        %v1962 = vunpack.c.l.b16 %v591
        %v1963 = vunpack.c.h.b16 %v591
        %v1964 = vunpack.c.l.b16 %v592
        %v1965 = vunpack.c.h.b16 %v592
        %v1966 = vunpack.c.l.b16 %v593
        %v1967 = vunpack.c.h.b16 %v593
        %v1968 = vunpack.c.l.b16 %v594
        %v1969 = vunpack.c.h.b16 %v594
        %v1970 = vunpack.c.l.b16 %v595
        %v1971 = vunpack.c.h.b16 %v595
        %v1972 = vunpack.c.l.b16 %v596
        %v1973 = vunpack.c.h.b16 %v596
        %v1974 = vunpack.c.l.b16 %v597
        %v1975 = vunpack.c.h.b16 %v597
        %v1976 = vunpack.c.l.b16 %v598
        %v1977 = vunpack.c.h.b16 %v598
        %v1978 = vunpack.c.l.b16 %v599
        %v1979 = vunpack.c.h.b16 %v599
        %v1980 = vunpack.c.l.b16 %v600
        %v1981 = vunpack.c.h.b16 %v600
        %v1982 = vunpack.c.l.b16 %v601
        %v1983 = vunpack.c.h.b16 %v601
        %v1984 = vunpack.c.l.b16 %v602
        %v1985 = vunpack.c.h.b16 %v602
        %v1986 = vunpack.c.l.b16 %v603
        %v1987 = vunpack.c.h.b16 %v603
        %v1988 = vunpack.c.l.b16 %v604
        %v1989 = vunpack.c.h.b16 %v604
        %v1990 = vunpack.c.l.b16 %v605
        %v1991 = vunpack.c.h.b16 %v605
        %v1992 = vunpack.c.l.b16 %v606
        %v1993 = vunpack.c.h.b16 %v606
        %v1994 = vunpack.c.l.b16 %v607
        %v1995 = vunpack.c.h.b16 %v607
        %v1996 = vunpack.c.l.b16 %v608
        %v1997 = vunpack.c.h.b16 %v608
        %v1998 = vunpack.c.l.b16 %v609
        %v1999 = vunpack.c.h.b16 %v609
        %v2000 = vunpack.c.l.b16 %v610
        %v2001 = vunpack.c.h.b16 %v610
        %v2002 = vunpack.c.l.b16 %v611
        %v2003 = vunpack.c.h.b16 %v611
        %v2004 = vunpack.c.l.b16 %v612
        %v2005 = vunpack.c.h.b16 %v612
        %v2006 = vunpack.c.l.b16 %v613
        %v2007 = vunpack.c.h.b16 %v613
        %v2008 = vunpack.c.l.b16 %v614
        %v2009 = vunpack.c.h.b16 %v614
        %v2010 = vunpack.c.l.b16 %v615
        %v2011 = vunpack.c.h.b16 %v615
        %v2012 = vunpack.c.l.b16 %v616
        %v2013 = vunpack.c.h.b16 %v616
        %v2014 = vunpack.c.l.b16 %v617
        %v2015 = vunpack.c.h.b16 %v617
        %v2016 = vunpack.c.l.b16 %v618
        %v2017 = vunpack.c.h.b16 %v618
        %v2018 = vunpack.c.l.b16 %v619
        %v2019 = vunpack.c.h.b16 %v619
        %v2020 = vunpack.c.l.b16 %v620
        %v2021 = vunpack.c.h.b16 %v620
        %v2022 = vunpack.c.l.b16 %v621
        %v2023 = vunpack.c.h.b16 %v621
        %v2024 = vunpack.c.l.b16 %v622
        %v2025 = vunpack.c.h.b16 %v622
        %v2026 = vunpack.c.l.b16 %v623
        %v2027 = vunpack.c.h.b16 %v623
        %v2028 = vunpack.c.l.b16 %v624
        %v2029 = vunpack.c.h.b16 %v624
        %v2030 = vunpack.c.l.b16 %v625
        %v2031 = vunpack.c.h.b16 %v625
        %v2032 = vunpack.c.l.b16 %v626
        %v2033 = vunpack.c.h.b16 %v626
        %v2034 = vunpack.c.l.b16 %v627
        %v2035 = vunpack.c.h.b16 %v627
        %v2036 = vunpack.c.l.b16 %v628
        %v2037 = vunpack.c.h.b16 %v628
        %v2038 = vunpack.c.l.b16 %v629
        %v2039 = vunpack.c.h.b16 %v629
        %v2040 = vunpack.c.l.b16 %v630
        %v2041 = vunpack.c.h.b16 %v630
        %v2042 = vunpack.c.l.b16 %v631
        %v2043 = vunpack.c.h.b16 %v631
        %v2044 = vunpack.c.l.b16 %v632
        %v2045 = vunpack.c.h.b16 %v632
        %v2046 = vunpack.c.l.b16 %v633
        %v2047 = vunpack.c.h.b16 %v633
        %v2048 = vunpack.c.l.b16 %v634
        %v2049 = vunpack.c.h.b16 %v634
        %v2050 = vunpack.c.l.b16 %v635
        %v2051 = vunpack.c.h.b16 %v635
        %v2052 = vunpack.c.l.b16 %v636
        %v2053 = vunpack.c.h.b16 %v636
        %v2054 = vunpack.c.l.b16 %v637
        %v2055 = vunpack.c.h.b16 %v637
        %v2056 = vunpack.c.l.b16 %v638
        %v2057 = vunpack.c.h.b16 %v638
        %v2058 = vunpack.c.l.b16 %v639
        %v2059 = vunpack.c.h.b16 %v639
        %v2060 = vunpack.c.l.b16 %v640
        %v2061 = vunpack.c.h.b16 %v640
        %v2062 = vunpack.c.l.b16 %v641
        %v2063 = vunpack.c.h.b16 %v641
        %v2064 = vunpack.c.l.b16 %v642
        %v2065 = vunpack.c.h.b16 %v642
        %v2066 = vunpack.c.l.b16 %v643
        %v2067 = vunpack.c.h.b16 %v643
        %v2068 = vunpack.c.l.b16 %v644
        %v2069 = vunpack.c.h.b16 %v644
        %v2070 = vunpack.c.l.b16 %v645
        %v2071 = vunpack.c.h.b16 %v645
        %v2072 = vunpack.c.l.b16 %v646
        %v2073 = vunpack.c.h.b16 %v646
        %v2074 = vunpack.c.l.b16 %v647
        %v2075 = vunpack.c.h.b16 %v647
        %v2076 = vunpack.c.l.b16 %v648
        %v2077 = vunpack.c.h.b16 %v648
        %v2078 = vunpack.c.l.b16 %v649
        %v2079 = vunpack.c.h.b16 %v649
        %v2080 = vunpack.c.l.b16 %v650
        %v2081 = vunpack.c.h.b16 %v650
        %v2082 = vunpack.c.l.b16 %v651
        %v2083 = vunpack.c.h.b16 %v651
        %v2084 = vunpack.c.l.b16 %v652
        %v2085 = vunpack.c.h.b16 %v652
        %v2086 = vunpack.c.l.b16 %v653
        %v2087 = vunpack.c.h.b16 %v653
        %v2088 = vunpack.c.l.b16 %v654
        %v2089 = vunpack.c.h.b16 %v654
        %v2090 = vunpack.c.l.b16 %v655
        %v2091 = vunpack.c.h.b16 %v655
        %v2092 = vunpack.c.l.b16 %v656
        %v2093 = vunpack.c.h.b16 %v656
        %v2094 = vunpack.c.l.b16 %v657
        %v2095 = vunpack.c.h.b16 %v657
        %v2096 = vunpack.c.l.b16 %v658
        %v2097 = vunpack.c.h.b16 %v658
        %v2098 = vunpack.c.l.b16 %v659
        %v2099 = vunpack.c.h.b16 %v659
        %v2100 = vunpack.c.l.b16 %v660
        %v2101 = vunpack.c.h.b16 %v660
        %v2102 = vunpack.c.l.b16 %v661
        %v2103 = vunpack.c.h.b16 %v661
        %v2104 = vunpack.c.l.b16 %v662
        %v2105 = vunpack.c.h.b16 %v662
        %v2106 = vunpack.c.l.b16 %v663
        %v2107 = vunpack.c.h.b16 %v663
        %v2108 = vunpack.c.l.b16 %v664
        %v2109 = vunpack.c.h.b16 %v664
        %v2110 = vunpack.c.l.b16 %v665
        %v2111 = vunpack.c.h.b16 %v665
        %v2112 = vunpack.c.l.b16 %v666
        %v2113 = vunpack.c.h.b16 %v666
        %v2114 = vunpack.c.l.b16 %v667
        %v2115 = vunpack.c.h.b16 %v667
        %v2116 = vunpack.c.l.b16 %v668
        %v2117 = vunpack.c.h.b16 %v668
        %v2118 = vunpack.c.l.b16 %v669
        %v2119 = vunpack.c.h.b16 %v669
        %v2120 = vunpack.c.l.b16 %v670
        %v2121 = vunpack.c.h.b16 %v670
        %v2122 = vunpack.c.l.b16 %v671
        %v2123 = vunpack.c.h.b16 %v671
        %v2124 = vunpack.c.l.b16 %v672
        %v2125 = vunpack.c.h.b16 %v672
        %v2126 = vunpack.c.l.b16 %v673
        %v2127 = vunpack.c.h.b16 %v673
        %v2128 = vunpack.c.l.b16 %v674
        %v2129 = vunpack.c.h.b16 %v674
        %v2130 = vunpack.c.l.b16 %v675
        %v2131 = vunpack.c.h.b16 %v675
        %v2132 = vunpack.c.l.b16 %v676
        %v2133 = vunpack.c.h.b16 %v676
        %v2134 = vunpack.c.l.b16 %v677
        %v2135 = vunpack.c.h.b16 %v677
        %v2136 = vunpack.c.l.b16 %v678
        %v2137 = vunpack.c.h.b16 %v678
        %v2138 = vunpack.c.l.b16 %v679
        %v2139 = vunpack.c.h.b16 %v679
        %v2140 = vunpack.c.l.b16 %v680
        %v2141 = vunpack.c.h.b16 %v680
        %v2142 = vunpack.c.l.b16 %v681
        %v2143 = vunpack.c.h.b16 %v681
        %v2144 = vunpack.c.l.b16 %v682
        %v2145 = vunpack.c.h.b16 %v682
        %v2146 = vunpack.c.l.b16 %v683
        %v2147 = vunpack.c.h.b16 %v683
        %v2148 = vunpack.c.l.b16 %v684
        %v2149 = vunpack.c.h.b16 %v684
        %v2150 = vunpack.c.l.b16 %v685
        %v2151 = vunpack.c.h.b16 %v685
        %v2152 = vunpack.c.l.b16 %v686
        %v2153 = vunpack.c.h.b16 %v686
        %v2154 = vunpack.c.l.b16 %v687
        %v2155 = vunpack.c.h.b16 %v687
        %v2156 = vunpack.c.l.b16 %v688
        %v2157 = vunpack.c.h.b16 %v688
        %v2158 = vunpack.c.l.b16 %v689
        %v2159 = vunpack.c.h.b16 %v689
        %v2160 = vunpack.c.l.b16 %v690
        %v2161 = vunpack.c.h.b16 %v690
        %v2162 = vunpack.c.l.b16 %v691
        %v2163 = vunpack.c.h.b16 %v691
        %v2164 = vunpack.c.l.b16 %v692
        %v2165 = vunpack.c.h.b16 %v692
        %v2166 = vunpack.c.l.b16 %v693
        %v2167 = vunpack.c.h.b16 %v693
        %v2168 = vunpack.c.l.b16 %v694
        %v2169 = vunpack.c.h.b16 %v694
        %v2170 = vunpack.c.l.b16 %v695
        %v2171 = vunpack.c.h.b16 %v695
        %v2172 = vunpack.c.l.b16 %v696
        %v2173 = vunpack.c.h.b16 %v696
        %v2174 = vunpack.c.l.b16 %v697
        %v2175 = vunpack.c.h.b16 %v697
        %v2176 = vunpack.c.l.b16 %v698
        %v2177 = vunpack.c.h.b16 %v698
        %v2178 = vunpack.c.l.b16 %v699
        %v2179 = vunpack.c.h.b16 %v699
        %v2180 = vunpack.c.l.b16 %v700
        %v2181 = vunpack.c.h.b16 %v700
        %v2182 = vunpack.c.l.b16 %v701
        %v2183 = vunpack.c.h.b16 %v701
        %v2184 = vunpack.c.l.b16 %v702
        %v2185 = vunpack.c.h.b16 %v702
        %v2186 = vunpack.c.l.b16 %v703
        %v2187 = vunpack.c.h.b16 %v703
        %v2188 = vunpack.c.l.b16 %v704
        %v2189 = vunpack.c.h.b16 %v704
        %v2190 = vunpack.c.l.b16 %v705
        %v2191 = vunpack.c.h.b16 %v705
        %v2192 = vunpack.c.l.b16 %v706
        %v2193 = vunpack.c.h.b16 %v706
        %v2194 = vunpack.c.l.b16 %v707
        %v2195 = vunpack.c.h.b16 %v707
        %v2196 = vunpack.c.l.b16 %v708
        %v2197 = vunpack.c.h.b16 %v708
        %v2198 = vunpack.c.l.b16 %v709
        %v2199 = vunpack.c.h.b16 %v709
        %v2200 = vunpack.c.l.b16 %v710
        %v2201 = vunpack.c.h.b16 %v710
        %v2202 = vunpack.c.l.b16 %v711
        %v2203 = vunpack.c.h.b16 %v711
        %v2204 = vunpack.c.l.b16 %v712
        %v2205 = vunpack.c.h.b16 %v712
        %v2206 = vunpack.c.l.b16 %v713
        %v2207 = vunpack.c.h.b16 %v713
        %v2208 = vunpack.c.l.b16 %v714
        %v2209 = vunpack.c.h.b16 %v714
        %v2210 = vunpack.c.l.b16 %v715
        %v2211 = vunpack.c.h.b16 %v715
        %v2212 = vunpack.c.l.b16 %v716
        %v2213 = vunpack.c.h.b16 %v716
        %v2214 = vunpack.c.l.b16 %v717
        %v2215 = vunpack.c.h.b16 %v717
        %v2216 = vunpack.c.l.b16 %v718
        %v2217 = vunpack.c.h.b16 %v718
        %v2218 = vunpack.c.l.b16 %v719
        %v2219 = vunpack.c.h.b16 %v719
        %v2220 = vunpack.c.l.b16 %v720
        %v2221 = vunpack.c.h.b16 %v720
        %v2222 = vunpack.c.l.b16 %v721
        %v2223 = vunpack.c.h.b16 %v721
        %v2224 = vunpack.c.l.b16 %v722
        %v2225 = vunpack.c.h.b16 %v722
        %v2226 = vunpack.c.l.b16 %v723
        %v2227 = vunpack.c.h.b16 %v723
        %v2228 = vunpack.c.l.b16 %v724
        %v2229 = vunpack.c.h.b16 %v724
        %v2230 = vunpack.c.l.b16 %v725
        %v2231 = vunpack.c.h.b16 %v725
        %v2232 = vunpack.c.l.b16 %v726
        %v2233 = vunpack.c.h.b16 %v726
        %v2234 = vunpack.c.l.b16 %v727
        %v2235 = vunpack.c.h.b16 %v727
        %v2236 = vunpack.c.l.b16 %v728
        %v2237 = vunpack.c.h.b16 %v728
        %v2238 = vunpack.c.l.b16 %v729
        %v2239 = vunpack.c.h.b16 %v729
        %v2240 = vunpack.c.l.b16 %v730
        %v2241 = vunpack.c.h.b16 %v730
        %v2242 = vunpack.c.l.b16 %v731
        %v2243 = vunpack.c.h.b16 %v731
        %v2244 = vunpack.c.l.b16 %v732
        %v2245 = vunpack.c.h.b16 %v732
        %v2246 = vunpack.c.l.b16 %v733
        %v2247 = vunpack.c.h.b16 %v733
        %v2248 = vunpack.c.l.b16 %v734
        %v2249 = vunpack.c.h.b16 %v734
        %v2250 = vunpack.c.l.b16 %v735
        %v2251 = vunpack.c.h.b16 %v735
        %v2252 = vunpack.c.l.b16 %v736
        %v2253 = vunpack.c.h.b16 %v736
        %v2254 = vunpack.c.l.b16 %v737
        %v2255 = vunpack.c.h.b16 %v737
        %v2256 = vunpack.c.l.b16 %v738
        %v2257 = vunpack.c.h.b16 %v738
        %v2258 = vunpack.c.l.b16 %v739
        %v2259 = vunpack.c.h.b16 %v739
        %v2260 = vunpack.c.l.b16 %v740
        %v2261 = vunpack.c.h.b16 %v740
        %v2262 = vunpack.c.l.b16 %v741
        %v2263 = vunpack.c.h.b16 %v741
        %v2264 = vunpack.c.l.b16 %v742
        %v2265 = vunpack.c.h.b16 %v742
        %v2266 = vunpack.c.l.b16 %v743
        %v2267 = vunpack.c.h.b16 %v743
        %v2268 = vunpack.c.l.b16 %v744
        %v2269 = vunpack.c.h.b16 %v744
        %v2270 = vunpack.c.l.b16 %v745
        %v2271 = vunpack.c.h.b16 %v745
        %v2272 = vunpack.c.l.b16 %v746
        %v2273 = vunpack.c.h.b16 %v746
        %v2274 = vunpack.c.l.b16 %v747
        %v2275 = vunpack.c.h.b16 %v747
        %v2276 = vunpack.c.l.b16 %v748
        %v2277 = vunpack.c.h.b16 %v748
        %v2278 = vunpack.c.l.b16 %v749
        %v2279 = vunpack.c.h.b16 %v749
        %v2280 = vunpack.c.l.b16 %v750
        %v2281 = vunpack.c.h.b16 %v750
        %v2282 = vunpack.c.l.b16 %v751
        %v2283 = vunpack.c.h.b16 %v751
        %v2284 = vunpack.c.l.b16 %v752
        %v2285 = vunpack.c.h.b16 %v752
        %v2286 = vunpack.c.l.b16 %v753
        %v2287 = vunpack.c.h.b16 %v753
        %v2288 = vunpack.c.l.b16 %v754
        %v2289 = vunpack.c.h.b16 %v754
        %v2290 = vunpack.c.l.b16 %v755
        %v2291 = vunpack.c.h.b16 %v755
        %v2292 = vunpack.c.l.b16 %v756
        %v2293 = vunpack.c.h.b16 %v756
        %v2294 = vunpack.c.l.b16 %v757
        %v2295 = vunpack.c.h.b16 %v757
        %v2296 = vunpack.c.l.b16 %v758
        %v2297 = vunpack.c.h.b16 %v758
        %v2298 = vunpack.c.l.b16 %v759
        %v2299 = vunpack.c.h.b16 %v759
        %v2300 = vunpack.c.l.b16 %v760
        %v2301 = vunpack.c.h.b16 %v760
        %v2302 = vunpack.c.l.b16 %v761
        %v2303 = vunpack.c.h.b16 %v761
        %v2304 = vunpack.c.l.b16 %v762
        %v2305 = vunpack.c.h.b16 %v762
        %v2306 = vunpack.c.l.b16 %v763
        %v2307 = vunpack.c.h.b16 %v763
        %v2308 = vunpack.c.l.b16 %v764
        %v2309 = vunpack.c.h.b16 %v764
        %v2310 = vunpack.c.l.b16 %v765
        %v2311 = vunpack.c.h.b16 %v765
        %v2312 = vunpack.c.l.b16 %v766
        %v2313 = vunpack.c.h.b16 %v766
        %v2314 = vunpack.c.l.b16 %v767
        %v2315 = vunpack.c.h.b16 %v767
        %v2316 = vunpack.c.l.b16 %v768
        %v2317 = vunpack.c.h.b16 %v768
        %v2318 = vunpack.c.l.b16 %v769
        %v2319 = vunpack.c.h.b16 %v769
        %v2320 = vunpack.c.l.b16 %v770
        %v2321 = vunpack.c.h.b16 %v770
        %v2322 = vunpack.c.l.b16 %v771
        %v2323 = vunpack.c.h.b16 %v771
        %v2324 = vunpack.c.l.b16 %v772
        %v2325 = vunpack.c.h.b16 %v772
        %v2326 = vunpack.c.l.b16 %v773
        %v2327 = vunpack.c.h.b16 %v773
        %v2328 = vunpack.c.l.b16 %v774
        %v2329 = vunpack.c.h.b16 %v774
        %v2330 = vunpack.c.l.b16 %v775
        %v2331 = vunpack.c.h.b16 %v775
        %v2332 = vunpack.c.l.b16 %v776
        %v2333 = vunpack.c.h.b16 %v776
        %v2334 = vunpack.c.l.b16 %v777
        %v2335 = vunpack.c.h.b16 %v777
        %v2336 = vunpack.c.l.b16 %v778
        %v2337 = vunpack.c.h.b16 %v778
        %v2338 = vunpack.c.l.b16 %v779
        %v2339 = vunpack.c.h.b16 %v779
        %v2340 = vunpack.c.l.b16 %v780
        %v2341 = vunpack.c.h.b16 %v780
        %v2342 = vunpack.c.l.b16 %v781
        %v2343 = vunpack.c.h.b16 %v781
        %v2344 = vunpack.c.l.b16 %v782
        %v2345 = vunpack.c.h.b16 %v782
        %v2346 = vunpack.c.l.b16 %v783
        %v2347 = vunpack.c.h.b16 %v783
        %v2348 = vunpack.c.l.b16 %v784
        %v2349 = vunpack.c.h.b16 %v784
        %v2350 = vunpack.c.l.b16 %v785
        %v2351 = vunpack.c.h.b16 %v785
        %v2352 = vunpack.c.l.b16 %v786
        %v2353 = vunpack.c.h.b16 %v786
        %v2354 = vunpack.c.l.b16 %v787
        %v2355 = vunpack.c.h.b16 %v787
        %v2356 = vunpack.c.l.b16 %v788
        %v2357 = vunpack.c.h.b16 %v788
        %v2358 = vunpack.c.l.b16 %v789
        %v2359 = vunpack.c.h.b16 %v789
        %v2360 = vunpack.c.l.b16 %v790
        %v2361 = vunpack.c.h.b16 %v790
        %v2362 = vunpack.c.l.b16 %v791
        %v2363 = vunpack.c.h.b16 %v791
        %v2364 = vunpack.c.l.b16 %v792
        %v2365 = vunpack.c.h.b16 %v792
        %v2366 = vunpack.c.l.b16 %v793
        %v2367 = vunpack.c.h.b16 %v793
        %v2368 = vunpack.c.l.b16 %v794
        %v2369 = vunpack.c.h.b16 %v794
        %v2370 = vunpack.c.l.b16 %v795
        %v2371 = vunpack.c.h.b16 %v795
        %v2372 = vunpack.c.l.b16 %v796
        %v2373 = vunpack.c.h.b16 %v796
        %v2374 = vunpack.c.l.b16 %v797
        %v2375 = vunpack.c.h.b16 %v797
        %v2376 = vpack.c.b16 %v1360, %v1352
        %v2377 = vpack.c.b16 %v1361, %v1353
        %v2378 = vpack.c.b16 %v1362, %v1354
        %v2379 = vpack.c.b16 %v1363, %v1355
        %v2380 = vpack.c.b16 %v1364, %v1356
        %v2381 = vpack.c.b16 %v1365, %v1357
        %v2382 = vpack.c.b16 %v1366, %v1358
        %v2383 = vpack.c.b16 %v1367, %v1359
        %v2384 = vpack.c.b16 %v1376, %v1368
        %v2385 = vpack.c.b16 %v1377, %v1369
        %v2386 = vpack.c.b16 %v1378, %v1370
        %v2387 = vpack.c.b16 %v1379, %v1371
        %v2388 = vpack.c.b16 %v1380, %v1372
        %v2389 = vpack.c.b16 %v1381, %v1373
        %v2390 = vpack.c.b16 %v1382, %v1374
        %v2391 = vpack.c.b16 %v1383, %v1375
        %v2392 = vpack.c.b16 %v1392, %v1384
        %v2393 = vpack.c.b16 %v1393, %v1385
        %v2394 = vpack.c.b16 %v1394, %v1386
        %v2395 = vpack.c.b16 %v1395, %v1387
        %v2396 = vpack.c.b16 %v1396, %v1388
        %v2397 = vpack.c.b16 %v1397, %v1389
        %v2398 = vpack.c.b16 %v1398, %v1390
        %v2399 = vpack.c.b16 %v1399, %v1391
        %v2400 = vpack.c.b16 %v1408, %v1400
        %v2401 = vpack.c.b16 %v1409, %v1401
        %v2402 = vpack.c.b16 %v1410, %v1402
        %v2403 = vpack.c.b16 %v1411, %v1403
        %v2404 = vpack.c.b16 %v1412, %v1404
        %v2405 = vpack.c.b16 %v1413, %v1405
        %v2406 = vpack.c.b16 %v1414, %v1406
        %v2407 = vpack.c.b16 %v1415, %v1407
        %v2408 = vpack.c.b16 %v1424, %v1416
        %v2409 = vpack.c.b16 %v1425, %v1417
        %v2410 = vpack.c.b16 %v1426, %v1418
        %v2411 = vpack.c.b16 %v1427, %v1419
        %v2412 = vpack.c.b16 %v1428, %v1420
        %v2413 = vpack.c.b16 %v1429, %v1421
        %v2414 = vpack.c.b16 %v1430, %v1422
        %v2415 = vpack.c.b16 %v1431, %v1423
        %v2416 = vpack.c.b16 %v1440, %v1432
        %v2417 = vpack.c.b16 %v1441, %v1433
        %v2418 = vpack.c.b16 %v1442, %v1434
        %v2419 = vpack.c.b16 %v1443, %v1435
        %v2420 = vpack.c.b16 %v1444, %v1436
        %v2421 = vpack.c.b16 %v1445, %v1437
        %v2422 = vpack.c.b16 %v1446, %v1438
        %v2423 = vpack.c.b16 %v1447, %v1439
        %v2424 = vpack.c.b16 %v1456, %v1448
        %v2425 = vpack.c.b16 %v1457, %v1449
        %v2426 = vpack.c.b16 %v1458, %v1450
        %v2427 = vpack.c.b16 %v1459, %v1451
        %v2428 = vpack.c.b16 %v1460, %v1452
        %v2429 = vpack.c.b16 %v1461, %v1453
        %v2430 = vpack.c.b16 %v1462, %v1454
        %v2431 = vpack.c.b16 %v1463, %v1455
        %v2432 = vpack.c.b16 %v1472, %v1464
        %v2433 = vpack.c.b16 %v1473, %v1465
        %v2434 = vpack.c.b16 %v1474, %v1466
        %v2435 = vpack.c.b16 %v1475, %v1467
        %v2436 = vpack.c.b16 %v1476, %v1468
        %v2437 = vpack.c.b16 %v1477, %v1469
        %v2438 = vpack.c.b16 %v1478, %v1470
        %v2439 = vpack.c.b16 %v1479, %v1471
        %v2440 = vpack.c.b16 %v1488, %v1480
        %v2441 = vpack.c.b16 %v1489, %v1481
        %v2442 = vpack.c.b16 %v1490, %v1482
        %v2443 = vpack.c.b16 %v1491, %v1483
        %v2444 = vpack.c.b16 %v1492, %v1484
        %v2445 = vpack.c.b16 %v1493, %v1485
        %v2446 = vpack.c.b16 %v1494, %v1486
        %v2447 = vpack.c.b16 %v1495, %v1487
        %v2448 = vpack.c.b16 %v1504, %v1496
        %v2449 = vpack.c.b16 %v1505, %v1497
        %v2450 = vpack.c.b16 %v1506, %v1498
        %v2451 = vpack.c.b16 %v1507, %v1499
        %v2452 = vpack.c.b16 %v1508, %v1500
        %v2453 = vpack.c.b16 %v1509, %v1501
        %v2454 = vpack.c.b16 %v1510, %v1502
        %v2455 = vpack.c.b16 %v1511, %v1503
        %v2456 = vpack.c.b16 %v1520, %v1512
        %v2457 = vpack.c.b16 %v1521, %v1513
        %v2458 = vpack.c.b16 %v1522, %v1514
        %v2459 = vpack.c.b16 %v1523, %v1515
        %v2460 = vpack.c.b16 %v1524, %v1516
        %v2461 = vpack.c.b16 %v1525, %v1517
        %v2462 = vpack.c.b16 %v1526, %v1518
        %v2463 = vpack.c.b16 %v1527, %v1519
        %v2464 = vpack.c.b16 %v1536, %v1528
        %v2465 = vpack.c.b16 %v1537, %v1529
        %v2466 = vpack.c.b16 %v1538, %v1530
        %v2467 = vpack.c.b16 %v1539, %v1531
        %v2468 = vpack.c.b16 %v1540, %v1532
        %v2469 = vpack.c.b16 %v1541, %v1533
        %v2470 = vpack.c.b16 %v1542, %v1534
        %v2471 = vpack.c.b16 %v1543, %v1535
        %v2472 = vpack.c.b16 %v1552, %v1544
        %v2473 = vpack.c.b16 %v1553, %v1545
        %v2474 = vpack.c.b16 %v1554, %v1546
        %v2475 = vpack.c.b16 %v1555, %v1547
        %v2476 = vpack.c.b16 %v1556, %v1548
        %v2477 = vpack.c.b16 %v1557, %v1549
        %v2478 = vpack.c.b16 %v1558, %v1550
        %v2479 = vpack.c.b16 %v1559, %v1551
        %v2480 = vpack.c.b16 %v1568, %v1560
        %v2481 = vpack.c.b16 %v1569, %v1561
        %v2482 = vpack.c.b16 %v1570, %v1562
        %v2483 = vpack.c.b16 %v1571, %v1563
        %v2484 = vpack.c.b16 %v1572, %v1564
        %v2485 = vpack.c.b16 %v1573, %v1565
        %v2486 = vpack.c.b16 %v1574, %v1566
        %v2487 = vpack.c.b16 %v1575, %v1567
        %v2488 = vpack.c.b16 %v1584, %v1576
        %v2489 = vpack.c.b16 %v1585, %v1577
        %v2490 = vpack.c.b16 %v1586, %v1578
        %v2491 = vpack.c.b16 %v1587, %v1579
        %v2492 = vpack.c.b16 %v1588, %v1580
        %v2493 = vpack.c.b16 %v1589, %v1581
        %v2494 = vpack.c.b16 %v1590, %v1582
        %v2495 = vpack.c.b16 %v1591, %v1583
        %v2496 = vpack.c.b16 %v1600, %v1592
        %v2497 = vpack.c.b16 %v1601, %v1593
        %v2498 = vpack.c.b16 %v1602, %v1594
        %v2499 = vpack.c.b16 %v1603, %v1595
        %v2500 = vpack.c.b16 %v1604, %v1596
        %v2501 = vpack.c.b16 %v1605, %v1597
        %v2502 = vpack.c.b16 %v1606, %v1598
        %v2503 = vpack.c.b16 %v1607, %v1599
        %v2504 = vpack.c.b16 %v1616, %v1608
        %v2505 = vpack.c.b16 %v1617, %v1609
        %v2506 = vpack.c.b16 %v1618, %v1610
        %v2507 = vpack.c.b16 %v1619, %v1611
        %v2508 = vpack.c.b16 %v1620, %v1612
        %v2509 = vpack.c.b16 %v1621, %v1613
        %v2510 = vpack.c.b16 %v1622, %v1614
        %v2511 = vpack.c.b16 %v1623, %v1615
        %v2512 = vpack.c.b16 %v1632, %v1624
        %v2513 = vpack.c.b16 %v1633, %v1625
        %v2514 = vpack.c.b16 %v1634, %v1626
        %v2515 = vpack.c.b16 %v1635, %v1627
        %v2516 = vpack.c.b16 %v1636, %v1628
        %v2517 = vpack.c.b16 %v1637, %v1629
        %v2518 = vpack.c.b16 %v1638, %v1630
        %v2519 = vpack.c.b16 %v1639, %v1631
        %v2520 = vpack.c.b16 %v1648, %v1640
        %v2521 = vpack.c.b16 %v1649, %v1641
        %v2522 = vpack.c.b16 %v1650, %v1642
        %v2523 = vpack.c.b16 %v1651, %v1643
        %v2524 = vpack.c.b16 %v1652, %v1644
        %v2525 = vpack.c.b16 %v1653, %v1645
        %v2526 = vpack.c.b16 %v1654, %v1646
        %v2527 = vpack.c.b16 %v1655, %v1647
        %v2528 = vpack.c.b16 %v1664, %v1656
        %v2529 = vpack.c.b16 %v1665, %v1657
        %v2530 = vpack.c.b16 %v1666, %v1658
        %v2531 = vpack.c.b16 %v1667, %v1659
        %v2532 = vpack.c.b16 %v1668, %v1660
        %v2533 = vpack.c.b16 %v1669, %v1661
        %v2534 = vpack.c.b16 %v1670, %v1662
        %v2535 = vpack.c.b16 %v1671, %v1663
        %v2536 = vpack.c.b16 %v1680, %v1672
        %v2537 = vpack.c.b16 %v1681, %v1673
        %v2538 = vpack.c.b16 %v1682, %v1674
        %v2539 = vpack.c.b16 %v1683, %v1675
        %v2540 = vpack.c.b16 %v1684, %v1676
        %v2541 = vpack.c.b16 %v1685, %v1677
        %v2542 = vpack.c.b16 %v1686, %v1678
        %v2543 = vpack.c.b16 %v1687, %v1679
        %v2544 = vpack.c.b16 %v1696, %v1688
        %v2545 = vpack.c.b16 %v1697, %v1689
        %v2546 = vpack.c.b16 %v1698, %v1690
        %v2547 = vpack.c.b16 %v1699, %v1691
        %v2548 = vpack.c.b16 %v1700, %v1692
        %v2549 = vpack.c.b16 %v1701, %v1693
        %v2550 = vpack.c.b16 %v1702, %v1694
        %v2551 = vpack.c.b16 %v1703, %v1695
        %v2552 = vpack.c.b16 %v1712, %v1704
        %v2553 = vpack.c.b16 %v1713, %v1705
        %v2554 = vpack.c.b16 %v1714, %v1706
        %v2555 = vpack.c.b16 %v1715, %v1707
        %v2556 = vpack.c.b16 %v1716, %v1708
        %v2557 = vpack.c.b16 %v1717, %v1709
        %v2558 = vpack.c.b16 %v1718, %v1710
        %v2559 = vpack.c.b16 %v1719, %v1711
        %v2560 = vpack.c.b16 %v1728, %v1720
        %v2561 = vpack.c.b16 %v1729, %v1721
        %v2562 = vpack.c.b16 %v1730, %v1722
        %v2563 = vpack.c.b16 %v1731, %v1723
        %v2564 = vpack.c.b16 %v1732, %v1724
        %v2565 = vpack.c.b16 %v1733, %v1725
        %v2566 = vpack.c.b16 %v1734, %v1726
        %v2567 = vpack.c.b16 %v1735, %v1727
        %v2568 = vpack.c.b16 %v1744, %v1736
        %v2569 = vpack.c.b16 %v1745, %v1737
        %v2570 = vpack.c.b16 %v1746, %v1738
        %v2571 = vpack.c.b16 %v1747, %v1739
        %v2572 = vpack.c.b16 %v1748, %v1740
        %v2573 = vpack.c.b16 %v1749, %v1741
        %v2574 = vpack.c.b16 %v1750, %v1742
        %v2575 = vpack.c.b16 %v1751, %v1743
        %v2576 = vpack.c.b16 %v1760, %v1752
        %v2577 = vpack.c.b16 %v1761, %v1753
        %v2578 = vpack.c.b16 %v1762, %v1754
        %v2579 = vpack.c.b16 %v1763, %v1755
        %v2580 = vpack.c.b16 %v1764, %v1756
        %v2581 = vpack.c.b16 %v1765, %v1757
        %v2582 = vpack.c.b16 %v1766, %v1758
        %v2583 = vpack.c.b16 %v1767, %v1759
        %v2584 = vpack.c.b16 %v1776, %v1768
        %v2585 = vpack.c.b16 %v1777, %v1769
        %v2586 = vpack.c.b16 %v1778, %v1770
        %v2587 = vpack.c.b16 %v1779, %v1771
        %v2588 = vpack.c.b16 %v1780, %v1772
        %v2589 = vpack.c.b16 %v1781, %v1773
        %v2590 = vpack.c.b16 %v1782, %v1774
        %v2591 = vpack.c.b16 %v1783, %v1775
        %v2592 = vpack.c.b16 %v1792, %v1784
        %v2593 = vpack.c.b16 %v1793, %v1785
        %v2594 = vpack.c.b16 %v1794, %v1786
        %v2595 = vpack.c.b16 %v1795, %v1787
        %v2596 = vpack.c.b16 %v1796, %v1788
        %v2597 = vpack.c.b16 %v1797, %v1789
        %v2598 = vpack.c.b16 %v1798, %v1790
        %v2599 = vpack.c.b16 %v1799, %v1791
        %v2600 = vpack.c.b16 %v1808, %v1800
        %v2601 = vpack.c.b16 %v1809, %v1801
        %v2602 = vpack.c.b16 %v1810, %v1802
        %v2603 = vpack.c.b16 %v1811, %v1803
        %v2604 = vpack.c.b16 %v1812, %v1804
        %v2605 = vpack.c.b16 %v1813, %v1805
        %v2606 = vpack.c.b16 %v1814, %v1806
        %v2607 = vpack.c.b16 %v1815, %v1807
        %v2608 = vpack.c.b16 %v1824, %v1816
        %v2609 = vpack.c.b16 %v1825, %v1817
        %v2610 = vpack.c.b16 %v1826, %v1818
        %v2611 = vpack.c.b16 %v1827, %v1819
        %v2612 = vpack.c.b16 %v1828, %v1820
        %v2613 = vpack.c.b16 %v1829, %v1821
        %v2614 = vpack.c.b16 %v1830, %v1822
        %v2615 = vpack.c.b16 %v1831, %v1823
        %v2616 = vpack.c.b16 %v1840, %v1832
        %v2617 = vpack.c.b16 %v1841, %v1833
        %v2618 = vpack.c.b16 %v1842, %v1834
        %v2619 = vpack.c.b16 %v1843, %v1835
        %v2620 = vpack.c.b16 %v1844, %v1836
        %v2621 = vpack.c.b16 %v1845, %v1837
        %v2622 = vpack.c.b16 %v1846, %v1838
        %v2623 = vpack.c.b16 %v1847, %v1839
        %v2624 = vpack.c.b16 %v1856, %v1848
        %v2625 = vpack.c.b16 %v1857, %v1849
        %v2626 = vpack.c.b16 %v1858, %v1850
        %v2627 = vpack.c.b16 %v1859, %v1851
        %v2628 = vpack.c.b16 %v1860, %v1852
        %v2629 = vpack.c.b16 %v1861, %v1853
        %v2630 = vpack.c.b16 %v1862, %v1854
        %v2631 = vpack.c.b16 %v1863, %v1855
        %v2632 = vpack.c.b16 %v1872, %v1864
        %v2633 = vpack.c.b16 %v1873, %v1865
        %v2634 = vpack.c.b16 %v1874, %v1866
        %v2635 = vpack.c.b16 %v1875, %v1867
        %v2636 = vpack.c.b16 %v1876, %v1868
        %v2637 = vpack.c.b16 %v1877, %v1869
        %v2638 = vpack.c.b16 %v1878, %v1870
        %v2639 = vpack.c.b16 %v1879, %v1871
        %v2640 = vpack.c.b16 %v1888, %v1880
        %v2641 = vpack.c.b16 %v1889, %v1881
        %v2642 = vpack.c.b16 %v1890, %v1882
        %v2643 = vpack.c.b16 %v1891, %v1883
        %v2644 = vpack.c.b16 %v1892, %v1884
        %v2645 = vpack.c.b16 %v1893, %v1885
        %v2646 = vpack.c.b16 %v1894, %v1886
        %v2647 = vpack.c.b16 %v1895, %v1887
        %v2648 = vpack.c.b16 %v1904, %v1896
        %v2649 = vpack.c.b16 %v1905, %v1897
        %v2650 = vpack.c.b16 %v1906, %v1898
        %v2651 = vpack.c.b16 %v1907, %v1899
        %v2652 = vpack.c.b16 %v1908, %v1900
        %v2653 = vpack.c.b16 %v1909, %v1901
        %v2654 = vpack.c.b16 %v1910, %v1902
        %v2655 = vpack.c.b16 %v1911, %v1903
        %v2656 = vpack.c.b16 %v1920, %v1912
        %v2657 = vpack.c.b16 %v1921, %v1913
        %v2658 = vpack.c.b16 %v1922, %v1914
        %v2659 = vpack.c.b16 %v1923, %v1915
        %v2660 = vpack.c.b16 %v1924, %v1916
        %v2661 = vpack.c.b16 %v1925, %v1917
        %v2662 = vpack.c.b16 %v1926, %v1918
        %v2663 = vpack.c.b16 %v1927, %v1919
        %v2664 = vpack.c.b16 %v1936, %v1928
        %v2665 = vpack.c.b16 %v1937, %v1929
        %v2666 = vpack.c.b16 %v1938, %v1930
        %v2667 = vpack.c.b16 %v1939, %v1931
        %v2668 = vpack.c.b16 %v1940, %v1932
        %v2669 = vpack.c.b16 %v1941, %v1933
        %v2670 = vpack.c.b16 %v1942, %v1934
        %v2671 = vpack.c.b16 %v1943, %v1935
        %v2672 = vpack.c.b16 %v1952, %v1944
        %v2673 = vpack.c.b16 %v1953, %v1945
        %v2674 = vpack.c.b16 %v1954, %v1946
        %v2675 = vpack.c.b16 %v1955, %v1947
        %v2676 = vpack.c.b16 %v1956, %v1948
        %v2677 = vpack.c.b16 %v1957, %v1949
        %v2678 = vpack.c.b16 %v1958, %v1950
        %v2679 = vpack.c.b16 %v1959, %v1951
        %v2680 = vpack.c.b16 %v1968, %v1960
        %v2681 = vpack.c.b16 %v1969, %v1961
        %v2682 = vpack.c.b16 %v1970, %v1962
        %v2683 = vpack.c.b16 %v1971, %v1963
        %v2684 = vpack.c.b16 %v1972, %v1964
        %v2685 = vpack.c.b16 %v1973, %v1965
        %v2686 = vpack.c.b16 %v1974, %v1966
        %v2687 = vpack.c.b16 %v1975, %v1967
        %v2688 = vpack.c.b16 %v1984, %v1976
        %v2689 = vpack.c.b16 %v1985, %v1977
        %v2690 = vpack.c.b16 %v1986, %v1978
        %v2691 = vpack.c.b16 %v1987, %v1979
        %v2692 = vpack.c.b16 %v1988, %v1980
        %v2693 = vpack.c.b16 %v1989, %v1981
        %v2694 = vpack.c.b16 %v1990, %v1982
        %v2695 = vpack.c.b16 %v1991, %v1983
        %v2696 = vpack.c.b16 %v2000, %v1992
        %v2697 = vpack.c.b16 %v2001, %v1993
        %v2698 = vpack.c.b16 %v2002, %v1994
        %v2699 = vpack.c.b16 %v2003, %v1995
        %v2700 = vpack.c.b16 %v2004, %v1996
        %v2701 = vpack.c.b16 %v2005, %v1997
        %v2702 = vpack.c.b16 %v2006, %v1998
        %v2703 = vpack.c.b16 %v2007, %v1999
        %v2704 = vpack.c.b16 %v2016, %v2008
        %v2705 = vpack.c.b16 %v2017, %v2009
        %v2706 = vpack.c.b16 %v2018, %v2010
        %v2707 = vpack.c.b16 %v2019, %v2011
        %v2708 = vpack.c.b16 %v2020, %v2012
        %v2709 = vpack.c.b16 %v2021, %v2013
        %v2710 = vpack.c.b16 %v2022, %v2014
        %v2711 = vpack.c.b16 %v2023, %v2015
        %v2712 = vpack.c.b16 %v2032, %v2024
        %v2713 = vpack.c.b16 %v2033, %v2025
        %v2714 = vpack.c.b16 %v2034, %v2026
        %v2715 = vpack.c.b16 %v2035, %v2027
        %v2716 = vpack.c.b16 %v2036, %v2028
        %v2717 = vpack.c.b16 %v2037, %v2029
        %v2718 = vpack.c.b16 %v2038, %v2030
        %v2719 = vpack.c.b16 %v2039, %v2031
        %v2720 = vpack.c.b16 %v2048, %v2040
        %v2721 = vpack.c.b16 %v2049, %v2041
        %v2722 = vpack.c.b16 %v2050, %v2042
        %v2723 = vpack.c.b16 %v2051, %v2043
        %v2724 = vpack.c.b16 %v2052, %v2044
        %v2725 = vpack.c.b16 %v2053, %v2045
        %v2726 = vpack.c.b16 %v2054, %v2046
        %v2727 = vpack.c.b16 %v2055, %v2047
        %v2728 = vpack.c.b16 %v2064, %v2056
        %v2729 = vpack.c.b16 %v2065, %v2057
        %v2730 = vpack.c.b16 %v2066, %v2058
        %v2731 = vpack.c.b16 %v2067, %v2059
        %v2732 = vpack.c.b16 %v2068, %v2060
        %v2733 = vpack.c.b16 %v2069, %v2061
        %v2734 = vpack.c.b16 %v2070, %v2062
        %v2735 = vpack.c.b16 %v2071, %v2063
        %v2736 = vpack.c.b16 %v2080, %v2072
        %v2737 = vpack.c.b16 %v2081, %v2073
        %v2738 = vpack.c.b16 %v2082, %v2074
        %v2739 = vpack.c.b16 %v2083, %v2075
        %v2740 = vpack.c.b16 %v2084, %v2076
        %v2741 = vpack.c.b16 %v2085, %v2077
        %v2742 = vpack.c.b16 %v2086, %v2078
        %v2743 = vpack.c.b16 %v2087, %v2079
        %v2744 = vpack.c.b16 %v2096, %v2088
        %v2745 = vpack.c.b16 %v2097, %v2089
        %v2746 = vpack.c.b16 %v2098, %v2090
        %v2747 = vpack.c.b16 %v2099, %v2091
        %v2748 = vpack.c.b16 %v2100, %v2092
        %v2749 = vpack.c.b16 %v2101, %v2093
        %v2750 = vpack.c.b16 %v2102, %v2094
        %v2751 = vpack.c.b16 %v2103, %v2095
        %v2752 = vpack.c.b16 %v2112, %v2104
        %v2753 = vpack.c.b16 %v2113, %v2105
        %v2754 = vpack.c.b16 %v2114, %v2106
        %v2755 = vpack.c.b16 %v2115, %v2107
        %v2756 = vpack.c.b16 %v2116, %v2108
        %v2757 = vpack.c.b16 %v2117, %v2109
        %v2758 = vpack.c.b16 %v2118, %v2110
        %v2759 = vpack.c.b16 %v2119, %v2111
        %v2760 = vpack.c.b16 %v2128, %v2120
        %v2761 = vpack.c.b16 %v2129, %v2121
        %v2762 = vpack.c.b16 %v2130, %v2122
        %v2763 = vpack.c.b16 %v2131, %v2123
        %v2764 = vpack.c.b16 %v2132, %v2124
        %v2765 = vpack.c.b16 %v2133, %v2125
        %v2766 = vpack.c.b16 %v2134, %v2126
        %v2767 = vpack.c.b16 %v2135, %v2127
        %v2768 = vpack.c.b16 %v2144, %v2136
        %v2769 = vpack.c.b16 %v2145, %v2137
        %v2770 = vpack.c.b16 %v2146, %v2138
        %v2771 = vpack.c.b16 %v2147, %v2139
        %v2772 = vpack.c.b16 %v2148, %v2140
        %v2773 = vpack.c.b16 %v2149, %v2141
        %v2774 = vpack.c.b16 %v2150, %v2142
        %v2775 = vpack.c.b16 %v2151, %v2143
        %v2776 = vpack.c.b16 %v2160, %v2152
        %v2777 = vpack.c.b16 %v2161, %v2153
        %v2778 = vpack.c.b16 %v2162, %v2154
        %v2779 = vpack.c.b16 %v2163, %v2155
        %v2780 = vpack.c.b16 %v2164, %v2156
        %v2781 = vpack.c.b16 %v2165, %v2157
        %v2782 = vpack.c.b16 %v2166, %v2158
        %v2783 = vpack.c.b16 %v2167, %v2159
        %v2784 = vpack.c.b16 %v2176, %v2168
        %v2785 = vpack.c.b16 %v2177, %v2169
        %v2786 = vpack.c.b16 %v2178, %v2170
        %v2787 = vpack.c.b16 %v2179, %v2171
        %v2788 = vpack.c.b16 %v2180, %v2172
        %v2789 = vpack.c.b16 %v2181, %v2173
        %v2790 = vpack.c.b16 %v2182, %v2174
        %v2791 = vpack.c.b16 %v2183, %v2175
        %v2792 = vpack.c.b16 %v2192, %v2184
        %v2793 = vpack.c.b16 %v2193, %v2185
        %v2794 = vpack.c.b16 %v2194, %v2186
        %v2795 = vpack.c.b16 %v2195, %v2187
        %v2796 = vpack.c.b16 %v2196, %v2188
        %v2797 = vpack.c.b16 %v2197, %v2189
        %v2798 = vpack.c.b16 %v2198, %v2190
        %v2799 = vpack.c.b16 %v2199, %v2191
        %v2800 = vpack.c.b16 %v2208, %v2200
        %v2801 = vpack.c.b16 %v2209, %v2201
        %v2802 = vpack.c.b16 %v2210, %v2202
        %v2803 = vpack.c.b16 %v2211, %v2203
        %v2804 = vpack.c.b16 %v2212, %v2204
        %v2805 = vpack.c.b16 %v2213, %v2205
        %v2806 = vpack.c.b16 %v2214, %v2206
        %v2807 = vpack.c.b16 %v2215, %v2207
        %v2808 = vpack.c.b16 %v2224, %v2216
        %v2809 = vpack.c.b16 %v2225, %v2217
        %v2810 = vpack.c.b16 %v2226, %v2218
        %v2811 = vpack.c.b16 %v2227, %v2219
        %v2812 = vpack.c.b16 %v2228, %v2220
        %v2813 = vpack.c.b16 %v2229, %v2221
        %v2814 = vpack.c.b16 %v2230, %v2222
        %v2815 = vpack.c.b16 %v2231, %v2223
        %v2816 = vpack.c.b16 %v2240, %v2232
        %v2817 = vpack.c.b16 %v2241, %v2233
        %v2818 = vpack.c.b16 %v2242, %v2234
        %v2819 = vpack.c.b16 %v2243, %v2235
        %v2820 = vpack.c.b16 %v2244, %v2236
        %v2821 = vpack.c.b16 %v2245, %v2237
        %v2822 = vpack.c.b16 %v2246, %v2238
        %v2823 = vpack.c.b16 %v2247, %v2239
        %v2824 = vpack.c.b16 %v2256, %v2248
        %v2825 = vpack.c.b16 %v2257, %v2249
        %v2826 = vpack.c.b16 %v2258, %v2250
        %v2827 = vpack.c.b16 %v2259, %v2251
        %v2828 = vpack.c.b16 %v2260, %v2252
        %v2829 = vpack.c.b16 %v2261, %v2253
        %v2830 = vpack.c.b16 %v2262, %v2254
        %v2831 = vpack.c.b16 %v2263, %v2255
        %v2832 = vpack.c.b16 %v2272, %v2264
        %v2833 = vpack.c.b16 %v2273, %v2265
        %v2834 = vpack.c.b16 %v2274, %v2266
        %v2835 = vpack.c.b16 %v2275, %v2267
        %v2836 = vpack.c.b16 %v2276, %v2268
        %v2837 = vpack.c.b16 %v2277, %v2269
        %v2838 = vpack.c.b16 %v2278, %v2270
        %v2839 = vpack.c.b16 %v2279, %v2271
        %v2840 = vpack.c.b16 %v2288, %v2280
        %v2841 = vpack.c.b16 %v2289, %v2281
        %v2842 = vpack.c.b16 %v2290, %v2282
        %v2843 = vpack.c.b16 %v2291, %v2283
        %v2844 = vpack.c.b16 %v2292, %v2284
        %v2845 = vpack.c.b16 %v2293, %v2285
        %v2846 = vpack.c.b16 %v2294, %v2286
        %v2847 = vpack.c.b16 %v2295, %v2287
        %v2848 = vpack.c.b16 %v2304, %v2296
        %v2849 = vpack.c.b16 %v2305, %v2297
        %v2850 = vpack.c.b16 %v2306, %v2298
        %v2851 = vpack.c.b16 %v2307, %v2299
        %v2852 = vpack.c.b16 %v2308, %v2300
        %v2853 = vpack.c.b16 %v2309, %v2301
        %v2854 = vpack.c.b16 %v2310, %v2302
        %v2855 = vpack.c.b16 %v2311, %v2303
        %v2856 = vpack.c.b16 %v2320, %v2312
        %v2857 = vpack.c.b16 %v2321, %v2313
        %v2858 = vpack.c.b16 %v2322, %v2314
        %v2859 = vpack.c.b16 %v2323, %v2315
        %v2860 = vpack.c.b16 %v2324, %v2316
        %v2861 = vpack.c.b16 %v2325, %v2317
        %v2862 = vpack.c.b16 %v2326, %v2318
        %v2863 = vpack.c.b16 %v2327, %v2319
        %v2864 = vpack.c.b16 %v2336, %v2328
        %v2865 = vpack.c.b16 %v2337, %v2329
        %v2866 = vpack.c.b16 %v2338, %v2330
        %v2867 = vpack.c.b16 %v2339, %v2331
        %v2868 = vpack.c.b16 %v2340, %v2332
        %v2869 = vpack.c.b16 %v2341, %v2333
        %v2870 = vpack.c.b16 %v2342, %v2334
        %v2871 = vpack.c.b16 %v2343, %v2335
        %v2872 = vpack.c.b16 %v2352, %v2344
        %v2873 = vpack.c.b16 %v2353, %v2345
        %v2874 = vpack.c.b16 %v2354, %v2346
        %v2875 = vpack.c.b16 %v2355, %v2347
        %v2876 = vpack.c.b16 %v2356, %v2348
        %v2877 = vpack.c.b16 %v2357, %v2349
        %v2878 = vpack.c.b16 %v2358, %v2350
        %v2879 = vpack.c.b16 %v2359, %v2351
        %v2880 = vpack.c.b16 %v2368, %v2360
        %v2881 = vpack.c.b16 %v2369, %v2361
        %v2882 = vpack.c.b16 %v2370, %v2362
        %v2883 = vpack.c.b16 %v2371, %v2363
        %v2884 = vpack.c.b16 %v2372, %v2364
        %v2885 = vpack.c.b16 %v2373, %v2365
        %v2886 = vpack.c.b16 %v2374, %v2366
        %v2887 = vpack.c.b16 %v2375, %v2367
        %3400 = vmatprep.subr.bf16.mxu0 %v2433
        %3401 = vmatpush1.bf16.msra.mxu0 %v2432
        %3402 = vmatprep.subr.bf16.mxu0 %v2425
        %3403 = vmatpush1.bf16.msra.mxu0 %v2424
        %3404 = vmatprep.subr.bf16.mxu0 %v2417
        %3405 = vmatpush1.bf16.msra.mxu0 %v2416
        %3406 = vmatprep.subr.bf16.mxu0 %v2409
        %3407 = vmatpush1.bf16.msra.mxu0 %v2408
        %3408 = vmatprep.subr.bf16.mxu0 %v2401
        %3409 = vmatpush1.bf16.msra.mxu0 %v2400
        %3410 = vmatprep.subr.bf16.mxu0 %v2393
        %3411 = vmatpush1.bf16.msra.mxu0 %v2392
        %3412 = vmatprep.subr.bf16.mxu0 %v2385
        %3413 = vmatpush1.bf16.msra.mxu0 %v2384
        %3414 = vmatprep.subr.bf16.mxu0 %v2377
        %3415 = vmatpush1.bf16.msra.mxu0 %v2376
        %3416 = vmatprep.subr.bf16.mxu0 %v2497
        %3417 = vmatpush2.bf16.msra.mxu0 %v2496
        %3418 = vmatprep.subr.bf16.mxu0 %v2489
        %3419 = vmatpush2.bf16.msra.mxu0 %v2488
        %3420 = vmatprep.subr.bf16.mxu0 %v2481
        %3421 = vmatpush2.bf16.msra.mxu0 %v2480
        %3422 = vmatprep.subr.bf16.mxu0 %v2473
        %3423 = vmatpush2.bf16.msra.mxu0 %v2472
        %3424 = vmatprep.subr.bf16.mxu0 %v2465
        %3425 = vmatpush2.bf16.msra.mxu0 %v2464
        %3426 = vmatprep.subr.bf16.mxu0 %v2457
        %3427 = vmatpush2.bf16.msra.mxu0 %v2456
        %3428 = vmatprep.subr.bf16.mxu0 %v2449
        %3429 = vmatpush2.bf16.msra.mxu0 %v2448
        %3430 = vmatprep.subr.bf16.mxu0 %v2441
        %3431 = vmatpush2.bf16.msra.mxu0 %v2440
        %3432 = vmatprep.mubr.bf16.mxu0 %v279
        %3433 = vmatmul.mubr.bf16.gmra.mxu0 %v278
        %v3434 = vpop.f32.mrf.mxu0
        %v3435 = vadd.f32 %v803, %v3434
        %v3436 = vpop.f32.mrf.mxu0
        %v3437 = vadd.f32 %v807, %v3436
        %v3438 = vpop.f32.mrf.mxu0
        %v3439 = vpop.f32.mrf.mxu0
        %3440 = vdwg.mxu0
        %3441 = vmatprep.subr.bf16.mxu0 %v2561
        %3442 = vmatpush1.bf16.msra.mxu0 %v2560
        %3443 = vmatprep.subr.bf16.mxu0 %v2553
        %3444 = vmatpush1.bf16.msra.mxu0 %v2552
        %3445 = vmatprep.subr.bf16.mxu0 %v2545
        %3446 = vmatpush1.bf16.msra.mxu0 %v2544
        %3447 = vmatprep.subr.bf16.mxu0 %v2537
        %3448 = vmatpush1.bf16.msra.mxu0 %v2536
        %3449 = vmatprep.subr.bf16.mxu0 %v2529
        %3450 = vmatpush1.bf16.msra.mxu0 %v2528
        %3451 = vmatprep.subr.bf16.mxu0 %v2521
        %3452 = vmatpush1.bf16.msra.mxu0 %v2520
        %3453 = vmatprep.subr.bf16.mxu0 %v2513
        %3454 = vmatpush1.bf16.msra.mxu0 %v2512
        %3455 = vmatprep.subr.bf16.mxu0 %v2505
        %3456 = vmatpush1.bf16.msra.mxu0 %v2504
        %3457 = vmatprep.subr.bf16.mxu0 %v2625
        %3458 = vmatpush2.bf16.msra.mxu0 %v2624
        %3459 = vmatprep.subr.bf16.mxu0 %v2617
        %3460 = vmatpush2.bf16.msra.mxu0 %v2616
        %3461 = vmatprep.subr.bf16.mxu0 %v2609
        %3462 = vmatpush2.bf16.msra.mxu0 %v2608
        %3463 = vmatprep.subr.bf16.mxu0 %v2601
        %3464 = vmatpush2.bf16.msra.mxu0 %v2600
        %3465 = vmatprep.subr.bf16.mxu0 %v2593
        %3466 = vmatpush2.bf16.msra.mxu0 %v2592
        %3467 = vmatprep.subr.bf16.mxu0 %v2585
        %3468 = vmatpush2.bf16.msra.mxu0 %v2584
        %3469 = vmatprep.subr.bf16.mxu0 %v2577
        %3470 = vmatpush2.bf16.msra.mxu0 %v2576
        %3471 = vmatprep.subr.bf16.mxu0 %v2569
        %3472 = vmatpush2.bf16.msra.mxu0 %v2568
        %3473 = vmatprep.mubr.bf16.mxu0 %v281
        %3474 = vmatmul.mubr.bf16.gmra.mxu0 %v280
        %v3475 = vpop.f32.mrf.mxu0
        %v3476 = vadd.f32 %v3435, %v3475
        %v3477 = vpop.f32.mrf.mxu0
        %v3478 = vadd.f32 %v3437, %v3477
        %v3479 = vpop.f32.mrf.mxu0
        %v3480 = vpop.f32.mrf.mxu0
        %3481 = vdwg.mxu0
        %3482 = vmatprep.subr.bf16.mxu0 %v2689
        %3483 = vmatpush1.bf16.msra.mxu0 %v2688
        %3484 = vmatprep.subr.bf16.mxu0 %v2681
        %3485 = vmatpush1.bf16.msra.mxu0 %v2680
        %3486 = vmatprep.subr.bf16.mxu0 %v2673
        %3487 = vmatpush1.bf16.msra.mxu0 %v2672
        %3488 = vmatprep.subr.bf16.mxu0 %v2665
        %3489 = vmatpush1.bf16.msra.mxu0 %v2664
        %3490 = vmatprep.subr.bf16.mxu0 %v2657
        %3491 = vmatpush1.bf16.msra.mxu0 %v2656
        %3492 = vmatprep.subr.bf16.mxu0 %v2649
        %3493 = vmatpush1.bf16.msra.mxu0 %v2648
        %3494 = vmatprep.subr.bf16.mxu0 %v2641
        %3495 = vmatpush1.bf16.msra.mxu0 %v2640
        %3496 = vmatprep.subr.bf16.mxu0 %v2633
        %3497 = vmatpush1.bf16.msra.mxu0 %v2632
        %3498 = vmatprep.subr.bf16.mxu0 %v2753
        %3499 = vmatpush2.bf16.msra.mxu0 %v2752
        %3500 = vmatprep.subr.bf16.mxu0 %v2745
        %3501 = vmatpush2.bf16.msra.mxu0 %v2744
        %3502 = vmatprep.subr.bf16.mxu0 %v2737
        %3503 = vmatpush2.bf16.msra.mxu0 %v2736
        %3504 = vmatprep.subr.bf16.mxu0 %v2729
        %3505 = vmatpush2.bf16.msra.mxu0 %v2728
        %3506 = vmatprep.subr.bf16.mxu0 %v2721
        %3507 = vmatpush2.bf16.msra.mxu0 %v2720
        %3508 = vmatprep.subr.bf16.mxu0 %v2713
        %3509 = vmatpush2.bf16.msra.mxu0 %v2712
        %3510 = vmatprep.subr.bf16.mxu0 %v2705
        %3511 = vmatpush2.bf16.msra.mxu0 %v2704
        %3512 = vmatprep.subr.bf16.mxu0 %v2697
        %3513 = vmatpush2.bf16.msra.mxu0 %v2696
        %3514 = vmatprep.mubr.bf16.mxu0 %v283
        %3515 = vmatmul.mubr.bf16.gmra.mxu0 %v282
        %v3516 = vpop.f32.mrf.mxu0
        %v3517 = vadd.f32 %v3476, %v3516
        %v3518 = vpop.f32.mrf.mxu0
        %v3519 = vadd.f32 %v3478, %v3518
        %v3520 = vpop.f32.mrf.mxu0
        %v3521 = vpop.f32.mrf.mxu0
        %3522 = vdwg.mxu0
        %3523 = vmatprep.subr.bf16.mxu0 %v2817
        %3524 = vmatpush1.bf16.msra.mxu0 %v2816
        %3525 = vmatprep.subr.bf16.mxu0 %v2809
        %3526 = vmatpush1.bf16.msra.mxu0 %v2808
        %3527 = vmatprep.subr.bf16.mxu0 %v2801
        %3528 = vmatpush1.bf16.msra.mxu0 %v2800
        %3529 = vmatprep.subr.bf16.mxu0 %v2793
        %3530 = vmatpush1.bf16.msra.mxu0 %v2792
        %3531 = vmatprep.subr.bf16.mxu0 %v2785
        %3532 = vmatpush1.bf16.msra.mxu0 %v2784
        %3533 = vmatprep.subr.bf16.mxu0 %v2777
        %3534 = vmatpush1.bf16.msra.mxu0 %v2776
        %3535 = vmatprep.subr.bf16.mxu0 %v2769
        %3536 = vmatpush1.bf16.msra.mxu0 %v2768
        %3537 = vmatprep.subr.bf16.mxu0 %v2761
        %3538 = vmatpush1.bf16.msra.mxu0 %v2760
        %3539 = vmatprep.subr.bf16.mxu0 %v2881
        %3540 = vmatpush2.bf16.msra.mxu0 %v2880
        %3541 = vmatprep.subr.bf16.mxu0 %v2873
        %3542 = vmatpush2.bf16.msra.mxu0 %v2872
        %3543 = vmatprep.subr.bf16.mxu0 %v2865
        %3544 = vmatpush2.bf16.msra.mxu0 %v2864
        %3545 = vmatprep.subr.bf16.mxu0 %v2857
        %3546 = vmatpush2.bf16.msra.mxu0 %v2856
        %3547 = vmatprep.subr.bf16.mxu0 %v2849
        %3548 = vmatpush2.bf16.msra.mxu0 %v2848
        %3549 = vmatprep.subr.bf16.mxu0 %v2841
        %3550 = vmatpush2.bf16.msra.mxu0 %v2840
        %3551 = vmatprep.subr.bf16.mxu0 %v2833
        %3552 = vmatpush2.bf16.msra.mxu0 %v2832
        %3553 = vmatprep.subr.bf16.mxu0 %v2825
        %3554 = vmatpush2.bf16.msra.mxu0 %v2824
        %3555 = vmatprep.mubr.bf16.mxu0 %v285
        %3556 = vmatmul.mubr.bf16.gmra.mxu0 %v284
        %v3557 = vpop.f32.mrf.mxu0
        %v3558 = vadd.f32 %v3517, %v3557
        %v3559 = vpop.f32.mrf.mxu0
        %v3560 = vadd.f32 %v3519, %v3559
        %v3561 = vpop.f32.mrf.mxu0
        %v3562 = vpop.f32.mrf.mxu0
        %3563 = vdwg.mxu0
        %3564 = vmatprep.subr.bf16.mxu0 %v2435
        %3565 = vmatpush1.bf16.msra.mxu0 %v2434
        %3566 = vmatprep.subr.bf16.mxu0 %v2427
        %3567 = vmatpush1.bf16.msra.mxu0 %v2426
        %3568 = vmatprep.subr.bf16.mxu0 %v2419
        %3569 = vmatpush1.bf16.msra.mxu0 %v2418
        %3570 = vmatprep.subr.bf16.mxu0 %v2411
        %3571 = vmatpush1.bf16.msra.mxu0 %v2410
        %3572 = vmatprep.subr.bf16.mxu0 %v2403
        %3573 = vmatpush1.bf16.msra.mxu0 %v2402
        %3574 = vmatprep.subr.bf16.mxu0 %v2395
        %3575 = vmatpush1.bf16.msra.mxu0 %v2394
        %3576 = vmatprep.subr.bf16.mxu0 %v2387
        %3577 = vmatpush1.bf16.msra.mxu0 %v2386
        %3578 = vmatprep.subr.bf16.mxu0 %v2379
        %3579 = vmatpush1.bf16.msra.mxu0 %v2378
        %3580 = vmatprep.subr.bf16.mxu0 %v2499
        %3581 = vmatpush2.bf16.msra.mxu0 %v2498
        %3582 = vmatprep.subr.bf16.mxu0 %v2491
        %3583 = vmatpush2.bf16.msra.mxu0 %v2490
        %3584 = vmatprep.subr.bf16.mxu0 %v2483
        %3585 = vmatpush2.bf16.msra.mxu0 %v2482
        %3586 = vmatprep.subr.bf16.mxu0 %v2475
        %3587 = vmatpush2.bf16.msra.mxu0 %v2474
        %3588 = vmatprep.subr.bf16.mxu0 %v2467
        %3589 = vmatpush2.bf16.msra.mxu0 %v2466
        %3590 = vmatprep.subr.bf16.mxu0 %v2459
        %3591 = vmatpush2.bf16.msra.mxu0 %v2458
        %3592 = vmatprep.subr.bf16.mxu0 %v2451
        %3593 = vmatpush2.bf16.msra.mxu0 %v2450
        %3594 = vmatprep.subr.bf16.mxu0 %v2443
        %3595 = vmatpush2.bf16.msra.mxu0 %v2442
        %3596 = vmatprep.mubr.bf16.mxu0 %v279
        %3597 = vmatmul.mubr.bf16.gmra.mxu0 %v278
        %v3598 = vpop.f32.mrf.mxu0
        %v3599 = vadd.f32 %v811, %v3598
        %v3600 = vpop.f32.mrf.mxu0
        %v3601 = vadd.f32 %v815, %v3600
        %v3602 = vpop.f32.mrf.mxu0
        %v3603 = vpop.f32.mrf.mxu0
        %3604 = vdwg.mxu0
        %3605 = vmatprep.subr.bf16.mxu0 %v2563
        %3606 = vmatpush1.bf16.msra.mxu0 %v2562
        %3607 = vmatprep.subr.bf16.mxu0 %v2555
        %3608 = vmatpush1.bf16.msra.mxu0 %v2554
        %3609 = vmatprep.subr.bf16.mxu0 %v2547
        %3610 = vmatpush1.bf16.msra.mxu0 %v2546
        %3611 = vmatprep.subr.bf16.mxu0 %v2539
        %3612 = vmatpush1.bf16.msra.mxu0 %v2538
        %3613 = vmatprep.subr.bf16.mxu0 %v2531
        %3614 = vmatpush1.bf16.msra.mxu0 %v2530
        %3615 = vmatprep.subr.bf16.mxu0 %v2523
        %3616 = vmatpush1.bf16.msra.mxu0 %v2522
        %3617 = vmatprep.subr.bf16.mxu0 %v2515
        %3618 = vmatpush1.bf16.msra.mxu0 %v2514
        %3619 = vmatprep.subr.bf16.mxu0 %v2507
        %3620 = vmatpush1.bf16.msra.mxu0 %v2506
        %3621 = vmatprep.subr.bf16.mxu0 %v2627
        %3622 = vmatpush2.bf16.msra.mxu0 %v2626
        %3623 = vmatprep.subr.bf16.mxu0 %v2619
        %3624 = vmatpush2.bf16.msra.mxu0 %v2618
        %3625 = vmatprep.subr.bf16.mxu0 %v2611
        %3626 = vmatpush2.bf16.msra.mxu0 %v2610
        %3627 = vmatprep.subr.bf16.mxu0 %v2603
        %3628 = vmatpush2.bf16.msra.mxu0 %v2602
        %3629 = vmatprep.subr.bf16.mxu0 %v2595
        %3630 = vmatpush2.bf16.msra.mxu0 %v2594
        %3631 = vmatprep.subr.bf16.mxu0 %v2587
        %3632 = vmatpush2.bf16.msra.mxu0 %v2586
        %3633 = vmatprep.subr.bf16.mxu0 %v2579
        %3634 = vmatpush2.bf16.msra.mxu0 %v2578
        %3635 = vmatprep.subr.bf16.mxu0 %v2571
        %3636 = vmatpush2.bf16.msra.mxu0 %v2570
        %3637 = vmatprep.mubr.bf16.mxu0 %v281
        %3638 = vmatmul.mubr.bf16.gmra.mxu0 %v280
        %v3639 = vpop.f32.mrf.mxu0
        %v3640 = vadd.f32 %v3599, %v3639
        %v3641 = vpop.f32.mrf.mxu0
        %v3642 = vadd.f32 %v3601, %v3641
        %v3643 = vpop.f32.mrf.mxu0
        %v3644 = vpop.f32.mrf.mxu0
        %3645 = vdwg.mxu0
        %3646 = vmatprep.subr.bf16.mxu0 %v2691
        %3647 = vmatpush1.bf16.msra.mxu0 %v2690
        %3648 = vmatprep.subr.bf16.mxu0 %v2683
        %3649 = vmatpush1.bf16.msra.mxu0 %v2682
        %3650 = vmatprep.subr.bf16.mxu0 %v2675
        %3651 = vmatpush1.bf16.msra.mxu0 %v2674
        %3652 = vmatprep.subr.bf16.mxu0 %v2667
        %3653 = vmatpush1.bf16.msra.mxu0 %v2666
        %3654 = vmatprep.subr.bf16.mxu0 %v2659
        %3655 = vmatpush1.bf16.msra.mxu0 %v2658
        %3656 = vmatprep.subr.bf16.mxu0 %v2651
        %3657 = vmatpush1.bf16.msra.mxu0 %v2650
        %3658 = vmatprep.subr.bf16.mxu0 %v2643
        %3659 = vmatpush1.bf16.msra.mxu0 %v2642
        %3660 = vmatprep.subr.bf16.mxu0 %v2635
        %3661 = vmatpush1.bf16.msra.mxu0 %v2634
        %3662 = vmatprep.subr.bf16.mxu0 %v2755
        %3663 = vmatpush2.bf16.msra.mxu0 %v2754
        %3664 = vmatprep.subr.bf16.mxu0 %v2747
        %3665 = vmatpush2.bf16.msra.mxu0 %v2746
        %3666 = vmatprep.subr.bf16.mxu0 %v2739
        %3667 = vmatpush2.bf16.msra.mxu0 %v2738
        %3668 = vmatprep.subr.bf16.mxu0 %v2731
        %3669 = vmatpush2.bf16.msra.mxu0 %v2730
        %3670 = vmatprep.subr.bf16.mxu0 %v2723
        %3671 = vmatpush2.bf16.msra.mxu0 %v2722
        %3672 = vmatprep.subr.bf16.mxu0 %v2715
        %3673 = vmatpush2.bf16.msra.mxu0 %v2714
        %3674 = vmatprep.subr.bf16.mxu0 %v2707
        %3675 = vmatpush2.bf16.msra.mxu0 %v2706
        %3676 = vmatprep.subr.bf16.mxu0 %v2699
        %3677 = vmatpush2.bf16.msra.mxu0 %v2698
        %3678 = vmatprep.mubr.bf16.mxu0 %v283
        %3679 = vmatmul.mubr.bf16.gmra.mxu0 %v282
        %v3680 = vpop.f32.mrf.mxu0
        %v3681 = vadd.f32 %v3640, %v3680
        %v3682 = vpop.f32.mrf.mxu0
        %v3683 = vadd.f32 %v3642, %v3682
        %v3684 = vpop.f32.mrf.mxu0
        %v3685 = vpop.f32.mrf.mxu0
        %3686 = vdwg.mxu0
        %3687 = vmatprep.subr.bf16.mxu0 %v2819
        %3688 = vmatpush1.bf16.msra.mxu0 %v2818
        %3689 = vmatprep.subr.bf16.mxu0 %v2811
        %3690 = vmatpush1.bf16.msra.mxu0 %v2810
        %3691 = vmatprep.subr.bf16.mxu0 %v2803
        %3692 = vmatpush1.bf16.msra.mxu0 %v2802
        %3693 = vmatprep.subr.bf16.mxu0 %v2795
        %3694 = vmatpush1.bf16.msra.mxu0 %v2794
        %3695 = vmatprep.subr.bf16.mxu0 %v2787
        %3696 = vmatpush1.bf16.msra.mxu0 %v2786
        %3697 = vmatprep.subr.bf16.mxu0 %v2779
        %3698 = vmatpush1.bf16.msra.mxu0 %v2778
        %3699 = vmatprep.subr.bf16.mxu0 %v2771
        %3700 = vmatpush1.bf16.msra.mxu0 %v2770
        %3701 = vmatprep.subr.bf16.mxu0 %v2763
        %3702 = vmatpush1.bf16.msra.mxu0 %v2762
        %3703 = vmatprep.subr.bf16.mxu0 %v2883
        %3704 = vmatpush2.bf16.msra.mxu0 %v2882
        %3705 = vmatprep.subr.bf16.mxu0 %v2875
        %3706 = vmatpush2.bf16.msra.mxu0 %v2874
        %3707 = vmatprep.subr.bf16.mxu0 %v2867
        %3708 = vmatpush2.bf16.msra.mxu0 %v2866
        %3709 = vmatprep.subr.bf16.mxu0 %v2859
        %3710 = vmatpush2.bf16.msra.mxu0 %v2858
        %3711 = vmatprep.subr.bf16.mxu0 %v2851
        %3712 = vmatpush2.bf16.msra.mxu0 %v2850
        %3713 = vmatprep.subr.bf16.mxu0 %v2843
        %3714 = vmatpush2.bf16.msra.mxu0 %v2842
        %3715 = vmatprep.subr.bf16.mxu0 %v2835
        %3716 = vmatpush2.bf16.msra.mxu0 %v2834
        %3717 = vmatprep.subr.bf16.mxu0 %v2827
        %3718 = vmatpush2.bf16.msra.mxu0 %v2826
        %3719 = vmatprep.mubr.bf16.mxu0 %v285
        %3720 = vmatmul.mubr.bf16.gmra.mxu0 %v284
        %v3721 = vpop.f32.mrf.mxu0
        %v3722 = vadd.f32 %v3681, %v3721
        %v3723 = vpop.f32.mrf.mxu0
        %v3724 = vadd.f32 %v3683, %v3723
        %v3725 = vpop.f32.mrf.mxu0
        %v3726 = vpop.f32.mrf.mxu0
        %3727 = vdwg.mxu0
        %3728 = vmatprep.subr.bf16.mxu0 %v2437
        %3729 = vmatpush1.bf16.msra.mxu0 %v2436
        %3730 = vmatprep.subr.bf16.mxu0 %v2429
        %3731 = vmatpush1.bf16.msra.mxu0 %v2428
        %3732 = vmatprep.subr.bf16.mxu0 %v2421
        %3733 = vmatpush1.bf16.msra.mxu0 %v2420
        %3734 = vmatprep.subr.bf16.mxu0 %v2413
        %3735 = vmatpush1.bf16.msra.mxu0 %v2412
        %3736 = vmatprep.subr.bf16.mxu0 %v2405
        %3737 = vmatpush1.bf16.msra.mxu0 %v2404
        %3738 = vmatprep.subr.bf16.mxu0 %v2397
        %3739 = vmatpush1.bf16.msra.mxu0 %v2396
        %3740 = vmatprep.subr.bf16.mxu0 %v2389
        %3741 = vmatpush1.bf16.msra.mxu0 %v2388
        %3742 = vmatprep.subr.bf16.mxu0 %v2381
        %3743 = vmatpush1.bf16.msra.mxu0 %v2380
        %3744 = vmatprep.subr.bf16.mxu0 %v2501
        %3745 = vmatpush2.bf16.msra.mxu0 %v2500
        %3746 = vmatprep.subr.bf16.mxu0 %v2493
        %3747 = vmatpush2.bf16.msra.mxu0 %v2492
        %3748 = vmatprep.subr.bf16.mxu0 %v2485
        %3749 = vmatpush2.bf16.msra.mxu0 %v2484
        %3750 = vmatprep.subr.bf16.mxu0 %v2477
        %3751 = vmatpush2.bf16.msra.mxu0 %v2476
        %3752 = vmatprep.subr.bf16.mxu0 %v2469
        %3753 = vmatpush2.bf16.msra.mxu0 %v2468
        %3754 = vmatprep.subr.bf16.mxu0 %v2461
        %3755 = vmatpush2.bf16.msra.mxu0 %v2460
        %3756 = vmatprep.subr.bf16.mxu0 %v2453
        %3757 = vmatpush2.bf16.msra.mxu0 %v2452
        %3758 = vmatprep.subr.bf16.mxu0 %v2445
        %3759 = vmatpush2.bf16.msra.mxu0 %v2444
        %3760 = vmatprep.mubr.bf16.mxu0 %v279
        %3761 = vmatmul.mubr.bf16.gmra.mxu0 %v278
        %v3762 = vpop.f32.mrf.mxu0
        %v3763 = vadd.f32 %v819, %v3762
        %v3764 = vpop.f32.mrf.mxu0
        %v3765 = vadd.f32 %v823, %v3764
        %v3766 = vpop.f32.mrf.mxu0
        %v3767 = vpop.f32.mrf.mxu0
        %3768 = vdwg.mxu0
        %3769 = vmatprep.subr.bf16.mxu0 %v2565
        %3770 = vmatpush1.bf16.msra.mxu0 %v2564
        %3771 = vmatprep.subr.bf16.mxu0 %v2557
        %3772 = vmatpush1.bf16.msra.mxu0 %v2556
        %3773 = vmatprep.subr.bf16.mxu0 %v2549
        %3774 = vmatpush1.bf16.msra.mxu0 %v2548
        %3775 = vmatprep.subr.bf16.mxu0 %v2541
        %3776 = vmatpush1.bf16.msra.mxu0 %v2540
        %3777 = vmatprep.subr.bf16.mxu0 %v2533
        %3778 = vmatpush1.bf16.msra.mxu0 %v2532
        %3779 = vmatprep.subr.bf16.mxu0 %v2525
        %3780 = vmatpush1.bf16.msra.mxu0 %v2524
        %3781 = vmatprep.subr.bf16.mxu0 %v2517
        %3782 = vmatpush1.bf16.msra.mxu0 %v2516
        %3783 = vmatprep.subr.bf16.mxu0 %v2509
        %3784 = vmatpush1.bf16.msra.mxu0 %v2508
        %3785 = vmatprep.subr.bf16.mxu0 %v2629
        %3786 = vmatpush2.bf16.msra.mxu0 %v2628
        %3787 = vmatprep.subr.bf16.mxu0 %v2621
        %3788 = vmatpush2.bf16.msra.mxu0 %v2620
        %3789 = vmatprep.subr.bf16.mxu0 %v2613
        %3790 = vmatpush2.bf16.msra.mxu0 %v2612
        %3791 = vmatprep.subr.bf16.mxu0 %v2605
        %3792 = vmatpush2.bf16.msra.mxu0 %v2604
        %3793 = vmatprep.subr.bf16.mxu0 %v2597
        %3794 = vmatpush2.bf16.msra.mxu0 %v2596
        %3795 = vmatprep.subr.bf16.mxu0 %v2589
        %3796 = vmatpush2.bf16.msra.mxu0 %v2588
        %3797 = vmatprep.subr.bf16.mxu0 %v2581
        %3798 = vmatpush2.bf16.msra.mxu0 %v2580
        %3799 = vmatprep.subr.bf16.mxu0 %v2573
        %3800 = vmatpush2.bf16.msra.mxu0 %v2572
        %3801 = vmatprep.mubr.bf16.mxu0 %v281
        %3802 = vmatmul.mubr.bf16.gmra.mxu0 %v280
        %v3803 = vpop.f32.mrf.mxu0
        %v3804 = vadd.f32 %v3763, %v3803
        %v3805 = vpop.f32.mrf.mxu0
        %v3806 = vadd.f32 %v3765, %v3805
        %v3807 = vpop.f32.mrf.mxu0
        %v3808 = vpop.f32.mrf.mxu0
        %3809 = vdwg.mxu0
        %3810 = vmatprep.subr.bf16.mxu0 %v2693
        %3811 = vmatpush1.bf16.msra.mxu0 %v2692
        %3812 = vmatprep.subr.bf16.mxu0 %v2685
        %3813 = vmatpush1.bf16.msra.mxu0 %v2684
        %3814 = vmatprep.subr.bf16.mxu0 %v2677
        %3815 = vmatpush1.bf16.msra.mxu0 %v2676
        %3816 = vmatprep.subr.bf16.mxu0 %v2669
        %3817 = vmatpush1.bf16.msra.mxu0 %v2668
        %3818 = vmatprep.subr.bf16.mxu0 %v2661
        %3819 = vmatpush1.bf16.msra.mxu0 %v2660
        %3820 = vmatprep.subr.bf16.mxu0 %v2653
        %3821 = vmatpush1.bf16.msra.mxu0 %v2652
        %3822 = vmatprep.subr.bf16.mxu0 %v2645
        %3823 = vmatpush1.bf16.msra.mxu0 %v2644
        %3824 = vmatprep.subr.bf16.mxu0 %v2637
        %3825 = vmatpush1.bf16.msra.mxu0 %v2636
        %3826 = vmatprep.subr.bf16.mxu0 %v2757
        %3827 = vmatpush2.bf16.msra.mxu0 %v2756
        %3828 = vmatprep.subr.bf16.mxu0 %v2749
        %3829 = vmatpush2.bf16.msra.mxu0 %v2748
        %3830 = vmatprep.subr.bf16.mxu0 %v2741
        %3831 = vmatpush2.bf16.msra.mxu0 %v2740
        %3832 = vmatprep.subr.bf16.mxu0 %v2733
        %3833 = vmatpush2.bf16.msra.mxu0 %v2732
        %3834 = vmatprep.subr.bf16.mxu0 %v2725
        %3835 = vmatpush2.bf16.msra.mxu0 %v2724
        %3836 = vmatprep.subr.bf16.mxu0 %v2717
        %3837 = vmatpush2.bf16.msra.mxu0 %v2716
        %3838 = vmatprep.subr.bf16.mxu0 %v2709
        %3839 = vmatpush2.bf16.msra.mxu0 %v2708
        %3840 = vmatprep.subr.bf16.mxu0 %v2701
        %3841 = vmatpush2.bf16.msra.mxu0 %v2700
        %3842 = vmatprep.mubr.bf16.mxu0 %v283
        %3843 = vmatmul.mubr.bf16.gmra.mxu0 %v282
        %v3844 = vpop.f32.mrf.mxu0
        %v3845 = vadd.f32 %v3804, %v3844
        %v3846 = vpop.f32.mrf.mxu0
        %v3847 = vadd.f32 %v3806, %v3846
        %v3848 = vpop.f32.mrf.mxu0
        %v3849 = vpop.f32.mrf.mxu0
        %3850 = vdwg.mxu0
        %3851 = vmatprep.subr.bf16.mxu0 %v2821
        %3852 = vmatpush1.bf16.msra.mxu0 %v2820
        %3853 = vmatprep.subr.bf16.mxu0 %v2813
        %3854 = vmatpush1.bf16.msra.mxu0 %v2812
        %3855 = vmatprep.subr.bf16.mxu0 %v2805
        %3856 = vmatpush1.bf16.msra.mxu0 %v2804
        %3857 = vmatprep.subr.bf16.mxu0 %v2797
        %3858 = vmatpush1.bf16.msra.mxu0 %v2796
        %3859 = vmatprep.subr.bf16.mxu0 %v2789
        %3860 = vmatpush1.bf16.msra.mxu0 %v2788
        %3861 = vmatprep.subr.bf16.mxu0 %v2781
        %3862 = vmatpush1.bf16.msra.mxu0 %v2780
        %3863 = vmatprep.subr.bf16.mxu0 %v2773
        %3864 = vmatpush1.bf16.msra.mxu0 %v2772
        %3865 = vmatprep.subr.bf16.mxu0 %v2765
        %3866 = vmatpush1.bf16.msra.mxu0 %v2764
        %3867 = vmatprep.subr.bf16.mxu0 %v2885
        %3868 = vmatpush2.bf16.msra.mxu0 %v2884
        %3869 = vmatprep.subr.bf16.mxu0 %v2877
        %3870 = vmatpush2.bf16.msra.mxu0 %v2876
        %3871 = vmatprep.subr.bf16.mxu0 %v2869
        %3872 = vmatpush2.bf16.msra.mxu0 %v2868
        %3873 = vmatprep.subr.bf16.mxu0 %v2861
        %3874 = vmatpush2.bf16.msra.mxu0 %v2860
        %3875 = vmatprep.subr.bf16.mxu0 %v2853
        %3876 = vmatpush2.bf16.msra.mxu0 %v2852
        %3877 = vmatprep.subr.bf16.mxu0 %v2845
        %3878 = vmatpush2.bf16.msra.mxu0 %v2844
        %3879 = vmatprep.subr.bf16.mxu0 %v2837
        %3880 = vmatpush2.bf16.msra.mxu0 %v2836
        %3881 = vmatprep.subr.bf16.mxu0 %v2829
        %3882 = vmatpush2.bf16.msra.mxu0 %v2828
        %3883 = vmatprep.mubr.bf16.mxu0 %v285
        %3884 = vmatmul.mubr.bf16.gmra.mxu0 %v284
        %v3885 = vpop.f32.mrf.mxu0
        %v3886 = vadd.f32 %v3845, %v3885
        %v3887 = vpop.f32.mrf.mxu0
        %v3888 = vadd.f32 %v3847, %v3887
        %v3889 = vpop.f32.mrf.mxu0
        %v3890 = vpop.f32.mrf.mxu0
        %3891 = vdwg.mxu0
        %3892 = vmatprep.subr.bf16.mxu0 %v2439
        %3893 = vmatpush1.bf16.msra.mxu0 %v2438
        %3894 = vmatprep.subr.bf16.mxu0 %v2431
        %3895 = vmatpush1.bf16.msra.mxu0 %v2430
        %3896 = vmatprep.subr.bf16.mxu0 %v2423
        %3897 = vmatpush1.bf16.msra.mxu0 %v2422
        %3898 = vmatprep.subr.bf16.mxu0 %v2415
        %3899 = vmatpush1.bf16.msra.mxu0 %v2414
        %3900 = vmatprep.subr.bf16.mxu0 %v2407
        %3901 = vmatpush1.bf16.msra.mxu0 %v2406
        %3902 = vmatprep.subr.bf16.mxu0 %v2399
        %3903 = vmatpush1.bf16.msra.mxu0 %v2398
        %3904 = vmatprep.subr.bf16.mxu0 %v2391
        %3905 = vmatpush1.bf16.msra.mxu0 %v2390
        %3906 = vmatprep.subr.bf16.mxu0 %v2383
        %3907 = vmatpush1.bf16.msra.mxu0 %v2382
        %3908 = vmatprep.subr.bf16.mxu0 %v2503
        %3909 = vmatpush2.bf16.msra.mxu0 %v2502
        %3910 = vmatprep.subr.bf16.mxu0 %v2495
        %3911 = vmatpush2.bf16.msra.mxu0 %v2494
        %3912 = vmatprep.subr.bf16.mxu0 %v2487
        %3913 = vmatpush2.bf16.msra.mxu0 %v2486
        %3914 = vmatprep.subr.bf16.mxu0 %v2479
        %3915 = vmatpush2.bf16.msra.mxu0 %v2478
        %3916 = vmatprep.subr.bf16.mxu0 %v2471
        %3917 = vmatpush2.bf16.msra.mxu0 %v2470
        %3918 = vmatprep.subr.bf16.mxu0 %v2463
        %3919 = vmatpush2.bf16.msra.mxu0 %v2462
        %3920 = vmatprep.subr.bf16.mxu0 %v2455
        %3921 = vmatpush2.bf16.msra.mxu0 %v2454
        %3922 = vmatprep.subr.bf16.mxu0 %v2447
        %3923 = vmatpush2.bf16.msra.mxu0 %v2446
        %3924 = vmatprep.mubr.bf16.mxu0 %v279
        %3925 = vmatmul.mubr.bf16.gmra.mxu0 %v278
        %v3926 = vpop.f32.mrf.mxu0
        %v3927 = vadd.f32 %v827, %v3926
        %v3928 = vpop.f32.mrf.mxu0
        %v3929 = vadd.f32 %v831, %v3928
        %v3930 = vpop.f32.mrf.mxu0
        %v3931 = vpop.f32.mrf.mxu0
        %3932 = vdwg.mxu0
        %3933 = vmatprep.subr.bf16.mxu0 %v2567
        %3934 = vmatpush1.bf16.msra.mxu0 %v2566
        %3935 = vmatprep.subr.bf16.mxu0 %v2559
        %3936 = vmatpush1.bf16.msra.mxu0 %v2558
        %3937 = vmatprep.subr.bf16.mxu0 %v2551
        %3938 = vmatpush1.bf16.msra.mxu0 %v2550
        %3939 = vmatprep.subr.bf16.mxu0 %v2543
        %3940 = vmatpush1.bf16.msra.mxu0 %v2542
        %3941 = vmatprep.subr.bf16.mxu0 %v2535
        %3942 = vmatpush1.bf16.msra.mxu0 %v2534
        %3943 = vmatprep.subr.bf16.mxu0 %v2527
        %3944 = vmatpush1.bf16.msra.mxu0 %v2526
        %3945 = vmatprep.subr.bf16.mxu0 %v2519
        %3946 = vmatpush1.bf16.msra.mxu0 %v2518
        %3947 = vmatprep.subr.bf16.mxu0 %v2511
        %3948 = vmatpush1.bf16.msra.mxu0 %v2510
        %3949 = vmatprep.subr.bf16.mxu0 %v2631
        %3950 = vmatpush2.bf16.msra.mxu0 %v2630
        %3951 = vmatprep.subr.bf16.mxu0 %v2623
        %3952 = vmatpush2.bf16.msra.mxu0 %v2622
        %3953 = vmatprep.subr.bf16.mxu0 %v2615
        %3954 = vmatpush2.bf16.msra.mxu0 %v2614
        %3955 = vmatprep.subr.bf16.mxu0 %v2607
        %3956 = vmatpush2.bf16.msra.mxu0 %v2606
        %3957 = vmatprep.subr.bf16.mxu0 %v2599
        %3958 = vmatpush2.bf16.msra.mxu0 %v2598
        %3959 = vmatprep.subr.bf16.mxu0 %v2591
        %3960 = vmatpush2.bf16.msra.mxu0 %v2590
        %3961 = vmatprep.subr.bf16.mxu0 %v2583
        %3962 = vmatpush2.bf16.msra.mxu0 %v2582
        %3963 = vmatprep.subr.bf16.mxu0 %v2575
        %3964 = vmatpush2.bf16.msra.mxu0 %v2574
        %3965 = vmatprep.mubr.bf16.mxu0 %v281
        %3966 = vmatmul.mubr.bf16.gmra.mxu0 %v280
        %v3967 = vpop.f32.mrf.mxu0
        %v3968 = vadd.f32 %v3927, %v3967
        %v3969 = vpop.f32.mrf.mxu0
        %v3970 = vadd.f32 %v3929, %v3969
        %v3971 = vpop.f32.mrf.mxu0
        %v3972 = vpop.f32.mrf.mxu0
        %3973 = vdwg.mxu0
        %3974 = vmatprep.subr.bf16.mxu0 %v2695
        %3975 = vmatpush1.bf16.msra.mxu0 %v2694
        %3976 = vmatprep.subr.bf16.mxu0 %v2687
        %3977 = vmatpush1.bf16.msra.mxu0 %v2686
        %3978 = vmatprep.subr.bf16.mxu0 %v2679
        %3979 = vmatpush1.bf16.msra.mxu0 %v2678
        %3980 = vmatprep.subr.bf16.mxu0 %v2671
        %3981 = vmatpush1.bf16.msra.mxu0 %v2670
        %3982 = vmatprep.subr.bf16.mxu0 %v2663
        %3983 = vmatpush1.bf16.msra.mxu0 %v2662
        %3984 = vmatprep.subr.bf16.mxu0 %v2655
        %3985 = vmatpush1.bf16.msra.mxu0 %v2654
        %3986 = vmatprep.subr.bf16.mxu0 %v2647
        %3987 = vmatpush1.bf16.msra.mxu0 %v2646
        %3988 = vmatprep.subr.bf16.mxu0 %v2639
        %3989 = vmatpush1.bf16.msra.mxu0 %v2638
        %3990 = vmatprep.subr.bf16.mxu0 %v2759
        %3991 = vmatpush2.bf16.msra.mxu0 %v2758
        %3992 = vmatprep.subr.bf16.mxu0 %v2751
        %3993 = vmatpush2.bf16.msra.mxu0 %v2750
        %3994 = vmatprep.subr.bf16.mxu0 %v2743
        %3995 = vmatpush2.bf16.msra.mxu0 %v2742
        %3996 = vmatprep.subr.bf16.mxu0 %v2735
        %3997 = vmatpush2.bf16.msra.mxu0 %v2734
        %3998 = vmatprep.subr.bf16.mxu0 %v2727
        %3999 = vmatpush2.bf16.msra.mxu0 %v2726
        %4000 = vmatprep.subr.bf16.mxu0 %v2719
        %4001 = vmatpush2.bf16.msra.mxu0 %v2718
        %4002 = vmatprep.subr.bf16.mxu0 %v2711
        %4003 = vmatpush2.bf16.msra.mxu0 %v2710
        %4004 = vmatprep.subr.bf16.mxu0 %v2703
        %4005 = vmatpush2.bf16.msra.mxu0 %v2702
        %4006 = vmatprep.mubr.bf16.mxu0 %v283
        %4007 = vmatmul.mubr.bf16.gmra.mxu0 %v282
        %v4008 = vpop.f32.mrf.mxu0
        %v4009 = vadd.f32 %v3968, %v4008
        %v4010 = vpop.f32.mrf.mxu0
        %v4011 = vadd.f32 %v3970, %v4010
        %v4012 = vpop.f32.mrf.mxu0
        %v4013 = vpop.f32.mrf.mxu0
        %4014 = vdwg.mxu0
        %4015 = vmatprep.subr.bf16.mxu0 %v2823
        %4016 = vmatpush1.bf16.msra.mxu0 %v2822
        %4017 = vmatprep.subr.bf16.mxu0 %v2815
        %4018 = vmatpush1.bf16.msra.mxu0 %v2814
        %4019 = vmatprep.subr.bf16.mxu0 %v2807
        %4020 = vmatpush1.bf16.msra.mxu0 %v2806
        %4021 = vmatprep.subr.bf16.mxu0 %v2799
        %4022 = vmatpush1.bf16.msra.mxu0 %v2798
        %4023 = vmatprep.subr.bf16.mxu0 %v2791
        %4024 = vmatpush1.bf16.msra.mxu0 %v2790
        %4025 = vmatprep.subr.bf16.mxu0 %v2783
        %4026 = vmatpush1.bf16.msra.mxu0 %v2782
        %4027 = vmatprep.subr.bf16.mxu0 %v2775
        %4028 = vmatpush1.bf16.msra.mxu0 %v2774
        %4029 = vmatprep.subr.bf16.mxu0 %v2767
        %4030 = vmatpush1.bf16.msra.mxu0 %v2766
        %4031 = vmatprep.subr.bf16.mxu0 %v2887
        %4032 = vmatpush2.bf16.msra.mxu0 %v2886
        %4033 = vmatprep.subr.bf16.mxu0 %v2879
        %4034 = vmatpush2.bf16.msra.mxu0 %v2878
        %4035 = vmatprep.subr.bf16.mxu0 %v2871
        %4036 = vmatpush2.bf16.msra.mxu0 %v2870
        %4037 = vmatprep.subr.bf16.mxu0 %v2863
        %4038 = vmatpush2.bf16.msra.mxu0 %v2862
        %4039 = vmatprep.subr.bf16.mxu0 %v2855
        %4040 = vmatpush2.bf16.msra.mxu0 %v2854
        %4041 = vmatprep.subr.bf16.mxu0 %v2847
        %4042 = vmatpush2.bf16.msra.mxu0 %v2846
        %4043 = vmatprep.subr.bf16.mxu0 %v2839
        %4044 = vmatpush2.bf16.msra.mxu0 %v2838
        %4045 = vmatprep.subr.bf16.mxu0 %v2831
        %4046 = vmatpush2.bf16.msra.mxu0 %v2830
        %4047 = vmatprep.mubr.bf16.mxu0 %v285
        %4048 = vmatmul.mubr.bf16.gmra.mxu0 %v284
        %v4049 = vpop.f32.mrf.mxu0
        %v4050 = vadd.f32 %v4009, %v4049
        %v4051 = vpop.f32.mrf.mxu0
        %v4052 = vadd.f32 %v4011, %v4051
        %v4053 = vpop.f32.mrf.mxu0
        %v4054 = vpop.f32.mrf.mxu0
        %4055 = vdwg.mxu0
        %v4064 = vcombine.low %v3558, %v3560
        %v4065 = vcombine.low %v3722, %v3724
        %v4067 = vunpack.c.l.s4 1983009808
        %v4068 = vunpack.c.0.s8 %v4067
        %v4069 = vlaneseq
        %v4070 = vshrl.u32 %v4069, 7
        %v4071 = vsub.s32 %v4068, %v4070
        %v4072 = vrot.slane %v4064, %v4071
        %v4074 = vunpack.c.l.s4 1983009808
        %v4075 = vunpack.c.0.s8 %v4074
        %v4076 = vlaneseq
        %v4077 = vshrl.u32 %v4076, 7
        %v4078 = vsub.s32 %v4075, %v4077
        %v4079 = vrot.slane %v4065, %v4078
        %v4080 = vcombine.low %v4072, %v4079
        %v4081 = vcombine.low %v3886, %v3888
        %v4082 = vcombine.low %v4050, %v4052
        %v4084 = vunpack.c.l.s4 1983009808
        %v4085 = vunpack.c.0.s8 %v4084
        %v4086 = vlaneseq
        %v4087 = vshrl.u32 %v4086, 7
        %v4088 = vsub.s32 %v4085, %v4087
        %v4089 = vrot.slane %v4081, %v4088
        %v4091 = vunpack.c.l.s4 1983009808
        %v4092 = vunpack.c.0.s8 %v4091
        %v4093 = vlaneseq
        %v4094 = vshrl.u32 %v4093, 7
        %v4095 = vsub.s32 %v4092, %v4094
        %v4096 = vrot.slane %v4082, %v4095
        %v4097 = vcombine.low %v4089, %v4096
        %4100 = vst [vmem:[%s230] sm:$0xff] %v4080
        %4101 = vst [vmem:[%s230 + $0x8] sm:$0xff] %v4097
        %s4102 = smul.u32 8, %s20
        %p4103 = scmp.lt.s32.totalorder %s4102, 31
        %s4104 = scalar_select %p4103, %s4102, 31
        %s4105 = smul.addr %s4104, 2
        %s4106 = scalar_lea.vmem %s3, %s4105
        // Predicated region
        $region41: #{forward.3} parent=31 // pred_check
          %p4107 = pneg %p111
        $region42: #{forward.3} parent=31 // pred_check_branch
          %4109 = sbr.rel (%p4107) target = $region44
        $region43: #{forward.3} parent=31 // pred_region
          %s4110 = smul.u32 8, %s20
        $region44: #{forward.3} parent=31 // pred_fallthru
          _
      $region32: #{forward.3} parent=5 // pred_fallthru
        _
      %p4111 = scmp.le.s32.totalorder 2, %s15
      // Predicated region
      $region45: #{forward.3} parent=5 // pred_check
        %p4112 = pneg %p4111
      $region46: #{forward.3} parent=5 // pred_check_branch
        %4114 = sbr.rel (%p4112) target = $region48
      $region47: #{forward.3} parent=5 // pred_region
        %s4115 = ssub.s32 %s15, 2
        // Predicated region
        $region49: #{forward.3} parent=47 // pred_check
          %p4116 = pneg %p117
        $region50: #{forward.3} parent=47 // pred_check_branch
          %4118 = sbr.rel (%p4116) target = $region52
        $region51: #{forward.3} parent=47 // pred_region
          %s4119 = smul.u32 8, %s21
          %p4120 = scmp.lt.s32.totalorder %s4119, 31
          %s4121 = scalar_select %p4120, %s4119, 31
          %s4122 = smul.addr %s4121, 2
          %s4123 = scalar_lea.vmem %s3, %s4122
        $region52: #{forward.3} parent=47 // pred_fallthru
          _
      $region48: #{forward.3} parent=5 // pred_fallthru
        _
    $region6: #{forward.3} parent=1 // loop_footer
      %s19 = sadd.s32 1, %s15
    $region7: #{forward.3} parent=1 // loop_footer_branch
      %14 = sbr.rel target = $region3
    $region8: #{forward.3} parent=1 // loop_exit
      _
    %4124 = vsyncpa [#allocation3], 1
    %s4125 = scalar_lea.sflag [#allocation3], 1
    %4126 = vsyncpa %s4125, 1
    %4127 = vsyncpa [#allocation5], 1
    %s4128 = scalar_lea.sflag [#allocation5], 1
    %4129 = vsyncpa %s4128, 1

// kernel: forward.4
$region0: #{forward.4}
  #allocation0 [shape = 'u32[]', space=smem, size = 0x4, offset = 0x4, fixed_abs, tag = 'smem constant byte address 0x4 - core index']
  #allocation1 [shape = 'u32[144,128]{1,0:T(1,128)}', space=vmem, size = 0x12000, scoped, tag = 'internal scratch']
  %s0 = inlined_call_operand.vmem [shape: f32[288,256], index: 0, kind: input, shape index: {}]
  %s1 = inlined_call_operand.vmem [shape: f32[256,128], index: 1, kind: input, shape index: {}]
  %s2 = inlined_call_operand.vmem [shape: f32[1,128], index: 2, kind: input, shape index: {}]
  %s3 = inlined_call_operand.vmem [shape: f32[1568,256], index: 3, kind: input, shape index: {}]
  %s4 = inlined_call_operand.vmem [shape: f32[256,128], index: 4, kind: input, shape index: {}]
  %s5 = inlined_call_operand.vmem [shape: f32[1,128], index: 5, kind: input, shape index: {}]
  %s6 = inlined_call_operand.vmem [shape: f32[32,128], index: 6, kind: output, shape index: {0}]
  %s7 = inlined_call_operand.vmem [shape: f32[32,128], index: 7, kind: output, shape index: {1}]
  %8 = xla_tuple %s6, %s7
  %s9 = sld [smem:[#allocation0]]
  $region42: #{forward.4} parent=0
    _
  %s11 = ssub.s32 1, %s9
  %s12 = scalar_select 0, %s11, %s9
  // Predicated region
  $region2: #{forward.4} parent=0 // pred_check
    _
  $region3: #{forward.4} parent=0 // pred_check_branch
    %14 = sbr.rel (0) target = $region5
  $region4: #{forward.4} parent=0 // pred_region
    _
  $region5: #{forward.4} parent=0 // pred_fallthru
    _
  // Predicated region
  $region6: #{forward.4} parent=0 // pred_check
    _
  $region7: #{forward.4} parent=0 // pred_check_branch
    %16 = sbr.rel (0) target = $region9
  $region8: #{forward.4} parent=0 // pred_region
    _
  $region9: #{forward.4} parent=0 // pred_fallthru
    _
  // Predicated region
  $region10: #{forward.4} parent=0 // pred_check
    _
  $region11: #{forward.4} parent=0 // pred_check_branch
    %18 = sbr.rel (0) target = $region13
  $region12: #{forward.4} parent=0 // pred_region
    _
  $region13: #{forward.4} parent=0 // pred_fallthru
    _
  // Predicated region
  $region14: #{forward.4} parent=0 // pred_check
    _
  $region15: #{forward.4} parent=0 // pred_check_branch
    %20 = sbr.rel (0) target = $region17
  $region16: #{forward.4} parent=0 // pred_region
    _
  $region17: #{forward.4} parent=0 // pred_fallthru
    _
  // Predicated region
  $region18: #{forward.4} parent=0 // pred_check
    _
  $region19: #{forward.4} parent=0 // pred_check_branch
    %22 = sbr.rel (0) target = $region21
  $region20: #{forward.4} parent=0 // pred_region
    _
  $region21: #{forward.4} parent=0 // pred_fallthru
    _
  // Predicated region
  $region22: #{forward.4} parent=0 // pred_check
    _
  $region23: #{forward.4} parent=0 // pred_check_branch
    %24 = sbr.rel (0) target = $region25
  $region24: #{forward.4} parent=0 // pred_region
    _
  $region25: #{forward.4} parent=0 // pred_fallthru
    _
  %v25 = vld [vmem:[%s0] sm:$0xff]
  %v26 = vld [vmem:[%s0 + $0x8] sm:$0xff]
  %v27 = vld [vmem:[%s0 + $0x10] sm:$0xff]
  %v28 = vld [vmem:[%s0 + $0x18] sm:$0xff]
  %v29 = vld [vmem:[%s0 + $0x20] sm:$0xff]
  %v30 = vld [vmem:[%s0 + $0x28] sm:$0xff]
  %v31 = vld [vmem:[%s0 + $0x30] sm:$0xff]
  %v32 = vld [vmem:[%s0 + $0x38] sm:$0xff]
  %v33 = vld [vmem:[%s0 + $0x40] sm:$0xff]
  %v34 = vld [vmem:[%s0 + $0x48] sm:$0xff]
  %v35 = vld [vmem:[%s0 + $0x50] sm:$0xff]
  %v36 = vld [vmem:[%s0 + $0x58] sm:$0xff]
  %v37 = vld [vmem:[%s0 + $0x60] sm:$0xff]
  %v38 = vld [vmem:[%s0 + $0x68] sm:$0xff]
  %v39 = vld [vmem:[%s0 + $0x70] sm:$0xff]
  %v40 = vld [vmem:[%s0 + $0x78] sm:$0xff]
  %v41 = vld [vmem:[%s0 + $0x80] sm:$0xff]
  %v42 = vld [vmem:[%s0 + $0x88] sm:$0xff]
  %v43 = vld [vmem:[%s0 + $0x90] sm:$0xff]
  %v44 = vld [vmem:[%s0 + $0x98] sm:$0xff]
  %v45 = vld [vmem:[%s0 + $0xa0] sm:$0xff]
  %v46 = vld [vmem:[%s0 + $0xa8] sm:$0xff]
  %v47 = vld [vmem:[%s0 + $0xb0] sm:$0xff]
  %v48 = vld [vmem:[%s0 + $0xb8] sm:$0xff]
  %v49 = vld [vmem:[%s0 + $0xc0] sm:$0xff]
  %v50 = vld [vmem:[%s0 + $0xc8] sm:$0xff]
  %v51 = vld [vmem:[%s0 + $0xd0] sm:$0xff]
  %v52 = vld [vmem:[%s0 + $0xd8] sm:$0xff]
  %v53 = vld [vmem:[%s0 + $0xe0] sm:$0xff]
  %v54 = vld [vmem:[%s0 + $0xe8] sm:$0xff]
  %v55 = vld [vmem:[%s0 + $0xf0] sm:$0xff]
  %v56 = vld [vmem:[%s0 + $0xf8] sm:$0xff]
  %v57 = vld [vmem:[%s0 + $0x100] sm:$0xff]
  %v58 = vld [vmem:[%s0 + $0x108] sm:$0xff]
  %v59 = vld [vmem:[%s0 + $0x110] sm:$0xff]
  %v60 = vld [vmem:[%s0 + $0x118] sm:$0xff]
  %v61 = vld [vmem:[%s0 + $0x120] sm:$0xff]
  %v62 = vld [vmem:[%s0 + $0x128] sm:$0xff]
  %v63 = vld [vmem:[%s0 + $0x130] sm:$0xff]
  %v64 = vld [vmem:[%s0 + $0x138] sm:$0xff]
  %v65 = vld [vmem:[%s0 + $0x140] sm:$0xff]
  %v66 = vld [vmem:[%s0 + $0x148] sm:$0xff]
  %v67 = vld [vmem:[%s0 + $0x150] sm:$0xff]
  %v68 = vld [vmem:[%s0 + $0x158] sm:$0xff]
  %v69 = vld [vmem:[%s0 + $0x160] sm:$0xff]
  %v70 = vld [vmem:[%s0 + $0x168] sm:$0xff]
  %v71 = vld [vmem:[%s0 + $0x170] sm:$0xff]
  %v72 = vld [vmem:[%s0 + $0x178] sm:$0xff]
  %v73 = vld [vmem:[%s0 + $0x180] sm:$0xff]
  %v74 = vld [vmem:[%s0 + $0x188] sm:$0xff]
  %v75 = vld [vmem:[%s0 + $0x190] sm:$0xff]
  %v76 = vld [vmem:[%s0 + $0x198] sm:$0xff]
  %v77 = vld [vmem:[%s0 + $0x1a0] sm:$0xff]
  %v78 = vld [vmem:[%s0 + $0x1a8] sm:$0xff]
  %v79 = vld [vmem:[%s0 + $0x1b0] sm:$0xff]
  %v80 = vld [vmem:[%s0 + $0x1b8] sm:$0xff]
  %v81 = vld [vmem:[%s0 + $0x1c0] sm:$0xff]
  %v82 = vld [vmem:[%s0 + $0x1c8] sm:$0xff]
  %v83 = vld [vmem:[%s0 + $0x1d0] sm:$0xff]
  %v84 = vld [vmem:[%s0 + $0x1d8] sm:$0xff]
  %v85 = vld [vmem:[%s0 + $0x1e0] sm:$0xff]
  %v86 = vld [vmem:[%s0 + $0x1e8] sm:$0xff]
  %v87 = vld [vmem:[%s0 + $0x1f0] sm:$0xff]
  %v88 = vld [vmem:[%s0 + $0x1f8] sm:$0xff]
  %v89 = vld [vmem:[%s0 + $0x200] sm:$0xff]
  %v90 = vld [vmem:[%s0 + $0x208] sm:$0xff]
  %v91 = vld [vmem:[%s0 + $0x210] sm:$0xff]
  %v92 = vld [vmem:[%s0 + $0x218] sm:$0xff]
  %v93 = vld [vmem:[%s0 + $0x220] sm:$0xff]
  %v94 = vld [vmem:[%s0 + $0x228] sm:$0xff]
  %v95 = vld [vmem:[%s0 + $0x230] sm:$0xff]
  %v96 = vld [vmem:[%s0 + $0x238] sm:$0xff]
  %v97 = vld [vmem:[%s1] sm:$0xff]
  %v98 = vld [vmem:[%s1 + $0x8] sm:$0xff]
  %v99 = vld [vmem:[%s1 + $0x10] sm:$0xff]
  %v100 = vld [vmem:[%s1 + $0x18] sm:$0xff]
  %v101 = vld [vmem:[%s1 + $0x20] sm:$0xff]
  %v102 = vld [vmem:[%s1 + $0x28] sm:$0xff]
  %v103 = vld [vmem:[%s1 + $0x30] sm:$0xff]
  %v104 = vld [vmem:[%s1 + $0x38] sm:$0xff]
  %v105 = vld [vmem:[%s1 + $0x40] sm:$0xff]
  %v106 = vld [vmem:[%s1 + $0x48] sm:$0xff]
  %v107 = vld [vmem:[%s1 + $0x50] sm:$0xff]
  %v108 = vld [vmem:[%s1 + $0x58] sm:$0xff]
  %v109 = vld [vmem:[%s1 + $0x60] sm:$0xff]
  %v110 = vld [vmem:[%s1 + $0x68] sm:$0xff]
  %v111 = vld [vmem:[%s1 + $0x70] sm:$0xff]
  %v112 = vld [vmem:[%s1 + $0x78] sm:$0xff]
  %v113 = vld [vmem:[%s1 + $0x80] sm:$0xff]
  %v114 = vld [vmem:[%s1 + $0x88] sm:$0xff]
  %v115 = vld [vmem:[%s1 + $0x90] sm:$0xff]
  %v116 = vld [vmem:[%s1 + $0x98] sm:$0xff]
  %v117 = vld [vmem:[%s1 + $0xa0] sm:$0xff]
  %v118 = vld [vmem:[%s1 + $0xa8] sm:$0xff]
  %v119 = vld [vmem:[%s1 + $0xb0] sm:$0xff]
  %v120 = vld [vmem:[%s1 + $0xb8] sm:$0xff]
  %v121 = vld [vmem:[%s1 + $0xc0] sm:$0xff]
  %v122 = vld [vmem:[%s1 + $0xc8] sm:$0xff]
  %v123 = vld [vmem:[%s1 + $0xd0] sm:$0xff]
  %v124 = vld [vmem:[%s1 + $0xd8] sm:$0xff]
  %v125 = vld [vmem:[%s1 + $0xe0] sm:$0xff]
  %v126 = vld [vmem:[%s1 + $0xe8] sm:$0xff]
  %v127 = vld [vmem:[%s1 + $0xf0] sm:$0xff]
  %v128 = vld [vmem:[%s1 + $0xf8] sm:$0xff]
  %129 = vmatprep.subr.mxu0 0.0
  %130 = vmatpush1.msra.mxu0 %v112
  %131 = vmatprep.subr.mxu0 0.0
  %132 = vmatpush1.msra.mxu0 %v111
  %133 = vmatprep.subr.mxu0 0.0
  %134 = vmatpush1.msra.mxu0 %v110
  %135 = vmatprep.subr.mxu0 0.0
  %136 = vmatpush1.msra.mxu0 %v109
  %137 = vmatprep.subr.mxu0 0.0
  %138 = vmatpush1.msra.mxu0 %v108
  %139 = vmatprep.subr.mxu0 0.0
  %140 = vmatpush1.msra.mxu0 %v107
  %141 = vmatprep.subr.mxu0 0.0
  %142 = vmatpush1.msra.mxu0 %v106
  %143 = vmatprep.subr.mxu0 0.0
  %144 = vmatpush1.msra.mxu0 %v105
  %145 = vmatprep.subr.mxu0 0.0
  %146 = vmatpush1.msra.mxu0 %v104
  %147 = vmatprep.subr.mxu0 0.0
  %148 = vmatpush1.msra.mxu0 %v103
  %149 = vmatprep.subr.mxu0 0.0
  %150 = vmatpush1.msra.mxu0 %v102
  %151 = vmatprep.subr.mxu0 0.0
  %152 = vmatpush1.msra.mxu0 %v101
  %153 = vmatprep.subr.mxu0 0.0
  %154 = vmatpush1.msra.mxu0 %v100
  %155 = vmatprep.subr.mxu0 0.0
  %156 = vmatpush1.msra.mxu0 %v99
  %157 = vmatprep.subr.mxu0 0.0
  %158 = vmatpush1.msra.mxu0 %v98
  %159 = vmatprep.subr.mxu0 0.0
  %160 = vmatpush1.msra.mxu0 %v97
  %161 = vmatprep.subr.mxu0 0.0
  %162 = vmatpush2.msra.mxu0 %v128
  %163 = vmatprep.subr.mxu0 0.0
  %164 = vmatpush2.msra.mxu0 %v127
  %165 = vmatprep.subr.mxu0 0.0
  %166 = vmatpush2.msra.mxu0 %v126
  %167 = vmatprep.subr.mxu0 0.0
  %168 = vmatpush2.msra.mxu0 %v125
  %169 = vmatprep.subr.mxu0 0.0
  %170 = vmatpush2.msra.mxu0 %v124
  %171 = vmatprep.subr.mxu0 0.0
  %172 = vmatpush2.msra.mxu0 %v123
  %173 = vmatprep.subr.mxu0 0.0
  %174 = vmatpush2.msra.mxu0 %v122
  %175 = vmatprep.subr.mxu0 0.0
  %176 = vmatpush2.msra.mxu0 %v121
  %177 = vmatprep.subr.mxu0 0.0
  %178 = vmatpush2.msra.mxu0 %v120
  %179 = vmatprep.subr.mxu0 0.0
  %180 = vmatpush2.msra.mxu0 %v119
  %181 = vmatprep.subr.mxu0 0.0
  %182 = vmatpush2.msra.mxu0 %v118
  %183 = vmatprep.subr.mxu0 0.0
  %184 = vmatpush2.msra.mxu0 %v117
  %185 = vmatprep.subr.mxu0 0.0
  %186 = vmatpush2.msra.mxu0 %v116
  %187 = vmatprep.subr.mxu0 0.0
  %188 = vmatpush2.msra.mxu0 %v115
  %189 = vmatprep.subr.mxu0 0.0
  %190 = vmatpush2.msra.mxu0 %v114
  %191 = vmatprep.subr.mxu0 0.0
  %192 = vmatpush2.msra.mxu0 %v113
  %193 = vmatprep.mubr.f32.mxu0 %v26
  %194 = vmatmul.mubr.f32.gmra.mxu0 %v25
  %v195 = vpop.f32.mrf.mxu0
  %v196 = vadd.f32 0.0, %v195
  %v197 = vpop.f32.mrf.mxu0
  %198 = vmatprep.mubr.f32.mxu0 %v28
  %199 = vmatmul.mubr.f32.gmra.mxu0 %v27
  %v200 = vpop.f32.mrf.mxu0
  %v201 = vadd.f32 0.0, %v200
  %v202 = vpop.f32.mrf.mxu0
  %203 = vmatprep.mubr.f32.mxu0 %v30
  %204 = vmatmul.mubr.f32.gmra.mxu0 %v29
  %v205 = vpop.f32.mrf.mxu0
  %v206 = vadd.f32 0.0, %v205
  %v207 = vpop.f32.mrf.mxu0
  %208 = vmatprep.mubr.f32.mxu0 %v32
  %209 = vmatmul.mubr.f32.gmra.mxu0 %v31
  %v210 = vpop.f32.mrf.mxu0
  %v211 = vadd.f32 0.0, %v210
  %v212 = vpop.f32.mrf.mxu0
  %213 = vmatprep.mubr.f32.mxu0 %v34
  %214 = vmatmul.mubr.f32.gmra.mxu0 %v33
  %v215 = vpop.f32.mrf.mxu0
  %v216 = vadd.f32 0.0, %v215
  %v217 = vpop.f32.mrf.mxu0
  %218 = vmatprep.mubr.f32.mxu0 %v36
  %219 = vmatmul.mubr.f32.gmra.mxu0 %v35
  %v220 = vpop.f32.mrf.mxu0
  %v221 = vadd.f32 0.0, %v220
  %v222 = vpop.f32.mrf.mxu0
  %223 = vmatprep.mubr.f32.mxu0 %v38
  %224 = vmatmul.mubr.f32.gmra.mxu0 %v37
  %v225 = vpop.f32.mrf.mxu0
  %v226 = vadd.f32 0.0, %v225
  %v227 = vpop.f32.mrf.mxu0
  %228 = vmatprep.mubr.f32.mxu0 %v40
  %229 = vmatmul.mubr.f32.gmra.mxu0 %v39
  %v230 = vpop.f32.mrf.mxu0
  %v231 = vadd.f32 0.0, %v230
  %v232 = vpop.f32.mrf.mxu0
  %233 = vmatprep.mubr.f32.mxu0 %v42
  %234 = vmatmul.mubr.f32.gmra.mxu0 %v41
  %v235 = vpop.f32.mrf.mxu0
  %v236 = vadd.f32 0.0, %v235
  %v237 = vpop.f32.mrf.mxu0
  %238 = vmatprep.mubr.f32.mxu0 %v44
  %239 = vmatmul.mubr.f32.gmra.mxu0 %v43
  %v240 = vpop.f32.mrf.mxu0
  %v241 = vadd.f32 0.0, %v240
  %v242 = vpop.f32.mrf.mxu0
  %243 = vmatprep.mubr.f32.mxu0 %v46
  %244 = vmatmul.mubr.f32.gmra.mxu0 %v45
  %v245 = vpop.f32.mrf.mxu0
  %v246 = vadd.f32 0.0, %v245
  %v247 = vpop.f32.mrf.mxu0
  %248 = vmatprep.mubr.f32.mxu0 %v48
  %249 = vmatmul.mubr.f32.gmra.mxu0 %v47
  %v250 = vpop.f32.mrf.mxu0
  %v251 = vadd.f32 0.0, %v250
  %v252 = vpop.f32.mrf.mxu0
  %253 = vmatprep.mubr.f32.mxu0 %v50
  %254 = vmatmul.mubr.f32.gmra.mxu0 %v49
  %v255 = vpop.f32.mrf.mxu0
  %v256 = vadd.f32 0.0, %v255
  %v257 = vpop.f32.mrf.mxu0
  %258 = vmatprep.mubr.f32.mxu0 %v52
  %259 = vmatmul.mubr.f32.gmra.mxu0 %v51
  %v260 = vpop.f32.mrf.mxu0
  %v261 = vadd.f32 0.0, %v260
  %v262 = vpop.f32.mrf.mxu0
  %263 = vmatprep.mubr.f32.mxu0 %v54
  %264 = vmatmul.mubr.f32.gmra.mxu0 %v53
  %v265 = vpop.f32.mrf.mxu0
  %v266 = vadd.f32 0.0, %v265
  %v267 = vpop.f32.mrf.mxu0
  %268 = vmatprep.mubr.f32.mxu0 %v56
  %269 = vmatmul.mubr.f32.gmra.mxu0 %v55
  %v270 = vpop.f32.mrf.mxu0
  %v271 = vadd.f32 0.0, %v270
  %v272 = vpop.f32.mrf.mxu0
  %273 = vmatprep.mubr.f32.mxu0 %v58
  %274 = vmatmul.mubr.f32.gmra.mxu0 %v57
  %v275 = vpop.f32.mrf.mxu0
  %v276 = vadd.f32 0.0, %v275
  %v277 = vpop.f32.mrf.mxu0
  %278 = vmatprep.mubr.f32.mxu0 %v60
  %279 = vmatmul.mubr.f32.gmra.mxu0 %v59
  %v280 = vpop.f32.mrf.mxu0
  %v281 = vadd.f32 0.0, %v280
  %v282 = vpop.f32.mrf.mxu0
  %283 = vmatprep.mubr.f32.mxu0 %v62
  %284 = vmatmul.mubr.f32.gmra.mxu0 %v61
  %v285 = vpop.f32.mrf.mxu0
  %v286 = vadd.f32 0.0, %v285
  %v287 = vpop.f32.mrf.mxu0
  %288 = vmatprep.mubr.f32.mxu0 %v64
  %289 = vmatmul.mubr.f32.gmra.mxu0 %v63
  %v290 = vpop.f32.mrf.mxu0
  %v291 = vadd.f32 0.0, %v290
  %v292 = vpop.f32.mrf.mxu0
  %293 = vmatprep.mubr.f32.mxu0 %v66
  %294 = vmatmul.mubr.f32.gmra.mxu0 %v65
  %v295 = vpop.f32.mrf.mxu0
  %v296 = vadd.f32 0.0, %v295
  %v297 = vpop.f32.mrf.mxu0
  %298 = vmatprep.mubr.f32.mxu0 %v68
  %299 = vmatmul.mubr.f32.gmra.mxu0 %v67
  %v300 = vpop.f32.mrf.mxu0
  %v301 = vadd.f32 0.0, %v300
  %v302 = vpop.f32.mrf.mxu0
  %303 = vmatprep.mubr.f32.mxu0 %v70
  %304 = vmatmul.mubr.f32.gmra.mxu0 %v69
  %v305 = vpop.f32.mrf.mxu0
  %v306 = vadd.f32 0.0, %v305
  %v307 = vpop.f32.mrf.mxu0
  %308 = vmatprep.mubr.f32.mxu0 %v72
  %309 = vmatmul.mubr.f32.gmra.mxu0 %v71
  %v310 = vpop.f32.mrf.mxu0
  %v311 = vadd.f32 0.0, %v310
  %v312 = vpop.f32.mrf.mxu0
  %313 = vmatprep.mubr.f32.mxu0 %v74
  %314 = vmatmul.mubr.f32.gmra.mxu0 %v73
  %v315 = vpop.f32.mrf.mxu0
  %v316 = vadd.f32 0.0, %v315
  %v317 = vpop.f32.mrf.mxu0
  %318 = vmatprep.mubr.f32.mxu0 %v76
  %319 = vmatmul.mubr.f32.gmra.mxu0 %v75
  %v320 = vpop.f32.mrf.mxu0
  %v321 = vadd.f32 0.0, %v320
  %v322 = vpop.f32.mrf.mxu0
  %323 = vmatprep.mubr.f32.mxu0 %v78
  %324 = vmatmul.mubr.f32.gmra.mxu0 %v77
  %v325 = vpop.f32.mrf.mxu0
  %v326 = vadd.f32 0.0, %v325
  %v327 = vpop.f32.mrf.mxu0
  %328 = vmatprep.mubr.f32.mxu0 %v80
  %329 = vmatmul.mubr.f32.gmra.mxu0 %v79
  %v330 = vpop.f32.mrf.mxu0
  %v331 = vadd.f32 0.0, %v330
  %v332 = vpop.f32.mrf.mxu0
  %333 = vmatprep.mubr.f32.mxu0 %v82
  %334 = vmatmul.mubr.f32.gmra.mxu0 %v81
  %v335 = vpop.f32.mrf.mxu0
  %v336 = vadd.f32 0.0, %v335
  %v337 = vpop.f32.mrf.mxu0
  %338 = vmatprep.mubr.f32.mxu0 %v84
  %339 = vmatmul.mubr.f32.gmra.mxu0 %v83
  %v340 = vpop.f32.mrf.mxu0
  %v341 = vadd.f32 0.0, %v340
  %v342 = vpop.f32.mrf.mxu0
  %343 = vmatprep.mubr.f32.mxu0 %v86
  %344 = vmatmul.mubr.f32.gmra.mxu0 %v85
  %v345 = vpop.f32.mrf.mxu0
  %v346 = vadd.f32 0.0, %v345
  %v347 = vpop.f32.mrf.mxu0
  %348 = vmatprep.mubr.f32.mxu0 %v88
  %349 = vmatmul.mubr.f32.gmra.mxu0 %v87
  %v350 = vpop.f32.mrf.mxu0
  %v351 = vadd.f32 0.0, %v350
  %v352 = vpop.f32.mrf.mxu0
  %353 = vmatprep.mubr.f32.mxu0 %v90
  %354 = vmatmul.mubr.f32.gmra.mxu0 %v89
  %v355 = vpop.f32.mrf.mxu0
  %v356 = vadd.f32 0.0, %v355
  %v357 = vpop.f32.mrf.mxu0
  %358 = vmatprep.mubr.f32.mxu0 %v92
  %359 = vmatmul.mubr.f32.gmra.mxu0 %v91
  %v360 = vpop.f32.mrf.mxu0
  %v361 = vadd.f32 0.0, %v360
  %v362 = vpop.f32.mrf.mxu0
  %363 = vmatprep.mubr.f32.mxu0 %v94
  %364 = vmatmul.mubr.f32.gmra.mxu0 %v93
  %v365 = vpop.f32.mrf.mxu0
  %v366 = vadd.f32 0.0, %v365
  %v367 = vpop.f32.mrf.mxu0
  %368 = vmatprep.mubr.f32.mxu0 %v96
  %369 = vmatmul.mubr.f32.gmra.mxu0 %v95
  %v370 = vpop.f32.mrf.mxu0
  %v371 = vadd.f32 0.0, %v370
  %v372 = vpop.f32.mrf.mxu0
  %373 = vdwg.mxu0
  %v374 = vmax.f32 %v196, %v216
  %v375 = vmax.f32 %v201, %v221
  %v376 = vmax.f32 %v206, %v226
  %v377 = vmax.f32 %v211, %v231
  %v378 = vmax.f32 %v374, %v236
  %v379 = vmax.f32 %v375, %v241
  %v380 = vmax.f32 %v376, %v246
  %v381 = vmax.f32 %v377, %v251
  %v382 = vmax.f32 %v378, %v256
  %v383 = vmax.f32 %v379, %v261
  %v384 = vmax.f32 %v380, %v266
  %v385 = vmax.f32 %v381, %v271
  %v386 = vmax.f32 %v382, %v276
  %v387 = vmax.f32 %v383, %v281
  %v388 = vmax.f32 %v384, %v286
  %v389 = vmax.f32 %v385, %v291
  %v390 = vmax.f32 %v386, %v296
  %v391 = vmax.f32 %v387, %v301
  %v392 = vmax.f32 %v388, %v306
  %v393 = vmax.f32 %v389, %v311
  %v394 = vmax.f32 %v390, %v316
  %v395 = vmax.f32 %v391, %v321
  %v396 = vmax.f32 %v392, %v326
  %v397 = vmax.f32 %v393, %v331
  %v398 = vmax.f32 %v394, %v336
  %v399 = vmax.f32 %v395, %v341
  %v400 = vmax.f32 %v396, %v346
  %v401 = vmax.f32 %v397, %v351
  %v402 = vmax.f32 %v398, %v356
  %v403 = vmax.f32 %v399, %v361
  %v404 = vmax.f32 %v400, %v366
  %v405 = vmax.f32 %v401, %v371
  %v406 = vld [vmem:[%s2] sm:$0x1]
  %v408 = vlaneseq
  %v409 = vshrl.u32 %v408, 7
  %v410 = vsub.s32 0, %v409
  %v411 = vrot.slane %v406, %v410
  %v413 = vadd.f32 %v402, %v411
  %v414 = vadd.f32 %v403, %v411
  %v415 = vadd.f32 %v404, %v411
  %v416 = vadd.f32 %v405, %v411
  %417 = vst [vmem:[%s6] sm:$0xff] %v413
  %418 = vst [vmem:[%s6 + $0x8] sm:$0xff] %v414
  %419 = vst [vmem:[%s6 + $0x10] sm:$0xff] %v415
  %420 = vst [vmem:[%s6 + $0x18] sm:$0xff] %v416
  %v421 = vld [vmem:[%s3] sm:$0xff]
  %v422 = vld [vmem:[%s3 + $0x8] sm:$0xff]
  %v423 = vld [vmem:[%s3 + $0x10] sm:$0xff]
  %v424 = vld [vmem:[%s3 + $0x18] sm:$0xff]
  %v425 = vld [vmem:[%s3 + $0x20] sm:$0xff]
  %v426 = vld [vmem:[%s3 + $0x28] sm:$0xff]
  %v427 = vld [vmem:[%s3 + $0x30] sm:$0xff]
  %v428 = vld [vmem:[%s3 + $0x38] sm:$0xff]
  %v429 = vld [vmem:[%s3 + $0x40] sm:$0xff]
  %v430 = vld [vmem:[%s3 + $0x48] sm:$0xff]
  %v431 = vld [vmem:[%s3 + $0x50] sm:$0xff]
  %v432 = vld [vmem:[%s3 + $0x58] sm:$0xff]
  %v433 = vld [vmem:[%s3 + $0x60] sm:$0xff]
  %v434 = vld [vmem:[%s3 + $0x68] sm:$0xff]
  %v435 = vld [vmem:[%s3 + $0x70] sm:$0xff]
  %v436 = vld [vmem:[%s3 + $0x78] sm:$0xff]
  %v437 = vld [vmem:[%s3 + $0x80] sm:$0xff]
  %v438 = vld [vmem:[%s3 + $0x88] sm:$0xff]
  %v439 = vld [vmem:[%s3 + $0x90] sm:$0xff]
  %v440 = vld [vmem:[%s3 + $0x98] sm:$0xff]
  %v441 = vld [vmem:[%s3 + $0xa0] sm:$0xff]
  %v442 = vld [vmem:[%s3 + $0xa8] sm:$0xff]
  %v443 = vld [vmem:[%s3 + $0xb0] sm:$0xff]
  %v444 = vld [vmem:[%s3 + $0xb8] sm:$0xff]
  %v445 = vld [vmem:[%s3 + $0xc0] sm:$0xff]
  %v446 = vld [vmem:[%s3 + $0xc8] sm:$0xff]
  %v447 = vld [vmem:[%s3 + $0xd0] sm:$0xff]
  %v448 = vld [vmem:[%s3 + $0xd8] sm:$0xff]
  %v449 = vld [vmem:[%s3 + $0xe0] sm:$0xff]
  %v450 = vld [vmem:[%s3 + $0xe8] sm:$0xff]
  %v451 = vld [vmem:[%s3 + $0xf0] sm:$0xff]
  %v452 = vld [vmem:[%s3 + $0xf8] sm:$0xff]
  %v453 = vld [vmem:[%s3 + $0x100] sm:$0xff]
  %v454 = vld [vmem:[%s3 + $0x108] sm:$0xff]
  %v455 = vld [vmem:[%s3 + $0x110] sm:$0xff]
  %v456 = vld [vmem:[%s3 + $0x118] sm:$0xff]
  %v457 = vld [vmem:[%s3 + $0x120] sm:$0xff]
  %v458 = vld [vmem:[%s3 + $0x128] sm:$0xff]
  %v459 = vld [vmem:[%s3 + $0x130] sm:$0xff]
  %v460 = vld [vmem:[%s3 + $0x138] sm:$0xff]
  %v461 = vld [vmem:[%s3 + $0x140] sm:$0xff]
  %v462 = vld [vmem:[%s3 + $0x148] sm:$0xff]
  %v463 = vld [vmem:[%s3 + $0x150] sm:$0xff]
  %v464 = vld [vmem:[%s3 + $0x158] sm:$0xff]
  %v465 = vld [vmem:[%s3 + $0x160] sm:$0xff]
  %v466 = vld [vmem:[%s3 + $0x168] sm:$0xff]
  %v467 = vld [vmem:[%s3 + $0x170] sm:$0xff]
  %v468 = vld [vmem:[%s3 + $0x178] sm:$0xff]
  %v469 = vld [vmem:[%s3 + $0x180] sm:$0xff]
  %v470 = vld [vmem:[%s3 + $0x188] sm:$0xff]
  %v471 = vld [vmem:[%s3 + $0x190] sm:$0xff]
  %v472 = vld [vmem:[%s3 + $0x198] sm:$0xff]
  %v473 = vld [vmem:[%s3 + $0x1a0] sm:$0xff]
  %v474 = vld [vmem:[%s3 + $0x1a8] sm:$0xff]
  %v475 = vld [vmem:[%s3 + $0x1b0] sm:$0xff]
  %v476 = vld [vmem:[%s3 + $0x1b8] sm:$0xff]
  %v477 = vld [vmem:[%s3 + $0x1c0] sm:$0xff]
  %v478 = vld [vmem:[%s3 + $0x1c8] sm:$0xff]
  %v479 = vld [vmem:[%s3 + $0x1d0] sm:$0xff]
  %v480 = vld [vmem:[%s3 + $0x1d8] sm:$0xff]
  %v481 = vld [vmem:[%s3 + $0x1e0] sm:$0xff]
  %v482 = vld [vmem:[%s3 + $0x1e8] sm:$0xff]
  %v483 = vld [vmem:[%s3 + $0x1f0] sm:$0xff]
  %v484 = vld [vmem:[%s3 + $0x1f8] sm:$0xff]
  %v485 = vld [vmem:[%s3 + $0x200] sm:$0xff]
  %v486 = vld [vmem:[%s3 + $0x208] sm:$0xff]
  %v487 = vld [vmem:[%s3 + $0x210] sm:$0xff]
  %v488 = vld [vmem:[%s3 + $0x218] sm:$0xff]
  %v489 = vld [vmem:[%s3 + $0x220] sm:$0xff]
  %v490 = vld [vmem:[%s3 + $0x228] sm:$0xff]
  %v491 = vld [vmem:[%s3 + $0x230] sm:$0xff]
  %v492 = vld [vmem:[%s3 + $0x238] sm:$0xff]
  %v493 = vld [vmem:[%s3 + $0x240] sm:$0xff]
  %v494 = vld [vmem:[%s3 + $0x248] sm:$0xff]
  %v495 = vld [vmem:[%s3 + $0x250] sm:$0xff]
  %v496 = vld [vmem:[%s3 + $0x258] sm:$0xff]
  %v497 = vld [vmem:[%s3 + $0x260] sm:$0xff]
  %v498 = vld [vmem:[%s3 + $0x268] sm:$0xff]
  %v499 = vld [vmem:[%s3 + $0x270] sm:$0xff]
  %v500 = vld [vmem:[%s3 + $0x278] sm:$0xff]
  %v501 = vld [vmem:[%s3 + $0x280] sm:$0xff]
  %v502 = vld [vmem:[%s3 + $0x288] sm:$0xff]
  %v503 = vld [vmem:[%s3 + $0x290] sm:$0xff]
  %v504 = vld [vmem:[%s3 + $0x298] sm:$0xff]
  %v505 = vld [vmem:[%s3 + $0x2a0] sm:$0xff]
  %v506 = vld [vmem:[%s3 + $0x2a8] sm:$0xff]
  %v507 = vld [vmem:[%s3 + $0x2b0] sm:$0xff]
  %v508 = vld [vmem:[%s3 + $0x2b8] sm:$0xff]
  %v509 = vld [vmem:[%s3 + $0x2c0] sm:$0xff]
  %v510 = vld [vmem:[%s3 + $0x2c8] sm:$0xff]
  %v511 = vld [vmem:[%s3 + $0x2d0] sm:$0xff]
  %v512 = vld [vmem:[%s3 + $0x2d8] sm:$0xff]
  %v513 = vld [vmem:[%s3 + $0x2e0] sm:$0xff]
  %v514 = vld [vmem:[%s3 + $0x2e8] sm:$0xff]
  %v515 = vld [vmem:[%s3 + $0x2f0] sm:$0xff]
  %v516 = vld [vmem:[%s3 + $0x2f8] sm:$0xff]
  %v517 = vld [vmem:[%s3 + $0x300] sm:$0xff]
  %v518 = vld [vmem:[%s3 + $0x308] sm:$0xff]
  %v519 = vld [vmem:[%s3 + $0x310] sm:$0xff]
  %v520 = vld [vmem:[%s3 + $0x318] sm:$0xff]
  %v521 = vld [vmem:[%s3 + $0x320] sm:$0xff]
  %v522 = vld [vmem:[%s3 + $0x328] sm:$0xff]
  %v523 = vld [vmem:[%s3 + $0x330] sm:$0xff]
  %v524 = vld [vmem:[%s3 + $0x338] sm:$0xff]
  %v525 = vld [vmem:[%s3 + $0x340] sm:$0xff]
  %v526 = vld [vmem:[%s3 + $0x348] sm:$0xff]
  %v527 = vld [vmem:[%s3 + $0x350] sm:$0xff]
  %v528 = vld [vmem:[%s3 + $0x358] sm:$0xff]
  %v529 = vld [vmem:[%s3 + $0x360] sm:$0xff]
  %v530 = vld [vmem:[%s3 + $0x368] sm:$0xff]
  %v531 = vld [vmem:[%s3 + $0x370] sm:$0xff]
  %v532 = vld [vmem:[%s3 + $0x378] sm:$0xff]
  %v533 = vld [vmem:[%s3 + $0x380] sm:$0xff]
  %v534 = vld [vmem:[%s3 + $0x388] sm:$0xff]
  %v535 = vld [vmem:[%s3 + $0x390] sm:$0xff]
  %v536 = vld [vmem:[%s3 + $0x398] sm:$0xff]
  %v537 = vld [vmem:[%s3 + $0x3a0] sm:$0xff]
  %v538 = vld [vmem:[%s3 + $0x3a8] sm:$0xff]
  %v539 = vld [vmem:[%s3 + $0x3b0] sm:$0xff]
  %v540 = vld [vmem:[%s3 + $0x3b8] sm:$0xff]
  %v541 = vld [vmem:[%s3 + $0x3c0] sm:$0xff]
  %v542 = vld [vmem:[%s3 + $0x3c8] sm:$0xff]
  %v543 = vld [vmem:[%s3 + $0x3d0] sm:$0xff]
  %v544 = vld [vmem:[%s3 + $0x3d8] sm:$0xff]
  %v545 = vld [vmem:[%s3 + $0x3e0] sm:$0xff]
  %v546 = vld [vmem:[%s3 + $0x3e8] sm:$0xff]
  %v547 = vld [vmem:[%s3 + $0x3f0] sm:$0xff]
  %v548 = vld [vmem:[%s3 + $0x3f8] sm:$0xff]
  %v549 = vld [vmem:[%s3 + $0x400] sm:$0xff]
  %v550 = vld [vmem:[%s3 + $0x408] sm:$0xff]
  %v551 = vld [vmem:[%s3 + $0x410] sm:$0xff]
  %v552 = vld [vmem:[%s3 + $0x418] sm:$0xff]
  %v553 = vld [vmem:[%s3 + $0x420] sm:$0xff]
  %v554 = vld [vmem:[%s3 + $0x428] sm:$0xff]
  %v555 = vld [vmem:[%s3 + $0x430] sm:$0xff]
  %v556 = vld [vmem:[%s3 + $0x438] sm:$0xff]
  %v557 = vld [vmem:[%s3 + $0x440] sm:$0xff]
  %v558 = vld [vmem:[%s3 + $0x448] sm:$0xff]
  %v559 = vld [vmem:[%s3 + $0x450] sm:$0xff]
  %v560 = vld [vmem:[%s3 + $0x458] sm:$0xff]
  %v561 = vld [vmem:[%s3 + $0x460] sm:$0xff]
  %v562 = vld [vmem:[%s3 + $0x468] sm:$0xff]
  %v563 = vld [vmem:[%s3 + $0x470] sm:$0xff]
  %v564 = vld [vmem:[%s3 + $0x478] sm:$0xff]
  %v565 = vld [vmem:[%s3 + $0x480] sm:$0xff]
  %v566 = vld [vmem:[%s3 + $0x488] sm:$0xff]
  %v567 = vld [vmem:[%s3 + $0x490] sm:$0xff]
  %v568 = vld [vmem:[%s3 + $0x498] sm:$0xff]
  %v569 = vld [vmem:[%s3 + $0x4a0] sm:$0xff]
  %v570 = vld [vmem:[%s3 + $0x4a8] sm:$0xff]
  %v571 = vld [vmem:[%s3 + $0x4b0] sm:$0xff]
  %v572 = vld [vmem:[%s3 + $0x4b8] sm:$0xff]
  %v573 = vld [vmem:[%s3 + $0x4c0] sm:$0xff]
  %v574 = vld [vmem:[%s3 + $0x4c8] sm:$0xff]
  %v575 = vld [vmem:[%s3 + $0x4d0] sm:$0xff]
  %v576 = vld [vmem:[%s3 + $0x4d8] sm:$0xff]
  %v577 = vld [vmem:[%s3 + $0x4e0] sm:$0xff]
  %v578 = vld [vmem:[%s3 + $0x4e8] sm:$0xff]
  %v579 = vld [vmem:[%s3 + $0x4f0] sm:$0xff]
  %v580 = vld [vmem:[%s3 + $0x4f8] sm:$0xff]
  %v581 = vld [vmem:[%s3 + $0x500] sm:$0xff]
  %v582 = vld [vmem:[%s3 + $0x508] sm:$0xff]
  %v583 = vld [vmem:[%s3 + $0x510] sm:$0xff]
  %v584 = vld [vmem:[%s3 + $0x518] sm:$0xff]
  %v585 = vld [vmem:[%s3 + $0x520] sm:$0xff]
  %v586 = vld [vmem:[%s3 + $0x528] sm:$0xff]
  %v587 = vld [vmem:[%s3 + $0x530] sm:$0xff]
  %v588 = vld [vmem:[%s3 + $0x538] sm:$0xff]
  %v589 = vld [vmem:[%s3 + $0x540] sm:$0xff]
  %v590 = vld [vmem:[%s3 + $0x548] sm:$0xff]
  %v591 = vld [vmem:[%s3 + $0x550] sm:$0xff]
  %v592 = vld [vmem:[%s3 + $0x558] sm:$0xff]
  %v593 = vld [vmem:[%s3 + $0x560] sm:$0xff]
  %v594 = vld [vmem:[%s3 + $0x568] sm:$0xff]
  %v595 = vld [vmem:[%s3 + $0x570] sm:$0xff]
  %v596 = vld [vmem:[%s3 + $0x578] sm:$0xff]
  %v597 = vld [vmem:[%s3 + $0x580] sm:$0xff]
  %v598 = vld [vmem:[%s3 + $0x588] sm:$0xff]
  %v599 = vld [vmem:[%s3 + $0x590] sm:$0xff]
  %v600 = vld [vmem:[%s3 + $0x598] sm:$0xff]
  %v601 = vld [vmem:[%s3 + $0x5a0] sm:$0xff]
  %v602 = vld [vmem:[%s3 + $0x5a8] sm:$0xff]
  %v603 = vld [vmem:[%s3 + $0x5b0] sm:$0xff]
  %v604 = vld [vmem:[%s3 + $0x5b8] sm:$0xff]
  %v605 = vld [vmem:[%s3 + $0x5c0] sm:$0xff]
  %v606 = vld [vmem:[%s3 + $0x5c8] sm:$0xff]
  %v607 = vld [vmem:[%s3 + $0x5d0] sm:$0xff]
  %v608 = vld [vmem:[%s3 + $0x5d8] sm:$0xff]
  %v609 = vld [vmem:[%s3 + $0x5e0] sm:$0xff]
  %v610 = vld [vmem:[%s3 + $0x5e8] sm:$0xff]
  %v611 = vld [vmem:[%s3 + $0x5f0] sm:$0xff]
  %v612 = vld [vmem:[%s3 + $0x5f8] sm:$0xff]
  %v613 = vld [vmem:[%s3 + $0x600] sm:$0xff]
  %v614 = vld [vmem:[%s3 + $0x608] sm:$0xff]
  %v615 = vld [vmem:[%s3 + $0x610] sm:$0xff]
  %v616 = vld [vmem:[%s3 + $0x618] sm:$0xff]
  %v617 = vld [vmem:[%s3 + $0x620] sm:$0xff]
  %v618 = vld [vmem:[%s3 + $0x628] sm:$0xff]
  %v619 = vld [vmem:[%s3 + $0x630] sm:$0xff]
  %v620 = vld [vmem:[%s3 + $0x638] sm:$0xff]
  %v621 = vld [vmem:[%s3 + $0x640] sm:$0xff]
  %v622 = vld [vmem:[%s3 + $0x648] sm:$0xff]
  %v623 = vld [vmem:[%s3 + $0x650] sm:$0xff]
  %v624 = vld [vmem:[%s3 + $0x658] sm:$0xff]
  %v625 = vld [vmem:[%s3 + $0x660] sm:$0xff]
  %v626 = vld [vmem:[%s3 + $0x668] sm:$0xff]
  %v627 = vld [vmem:[%s3 + $0x670] sm:$0xff]
  %v628 = vld [vmem:[%s3 + $0x678] sm:$0xff]
  %v629 = vld [vmem:[%s3 + $0x680] sm:$0xff]
  %v630 = vld [vmem:[%s3 + $0x688] sm:$0xff]
  %v631 = vld [vmem:[%s3 + $0x690] sm:$0xff]
  %v632 = vld [vmem:[%s3 + $0x698] sm:$0xff]
  %v633 = vld [vmem:[%s3 + $0x6a0] sm:$0xff]
  %v634 = vld [vmem:[%s3 + $0x6a8] sm:$0xff]
  %v635 = vld [vmem:[%s3 + $0x6b0] sm:$0xff]
  %v636 = vld [vmem:[%s3 + $0x6b8] sm:$0xff]
  %v637 = vld [vmem:[%s3 + $0x6c0] sm:$0xff]
  %v638 = vld [vmem:[%s3 + $0x6c8] sm:$0xff]
  %v639 = vld [vmem:[%s3 + $0x6d0] sm:$0xff]
  %v640 = vld [vmem:[%s3 + $0x6d8] sm:$0xff]
  %v641 = vld [vmem:[%s3 + $0x6e0] sm:$0xff]
  %v642 = vld [vmem:[%s3 + $0x6e8] sm:$0xff]
  %v643 = vld [vmem:[%s3 + $0x6f0] sm:$0xff]
  %v644 = vld [vmem:[%s3 + $0x6f8] sm:$0xff]
  %v645 = vld [vmem:[%s3 + $0x700] sm:$0xff]
  %v646 = vld [vmem:[%s3 + $0x708] sm:$0xff]
  %v647 = vld [vmem:[%s3 + $0x710] sm:$0xff]
  %v648 = vld [vmem:[%s3 + $0x718] sm:$0xff]
  %v649 = vld [vmem:[%s3 + $0x720] sm:$0xff]
  %v650 = vld [vmem:[%s3 + $0x728] sm:$0xff]
  %v651 = vld [vmem:[%s3 + $0x730] sm:$0xff]
  %v652 = vld [vmem:[%s3 + $0x738] sm:$0xff]
  %v653 = vld [vmem:[%s3 + $0x740] sm:$0xff]
  %v654 = vld [vmem:[%s3 + $0x748] sm:$0xff]
  %v655 = vld [vmem:[%s3 + $0x750] sm:$0xff]
  %v656 = vld [vmem:[%s3 + $0x758] sm:$0xff]
  %v657 = vld [vmem:[%s3 + $0x760] sm:$0xff]
  %v658 = vld [vmem:[%s3 + $0x768] sm:$0xff]
  %v659 = vld [vmem:[%s3 + $0x770] sm:$0xff]
  %v660 = vld [vmem:[%s3 + $0x778] sm:$0xff]
  %v661 = vld [vmem:[%s3 + $0x780] sm:$0xff]
  %v662 = vld [vmem:[%s3 + $0x788] sm:$0xff]
  %v663 = vld [vmem:[%s3 + $0x790] sm:$0xff]
  %v664 = vld [vmem:[%s3 + $0x798] sm:$0xff]
  %v665 = vld [vmem:[%s3 + $0x7a0] sm:$0xff]
  %v666 = vld [vmem:[%s3 + $0x7a8] sm:$0xff]
  %v667 = vld [vmem:[%s3 + $0x7b0] sm:$0xff]
  %v668 = vld [vmem:[%s3 + $0x7b8] sm:$0xff]
  %v669 = vld [vmem:[%s3 + $0x7c0] sm:$0xff]
  %v670 = vld [vmem:[%s3 + $0x7c8] sm:$0xff]
  %v671 = vld [vmem:[%s3 + $0x7d0] sm:$0xff]
  %v672 = vld [vmem:[%s3 + $0x7d8] sm:$0xff]
  %v673 = vld [vmem:[%s3 + $0x7e0] sm:$0xff]
  %v674 = vld [vmem:[%s3 + $0x7e8] sm:$0xff]
  %v675 = vld [vmem:[%s3 + $0x7f0] sm:$0xff]
  %v676 = vld [vmem:[%s3 + $0x7f8] sm:$0xff]
  %v677 = vld [vmem:[%s3 + $0x800] sm:$0xff]
  %v678 = vld [vmem:[%s3 + $0x808] sm:$0xff]
  %v679 = vld [vmem:[%s3 + $0x810] sm:$0xff]
  %v680 = vld [vmem:[%s3 + $0x818] sm:$0xff]
  %v681 = vld [vmem:[%s3 + $0x820] sm:$0xff]
  %v682 = vld [vmem:[%s3 + $0x828] sm:$0xff]
  %v683 = vld [vmem:[%s3 + $0x830] sm:$0xff]
  %v684 = vld [vmem:[%s3 + $0x838] sm:$0xff]
  %v685 = vld [vmem:[%s3 + $0x840] sm:$0xff]
  %v686 = vld [vmem:[%s3 + $0x848] sm:$0xff]
  %v687 = vld [vmem:[%s3 + $0x850] sm:$0xff]
  %v688 = vld [vmem:[%s3 + $0x858] sm:$0xff]
  %v689 = vld [vmem:[%s3 + $0x860] sm:$0xff]
  %v690 = vld [vmem:[%s3 + $0x868] sm:$0xff]
  %v691 = vld [vmem:[%s3 + $0x870] sm:$0xff]
  %v692 = vld [vmem:[%s3 + $0x878] sm:$0xff]
  %v693 = vld [vmem:[%s3 + $0x880] sm:$0xff]
  %v694 = vld [vmem:[%s3 + $0x888] sm:$0xff]
  %v695 = vld [vmem:[%s3 + $0x890] sm:$0xff]
  %v696 = vld [vmem:[%s3 + $0x898] sm:$0xff]
  %v697 = vld [vmem:[%s3 + $0x8a0] sm:$0xff]
  %v698 = vld [vmem:[%s3 + $0x8a8] sm:$0xff]
  %v699 = vld [vmem:[%s3 + $0x8b0] sm:$0xff]
  %v700 = vld [vmem:[%s3 + $0x8b8] sm:$0xff]
  %v701 = vld [vmem:[%s3 + $0x8c0] sm:$0xff]
  %v702 = vld [vmem:[%s3 + $0x8c8] sm:$0xff]
  %v703 = vld [vmem:[%s3 + $0x8d0] sm:$0xff]
  %v704 = vld [vmem:[%s3 + $0x8d8] sm:$0xff]
  %v705 = vld [vmem:[%s3 + $0x8e0] sm:$0xff]
  %v706 = vld [vmem:[%s3 + $0x8e8] sm:$0xff]
  %v707 = vld [vmem:[%s3 + $0x8f0] sm:$0xff]
  %v708 = vld [vmem:[%s3 + $0x8f8] sm:$0xff]
  %v709 = vld [vmem:[%s3 + $0x900] sm:$0xff]
  %v710 = vld [vmem:[%s3 + $0x908] sm:$0xff]
  %v711 = vld [vmem:[%s3 + $0x910] sm:$0xff]
  %v712 = vld [vmem:[%s3 + $0x918] sm:$0xff]
  %v713 = vld [vmem:[%s3 + $0x920] sm:$0xff]
  %v714 = vld [vmem:[%s3 + $0x928] sm:$0xff]
  %v715 = vld [vmem:[%s3 + $0x930] sm:$0xff]
  %v716 = vld [vmem:[%s3 + $0x938] sm:$0xff]
  %v717 = vld [vmem:[%s3 + $0x940] sm:$0xff]
  %v718 = vld [vmem:[%s3 + $0x948] sm:$0xff]
  %v719 = vld [vmem:[%s3 + $0x950] sm:$0xff]
  %v720 = vld [vmem:[%s3 + $0x958] sm:$0xff]
  %v721 = vld [vmem:[%s3 + $0x960] sm:$0xff]
  %v722 = vld [vmem:[%s3 + $0x968] sm:$0xff]
  %v723 = vld [vmem:[%s3 + $0x970] sm:$0xff]
  %v724 = vld [vmem:[%s3 + $0x978] sm:$0xff]
  %v725 = vld [vmem:[%s3 + $0x980] sm:$0xff]
  %v726 = vld [vmem:[%s3 + $0x988] sm:$0xff]
  %v727 = vld [vmem:[%s3 + $0x990] sm:$0xff]
  %v728 = vld [vmem:[%s3 + $0x998] sm:$0xff]
  %v729 = vld [vmem:[%s3 + $0x9a0] sm:$0xff]
  %v730 = vld [vmem:[%s3 + $0x9a8] sm:$0xff]
  %v731 = vld [vmem:[%s3 + $0x9b0] sm:$0xff]
  %v732 = vld [vmem:[%s3 + $0x9b8] sm:$0xff]
  %v733 = vld [vmem:[%s3 + $0x9c0] sm:$0xff]
  %v734 = vld [vmem:[%s3 + $0x9c8] sm:$0xff]
  %v735 = vld [vmem:[%s3 + $0x9d0] sm:$0xff]
  %v736 = vld [vmem:[%s3 + $0x9d8] sm:$0xff]
  %v737 = vld [vmem:[%s3 + $0x9e0] sm:$0xff]
  %v738 = vld [vmem:[%s3 + $0x9e8] sm:$0xff]
  %v739 = vld [vmem:[%s3 + $0x9f0] sm:$0xff]
  %v740 = vld [vmem:[%s3 + $0x9f8] sm:$0xff]
  %v741 = vld [vmem:[%s3 + $0xa00] sm:$0xff]
  %v742 = vld [vmem:[%s3 + $0xa08] sm:$0xff]
  %v743 = vld [vmem:[%s3 + $0xa10] sm:$0xff]
  %v744 = vld [vmem:[%s3 + $0xa18] sm:$0xff]
  %v745 = vld [vmem:[%s3 + $0xa20] sm:$0xff]
  %v746 = vld [vmem:[%s3 + $0xa28] sm:$0xff]
  %v747 = vld [vmem:[%s3 + $0xa30] sm:$0xff]
  %v748 = vld [vmem:[%s3 + $0xa38] sm:$0xff]
  %v749 = vld [vmem:[%s3 + $0xa40] sm:$0xff]
  %v750 = vld [vmem:[%s3 + $0xa48] sm:$0xff]
  %v751 = vld [vmem:[%s3 + $0xa50] sm:$0xff]
  %v752 = vld [vmem:[%s3 + $0xa58] sm:$0xff]
  %v753 = vld [vmem:[%s3 + $0xa60] sm:$0xff]
  %v754 = vld [vmem:[%s3 + $0xa68] sm:$0xff]
  %v755 = vld [vmem:[%s3 + $0xa70] sm:$0xff]
  %v756 = vld [vmem:[%s3 + $0xa78] sm:$0xff]
  %v757 = vld [vmem:[%s3 + $0xa80] sm:$0xff]
  %v758 = vld [vmem:[%s3 + $0xa88] sm:$0xff]
  %v759 = vld [vmem:[%s3 + $0xa90] sm:$0xff]
  %v760 = vld [vmem:[%s3 + $0xa98] sm:$0xff]
  %v761 = vld [vmem:[%s3 + $0xaa0] sm:$0xff]
  %v762 = vld [vmem:[%s3 + $0xaa8] sm:$0xff]
  %v763 = vld [vmem:[%s3 + $0xab0] sm:$0xff]
  %v764 = vld [vmem:[%s3 + $0xab8] sm:$0xff]
  %v765 = vld [vmem:[%s3 + $0xac0] sm:$0xff]
  %v766 = vld [vmem:[%s3 + $0xac8] sm:$0xff]
  %v767 = vld [vmem:[%s3 + $0xad0] sm:$0xff]
  %v768 = vld [vmem:[%s3 + $0xad8] sm:$0xff]
  %v769 = vld [vmem:[%s3 + $0xae0] sm:$0xff]
  %v770 = vld [vmem:[%s3 + $0xae8] sm:$0xff]
  %v771 = vld [vmem:[%s3 + $0xaf0] sm:$0xff]
  %v772 = vld [vmem:[%s3 + $0xaf8] sm:$0xff]
  %v773 = vld [vmem:[%s3 + $0xb00] sm:$0xff]
  %v774 = vld [vmem:[%s3 + $0xb08] sm:$0xff]
  %v775 = vld [vmem:[%s3 + $0xb10] sm:$0xff]
  %v776 = vld [vmem:[%s3 + $0xb18] sm:$0xff]
  %v777 = vld [vmem:[%s3 + $0xb20] sm:$0xff]
  %v778 = vld [vmem:[%s3 + $0xb28] sm:$0xff]
  %v779 = vld [vmem:[%s3 + $0xb30] sm:$0xff]
  %v780 = vld [vmem:[%s3 + $0xb38] sm:$0xff]
  %v781 = vld [vmem:[%s3 + $0xb40] sm:$0xff]
  %v782 = vld [vmem:[%s3 + $0xb48] sm:$0xff]
  %v783 = vld [vmem:[%s3 + $0xb50] sm:$0xff]
  %v784 = vld [vmem:[%s3 + $0xb58] sm:$0xff]
  %v785 = vld [vmem:[%s3 + $0xb60] sm:$0xff]
  %v786 = vld [vmem:[%s3 + $0xb68] sm:$0xff]
  %v787 = vld [vmem:[%s3 + $0xb70] sm:$0xff]
  %v788 = vld [vmem:[%s3 + $0xb78] sm:$0xff]
  %v789 = vld [vmem:[%s3 + $0xb80] sm:$0xff]
  %v790 = vld [vmem:[%s3 + $0xb88] sm:$0xff]
  %v791 = vld [vmem:[%s3 + $0xb90] sm:$0xff]
  %v792 = vld [vmem:[%s3 + $0xb98] sm:$0xff]
  %v793 = vld [vmem:[%s3 + $0xba0] sm:$0xff]
  %v794 = vld [vmem:[%s3 + $0xba8] sm:$0xff]
  %v795 = vld [vmem:[%s3 + $0xbb0] sm:$0xff]
  %v796 = vld [vmem:[%s3 + $0xbb8] sm:$0xff]
  %v797 = vld [vmem:[%s3 + $0xbc0] sm:$0xff]
  %v798 = vld [vmem:[%s3 + $0xbc8] sm:$0xff]
  %v799 = vld [vmem:[%s3 + $0xbd0] sm:$0xff]
  %v800 = vld [vmem:[%s3 + $0xbd8] sm:$0xff]
  %v801 = vld [vmem:[%s3 + $0xbe0] sm:$0xff]
  %v802 = vld [vmem:[%s3 + $0xbe8] sm:$0xff]
  %v803 = vld [vmem:[%s3 + $0xbf0] sm:$0xff]
  %v804 = vld [vmem:[%s3 + $0xbf8] sm:$0xff]
  %v805 = vld [vmem:[%s3 + $0xc00] sm:$0xff]
  %v806 = vld [vmem:[%s3 + $0xc08] sm:$0xff]
  %v807 = vld [vmem:[%s3 + $0xc10] sm:$0xff]
  %v808 = vld [vmem:[%s3 + $0xc18] sm:$0xff]
  %v809 = vld [vmem:[%s3 + $0xc20] sm:$0xff]
  %v810 = vld [vmem:[%s3 + $0xc28] sm:$0xff]
  %v811 = vld [vmem:[%s3 + $0xc30] sm:$0xff]
  %v812 = vld [vmem:[%s3 + $0xc38] sm:$0xff]
  %v813 = vld [vmem:[%s4] sm:$0xff]
  %v814 = vld [vmem:[%s4 + $0x8] sm:$0xff]
  %v815 = vld [vmem:[%s4 + $0x10] sm:$0xff]
  %v816 = vld [vmem:[%s4 + $0x18] sm:$0xff]
  %v817 = vld [vmem:[%s4 + $0x20] sm:$0xff]
  %v818 = vld [vmem:[%s4 + $0x28] sm:$0xff]
  %v819 = vld [vmem:[%s4 + $0x30] sm:$0xff]
  %v820 = vld [vmem:[%s4 + $0x38] sm:$0xff]
  %v821 = vld [vmem:[%s4 + $0x40] sm:$0xff]
  %v822 = vld [vmem:[%s4 + $0x48] sm:$0xff]
  %v823 = vld [vmem:[%s4 + $0x50] sm:$0xff]
  %v824 = vld [vmem:[%s4 + $0x58] sm:$0xff]
  %v825 = vld [vmem:[%s4 + $0x60] sm:$0xff]
  %v826 = vld [vmem:[%s4 + $0x68] sm:$0xff]
  %v827 = vld [vmem:[%s4 + $0x70] sm:$0xff]
  %v828 = vld [vmem:[%s4 + $0x78] sm:$0xff]
  %v829 = vld [vmem:[%s4 + $0x80] sm:$0xff]
  %v830 = vld [vmem:[%s4 + $0x88] sm:$0xff]
  %v831 = vld [vmem:[%s4 + $0x90] sm:$0xff]
  %v832 = vld [vmem:[%s4 + $0x98] sm:$0xff]
  %v833 = vld [vmem:[%s4 + $0xa0] sm:$0xff]
  %v834 = vld [vmem:[%s4 + $0xa8] sm:$0xff]
  %v835 = vld [vmem:[%s4 + $0xb0] sm:$0xff]
  %v836 = vld [vmem:[%s4 + $0xb8] sm:$0xff]
  %v837 = vld [vmem:[%s4 + $0xc0] sm:$0xff]
  %v838 = vld [vmem:[%s4 + $0xc8] sm:$0xff]
  %v839 = vld [vmem:[%s4 + $0xd0] sm:$0xff]
  %v840 = vld [vmem:[%s4 + $0xd8] sm:$0xff]
  %v841 = vld [vmem:[%s4 + $0xe0] sm:$0xff]
  %v842 = vld [vmem:[%s4 + $0xe8] sm:$0xff]
  %v843 = vld [vmem:[%s4 + $0xf0] sm:$0xff]
  %v844 = vld [vmem:[%s4 + $0xf8] sm:$0xff]
  %845 = vmatprep.subr.mxu0 0.0
  %846 = vmatpush1.msra.mxu0 %v828
  %847 = vmatprep.subr.mxu0 0.0
  %848 = vmatpush1.msra.mxu0 %v827
  %849 = vmatprep.subr.mxu0 0.0
  %850 = vmatpush1.msra.mxu0 %v826
  %851 = vmatprep.subr.mxu0 0.0
  %852 = vmatpush1.msra.mxu0 %v825
  %853 = vmatprep.subr.mxu0 0.0
  %854 = vmatpush1.msra.mxu0 %v824
  %855 = vmatprep.subr.mxu0 0.0
  %856 = vmatpush1.msra.mxu0 %v823
  %857 = vmatprep.subr.mxu0 0.0
  %858 = vmatpush1.msra.mxu0 %v822
  %859 = vmatprep.subr.mxu0 0.0
  %860 = vmatpush1.msra.mxu0 %v821
  %861 = vmatprep.subr.mxu0 0.0
  %862 = vmatpush1.msra.mxu0 %v820
  %863 = vmatprep.subr.mxu0 0.0
  %864 = vmatpush1.msra.mxu0 %v819
  %865 = vmatprep.subr.mxu0 0.0
  %866 = vmatpush1.msra.mxu0 %v818
  %867 = vmatprep.subr.mxu0 0.0
  %868 = vmatpush1.msra.mxu0 %v817
  %869 = vmatprep.subr.mxu0 0.0
  %870 = vmatpush1.msra.mxu0 %v816
  %871 = vmatprep.subr.mxu0 0.0
  %872 = vmatpush1.msra.mxu0 %v815
  %873 = vmatprep.subr.mxu0 0.0
  %874 = vmatpush1.msra.mxu0 %v814
  %875 = vmatprep.subr.mxu0 0.0
  %876 = vmatpush1.msra.mxu0 %v813
  %877 = vmatprep.subr.mxu0 0.0
  %878 = vmatpush2.msra.mxu0 %v844
  %879 = vmatprep.subr.mxu0 0.0
  %880 = vmatpush2.msra.mxu0 %v843
  %881 = vmatprep.subr.mxu0 0.0
  %882 = vmatpush2.msra.mxu0 %v842
  %883 = vmatprep.subr.mxu0 0.0
  %884 = vmatpush2.msra.mxu0 %v841
  %885 = vmatprep.subr.mxu0 0.0
  %886 = vmatpush2.msra.mxu0 %v840
  %887 = vmatprep.subr.mxu0 0.0
  %888 = vmatpush2.msra.mxu0 %v839
  %889 = vmatprep.subr.mxu0 0.0
  %890 = vmatpush2.msra.mxu0 %v838
  %891 = vmatprep.subr.mxu0 0.0
  %892 = vmatpush2.msra.mxu0 %v837
  %893 = vmatprep.subr.mxu0 0.0
  %894 = vmatpush2.msra.mxu0 %v836
  %895 = vmatprep.subr.mxu0 0.0
  %896 = vmatpush2.msra.mxu0 %v835
  %897 = vmatprep.subr.mxu0 0.0
  %898 = vmatpush2.msra.mxu0 %v834
  %899 = vmatprep.subr.mxu0 0.0
  %900 = vmatpush2.msra.mxu0 %v833
  %901 = vmatprep.subr.mxu0 0.0
  %902 = vmatpush2.msra.mxu0 %v832
  %903 = vmatprep.subr.mxu0 0.0
  %904 = vmatpush2.msra.mxu0 %v831
  %905 = vmatprep.subr.mxu0 0.0
  %906 = vmatpush2.msra.mxu0 %v830
  %907 = vmatprep.subr.mxu0 0.0
  %908 = vmatpush2.msra.mxu0 %v829
  %909 = vmatprep.mubr.f32.mxu0 %v422
  %910 = vmatmul.mubr.f32.gmra.mxu0 %v421
  %v911 = vpop.f32.mrf.mxu0
  %v912 = vadd.f32 0.0, %v911
  %v913 = vpop.f32.mrf.mxu0
  %914 = vmatprep.mubr.f32.mxu0 %v424
  %915 = vmatmul.mubr.f32.gmra.mxu0 %v423
  %v916 = vpop.f32.mrf.mxu0
  %v917 = vadd.f32 0.0, %v916
  %v918 = vpop.f32.mrf.mxu0
  %919 = vmatprep.mubr.f32.mxu0 %v426
  %920 = vmatmul.mubr.f32.gmra.mxu0 %v425
  %v921 = vpop.f32.mrf.mxu0
  %v922 = vadd.f32 0.0, %v921
  %v923 = vpop.f32.mrf.mxu0
  %924 = vmatprep.mubr.f32.mxu0 %v428
  %925 = vmatmul.mubr.f32.gmra.mxu0 %v427
  %v926 = vpop.f32.mrf.mxu0
  %v927 = vadd.f32 0.0, %v926
  %v928 = vpop.f32.mrf.mxu0
  %929 = vmatprep.mubr.f32.mxu0 %v430
  %930 = vmatmul.mubr.f32.gmra.mxu0 %v429
  %v931 = vpop.f32.mrf.mxu0
  %v932 = vadd.f32 0.0, %v931
  %v933 = vpop.f32.mrf.mxu0
  %934 = vmatprep.mubr.f32.mxu0 %v432
  %935 = vmatmul.mubr.f32.gmra.mxu0 %v431
  %v936 = vpop.f32.mrf.mxu0
  %v937 = vadd.f32 0.0, %v936
  %v938 = vpop.f32.mrf.mxu0
  %939 = vmatprep.mubr.f32.mxu0 %v434
  %940 = vmatmul.mubr.f32.gmra.mxu0 %v433
  %v941 = vpop.f32.mrf.mxu0
  %v942 = vadd.f32 0.0, %v941
  %v943 = vpop.f32.mrf.mxu0
  %944 = vmatprep.mubr.f32.mxu0 %v436
  %945 = vmatmul.mubr.f32.gmra.mxu0 %v435
  %v946 = vpop.f32.mrf.mxu0
  %v947 = vadd.f32 0.0, %v946
  %v948 = vpop.f32.mrf.mxu0
  %949 = vmatprep.mubr.f32.mxu0 %v438
  %950 = vmatmul.mubr.f32.gmra.mxu0 %v437
  %v951 = vpop.f32.mrf.mxu0
  %v952 = vadd.f32 0.0, %v951
  %v953 = vpop.f32.mrf.mxu0
  %954 = vmatprep.mubr.f32.mxu0 %v440
  %955 = vmatmul.mubr.f32.gmra.mxu0 %v439
  %v956 = vpop.f32.mrf.mxu0
  %v957 = vadd.f32 0.0, %v956
  %v958 = vpop.f32.mrf.mxu0
  %959 = vmatprep.mubr.f32.mxu0 %v442
  %960 = vmatmul.mubr.f32.gmra.mxu0 %v441
  %v961 = vpop.f32.mrf.mxu0
  %v962 = vadd.f32 0.0, %v961
  %v963 = vpop.f32.mrf.mxu0
  %964 = vmatprep.mubr.f32.mxu0 %v444
  %965 = vmatmul.mubr.f32.gmra.mxu0 %v443
  %v966 = vpop.f32.mrf.mxu0
  %v967 = vadd.f32 0.0, %v966
  %v968 = vpop.f32.mrf.mxu0
  %969 = vmatprep.mubr.f32.mxu0 %v446
  %970 = vmatmul.mubr.f32.gmra.mxu0 %v445
  %v971 = vpop.f32.mrf.mxu0
  %v972 = vadd.f32 0.0, %v971
  %v973 = vpop.f32.mrf.mxu0
  %974 = vmatprep.mubr.f32.mxu0 %v448
  %975 = vmatmul.mubr.f32.gmra.mxu0 %v447
  %v976 = vpop.f32.mrf.mxu0
  %v977 = vadd.f32 0.0, %v976
  %v978 = vpop.f32.mrf.mxu0
  %979 = vmatprep.mubr.f32.mxu0 %v450
  %980 = vmatmul.mubr.f32.gmra.mxu0 %v449
  %v981 = vpop.f32.mrf.mxu0
  %v982 = vadd.f32 0.0, %v981
  %v983 = vpop.f32.mrf.mxu0
  %984 = vmatprep.mubr.f32.mxu0 %v452
  %985 = vmatmul.mubr.f32.gmra.mxu0 %v451
  %v986 = vpop.f32.mrf.mxu0
  %v987 = vadd.f32 0.0, %v986
  %v988 = vpop.f32.mrf.mxu0
  %989 = vmatprep.mubr.f32.mxu0 %v454
  %990 = vmatmul.mubr.f32.gmra.mxu0 %v453
  %v991 = vpop.f32.mrf.mxu0
  %v992 = vadd.f32 0.0, %v991
  %v993 = vpop.f32.mrf.mxu0
  %994 = vmatprep.mubr.f32.mxu0 %v456
  %995 = vmatmul.mubr.f32.gmra.mxu0 %v455
  %v996 = vpop.f32.mrf.mxu0
  %v997 = vadd.f32 0.0, %v996
  %v998 = vpop.f32.mrf.mxu0
  %999 = vmatprep.mubr.f32.mxu0 %v458
  %1000 = vmatmul.mubr.f32.gmra.mxu0 %v457
  %v1001 = vpop.f32.mrf.mxu0
  %v1002 = vadd.f32 0.0, %v1001
  %v1003 = vpop.f32.mrf.mxu0
  %1004 = vmatprep.mubr.f32.mxu0 %v460
  %1005 = vmatmul.mubr.f32.gmra.mxu0 %v459
  %v1006 = vpop.f32.mrf.mxu0
  %v1007 = vadd.f32 0.0, %v1006
  %v1008 = vpop.f32.mrf.mxu0
  %1009 = vmatprep.mubr.f32.mxu0 %v462
  %1010 = vmatmul.mubr.f32.gmra.mxu0 %v461
  %v1011 = vpop.f32.mrf.mxu0
  %v1012 = vadd.f32 0.0, %v1011
  %v1013 = vpop.f32.mrf.mxu0
  %1014 = vmatprep.mubr.f32.mxu0 %v464
  %1015 = vmatmul.mubr.f32.gmra.mxu0 %v463
  %v1016 = vpop.f32.mrf.mxu0
  %v1017 = vadd.f32 0.0, %v1016
  %v1018 = vpop.f32.mrf.mxu0
  %1019 = vmatprep.mubr.f32.mxu0 %v466
  %1020 = vmatmul.mubr.f32.gmra.mxu0 %v465
  %v1021 = vpop.f32.mrf.mxu0
  %v1022 = vadd.f32 0.0, %v1021
  %v1023 = vpop.f32.mrf.mxu0
  %1024 = vmatprep.mubr.f32.mxu0 %v468
  %1025 = vmatmul.mubr.f32.gmra.mxu0 %v467
  %v1026 = vpop.f32.mrf.mxu0
  %v1027 = vadd.f32 0.0, %v1026
  %v1028 = vpop.f32.mrf.mxu0
  %1029 = vmatprep.mubr.f32.mxu0 %v470
  %1030 = vmatmul.mubr.f32.gmra.mxu0 %v469
  %v1031 = vpop.f32.mrf.mxu0
  %v1032 = vadd.f32 0.0, %v1031
  %v1033 = vpop.f32.mrf.mxu0
  %1034 = vmatprep.mubr.f32.mxu0 %v472
  %1035 = vmatmul.mubr.f32.gmra.mxu0 %v471
  %v1036 = vpop.f32.mrf.mxu0
  %v1037 = vadd.f32 0.0, %v1036
  %v1038 = vpop.f32.mrf.mxu0
  %1039 = vmatprep.mubr.f32.mxu0 %v474
  %1040 = vmatmul.mubr.f32.gmra.mxu0 %v473
  %v1041 = vpop.f32.mrf.mxu0
  %v1042 = vadd.f32 0.0, %v1041
  %v1043 = vpop.f32.mrf.mxu0
  %1044 = vmatprep.mubr.f32.mxu0 %v476
  %1045 = vmatmul.mubr.f32.gmra.mxu0 %v475
  %v1046 = vpop.f32.mrf.mxu0
  %v1047 = vadd.f32 0.0, %v1046
  %v1048 = vpop.f32.mrf.mxu0
  %1049 = vmatprep.mubr.f32.mxu0 %v478
  %1050 = vmatmul.mubr.f32.gmra.mxu0 %v477
  %v1051 = vpop.f32.mrf.mxu0
  %v1052 = vadd.f32 0.0, %v1051
  %v1053 = vpop.f32.mrf.mxu0
  %1054 = vmatprep.mubr.f32.mxu0 %v480
  %1055 = vmatmul.mubr.f32.gmra.mxu0 %v479
  %v1056 = vpop.f32.mrf.mxu0
  %v1057 = vadd.f32 0.0, %v1056
  %v1058 = vpop.f32.mrf.mxu0
  %1059 = vmatprep.mubr.f32.mxu0 %v482
  %1060 = vmatmul.mubr.f32.gmra.mxu0 %v481
  %v1061 = vpop.f32.mrf.mxu0
  %v1062 = vadd.f32 0.0, %v1061
  %v1063 = vpop.f32.mrf.mxu0
  %1064 = vmatprep.mubr.f32.mxu0 %v484
  %1065 = vmatmul.mubr.f32.gmra.mxu0 %v483
  %v1066 = vpop.f32.mrf.mxu0
  %v1067 = vadd.f32 0.0, %v1066
  %v1068 = vpop.f32.mrf.mxu0
  %1069 = vmatprep.mubr.f32.mxu0 %v486
  %1070 = vmatmul.mubr.f32.gmra.mxu0 %v485
  %v1071 = vpop.f32.mrf.mxu0
  %v1072 = vadd.f32 0.0, %v1071
  %v1073 = vpop.f32.mrf.mxu0
  %1074 = vmatprep.mubr.f32.mxu0 %v488
  %1075 = vmatmul.mubr.f32.gmra.mxu0 %v487
  %v1076 = vpop.f32.mrf.mxu0
  %v1077 = vadd.f32 0.0, %v1076
  %v1078 = vpop.f32.mrf.mxu0
  %1079 = vmatprep.mubr.f32.mxu0 %v490
  %1080 = vmatmul.mubr.f32.gmra.mxu0 %v489
  %v1081 = vpop.f32.mrf.mxu0
  %v1082 = vadd.f32 0.0, %v1081
  %v1083 = vpop.f32.mrf.mxu0
  %1084 = vmatprep.mubr.f32.mxu0 %v492
  %1085 = vmatmul.mubr.f32.gmra.mxu0 %v491
  %v1086 = vpop.f32.mrf.mxu0
  %v1087 = vadd.f32 0.0, %v1086
  %v1088 = vpop.f32.mrf.mxu0
  %1089 = vmatprep.mubr.f32.mxu0 %v494
  %1090 = vmatmul.mubr.f32.gmra.mxu0 %v493
  %v1091 = vpop.f32.mrf.mxu0
  %v1092 = vadd.f32 0.0, %v1091
  %v1093 = vpop.f32.mrf.mxu0
  %1094 = vmatprep.mubr.f32.mxu0 %v496
  %1095 = vmatmul.mubr.f32.gmra.mxu0 %v495
  %v1096 = vpop.f32.mrf.mxu0
  %v1097 = vadd.f32 0.0, %v1096
  %v1098 = vpop.f32.mrf.mxu0
  %1099 = vmatprep.mubr.f32.mxu0 %v498
  %1100 = vmatmul.mubr.f32.gmra.mxu0 %v497
  %v1101 = vpop.f32.mrf.mxu0
  %v1102 = vadd.f32 0.0, %v1101
  %v1103 = vpop.f32.mrf.mxu0
  %1104 = vmatprep.mubr.f32.mxu0 %v500
  %1105 = vmatmul.mubr.f32.gmra.mxu0 %v499
  %v1106 = vpop.f32.mrf.mxu0
  %v1107 = vadd.f32 0.0, %v1106
  %v1108 = vpop.f32.mrf.mxu0
  %1109 = vmatprep.mubr.f32.mxu0 %v502
  %1110 = vmatmul.mubr.f32.gmra.mxu0 %v501
  %v1111 = vpop.f32.mrf.mxu0
  %v1112 = vadd.f32 0.0, %v1111
  %v1113 = vpop.f32.mrf.mxu0
  %1114 = vmatprep.mubr.f32.mxu0 %v504
  %1115 = vmatmul.mubr.f32.gmra.mxu0 %v503
  %v1116 = vpop.f32.mrf.mxu0
  %v1117 = vadd.f32 0.0, %v1116
  %v1118 = vpop.f32.mrf.mxu0
  %1119 = vmatprep.mubr.f32.mxu0 %v506
  %1120 = vmatmul.mubr.f32.gmra.mxu0 %v505
  %v1121 = vpop.f32.mrf.mxu0
  %v1122 = vadd.f32 0.0, %v1121
  %v1123 = vpop.f32.mrf.mxu0
  %1124 = vmatprep.mubr.f32.mxu0 %v508
  %1125 = vmatmul.mubr.f32.gmra.mxu0 %v507
  %v1126 = vpop.f32.mrf.mxu0
  %v1127 = vadd.f32 0.0, %v1126
  %v1128 = vpop.f32.mrf.mxu0
  %1129 = vmatprep.mubr.f32.mxu0 %v510
  %1130 = vmatmul.mubr.f32.gmra.mxu0 %v509
  %v1131 = vpop.f32.mrf.mxu0
  %v1132 = vadd.f32 0.0, %v1131
  %v1133 = vpop.f32.mrf.mxu0
  %1134 = vmatprep.mubr.f32.mxu0 %v512
  %1135 = vmatmul.mubr.f32.gmra.mxu0 %v511
  %v1136 = vpop.f32.mrf.mxu0
  %v1137 = vadd.f32 0.0, %v1136
  %v1138 = vpop.f32.mrf.mxu0
  %1139 = vmatprep.mubr.f32.mxu0 %v514
  %1140 = vmatmul.mubr.f32.gmra.mxu0 %v513
  %v1141 = vpop.f32.mrf.mxu0
  %v1142 = vadd.f32 0.0, %v1141
  %v1143 = vpop.f32.mrf.mxu0
  %1144 = vmatprep.mubr.f32.mxu0 %v516
  %1145 = vmatmul.mubr.f32.gmra.mxu0 %v515
  %v1146 = vpop.f32.mrf.mxu0
  %v1147 = vadd.f32 0.0, %v1146
  %v1148 = vpop.f32.mrf.mxu0
  %1149 = vmatprep.mubr.f32.mxu0 %v518
  %1150 = vmatmul.mubr.f32.gmra.mxu0 %v517
  %v1151 = vpop.f32.mrf.mxu0
  %v1152 = vadd.f32 0.0, %v1151
  %v1153 = vpop.f32.mrf.mxu0
  %1154 = vmatprep.mubr.f32.mxu0 %v520
  %1155 = vmatmul.mubr.f32.gmra.mxu0 %v519
  %v1156 = vpop.f32.mrf.mxu0
  %v1157 = vadd.f32 0.0, %v1156
  %v1158 = vpop.f32.mrf.mxu0
  %1159 = vmatprep.mubr.f32.mxu0 %v522
  %1160 = vmatmul.mubr.f32.gmra.mxu0 %v521
  %v1161 = vpop.f32.mrf.mxu0
  %v1162 = vadd.f32 0.0, %v1161
  %v1163 = vpop.f32.mrf.mxu0
  %1164 = vmatprep.mubr.f32.mxu0 %v524
  %1165 = vmatmul.mubr.f32.gmra.mxu0 %v523
  %v1166 = vpop.f32.mrf.mxu0
  %v1167 = vadd.f32 0.0, %v1166
  %v1168 = vpop.f32.mrf.mxu0
  %1169 = vmatprep.mubr.f32.mxu0 %v526
  %1170 = vmatmul.mubr.f32.gmra.mxu0 %v525
  %v1171 = vpop.f32.mrf.mxu0
  %v1172 = vadd.f32 0.0, %v1171
  %v1173 = vpop.f32.mrf.mxu0
  %1174 = vmatprep.mubr.f32.mxu0 %v528
  %1175 = vmatmul.mubr.f32.gmra.mxu0 %v527
  %v1176 = vpop.f32.mrf.mxu0
  %v1177 = vadd.f32 0.0, %v1176
  %v1178 = vpop.f32.mrf.mxu0
  %1179 = vmatprep.mubr.f32.mxu0 %v530
  %1180 = vmatmul.mubr.f32.gmra.mxu0 %v529
  %v1181 = vpop.f32.mrf.mxu0
  %v1182 = vadd.f32 0.0, %v1181
  %v1183 = vpop.f32.mrf.mxu0
  %1184 = vmatprep.mubr.f32.mxu0 %v532
  %1185 = vmatmul.mubr.f32.gmra.mxu0 %v531
  %v1186 = vpop.f32.mrf.mxu0
  %v1187 = vadd.f32 0.0, %v1186
  %v1188 = vpop.f32.mrf.mxu0
  %1189 = vmatprep.mubr.f32.mxu0 %v534
  %1190 = vmatmul.mubr.f32.gmra.mxu0 %v533
  %v1191 = vpop.f32.mrf.mxu0
  %v1192 = vadd.f32 0.0, %v1191
  %v1193 = vpop.f32.mrf.mxu0
  %1194 = vmatprep.mubr.f32.mxu0 %v536
  %1195 = vmatmul.mubr.f32.gmra.mxu0 %v535
  %v1196 = vpop.f32.mrf.mxu0
  %v1197 = vadd.f32 0.0, %v1196
  %v1198 = vpop.f32.mrf.mxu0
  %1199 = vmatprep.mubr.f32.mxu0 %v538
  %1200 = vmatmul.mubr.f32.gmra.mxu0 %v537
  %v1201 = vpop.f32.mrf.mxu0
  %v1202 = vadd.f32 0.0, %v1201
  %v1203 = vpop.f32.mrf.mxu0
  %1204 = vmatprep.mubr.f32.mxu0 %v540
  %1205 = vmatmul.mubr.f32.gmra.mxu0 %v539
  %v1206 = vpop.f32.mrf.mxu0
  %v1207 = vadd.f32 0.0, %v1206
  %v1208 = vpop.f32.mrf.mxu0
  %1209 = vmatprep.mubr.f32.mxu0 %v542
  %1210 = vmatmul.mubr.f32.gmra.mxu0 %v541
  %v1211 = vpop.f32.mrf.mxu0
  %v1212 = vadd.f32 0.0, %v1211
  %v1213 = vpop.f32.mrf.mxu0
  %1214 = vmatprep.mubr.f32.mxu0 %v544
  %1215 = vmatmul.mubr.f32.gmra.mxu0 %v543
  %v1216 = vpop.f32.mrf.mxu0
  %v1217 = vadd.f32 0.0, %v1216
  %v1218 = vpop.f32.mrf.mxu0
  %1219 = vmatprep.mubr.f32.mxu0 %v546
  %1220 = vmatmul.mubr.f32.gmra.mxu0 %v545
  %v1221 = vpop.f32.mrf.mxu0
  %v1222 = vadd.f32 0.0, %v1221
  %v1223 = vpop.f32.mrf.mxu0
  %1224 = vmatprep.mubr.f32.mxu0 %v548
  %1225 = vmatmul.mubr.f32.gmra.mxu0 %v547
  %v1226 = vpop.f32.mrf.mxu0
  %v1227 = vadd.f32 0.0, %v1226
  %v1228 = vpop.f32.mrf.mxu0
  %1229 = vmatprep.mubr.f32.mxu0 %v550
  %1230 = vmatmul.mubr.f32.gmra.mxu0 %v549
  %v1231 = vpop.f32.mrf.mxu0
  %v1232 = vadd.f32 0.0, %v1231
  %v1233 = vpop.f32.mrf.mxu0
  %1234 = vmatprep.mubr.f32.mxu0 %v552
  %1235 = vmatmul.mubr.f32.gmra.mxu0 %v551
  %v1236 = vpop.f32.mrf.mxu0
  %v1237 = vadd.f32 0.0, %v1236
  %v1238 = vpop.f32.mrf.mxu0
  %1239 = vmatprep.mubr.f32.mxu0 %v554
  %1240 = vmatmul.mubr.f32.gmra.mxu0 %v553
  %v1241 = vpop.f32.mrf.mxu0
  %v1242 = vadd.f32 0.0, %v1241
  %v1243 = vpop.f32.mrf.mxu0
  %1244 = vmatprep.mubr.f32.mxu0 %v556
  %1245 = vmatmul.mubr.f32.gmra.mxu0 %v555
  %v1246 = vpop.f32.mrf.mxu0
  %v1247 = vadd.f32 0.0, %v1246
  %v1248 = vpop.f32.mrf.mxu0
  %1249 = vmatprep.mubr.f32.mxu0 %v558
  %1250 = vmatmul.mubr.f32.gmra.mxu0 %v557
  %v1251 = vpop.f32.mrf.mxu0
  %v1252 = vadd.f32 0.0, %v1251
  %v1253 = vpop.f32.mrf.mxu0
  %1254 = vmatprep.mubr.f32.mxu0 %v560
  %1255 = vmatmul.mubr.f32.gmra.mxu0 %v559
  %v1256 = vpop.f32.mrf.mxu0
  %v1257 = vadd.f32 0.0, %v1256
  %v1258 = vpop.f32.mrf.mxu0
  %1259 = vmatprep.mubr.f32.mxu0 %v562
  %1260 = vmatmul.mubr.f32.gmra.mxu0 %v561
  %v1261 = vpop.f32.mrf.mxu0
  %v1262 = vadd.f32 0.0, %v1261
  %v1263 = vpop.f32.mrf.mxu0
  %1264 = vmatprep.mubr.f32.mxu0 %v564
  %1265 = vmatmul.mubr.f32.gmra.mxu0 %v563
  %v1266 = vpop.f32.mrf.mxu0
  %v1267 = vadd.f32 0.0, %v1266
  %v1268 = vpop.f32.mrf.mxu0
  %1269 = vmatprep.mubr.f32.mxu0 %v566
  %1270 = vmatmul.mubr.f32.gmra.mxu0 %v565
  %v1271 = vpop.f32.mrf.mxu0
  %v1272 = vadd.f32 0.0, %v1271
  %v1273 = vpop.f32.mrf.mxu0
  %1274 = vmatprep.mubr.f32.mxu0 %v568
  %1275 = vmatmul.mubr.f32.gmra.mxu0 %v567
  %v1276 = vpop.f32.mrf.mxu0
  %v1277 = vadd.f32 0.0, %v1276
  %v1278 = vpop.f32.mrf.mxu0
  %1279 = vmatprep.mubr.f32.mxu0 %v570
  %1280 = vmatmul.mubr.f32.gmra.mxu0 %v569
  %v1281 = vpop.f32.mrf.mxu0
  %v1282 = vadd.f32 0.0, %v1281
  %v1283 = vpop.f32.mrf.mxu0
  %1284 = vmatprep.mubr.f32.mxu0 %v572
  %1285 = vmatmul.mubr.f32.gmra.mxu0 %v571
  %v1286 = vpop.f32.mrf.mxu0
  %v1287 = vadd.f32 0.0, %v1286
  %v1288 = vpop.f32.mrf.mxu0
  %1289 = vmatprep.mubr.f32.mxu0 %v574
  %1290 = vmatmul.mubr.f32.gmra.mxu0 %v573
  %v1291 = vpop.f32.mrf.mxu0
  %v1292 = vadd.f32 0.0, %v1291
  %v1293 = vpop.f32.mrf.mxu0
  %1294 = vmatprep.mubr.f32.mxu0 %v576
  %1295 = vmatmul.mubr.f32.gmra.mxu0 %v575
  %v1296 = vpop.f32.mrf.mxu0
  %v1297 = vadd.f32 0.0, %v1296
  %v1298 = vpop.f32.mrf.mxu0
  %1299 = vmatprep.mubr.f32.mxu0 %v578
  %1300 = vmatmul.mubr.f32.gmra.mxu0 %v577
  %v1301 = vpop.f32.mrf.mxu0
  %v1302 = vadd.f32 0.0, %v1301
  %v1303 = vpop.f32.mrf.mxu0
  %1304 = vmatprep.mubr.f32.mxu0 %v580
  %1305 = vmatmul.mubr.f32.gmra.mxu0 %v579
  %v1306 = vpop.f32.mrf.mxu0
  %v1307 = vadd.f32 0.0, %v1306
  %v1308 = vpop.f32.mrf.mxu0
  %1309 = vmatprep.mubr.f32.mxu0 %v582
  %1310 = vmatmul.mubr.f32.gmra.mxu0 %v581
  %v1311 = vpop.f32.mrf.mxu0
  %v1312 = vadd.f32 0.0, %v1311
  %v1313 = vpop.f32.mrf.mxu0
  %1314 = vmatprep.mubr.f32.mxu0 %v584
  %1315 = vmatmul.mubr.f32.gmra.mxu0 %v583
  %v1316 = vpop.f32.mrf.mxu0
  %v1317 = vadd.f32 0.0, %v1316
  %v1318 = vpop.f32.mrf.mxu0
  %1319 = vmatprep.mubr.f32.mxu0 %v586
  %1320 = vmatmul.mubr.f32.gmra.mxu0 %v585
  %v1321 = vpop.f32.mrf.mxu0
  %v1322 = vadd.f32 0.0, %v1321
  %v1323 = vpop.f32.mrf.mxu0
  %1324 = vmatprep.mubr.f32.mxu0 %v588
  %1325 = vmatmul.mubr.f32.gmra.mxu0 %v587
  %v1326 = vpop.f32.mrf.mxu0
  %v1327 = vadd.f32 0.0, %v1326
  %v1328 = vpop.f32.mrf.mxu0
  %1329 = vmatprep.mubr.f32.mxu0 %v590
  %1330 = vmatmul.mubr.f32.gmra.mxu0 %v589
  %v1331 = vpop.f32.mrf.mxu0
  %v1332 = vadd.f32 0.0, %v1331
  %v1333 = vpop.f32.mrf.mxu0
  %1334 = vmatprep.mubr.f32.mxu0 %v592
  %1335 = vmatmul.mubr.f32.gmra.mxu0 %v591
  %v1336 = vpop.f32.mrf.mxu0
  %v1337 = vadd.f32 0.0, %v1336
  %v1338 = vpop.f32.mrf.mxu0
  %1339 = vmatprep.mubr.f32.mxu0 %v594
  %1340 = vmatmul.mubr.f32.gmra.mxu0 %v593
  %v1341 = vpop.f32.mrf.mxu0
  %v1342 = vadd.f32 0.0, %v1341
  %v1343 = vpop.f32.mrf.mxu0
  %1344 = vmatprep.mubr.f32.mxu0 %v596
  %1345 = vmatmul.mubr.f32.gmra.mxu0 %v595
  %v1346 = vpop.f32.mrf.mxu0
  %v1347 = vadd.f32 0.0, %v1346
  %v1348 = vpop.f32.mrf.mxu0
  %1349 = vmatprep.mubr.f32.mxu0 %v598
  %1350 = vmatmul.mubr.f32.gmra.mxu0 %v597
  %v1351 = vpop.f32.mrf.mxu0
  %v1352 = vadd.f32 0.0, %v1351
  %v1353 = vpop.f32.mrf.mxu0
  %1354 = vmatprep.mubr.f32.mxu0 %v600
  %1355 = vmatmul.mubr.f32.gmra.mxu0 %v599
  %v1356 = vpop.f32.mrf.mxu0
  %v1357 = vadd.f32 0.0, %v1356
  %v1358 = vpop.f32.mrf.mxu0
  %1359 = vmatprep.mubr.f32.mxu0 %v602
  %1360 = vmatmul.mubr.f32.gmra.mxu0 %v601
  %v1361 = vpop.f32.mrf.mxu0
  %v1362 = vadd.f32 0.0, %v1361
  %v1363 = vpop.f32.mrf.mxu0
  %1364 = vmatprep.mubr.f32.mxu0 %v604
  %1365 = vmatmul.mubr.f32.gmra.mxu0 %v603
  %v1366 = vpop.f32.mrf.mxu0
  %v1367 = vadd.f32 0.0, %v1366
  %v1368 = vpop.f32.mrf.mxu0
  %1369 = vmatprep.mubr.f32.mxu0 %v606
  %1370 = vmatmul.mubr.f32.gmra.mxu0 %v605
  %v1371 = vpop.f32.mrf.mxu0
  %v1372 = vadd.f32 0.0, %v1371
  %v1373 = vpop.f32.mrf.mxu0
  %1374 = vmatprep.mubr.f32.mxu0 %v608
  %1375 = vmatmul.mubr.f32.gmra.mxu0 %v607
  %v1376 = vpop.f32.mrf.mxu0
  %v1377 = vadd.f32 0.0, %v1376
  %v1378 = vpop.f32.mrf.mxu0
  %1379 = vmatprep.mubr.f32.mxu0 %v610
  %1380 = vmatmul.mubr.f32.gmra.mxu0 %v609
  %v1381 = vpop.f32.mrf.mxu0
  %v1382 = vadd.f32 0.0, %v1381
  %v1383 = vpop.f32.mrf.mxu0
  %1384 = vmatprep.mubr.f32.mxu0 %v612
  %1385 = vmatmul.mubr.f32.gmra.mxu0 %v611
  %v1386 = vpop.f32.mrf.mxu0
  %v1387 = vadd.f32 0.0, %v1386
  %v1388 = vpop.f32.mrf.mxu0
  %1389 = vmatprep.mubr.f32.mxu0 %v614
  %1390 = vmatmul.mubr.f32.gmra.mxu0 %v613
  %v1391 = vpop.f32.mrf.mxu0
  %v1392 = vadd.f32 0.0, %v1391
  %v1393 = vpop.f32.mrf.mxu0
  %1394 = vmatprep.mubr.f32.mxu0 %v616
  %1395 = vmatmul.mubr.f32.gmra.mxu0 %v615
  %v1396 = vpop.f32.mrf.mxu0
  %v1397 = vadd.f32 0.0, %v1396
  %v1398 = vpop.f32.mrf.mxu0
  %1399 = vmatprep.mubr.f32.mxu0 %v618
  %1400 = vmatmul.mubr.f32.gmra.mxu0 %v617
  %v1401 = vpop.f32.mrf.mxu0
  %v1402 = vadd.f32 0.0, %v1401
  %v1403 = vpop.f32.mrf.mxu0
  %1404 = vmatprep.mubr.f32.mxu0 %v620
  %1405 = vmatmul.mubr.f32.gmra.mxu0 %v619
  %v1406 = vpop.f32.mrf.mxu0
  %v1407 = vadd.f32 0.0, %v1406
  %v1408 = vpop.f32.mrf.mxu0
  %1409 = vmatprep.mubr.f32.mxu0 %v622
  %1410 = vmatmul.mubr.f32.gmra.mxu0 %v621
  %v1411 = vpop.f32.mrf.mxu0
  %v1412 = vadd.f32 0.0, %v1411
  %v1413 = vpop.f32.mrf.mxu0
  %1414 = vmatprep.mubr.f32.mxu0 %v624
  %1415 = vmatmul.mubr.f32.gmra.mxu0 %v623
  %v1416 = vpop.f32.mrf.mxu0
  %v1417 = vadd.f32 0.0, %v1416
  %v1418 = vpop.f32.mrf.mxu0
  %1419 = vmatprep.mubr.f32.mxu0 %v626
  %1420 = vmatmul.mubr.f32.gmra.mxu0 %v625
  %v1421 = vpop.f32.mrf.mxu0
  %v1422 = vadd.f32 0.0, %v1421
  %v1423 = vpop.f32.mrf.mxu0
  %1424 = vmatprep.mubr.f32.mxu0 %v628
  %1425 = vmatmul.mubr.f32.gmra.mxu0 %v627
  %v1426 = vpop.f32.mrf.mxu0
  %v1427 = vadd.f32 0.0, %v1426
  %v1428 = vpop.f32.mrf.mxu0
  %1429 = vmatprep.mubr.f32.mxu0 %v630
  %1430 = vmatmul.mubr.f32.gmra.mxu0 %v629
  %v1431 = vpop.f32.mrf.mxu0
  %v1432 = vadd.f32 0.0, %v1431
  %v1433 = vpop.f32.mrf.mxu0
  %1434 = vmatprep.mubr.f32.mxu0 %v632
  %1435 = vmatmul.mubr.f32.gmra.mxu0 %v631
  %v1436 = vpop.f32.mrf.mxu0
  %v1437 = vadd.f32 0.0, %v1436
  %v1438 = vpop.f32.mrf.mxu0
  %1439 = vmatprep.mubr.f32.mxu0 %v634
  %1440 = vmatmul.mubr.f32.gmra.mxu0 %v633
  %v1441 = vpop.f32.mrf.mxu0
  %v1442 = vadd.f32 0.0, %v1441
  %v1443 = vpop.f32.mrf.mxu0
  %1444 = vmatprep.mubr.f32.mxu0 %v636
  %1445 = vmatmul.mubr.f32.gmra.mxu0 %v635
  %v1446 = vpop.f32.mrf.mxu0
  %v1447 = vadd.f32 0.0, %v1446
  %v1448 = vpop.f32.mrf.mxu0
  %1449 = vmatprep.mubr.f32.mxu0 %v638
  %1450 = vmatmul.mubr.f32.gmra.mxu0 %v637
  %v1451 = vpop.f32.mrf.mxu0
  %v1452 = vadd.f32 0.0, %v1451
  %v1453 = vpop.f32.mrf.mxu0
  %1454 = vmatprep.mubr.f32.mxu0 %v640
  %1455 = vmatmul.mubr.f32.gmra.mxu0 %v639
  %v1456 = vpop.f32.mrf.mxu0
  %v1457 = vadd.f32 0.0, %v1456
  %v1458 = vpop.f32.mrf.mxu0
  %1459 = vmatprep.mubr.f32.mxu0 %v642
  %1460 = vmatmul.mubr.f32.gmra.mxu0 %v641
  %v1461 = vpop.f32.mrf.mxu0
  %v1462 = vadd.f32 0.0, %v1461
  %v1463 = vpop.f32.mrf.mxu0
  %1464 = vmatprep.mubr.f32.mxu0 %v644
  %1465 = vmatmul.mubr.f32.gmra.mxu0 %v643
  %v1466 = vpop.f32.mrf.mxu0
  %v1467 = vadd.f32 0.0, %v1466
  %v1468 = vpop.f32.mrf.mxu0
  %1469 = vmatprep.mubr.f32.mxu0 %v646
  %1470 = vmatmul.mubr.f32.gmra.mxu0 %v645
  %v1471 = vpop.f32.mrf.mxu0
  %v1472 = vadd.f32 0.0, %v1471
  %v1473 = vpop.f32.mrf.mxu0
  %1474 = vmatprep.mubr.f32.mxu0 %v648
  %1475 = vmatmul.mubr.f32.gmra.mxu0 %v647
  %v1476 = vpop.f32.mrf.mxu0
  %v1477 = vadd.f32 0.0, %v1476
  %v1478 = vpop.f32.mrf.mxu0
  %1479 = vmatprep.mubr.f32.mxu0 %v650
  %1480 = vmatmul.mubr.f32.gmra.mxu0 %v649
  %v1481 = vpop.f32.mrf.mxu0
  %v1482 = vadd.f32 0.0, %v1481
  %v1483 = vpop.f32.mrf.mxu0
  %1484 = vmatprep.mubr.f32.mxu0 %v652
  %1485 = vmatmul.mubr.f32.gmra.mxu0 %v651
  %v1486 = vpop.f32.mrf.mxu0
  %v1487 = vadd.f32 0.0, %v1486
  %v1488 = vpop.f32.mrf.mxu0
  %1489 = vmatprep.mubr.f32.mxu0 %v654
  %1490 = vmatmul.mubr.f32.gmra.mxu0 %v653
  %v1491 = vpop.f32.mrf.mxu0
  %v1492 = vadd.f32 0.0, %v1491
  %v1493 = vpop.f32.mrf.mxu0
  %1494 = vmatprep.mubr.f32.mxu0 %v656
  %1495 = vmatmul.mubr.f32.gmra.mxu0 %v655
  %v1496 = vpop.f32.mrf.mxu0
  %v1497 = vadd.f32 0.0, %v1496
  %v1498 = vpop.f32.mrf.mxu0
  %1499 = vmatprep.mubr.f32.mxu0 %v658
  %1500 = vmatmul.mubr.f32.gmra.mxu0 %v657
  %v1501 = vpop.f32.mrf.mxu0
  %v1502 = vadd.f32 0.0, %v1501
  %v1503 = vpop.f32.mrf.mxu0
  %1504 = vmatprep.mubr.f32.mxu0 %v660
  %1505 = vmatmul.mubr.f32.gmra.mxu0 %v659
  %v1506 = vpop.f32.mrf.mxu0
  %v1507 = vadd.f32 0.0, %v1506
  %v1508 = vpop.f32.mrf.mxu0
  %1509 = vmatprep.mubr.f32.mxu0 %v662
  %1510 = vmatmul.mubr.f32.gmra.mxu0 %v661
  %v1511 = vpop.f32.mrf.mxu0
  %v1512 = vadd.f32 0.0, %v1511
  %v1513 = vpop.f32.mrf.mxu0
  %1514 = vmatprep.mubr.f32.mxu0 %v664
  %1515 = vmatmul.mubr.f32.gmra.mxu0 %v663
  %v1516 = vpop.f32.mrf.mxu0
  %v1517 = vadd.f32 0.0, %v1516
  %v1518 = vpop.f32.mrf.mxu0
  %1519 = vmatprep.mubr.f32.mxu0 %v666
  %1520 = vmatmul.mubr.f32.gmra.mxu0 %v665
  %v1521 = vpop.f32.mrf.mxu0
  %v1522 = vadd.f32 0.0, %v1521
  %v1523 = vpop.f32.mrf.mxu0
  %1524 = vmatprep.mubr.f32.mxu0 %v668
  %1525 = vmatmul.mubr.f32.gmra.mxu0 %v667
  %v1526 = vpop.f32.mrf.mxu0
  %v1527 = vadd.f32 0.0, %v1526
  %v1528 = vpop.f32.mrf.mxu0
  %1529 = vmatprep.mubr.f32.mxu0 %v670
  %1530 = vmatmul.mubr.f32.gmra.mxu0 %v669
  %v1531 = vpop.f32.mrf.mxu0
  %v1532 = vadd.f32 0.0, %v1531
  %v1533 = vpop.f32.mrf.mxu0
  %1534 = vmatprep.mubr.f32.mxu0 %v672
  %1535 = vmatmul.mubr.f32.gmra.mxu0 %v671
  %v1536 = vpop.f32.mrf.mxu0
  %v1537 = vadd.f32 0.0, %v1536
  %v1538 = vpop.f32.mrf.mxu0
  %1539 = vmatprep.mubr.f32.mxu0 %v674
  %1540 = vmatmul.mubr.f32.gmra.mxu0 %v673
  %v1541 = vpop.f32.mrf.mxu0
  %v1542 = vadd.f32 0.0, %v1541
  %v1543 = vpop.f32.mrf.mxu0
  %1544 = vmatprep.mubr.f32.mxu0 %v676
  %1545 = vmatmul.mubr.f32.gmra.mxu0 %v675
  %v1546 = vpop.f32.mrf.mxu0
  %v1547 = vadd.f32 0.0, %v1546
  %v1548 = vpop.f32.mrf.mxu0
  %1549 = vmatprep.mubr.f32.mxu0 %v678
  %1550 = vmatmul.mubr.f32.gmra.mxu0 %v677
  %v1551 = vpop.f32.mrf.mxu0
  %v1552 = vadd.f32 0.0, %v1551
  %v1553 = vpop.f32.mrf.mxu0
  %1554 = vmatprep.mubr.f32.mxu0 %v680
  %1555 = vmatmul.mubr.f32.gmra.mxu0 %v679
  %v1556 = vpop.f32.mrf.mxu0
  %v1557 = vadd.f32 0.0, %v1556
  %v1558 = vpop.f32.mrf.mxu0
  %1559 = vmatprep.mubr.f32.mxu0 %v682
  %1560 = vmatmul.mubr.f32.gmra.mxu0 %v681
  %v1561 = vpop.f32.mrf.mxu0
  %v1562 = vadd.f32 0.0, %v1561
  %v1563 = vpop.f32.mrf.mxu0
  %1564 = vmatprep.mubr.f32.mxu0 %v684
  %1565 = vmatmul.mubr.f32.gmra.mxu0 %v683
  %v1566 = vpop.f32.mrf.mxu0
  %v1567 = vadd.f32 0.0, %v1566
  %v1568 = vpop.f32.mrf.mxu0
  %1569 = vmatprep.mubr.f32.mxu0 %v686
  %1570 = vmatmul.mubr.f32.gmra.mxu0 %v685
  %v1571 = vpop.f32.mrf.mxu0
  %v1572 = vadd.f32 0.0, %v1571
  %v1573 = vpop.f32.mrf.mxu0
  %1574 = vmatprep.mubr.f32.mxu0 %v688
  %1575 = vmatmul.mubr.f32.gmra.mxu0 %v687
  %v1576 = vpop.f32.mrf.mxu0
  %v1577 = vadd.f32 0.0, %v1576
  %v1578 = vpop.f32.mrf.mxu0
  %1579 = vmatprep.mubr.f32.mxu0 %v690
  %1580 = vmatmul.mubr.f32.gmra.mxu0 %v689
  %v1581 = vpop.f32.mrf.mxu0
  %v1582 = vadd.f32 0.0, %v1581
  %v1583 = vpop.f32.mrf.mxu0
  %1584 = vmatprep.mubr.f32.mxu0 %v692
  %1585 = vmatmul.mubr.f32.gmra.mxu0 %v691
  %v1586 = vpop.f32.mrf.mxu0
  %v1587 = vadd.f32 0.0, %v1586
  %v1588 = vpop.f32.mrf.mxu0
  %1589 = vmatprep.mubr.f32.mxu0 %v694
  %1590 = vmatmul.mubr.f32.gmra.mxu0 %v693
  %v1591 = vpop.f32.mrf.mxu0
  %v1592 = vadd.f32 0.0, %v1591
  %v1593 = vpop.f32.mrf.mxu0
  %1594 = vmatprep.mubr.f32.mxu0 %v696
  %1595 = vmatmul.mubr.f32.gmra.mxu0 %v695
  %v1596 = vpop.f32.mrf.mxu0
  %v1597 = vadd.f32 0.0, %v1596
  %v1598 = vpop.f32.mrf.mxu0
  %1599 = vmatprep.mubr.f32.mxu0 %v698
  %1600 = vmatmul.mubr.f32.gmra.mxu0 %v697
  %v1601 = vpop.f32.mrf.mxu0
  %v1602 = vadd.f32 0.0, %v1601
  %v1603 = vpop.f32.mrf.mxu0
  %1604 = vmatprep.mubr.f32.mxu0 %v700
  %1605 = vmatmul.mubr.f32.gmra.mxu0 %v699
  %v1606 = vpop.f32.mrf.mxu0
  %v1607 = vadd.f32 0.0, %v1606
  %v1608 = vpop.f32.mrf.mxu0
  %1609 = vmatprep.mubr.f32.mxu0 %v702
  %1610 = vmatmul.mubr.f32.gmra.mxu0 %v701
  %v1611 = vpop.f32.mrf.mxu0
  %v1612 = vadd.f32 0.0, %v1611
  %v1613 = vpop.f32.mrf.mxu0
  %1614 = vmatprep.mubr.f32.mxu0 %v704
  %1615 = vmatmul.mubr.f32.gmra.mxu0 %v703
  %v1616 = vpop.f32.mrf.mxu0
  %v1617 = vadd.f32 0.0, %v1616
  %v1618 = vpop.f32.mrf.mxu0
  %1619 = vmatprep.mubr.f32.mxu0 %v706
  %1620 = vmatmul.mubr.f32.gmra.mxu0 %v705
  %v1621 = vpop.f32.mrf.mxu0
  %v1622 = vadd.f32 0.0, %v1621
  %v1623 = vpop.f32.mrf.mxu0
  %1624 = vmatprep.mubr.f32.mxu0 %v708
  %1625 = vmatmul.mubr.f32.gmra.mxu0 %v707
  %v1626 = vpop.f32.mrf.mxu0
  %v1627 = vadd.f32 0.0, %v1626
  %v1628 = vpop.f32.mrf.mxu0
  %1629 = vmatprep.mubr.f32.mxu0 %v710
  %1630 = vmatmul.mubr.f32.gmra.mxu0 %v709
  %v1631 = vpop.f32.mrf.mxu0
  %v1632 = vadd.f32 0.0, %v1631
  %v1633 = vpop.f32.mrf.mxu0
  %1634 = vmatprep.mubr.f32.mxu0 %v712
  %1635 = vmatmul.mubr.f32.gmra.mxu0 %v711
  %v1636 = vpop.f32.mrf.mxu0
  %v1637 = vadd.f32 0.0, %v1636
  %v1638 = vpop.f32.mrf.mxu0
  %1639 = vmatprep.mubr.f32.mxu0 %v714
  %1640 = vmatmul.mubr.f32.gmra.mxu0 %v713
  %v1641 = vpop.f32.mrf.mxu0
  %v1642 = vadd.f32 0.0, %v1641
  %v1643 = vpop.f32.mrf.mxu0
  %1644 = vmatprep.mubr.f32.mxu0 %v716
  %1645 = vmatmul.mubr.f32.gmra.mxu0 %v715
  %v1646 = vpop.f32.mrf.mxu0
  %v1647 = vadd.f32 0.0, %v1646
  %v1648 = vpop.f32.mrf.mxu0
  %1649 = vmatprep.mubr.f32.mxu0 %v718
  %1650 = vmatmul.mubr.f32.gmra.mxu0 %v717
  %v1651 = vpop.f32.mrf.mxu0
  %v1652 = vadd.f32 0.0, %v1651
  %v1653 = vpop.f32.mrf.mxu0
  %1654 = vmatprep.mubr.f32.mxu0 %v720
  %1655 = vmatmul.mubr.f32.gmra.mxu0 %v719
  %v1656 = vpop.f32.mrf.mxu0
  %v1657 = vadd.f32 0.0, %v1656
  %v1658 = vpop.f32.mrf.mxu0
  %1659 = vmatprep.mubr.f32.mxu0 %v722
  %1660 = vmatmul.mubr.f32.gmra.mxu0 %v721
  %v1661 = vpop.f32.mrf.mxu0
  %v1662 = vadd.f32 0.0, %v1661
  %v1663 = vpop.f32.mrf.mxu0
  %1664 = vmatprep.mubr.f32.mxu0 %v724
  %1665 = vmatmul.mubr.f32.gmra.mxu0 %v723
  %v1666 = vpop.f32.mrf.mxu0
  %v1667 = vadd.f32 0.0, %v1666
  %v1668 = vpop.f32.mrf.mxu0
  %1669 = vmatprep.mubr.f32.mxu0 %v726
  %1670 = vmatmul.mubr.f32.gmra.mxu0 %v725
  %v1671 = vpop.f32.mrf.mxu0
  %v1672 = vadd.f32 0.0, %v1671
  %v1673 = vpop.f32.mrf.mxu0
  %1674 = vmatprep.mubr.f32.mxu0 %v728
  %1675 = vmatmul.mubr.f32.gmra.mxu0 %v727
  %v1676 = vpop.f32.mrf.mxu0
  %v1677 = vadd.f32 0.0, %v1676
  %v1678 = vpop.f32.mrf.mxu0
  %1679 = vmatprep.mubr.f32.mxu0 %v730
  %1680 = vmatmul.mubr.f32.gmra.mxu0 %v729
  %v1681 = vpop.f32.mrf.mxu0
  %v1682 = vadd.f32 0.0, %v1681
  %v1683 = vpop.f32.mrf.mxu0
  %1684 = vmatprep.mubr.f32.mxu0 %v732
  %1685 = vmatmul.mubr.f32.gmra.mxu0 %v731
  %v1686 = vpop.f32.mrf.mxu0
  %v1687 = vadd.f32 0.0, %v1686
  %v1688 = vpop.f32.mrf.mxu0
  %1689 = vmatprep.mubr.f32.mxu0 %v734
  %1690 = vmatmul.mubr.f32.gmra.mxu0 %v733
  %v1691 = vpop.f32.mrf.mxu0
  %v1692 = vadd.f32 0.0, %v1691
  %v1693 = vpop.f32.mrf.mxu0
  %1694 = vmatprep.mubr.f32.mxu0 %v736
  %1695 = vmatmul.mubr.f32.gmra.mxu0 %v735
  %v1696 = vpop.f32.mrf.mxu0
  %v1697 = vadd.f32 0.0, %v1696
  %v1698 = vpop.f32.mrf.mxu0
  %1699 = vmatprep.mubr.f32.mxu0 %v738
  %1700 = vmatmul.mubr.f32.gmra.mxu0 %v737
  %v1701 = vpop.f32.mrf.mxu0
  %v1702 = vadd.f32 0.0, %v1701
  %v1703 = vpop.f32.mrf.mxu0
  %1704 = vmatprep.mubr.f32.mxu0 %v740
  %1705 = vmatmul.mubr.f32.gmra.mxu0 %v739
  %v1706 = vpop.f32.mrf.mxu0
  %v1707 = vadd.f32 0.0, %v1706
  %v1708 = vpop.f32.mrf.mxu0
  %1709 = vmatprep.mubr.f32.mxu0 %v742
  %1710 = vmatmul.mubr.f32.gmra.mxu0 %v741
  %v1711 = vpop.f32.mrf.mxu0
  %v1712 = vadd.f32 0.0, %v1711
  %v1713 = vpop.f32.mrf.mxu0
  %1714 = vmatprep.mubr.f32.mxu0 %v744
  %1715 = vmatmul.mubr.f32.gmra.mxu0 %v743
  %v1716 = vpop.f32.mrf.mxu0
  %v1717 = vadd.f32 0.0, %v1716
  %v1718 = vpop.f32.mrf.mxu0
  %1719 = vmatprep.mubr.f32.mxu0 %v746
  %1720 = vmatmul.mubr.f32.gmra.mxu0 %v745
  %v1721 = vpop.f32.mrf.mxu0
  %v1722 = vadd.f32 0.0, %v1721
  %v1723 = vpop.f32.mrf.mxu0
  %1724 = vmatprep.mubr.f32.mxu0 %v748
  %1725 = vmatmul.mubr.f32.gmra.mxu0 %v747
  %v1726 = vpop.f32.mrf.mxu0
  %v1727 = vadd.f32 0.0, %v1726
  %v1728 = vpop.f32.mrf.mxu0
  %1729 = vmatprep.mubr.f32.mxu0 %v750
  %1730 = vmatmul.mubr.f32.gmra.mxu0 %v749
  %v1731 = vpop.f32.mrf.mxu0
  %v1732 = vadd.f32 0.0, %v1731
  %v1733 = vpop.f32.mrf.mxu0
  %1734 = vmatprep.mubr.f32.mxu0 %v752
  %1735 = vmatmul.mubr.f32.gmra.mxu0 %v751
  %v1736 = vpop.f32.mrf.mxu0
  %v1737 = vadd.f32 0.0, %v1736
  %v1738 = vpop.f32.mrf.mxu0
  %1739 = vmatprep.mubr.f32.mxu0 %v754
  %1740 = vmatmul.mubr.f32.gmra.mxu0 %v753
  %v1741 = vpop.f32.mrf.mxu0
  %v1742 = vadd.f32 0.0, %v1741
  %v1743 = vpop.f32.mrf.mxu0
  %1744 = vmatprep.mubr.f32.mxu0 %v756
  %1745 = vmatmul.mubr.f32.gmra.mxu0 %v755
  %v1746 = vpop.f32.mrf.mxu0
  %v1747 = vadd.f32 0.0, %v1746
  %v1748 = vpop.f32.mrf.mxu0
  %1749 = vmatprep.mubr.f32.mxu0 %v758
  %1750 = vmatmul.mubr.f32.gmra.mxu0 %v757
  %v1751 = vpop.f32.mrf.mxu0
  %v1752 = vadd.f32 0.0, %v1751
  %v1753 = vpop.f32.mrf.mxu0
  %1754 = vmatprep.mubr.f32.mxu0 %v760
  %1755 = vmatmul.mubr.f32.gmra.mxu0 %v759
  %v1756 = vpop.f32.mrf.mxu0
  %v1757 = vadd.f32 0.0, %v1756
  %v1758 = vpop.f32.mrf.mxu0
  %1759 = vmatprep.mubr.f32.mxu0 %v762
  %1760 = vmatmul.mubr.f32.gmra.mxu0 %v761
  %v1761 = vpop.f32.mrf.mxu0
  %v1762 = vadd.f32 0.0, %v1761
  %v1763 = vpop.f32.mrf.mxu0
  %1764 = vmatprep.mubr.f32.mxu0 %v764
  %1765 = vmatmul.mubr.f32.gmra.mxu0 %v763
  %v1766 = vpop.f32.mrf.mxu0
  %v1767 = vadd.f32 0.0, %v1766
  %v1768 = vpop.f32.mrf.mxu0
  %1769 = vmatprep.mubr.f32.mxu0 %v766
  %1770 = vmatmul.mubr.f32.gmra.mxu0 %v765
  %v1771 = vpop.f32.mrf.mxu0
  %v1772 = vadd.f32 0.0, %v1771
  %v1773 = vpop.f32.mrf.mxu0
  %1774 = vmatprep.mubr.f32.mxu0 %v768
  %1775 = vmatmul.mubr.f32.gmra.mxu0 %v767
  %v1776 = vpop.f32.mrf.mxu0
  %v1777 = vadd.f32 0.0, %v1776
  %v1778 = vpop.f32.mrf.mxu0
  %1779 = vmatprep.mubr.f32.mxu0 %v770
  %1780 = vmatmul.mubr.f32.gmra.mxu0 %v769
  %v1781 = vpop.f32.mrf.mxu0
  %v1782 = vadd.f32 0.0, %v1781
  %v1783 = vpop.f32.mrf.mxu0
  %1784 = vmatprep.mubr.f32.mxu0 %v772
  %1785 = vmatmul.mubr.f32.gmra.mxu0 %v771
  %v1786 = vpop.f32.mrf.mxu0
  %v1787 = vadd.f32 0.0, %v1786
  %v1788 = vpop.f32.mrf.mxu0
  %1789 = vmatprep.mubr.f32.mxu0 %v774
  %1790 = vmatmul.mubr.f32.gmra.mxu0 %v773
  %v1791 = vpop.f32.mrf.mxu0
  %v1792 = vadd.f32 0.0, %v1791
  %v1793 = vpop.f32.mrf.mxu0
  %1794 = vmatprep.mubr.f32.mxu0 %v776
  %1795 = vmatmul.mubr.f32.gmra.mxu0 %v775
  %v1796 = vpop.f32.mrf.mxu0
  %v1797 = vadd.f32 0.0, %v1796
  %v1798 = vpop.f32.mrf.mxu0
  %1799 = vmatprep.mubr.f32.mxu0 %v778
  %1800 = vmatmul.mubr.f32.gmra.mxu0 %v777
  %v1801 = vpop.f32.mrf.mxu0
  %v1802 = vadd.f32 0.0, %v1801
  %v1803 = vpop.f32.mrf.mxu0
  %1804 = vmatprep.mubr.f32.mxu0 %v780
  %1805 = vmatmul.mubr.f32.gmra.mxu0 %v779
  %v1806 = vpop.f32.mrf.mxu0
  %v1807 = vadd.f32 0.0, %v1806
  %v1808 = vpop.f32.mrf.mxu0
  %1809 = vmatprep.mubr.f32.mxu0 %v782
  %1810 = vmatmul.mubr.f32.gmra.mxu0 %v781
  %v1811 = vpop.f32.mrf.mxu0
  %v1812 = vadd.f32 0.0, %v1811
  %v1813 = vpop.f32.mrf.mxu0
  %1814 = vmatprep.mubr.f32.mxu0 %v784
  %1815 = vmatmul.mubr.f32.gmra.mxu0 %v783
  %v1816 = vpop.f32.mrf.mxu0
  %v1817 = vadd.f32 0.0, %v1816
  %v1818 = vpop.f32.mrf.mxu0
  %1819 = vmatprep.mubr.f32.mxu0 %v786
  %1820 = vmatmul.mubr.f32.gmra.mxu0 %v785
  %v1821 = vpop.f32.mrf.mxu0
  %v1822 = vadd.f32 0.0, %v1821
  %v1823 = vpop.f32.mrf.mxu0
  %1824 = vmatprep.mubr.f32.mxu0 %v788
  %1825 = vmatmul.mubr.f32.gmra.mxu0 %v787
  %v1826 = vpop.f32.mrf.mxu0
  %v1827 = vadd.f32 0.0, %v1826
  %v1828 = vpop.f32.mrf.mxu0
  %1829 = vmatprep.mubr.f32.mxu0 %v790
  %1830 = vmatmul.mubr.f32.gmra.mxu0 %v789
  %v1831 = vpop.f32.mrf.mxu0
  %v1832 = vadd.f32 0.0, %v1831
  %v1833 = vpop.f32.mrf.mxu0
  %1834 = vmatprep.mubr.f32.mxu0 %v792
  %1835 = vmatmul.mubr.f32.gmra.mxu0 %v791
  %v1836 = vpop.f32.mrf.mxu0
  %v1837 = vadd.f32 0.0, %v1836
  %v1838 = vpop.f32.mrf.mxu0
  %1839 = vmatprep.mubr.f32.mxu0 %v794
  %1840 = vmatmul.mubr.f32.gmra.mxu0 %v793
  %v1841 = vpop.f32.mrf.mxu0
  %v1842 = vadd.f32 0.0, %v1841
  %v1843 = vpop.f32.mrf.mxu0
  %1844 = vmatprep.mubr.f32.mxu0 %v796
  %1845 = vmatmul.mubr.f32.gmra.mxu0 %v795
  %v1846 = vpop.f32.mrf.mxu0
  %v1847 = vadd.f32 0.0, %v1846
  %v1848 = vpop.f32.mrf.mxu0
  %1849 = vmatprep.mubr.f32.mxu0 %v798
  %1850 = vmatmul.mubr.f32.gmra.mxu0 %v797
  %v1851 = vpop.f32.mrf.mxu0
  %v1852 = vadd.f32 0.0, %v1851
  %v1853 = vpop.f32.mrf.mxu0
  %1854 = vmatprep.mubr.f32.mxu0 %v800
  %1855 = vmatmul.mubr.f32.gmra.mxu0 %v799
  %v1856 = vpop.f32.mrf.mxu0
  %v1857 = vadd.f32 0.0, %v1856
  %v1858 = vpop.f32.mrf.mxu0
  %1859 = vmatprep.mubr.f32.mxu0 %v802
  %1860 = vmatmul.mubr.f32.gmra.mxu0 %v801
  %v1861 = vpop.f32.mrf.mxu0
  %v1862 = vadd.f32 0.0, %v1861
  %v1863 = vpop.f32.mrf.mxu0
  %1864 = vmatprep.mubr.f32.mxu0 %v804
  %1865 = vmatmul.mubr.f32.gmra.mxu0 %v803
  %v1866 = vpop.f32.mrf.mxu0
  %v1867 = vadd.f32 0.0, %v1866
  %v1868 = vpop.f32.mrf.mxu0
  %1869 = vmatprep.mubr.f32.mxu0 %v806
  %1870 = vmatmul.mubr.f32.gmra.mxu0 %v805
  %v1871 = vpop.f32.mrf.mxu0
  %v1872 = vadd.f32 0.0, %v1871
  %v1873 = vpop.f32.mrf.mxu0
  %1874 = vmatprep.mubr.f32.mxu0 %v808
  %1875 = vmatmul.mubr.f32.gmra.mxu0 %v807
  %v1876 = vpop.f32.mrf.mxu0
  %v1877 = vadd.f32 0.0, %v1876
  %v1878 = vpop.f32.mrf.mxu0
  %1879 = vmatprep.mubr.f32.mxu0 %v810
  %1880 = vmatmul.mubr.f32.gmra.mxu0 %v809
  %v1881 = vpop.f32.mrf.mxu0
  %v1882 = vadd.f32 0.0, %v1881
  %v1883 = vpop.f32.mrf.mxu0
  %1884 = vmatprep.mubr.f32.mxu0 %v812
  %1885 = vmatmul.mubr.f32.gmra.mxu0 %v811
  %v1886 = vpop.f32.mrf.mxu0
  %v1887 = vadd.f32 0.0, %v1886
  %v1888 = vpop.f32.mrf.mxu0
  %1889 = vdwg.mxu0
  %v1890 = vmax.f32 %v912, %v932
  %v1891 = vmax.f32 %v917, %v937
  %v1892 = vmax.f32 %v922, %v942
  %v1893 = vmax.f32 %v927, %v947
  %v1894 = vmax.f32 %v1890, %v952
  %v1895 = vmax.f32 %v1891, %v957
  %v1896 = vmax.f32 %v1892, %v962
  %v1897 = vmax.f32 %v1893, %v967
  %v1898 = vmax.f32 %v1894, %v972
  %v1899 = vmax.f32 %v1895, %v977
  %v1900 = vmax.f32 %v1896, %v982
  %v1901 = vmax.f32 %v1897, %v987
  %v1902 = vmax.f32 %v1898, %v992
  %v1903 = vmax.f32 %v1899, %v997
  %v1904 = vmax.f32 %v1900, %v1002
  %v1905 = vmax.f32 %v1901, %v1007
  %v1906 = vmax.f32 %v1902, %v1012
  %v1907 = vmax.f32 %v1903, %v1017
  %v1908 = vmax.f32 %v1904, %v1022
  %v1909 = vmax.f32 %v1905, %v1027
  %v1910 = vmax.f32 %v1906, %v1032
  %v1911 = vmax.f32 %v1907, %v1037
  %v1912 = vmax.f32 %v1908, %v1042
  %v1913 = vmax.f32 %v1909, %v1047
  %v1914 = vmax.f32 %v1910, %v1052
  %v1915 = vmax.f32 %v1911, %v1057
  %v1916 = vmax.f32 %v1912, %v1062
  %v1917 = vmax.f32 %v1913, %v1067
  %v1918 = vmax.f32 %v1914, %v1072
  %v1919 = vmax.f32 %v1915, %v1077
  %v1920 = vmax.f32 %v1916, %v1082
  %v1921 = vmax.f32 %v1917, %v1087
  %v1922 = vmax.f32 %v1918, %v1092
  %v1923 = vmax.f32 %v1919, %v1097
  %v1924 = vmax.f32 %v1920, %v1102
  %v1925 = vmax.f32 %v1921, %v1107
  %v1926 = vmax.f32 %v1922, %v1112
  %v1927 = vmax.f32 %v1923, %v1117
  %v1928 = vmax.f32 %v1924, %v1122
  %v1929 = vmax.f32 %v1925, %v1127
  %v1930 = vmax.f32 %v1926, %v1132
  %v1931 = vmax.f32 %v1927, %v1137
  %v1932 = vmax.f32 %v1928, %v1142
  %v1933 = vmax.f32 %v1929, %v1147
  %v1934 = vmax.f32 %v1930, %v1152
  %v1935 = vmax.f32 %v1931, %v1157
  %v1936 = vmax.f32 %v1932, %v1162
  %v1937 = vmax.f32 %v1933, %v1167
  %v1938 = vmax.f32 %v1934, %v1172
  %v1939 = vmax.f32 %v1935, %v1177
  %v1940 = vmax.f32 %v1936, %v1182
  %v1941 = vmax.f32 %v1937, %v1187
  %v1942 = vmax.f32 %v1938, %v1192
  %v1943 = vmax.f32 %v1939, %v1197
  %v1944 = vmax.f32 %v1940, %v1202
  %v1945 = vmax.f32 %v1941, %v1207
  %v1946 = vmax.f32 %v1942, %v1212
  %v1947 = vmax.f32 %v1943, %v1217
  %v1948 = vmax.f32 %v1944, %v1222
  %v1949 = vmax.f32 %v1945, %v1227
  %v1950 = vmax.f32 %v1946, %v1232
  %v1951 = vmax.f32 %v1947, %v1237
  %v1952 = vmax.f32 %v1948, %v1242
  %v1953 = vmax.f32 %v1949, %v1247
  %v1954 = vmax.f32 %v1950, %v1252
  %v1955 = vmax.f32 %v1951, %v1257
  %v1956 = vmax.f32 %v1952, %v1262
  %v1957 = vmax.f32 %v1953, %v1267
  %v1958 = vmax.f32 %v1954, %v1272
  %v1959 = vmax.f32 %v1955, %v1277
  %v1960 = vmax.f32 %v1956, %v1282
  %v1961 = vmax.f32 %v1957, %v1287
  %v1962 = vmax.f32 %v1958, %v1292
  %v1963 = vmax.f32 %v1959, %v1297
  %v1964 = vmax.f32 %v1960, %v1302
  %v1965 = vmax.f32 %v1961, %v1307
  %v1966 = vmax.f32 %v1962, %v1312
  %v1967 = vmax.f32 %v1963, %v1317
  %v1968 = vmax.f32 %v1964, %v1322
  %v1969 = vmax.f32 %v1965, %v1327
  %v1970 = vmax.f32 %v1966, %v1332
  %v1971 = vmax.f32 %v1967, %v1337
  %v1972 = vmax.f32 %v1968, %v1342
  %v1973 = vmax.f32 %v1969, %v1347
  %v1974 = vmax.f32 %v1970, %v1352
  %v1975 = vmax.f32 %v1971, %v1357
  %v1976 = vmax.f32 %v1972, %v1362
  %v1977 = vmax.f32 %v1973, %v1367
  %v1978 = vmax.f32 %v1974, %v1372
  %v1979 = vmax.f32 %v1975, %v1377
  %v1980 = vmax.f32 %v1976, %v1382
  %v1981 = vmax.f32 %v1977, %v1387
  %v1982 = vmax.f32 %v1978, %v1392
  %v1983 = vmax.f32 %v1979, %v1397
  %v1984 = vmax.f32 %v1980, %v1402
  %v1985 = vmax.f32 %v1981, %v1407
  %v1986 = vmax.f32 %v1982, %v1412
  %v1987 = vmax.f32 %v1983, %v1417
  %v1988 = vmax.f32 %v1984, %v1422
  %v1989 = vmax.f32 %v1985, %v1427
  %v1990 = vmax.f32 %v1986, %v1432
  %v1991 = vmax.f32 %v1987, %v1437
  %v1992 = vmax.f32 %v1988, %v1442
  %v1993 = vmax.f32 %v1989, %v1447
  %v1994 = vmax.f32 %v1990, %v1452
  %v1995 = vmax.f32 %v1991, %v1457
  %v1996 = vmax.f32 %v1992, %v1462
  %v1997 = vmax.f32 %v1993, %v1467
  %v1998 = vmax.f32 %v1994, %v1472
  %v1999 = vmax.f32 %v1995, %v1477
  %v2000 = vmax.f32 %v1996, %v1482
  %v2001 = vmax.f32 %v1997, %v1487
  %v2002 = vmax.f32 %v1998, %v1492
  %v2003 = vmax.f32 %v1999, %v1497
  %v2004 = vmax.f32 %v2000, %v1502
  %v2005 = vmax.f32 %v2001, %v1507
  %v2006 = vmax.f32 %v2002, %v1512
  %v2007 = vmax.f32 %v2003, %v1517
  %v2008 = vmax.f32 %v2004, %v1522
  %v2009 = vmax.f32 %v2005, %v1527
  %v2010 = vmax.f32 %v2006, %v1532
  %v2011 = vmax.f32 %v2007, %v1537
  %v2012 = vmax.f32 %v2008, %v1542
  %v2013 = vmax.f32 %v2009, %v1547
  %v2014 = vmax.f32 %v2010, %v1552
  %v2015 = vmax.f32 %v2011, %v1557
  %v2016 = vmax.f32 %v2012, %v1562
  %v2017 = vmax.f32 %v2013, %v1567
  %v2018 = vmax.f32 %v2014, %v1572
  %v2019 = vmax.f32 %v2015, %v1577
  %v2020 = vmax.f32 %v2016, %v1582
  %v2021 = vmax.f32 %v2017, %v1587
  %v2022 = vmax.f32 %v2018, %v1592
  %v2023 = vmax.f32 %v2019, %v1597
  %v2024 = vmax.f32 %v2020, %v1602
  %v2025 = vmax.f32 %v2021, %v1607
  %v2026 = vmax.f32 %v2022, %v1612
  %v2027 = vmax.f32 %v2023, %v1617
  %v2028 = vmax.f32 %v2024, %v1622
  %v2029 = vmax.f32 %v2025, %v1627
  %v2030 = vmax.f32 %v2026, %v1632
  %v2031 = vmax.f32 %v2027, %v1637
  %v2032 = vmax.f32 %v2028, %v1642
  %v2033 = vmax.f32 %v2029, %v1647
  %v2034 = vmax.f32 %v2030, %v1652
  %v2035 = vmax.f32 %v2031, %v1657
  %v2036 = vmax.f32 %v2032, %v1662
  %v2037 = vmax.f32 %v2033, %v1667
  %v2038 = vmax.f32 %v2034, %v1672
  %v2039 = vmax.f32 %v2035, %v1677
  %v2040 = vmax.f32 %v2036, %v1682
  %v2041 = vmax.f32 %v2037, %v1687
  %v2042 = vmax.f32 %v2038, %v1692
  %v2043 = vmax.f32 %v2039, %v1697
  %v2044 = vmax.f32 %v2040, %v1702
  %v2045 = vmax.f32 %v2041, %v1707
  %v2046 = vmax.f32 %v2042, %v1712
  %v2047 = vmax.f32 %v2043, %v1717
  %v2048 = vmax.f32 %v2044, %v1722
  %v2049 = vmax.f32 %v2045, %v1727
  %v2050 = vmax.f32 %v2046, %v1732
  %v2051 = vmax.f32 %v2047, %v1737
  %v2052 = vmax.f32 %v2048, %v1742
  %v2053 = vmax.f32 %v2049, %v1747
  %v2054 = vmax.f32 %v2050, %v1752
  %v2055 = vmax.f32 %v2051, %v1757
  %v2056 = vmax.f32 %v2052, %v1762
  %v2057 = vmax.f32 %v2053, %v1767
  %v2058 = vmax.f32 %v2054, %v1772
  %v2059 = vmax.f32 %v2055, %v1777
  %v2060 = vmax.f32 %v2056, %v1782
  %v2061 = vmax.f32 %v2057, %v1787
  %v2062 = vmax.f32 %v2058, %v1792
  %v2063 = vmax.f32 %v2059, %v1797
  %v2064 = vmax.f32 %v2060, %v1802
  %v2065 = vmax.f32 %v2061, %v1807
  %v2066 = vmax.f32 %v2062, %v1812
  %v2067 = vmax.f32 %v2063, %v1817
  %v2068 = vmax.f32 %v2064, %v1822
  %v2069 = vmax.f32 %v2065, %v1827
  %v2070 = vmax.f32 %v2066, %v1832
  %v2071 = vmax.f32 %v2067, %v1837
  %v2072 = vmax.f32 %v2068, %v1842
  %v2073 = vmax.f32 %v2069, %v1847
  %v2074 = vmax.f32 %v2070, %v1852
  %v2075 = vmax.f32 %v2071, %v1857
  %v2076 = vmax.f32 %v2072, %v1862
  %v2077 = vmax.f32 %v2073, %v1867
  %v2078 = vmax.f32 %v2074, %v1872
  %v2079 = vmax.f32 %v2075, %v1877
  %v2080 = vmax.f32 %v2076, %v1882
  %v2081 = vmax.f32 %v2077, %v1887
  %v2082 = vld [vmem:[%s5] sm:$0x1]
  %v2084 = vlaneseq
  %v2085 = vshrl.u32 %v2084, 7
  %v2086 = vsub.s32 0, %v2085
  %v2087 = vrot.slane %v2082, %v2086
  %v2089 = vadd.f32 %v2078, %v2087
  %v2090 = vadd.f32 %v2079, %v2087
  %v2091 = vadd.f32 %v2080, %v2087
  %v2092 = vadd.f32 %v2081, %v2087
  %2093 = vst [vmem:[%s7] sm:$0xff] %v2089
  %2094 = vst [vmem:[%s7 + $0x8] sm:$0xff] %v2090
  %2095 = vst [vmem:[%s7 + $0x10] sm:$0xff] %v2091
  %2096 = vst [vmem:[%s7 + $0x18] sm:$0xff] %v2092
  // Predicated region
  $region26: #{forward.4} parent=0 // pred_check
    _
  $region27: #{forward.4} parent=0 // pred_check_branch
    %2098 = sbr.rel (0) target = $region29
  $region28: #{forward.4} parent=0 // pred_region
    _
  $region29: #{forward.4} parent=0 // pred_fallthru
    _
  // Predicated region
  $region30: #{forward.4} parent=0 // pred_check
    _
  $region31: #{forward.4} parent=0 // pred_check_branch
    %2100 = sbr.rel (0) target = $region33
  $region32: #{forward.4} parent=0 // pred_region
    _
  $region33: #{forward.4} parent=0 // pred_fallthru
    _
  // Predicated region
  $region34: #{forward.4} parent=0 // pred_check
    _
  $region35: #{forward.4} parent=0 // pred_check_branch
    %2102 = sbr.rel (0) target = $region37
  $region36: #{forward.4} parent=0 // pred_region
    _
  $region37: #{forward.4} parent=0 // pred_fallthru
    _
  // Predicated region
  $region38: #{forward.4} parent=0 // pred_check
    _
  $region39: #{forward.4} parent=0 // pred_check_branch
    %2104 = sbr.rel (0) target = $region41
  $region40: #{forward.4} parent=0 // pred_region
    _
  $region41: #{forward.4} parent=0 // pred_fallthru
    _

// kernel: forward.5
$region0: #{forward.5}
  #allocation0 [shape = 'u32[]', space=smem, size = 0x4, offset = 0x4, fixed_abs, tag = 'smem constant byte address 0x4 - core index']
  #allocation1 [shape = 'u32[144,128]{1,0:T(1,128)}', space=vmem, size = 0x12000, scoped, tag = 'internal scratch']
  %s0 = inlined_call_operand.vmem [shape: f32[2,4096], index: 0, kind: input, shape index: {}]
  %s1 = inlined_call_operand.vmem [shape: f32[2,4096], index: 1, kind: input, shape index: {}]
  %s2 = inlined_call_operand.vmem [shape: bf16[4096,128], index: 2, kind: input, shape index: {}]
  %s3 = inlined_call_operand.vmem [shape: bf16[4096,128], index: 3, kind: input, shape index: {}]
  %s4 = inlined_call_operand.vmem [shape: f32[1,128], index: 4, kind: input, shape index: {}]
  %s5 = inlined_call_operand.hbm [shape: f32[2,128], index: 5, kind: output, shape index: {}]
  %s6 = sld [smem:[#allocation0]]
  $region30: #{forward.5} parent=0
    _
  %s8 = ssub.s32 1, %s6
  %s9 = scalar_select 0, %s8, %s6
  $region1: #{forward.5} parent=0
    #allocation2 [shape = 'u8[1024]{0}', space=vmem, size = 0x400, scoped, tag = 'output window, operand 0, single buffered']
    #allocation3 [shape = 's32[1]{0}', space=sflag, size = 0x4, scoped, tag = 'scoped memory for forward.5']
    %10 = vsyncpa [#allocation3], 0
    // Predicated region
    $region2: #{forward.5} parent=1 // pred_check
      _
    $region3: #{forward.5} parent=1 // pred_check_branch
      %12 = sbr.rel (0) target = $region5
    $region4: #{forward.5} parent=1 // pred_region
      _
    $region5: #{forward.5} parent=1 // pred_fallthru
      _
    // Predicated region
    $region6: #{forward.5} parent=1 // pred_check
      _
    $region7: #{forward.5} parent=1 // pred_check_branch
      %14 = sbr.rel (0) target = $region9
    $region8: #{forward.5} parent=1 // pred_region
      _
    $region9: #{forward.5} parent=1 // pred_fallthru
      _
    // Predicated region
    $region10: #{forward.5} parent=1 // pred_check
      _
    $region11: #{forward.5} parent=1 // pred_check_branch
      %16 = sbr.rel (0) target = $region13
    $region12: #{forward.5} parent=1 // pred_region
      _
    $region13: #{forward.5} parent=1 // pred_fallthru
      _
    // Predicated region
    $region14: #{forward.5} parent=1 // pred_check
      _
    $region15: #{forward.5} parent=1 // pred_check_branch
      %18 = sbr.rel (0) target = $region17
    $region16: #{forward.5} parent=1 // pred_region
      _
    $region17: #{forward.5} parent=1 // pred_fallthru
      _
    // Predicated region
    $region18: #{forward.5} parent=1 // pred_check
      _
    $region19: #{forward.5} parent=1 // pred_check_branch
      %20 = sbr.rel (0) target = $region21
    $region20: #{forward.5} parent=1 // pred_region
      _
    $region21: #{forward.5} parent=1 // pred_fallthru
      _
    %v22 = vld [vmem:[%s0] sm:$0xff]
    %v23 = vld [vmem:[%s0 + $0x8] sm:$0xff]
    %v24 = vld [vmem:[%s0 + $0x10] sm:$0xff]
    %v25 = vld [vmem:[%s0 + $0x18] sm:$0xff]
    %v26 = vld [vmem:[%s0 + $0x20] sm:$0xff]
    %v27 = vld [vmem:[%s0 + $0x28] sm:$0xff]
    %v28 = vld [vmem:[%s0 + $0x30] sm:$0xff]
    %v29 = vld [vmem:[%s0 + $0x38] sm:$0xff]
    %v30 = vmul.f32 %v22, %v22
    %v31 = vmul.f32 %v23, %v23
    %v32 = vmul.f32 %v24, %v24
    %v33 = vmul.f32 %v25, %v25
    %v34 = vmul.f32 %v26, %v26
    %v35 = vmul.f32 %v27, %v27
    %v36 = vmul.f32 %v28, %v28
    %v37 = vmul.f32 %v29, %v29
    %v46 = vcombine.high %v30, %v30
    %v48 = vunpack.c.l.s4 1983009808
    %v49 = vunpack.c.0.s8 %v48
    %v50 = vlaneseq
    %v51 = vshrl.u32 %v50, 7
    %v52 = vsub.s32 %v49, %v51
    %v53 = vrot.slane %v30, %v52
    %v55 = vunpack.c.l.s4 1983009808
    %v56 = vunpack.c.0.s8 %v55
    %v57 = vlaneseq
    %v58 = vshrl.u32 %v57, 7
    %v59 = vsub.s32 %v56, %v58
    %v60 = vrot.slane %v46, %v59
    %v61 = vcombine.high %v53, %v53
    %v62 = vcombine.high %v60, %v60
    %v63 = vcombine.high %v31, %v31
    %v65 = vunpack.c.l.s4 1983009808
    %v66 = vunpack.c.0.s8 %v65
    %v67 = vlaneseq
    %v68 = vshrl.u32 %v67, 7
    %v69 = vsub.s32 %v66, %v68
    %v70 = vrot.slane %v31, %v69
    %v72 = vunpack.c.l.s4 1983009808
    %v73 = vunpack.c.0.s8 %v72
    %v74 = vlaneseq
    %v75 = vshrl.u32 %v74, 7
    %v76 = vsub.s32 %v73, %v75
    %v77 = vrot.slane %v63, %v76
    %v78 = vcombine.high %v70, %v70
    %v79 = vcombine.high %v77, %v77
    %v80 = vcombine.high %v32, %v32
    %v82 = vunpack.c.l.s4 1983009808
    %v83 = vunpack.c.0.s8 %v82
    %v84 = vlaneseq
    %v85 = vshrl.u32 %v84, 7
    %v86 = vsub.s32 %v83, %v85
    %v87 = vrot.slane %v32, %v86
    %v89 = vunpack.c.l.s4 1983009808
    %v90 = vunpack.c.0.s8 %v89
    %v91 = vlaneseq
    %v92 = vshrl.u32 %v91, 7
    %v93 = vsub.s32 %v90, %v92
    %v94 = vrot.slane %v80, %v93
    %v95 = vcombine.high %v87, %v87
    %v96 = vcombine.high %v94, %v94
    %v97 = vcombine.high %v33, %v33
    %v99 = vunpack.c.l.s4 1983009808
    %v100 = vunpack.c.0.s8 %v99
    %v101 = vlaneseq
    %v102 = vshrl.u32 %v101, 7
    %v103 = vsub.s32 %v100, %v102
    %v104 = vrot.slane %v33, %v103
    %v106 = vunpack.c.l.s4 1983009808
    %v107 = vunpack.c.0.s8 %v106
    %v108 = vlaneseq
    %v109 = vshrl.u32 %v108, 7
    %v110 = vsub.s32 %v107, %v109
    %v111 = vrot.slane %v97, %v110
    %v112 = vcombine.high %v104, %v104
    %v113 = vcombine.high %v111, %v111
    %v114 = vcombine.high %v34, %v34
    %v116 = vunpack.c.l.s4 1983009808
    %v117 = vunpack.c.0.s8 %v116
    %v118 = vlaneseq
    %v119 = vshrl.u32 %v118, 7
    %v120 = vsub.s32 %v117, %v119
    %v121 = vrot.slane %v34, %v120
    %v123 = vunpack.c.l.s4 1983009808
    %v124 = vunpack.c.0.s8 %v123
    %v125 = vlaneseq
    %v126 = vshrl.u32 %v125, 7
    %v127 = vsub.s32 %v124, %v126
    %v128 = vrot.slane %v114, %v127
    %v129 = vcombine.high %v121, %v121
    %v130 = vcombine.high %v128, %v128
    %v131 = vcombine.high %v35, %v35
    %v133 = vunpack.c.l.s4 1983009808
    %v134 = vunpack.c.0.s8 %v133
    %v135 = vlaneseq
    %v136 = vshrl.u32 %v135, 7
    %v137 = vsub.s32 %v134, %v136
    %v138 = vrot.slane %v35, %v137
    %v140 = vunpack.c.l.s4 1983009808
    %v141 = vunpack.c.0.s8 %v140
    %v142 = vlaneseq
    %v143 = vshrl.u32 %v142, 7
    %v144 = vsub.s32 %v141, %v143
    %v145 = vrot.slane %v131, %v144
    %v146 = vcombine.high %v138, %v138
    %v147 = vcombine.high %v145, %v145
    %v148 = vcombine.high %v36, %v36
    %v150 = vunpack.c.l.s4 1983009808
    %v151 = vunpack.c.0.s8 %v150
    %v152 = vlaneseq
    %v153 = vshrl.u32 %v152, 7
    %v154 = vsub.s32 %v151, %v153
    %v155 = vrot.slane %v36, %v154
    %v157 = vunpack.c.l.s4 1983009808
    %v158 = vunpack.c.0.s8 %v157
    %v159 = vlaneseq
    %v160 = vshrl.u32 %v159, 7
    %v161 = vsub.s32 %v158, %v160
    %v162 = vrot.slane %v148, %v161
    %v163 = vcombine.high %v155, %v155
    %v164 = vcombine.high %v162, %v162
    %v165 = vcombine.high %v37, %v37
    %v167 = vunpack.c.l.s4 1983009808
    %v168 = vunpack.c.0.s8 %v167
    %v169 = vlaneseq
    %v170 = vshrl.u32 %v169, 7
    %v171 = vsub.s32 %v168, %v170
    %v172 = vrot.slane %v37, %v171
    %v174 = vunpack.c.l.s4 1983009808
    %v175 = vunpack.c.0.s8 %v174
    %v176 = vlaneseq
    %v177 = vshrl.u32 %v176, 7
    %v178 = vsub.s32 %v175, %v177
    %v179 = vrot.slane %v165, %v178
    %v180 = vcombine.high %v172, %v172
    %v181 = vcombine.high %v179, %v179
    %vm214 = vcmask 1041408
    %v215 = vsel %vm214, %v53, 0.0
    %v216 = vsel %vm214, %v61, 0.0
    %v217 = vadd.f32 %v215, %v216
    %v218 = vsel %vm214, %v60, 0.0
    %v219 = vadd.f32 %v217, %v218
    %v220 = vsel %vm214, %v62, 0.0
    %v221 = vadd.f32 %v219, %v220
    %v222 = vsel %vm214, %v70, 0.0
    %v223 = vadd.f32 %v221, %v222
    %v224 = vsel %vm214, %v78, 0.0
    %v225 = vadd.f32 %v223, %v224
    %v226 = vsel %vm214, %v77, 0.0
    %v227 = vadd.f32 %v225, %v226
    %v228 = vsel %vm214, %v79, 0.0
    %v229 = vadd.f32 %v227, %v228
    %v230 = vsel %vm214, %v87, 0.0
    %v231 = vadd.f32 %v229, %v230
    %v232 = vsel %vm214, %v95, 0.0
    %v233 = vadd.f32 %v231, %v232
    %v234 = vsel %vm214, %v94, 0.0
    %v235 = vadd.f32 %v233, %v234
    %v236 = vsel %vm214, %v96, 0.0
    %v237 = vadd.f32 %v235, %v236
    %v238 = vsel %vm214, %v104, 0.0
    %v239 = vadd.f32 %v237, %v238
    %v240 = vsel %vm214, %v112, 0.0
    %v241 = vadd.f32 %v239, %v240
    %v242 = vsel %vm214, %v111, 0.0
    %v243 = vadd.f32 %v241, %v242
    %v244 = vsel %vm214, %v113, 0.0
    %v245 = vadd.f32 %v243, %v244
    %v246 = vsel %vm214, %v121, 0.0
    %v247 = vadd.f32 %v245, %v246
    %v248 = vsel %vm214, %v129, 0.0
    %v249 = vadd.f32 %v247, %v248
    %v250 = vsel %vm214, %v128, 0.0
    %v251 = vadd.f32 %v249, %v250
    %v252 = vsel %vm214, %v130, 0.0
    %v253 = vadd.f32 %v251, %v252
    %v254 = vsel %vm214, %v138, 0.0
    %v255 = vadd.f32 %v253, %v254
    %v256 = vsel %vm214, %v146, 0.0
    %v257 = vadd.f32 %v255, %v256
    %v258 = vsel %vm214, %v145, 0.0
    %v259 = vadd.f32 %v257, %v258
    %v260 = vsel %vm214, %v147, 0.0
    %v261 = vadd.f32 %v259, %v260
    %v262 = vsel %vm214, %v155, 0.0
    %v263 = vadd.f32 %v261, %v262
    %v264 = vsel %vm214, %v163, 0.0
    %v265 = vadd.f32 %v263, %v264
    %v266 = vsel %vm214, %v162, 0.0
    %v267 = vadd.f32 %v265, %v266
    %v268 = vsel %vm214, %v164, 0.0
    %v269 = vadd.f32 %v267, %v268
    %v270 = vsel %vm214, %v172, 0.0
    %v271 = vadd.f32 %v269, %v270
    %v272 = vsel %vm214, %v180, 0.0
    %v273 = vadd.f32 %v271, %v272
    %v274 = vsel %vm214, %v179, 0.0
    %v275 = vadd.f32 %v273, %v274
    %v276 = vsel %vm214, %v181, 0.0
    %v277 = vadd.f32 %v275, %v276
    %278 = vadd.xlane.f32.xlu0 %v277
    %v279 = vpop.xlane.xlu0 %278
    %v280 = vmax.f32 %v279, 1e-24
    %v281 = vrsqrt.pop %v280
    %v284 = vunpack.c.l.s4 269488144
    %v285 = vunpack.c.0.s8 %v284
    %v286 = vlaneseq
    %v287 = vshrl.u32 %v286, 7
    %v288 = vsub.s32 %v285, %v287
    %v289 = vrot.slane %v281, %v288
    %v291 = vmul.f32 %v22, %v289
    %v292 = vmul.f32 %v23, %v289
    %v293 = vmul.f32 %v24, %v289
    %v294 = vmul.f32 %v25, %v289
    %v295 = vmul.f32 %v26, %v289
    %v296 = vmul.f32 %v27, %v289
    %v297 = vmul.f32 %v28, %v289
    %v298 = vmul.f32 %v29, %v289
    %v299 = vld [vmem:[%s1] sm:$0xff]
    %v300 = vld [vmem:[%s1 + $0x8] sm:$0xff]
    %v301 = vld [vmem:[%s1 + $0x10] sm:$0xff]
    %v302 = vld [vmem:[%s1 + $0x18] sm:$0xff]
    %v303 = vld [vmem:[%s1 + $0x20] sm:$0xff]
    %v304 = vld [vmem:[%s1 + $0x28] sm:$0xff]
    %v305 = vld [vmem:[%s1 + $0x30] sm:$0xff]
    %v306 = vld [vmem:[%s1 + $0x38] sm:$0xff]
    %v307 = vmul.f32 %v299, %v299
    %v308 = vmul.f32 %v300, %v300
    %v309 = vmul.f32 %v301, %v301
    %v310 = vmul.f32 %v302, %v302
    %v311 = vmul.f32 %v303, %v303
    %v312 = vmul.f32 %v304, %v304
    %v313 = vmul.f32 %v305, %v305
    %v314 = vmul.f32 %v306, %v306
    %v323 = vcombine.high %v307, %v307
    %v325 = vunpack.c.l.s4 1983009808
    %v326 = vunpack.c.0.s8 %v325
    %v327 = vlaneseq
    %v328 = vshrl.u32 %v327, 7
    %v329 = vsub.s32 %v326, %v328
    %v330 = vrot.slane %v307, %v329
    %v332 = vunpack.c.l.s4 1983009808
    %v333 = vunpack.c.0.s8 %v332
    %v334 = vlaneseq
    %v335 = vshrl.u32 %v334, 7
    %v336 = vsub.s32 %v333, %v335
    %v337 = vrot.slane %v323, %v336
    %v338 = vcombine.high %v330, %v330
    %v339 = vcombine.high %v337, %v337
    %v340 = vcombine.high %v308, %v308
    %v342 = vunpack.c.l.s4 1983009808
    %v343 = vunpack.c.0.s8 %v342
    %v344 = vlaneseq
    %v345 = vshrl.u32 %v344, 7
    %v346 = vsub.s32 %v343, %v345
    %v347 = vrot.slane %v308, %v346
    %v349 = vunpack.c.l.s4 1983009808
    %v350 = vunpack.c.0.s8 %v349
    %v351 = vlaneseq
    %v352 = vshrl.u32 %v351, 7
    %v353 = vsub.s32 %v350, %v352
    %v354 = vrot.slane %v340, %v353
    %v355 = vcombine.high %v347, %v347
    %v356 = vcombine.high %v354, %v354
    %v357 = vcombine.high %v309, %v309
    %v359 = vunpack.c.l.s4 1983009808
    %v360 = vunpack.c.0.s8 %v359
    %v361 = vlaneseq
    %v362 = vshrl.u32 %v361, 7
    %v363 = vsub.s32 %v360, %v362
    %v364 = vrot.slane %v309, %v363
    %v366 = vunpack.c.l.s4 1983009808
    %v367 = vunpack.c.0.s8 %v366
    %v368 = vlaneseq
    %v369 = vshrl.u32 %v368, 7
    %v370 = vsub.s32 %v367, %v369
    %v371 = vrot.slane %v357, %v370
    %v372 = vcombine.high %v364, %v364
    %v373 = vcombine.high %v371, %v371
    %v374 = vcombine.high %v310, %v310
    %v376 = vunpack.c.l.s4 1983009808
    %v377 = vunpack.c.0.s8 %v376
    %v378 = vlaneseq
    %v379 = vshrl.u32 %v378, 7
    %v380 = vsub.s32 %v377, %v379
    %v381 = vrot.slane %v310, %v380
    %v383 = vunpack.c.l.s4 1983009808
    %v384 = vunpack.c.0.s8 %v383
    %v385 = vlaneseq
    %v386 = vshrl.u32 %v385, 7
    %v387 = vsub.s32 %v384, %v386
    %v388 = vrot.slane %v374, %v387
    %v389 = vcombine.high %v381, %v381
    %v390 = vcombine.high %v388, %v388
    %v391 = vcombine.high %v311, %v311
    %v393 = vunpack.c.l.s4 1983009808
    %v394 = vunpack.c.0.s8 %v393
    %v395 = vlaneseq
    %v396 = vshrl.u32 %v395, 7
    %v397 = vsub.s32 %v394, %v396
    %v398 = vrot.slane %v311, %v397
    %v400 = vunpack.c.l.s4 1983009808
    %v401 = vunpack.c.0.s8 %v400
    %v402 = vlaneseq
    %v403 = vshrl.u32 %v402, 7
    %v404 = vsub.s32 %v401, %v403
    %v405 = vrot.slane %v391, %v404
    %v406 = vcombine.high %v398, %v398
    %v407 = vcombine.high %v405, %v405
    %v408 = vcombine.high %v312, %v312
    %v410 = vunpack.c.l.s4 1983009808
    %v411 = vunpack.c.0.s8 %v410
    %v412 = vlaneseq
    %v413 = vshrl.u32 %v412, 7
    %v414 = vsub.s32 %v411, %v413
    %v415 = vrot.slane %v312, %v414
    %v417 = vunpack.c.l.s4 1983009808
    %v418 = vunpack.c.0.s8 %v417
    %v419 = vlaneseq
    %v420 = vshrl.u32 %v419, 7
    %v421 = vsub.s32 %v418, %v420
    %v422 = vrot.slane %v408, %v421
    %v423 = vcombine.high %v415, %v415
    %v424 = vcombine.high %v422, %v422
    %v425 = vcombine.high %v313, %v313
    %v427 = vunpack.c.l.s4 1983009808
    %v428 = vunpack.c.0.s8 %v427
    %v429 = vlaneseq
    %v430 = vshrl.u32 %v429, 7
    %v431 = vsub.s32 %v428, %v430
    %v432 = vrot.slane %v313, %v431
    %v434 = vunpack.c.l.s4 1983009808
    %v435 = vunpack.c.0.s8 %v434
    %v436 = vlaneseq
    %v437 = vshrl.u32 %v436, 7
    %v438 = vsub.s32 %v435, %v437
    %v439 = vrot.slane %v425, %v438
    %v440 = vcombine.high %v432, %v432
    %v441 = vcombine.high %v439, %v439
    %v442 = vcombine.high %v314, %v314
    %v444 = vunpack.c.l.s4 1983009808
    %v445 = vunpack.c.0.s8 %v444
    %v446 = vlaneseq
    %v447 = vshrl.u32 %v446, 7
    %v448 = vsub.s32 %v445, %v447
    %v449 = vrot.slane %v314, %v448
    %v451 = vunpack.c.l.s4 1983009808
    %v452 = vunpack.c.0.s8 %v451
    %v453 = vlaneseq
    %v454 = vshrl.u32 %v453, 7
    %v455 = vsub.s32 %v452, %v454
    %v456 = vrot.slane %v442, %v455
    %v457 = vcombine.high %v449, %v449
    %v458 = vcombine.high %v456, %v456
    %v491 = vsel %vm214, %v330, 0.0
    %v492 = vsel %vm214, %v338, 0.0
    %v493 = vadd.f32 %v491, %v492
    %v494 = vsel %vm214, %v337, 0.0
    %v495 = vadd.f32 %v493, %v494
    %v496 = vsel %vm214, %v339, 0.0
    %v497 = vadd.f32 %v495, %v496
    %v498 = vsel %vm214, %v347, 0.0
    %v499 = vadd.f32 %v497, %v498
    %v500 = vsel %vm214, %v355, 0.0
    %v501 = vadd.f32 %v499, %v500
    %v502 = vsel %vm214, %v354, 0.0
    %v503 = vadd.f32 %v501, %v502
    %v504 = vsel %vm214, %v356, 0.0
    %v505 = vadd.f32 %v503, %v504
    %v506 = vsel %vm214, %v364, 0.0
    %v507 = vadd.f32 %v505, %v506
    %v508 = vsel %vm214, %v372, 0.0
    %v509 = vadd.f32 %v507, %v508
    %v510 = vsel %vm214, %v371, 0.0
    %v511 = vadd.f32 %v509, %v510
    %v512 = vsel %vm214, %v373, 0.0
    %v513 = vadd.f32 %v511, %v512
    %v514 = vsel %vm214, %v381, 0.0
    %v515 = vadd.f32 %v513, %v514
    %v516 = vsel %vm214, %v389, 0.0
    %v517 = vadd.f32 %v515, %v516
    %v518 = vsel %vm214, %v388, 0.0
    %v519 = vadd.f32 %v517, %v518
    %v520 = vsel %vm214, %v390, 0.0
    %v521 = vadd.f32 %v519, %v520
    %v522 = vsel %vm214, %v398, 0.0
    %v523 = vadd.f32 %v521, %v522
    %v524 = vsel %vm214, %v406, 0.0
    %v525 = vadd.f32 %v523, %v524
    %v526 = vsel %vm214, %v405, 0.0
    %v527 = vadd.f32 %v525, %v526
    %v528 = vsel %vm214, %v407, 0.0
    %v529 = vadd.f32 %v527, %v528
    %v530 = vsel %vm214, %v415, 0.0
    %v531 = vadd.f32 %v529, %v530
    %v532 = vsel %vm214, %v423, 0.0
    %v533 = vadd.f32 %v531, %v532
    %v534 = vsel %vm214, %v422, 0.0
    %v535 = vadd.f32 %v533, %v534
    %v536 = vsel %vm214, %v424, 0.0
    %v537 = vadd.f32 %v535, %v536
    %v538 = vsel %vm214, %v432, 0.0
    %v539 = vadd.f32 %v537, %v538
    %v540 = vsel %vm214, %v440, 0.0
    %v541 = vadd.f32 %v539, %v540
    %v542 = vsel %vm214, %v439, 0.0
    %v543 = vadd.f32 %v541, %v542
    %v544 = vsel %vm214, %v441, 0.0
    %v545 = vadd.f32 %v543, %v544
    %v546 = vsel %vm214, %v449, 0.0
    %v547 = vadd.f32 %v545, %v546
    %v548 = vsel %vm214, %v457, 0.0
    %v549 = vadd.f32 %v547, %v548
    %v550 = vsel %vm214, %v456, 0.0
    %v551 = vadd.f32 %v549, %v550
    %v552 = vsel %vm214, %v458, 0.0
    %v553 = vadd.f32 %v551, %v552
    %554 = vadd.xlane.f32.xlu0 %v553
    %v555 = vpop.xlane.xlu0 %554
    %v556 = vmax.f32 %v555, 1e-24
    %v557 = vrsqrt.pop %v556
    %v560 = vunpack.c.l.s4 269488144
    %v561 = vunpack.c.0.s8 %v560
    %v562 = vlaneseq
    %v563 = vshrl.u32 %v562, 7
    %v564 = vsub.s32 %v561, %v563
    %v565 = vrot.slane %v557, %v564
    %v567 = vmul.f32 %v299, %v565
    %v568 = vmul.f32 %v300, %v565
    %v569 = vmul.f32 %v301, %v565
    %v570 = vmul.f32 %v302, %v565
    %v571 = vmul.f32 %v303, %v565
    %v572 = vmul.f32 %v304, %v565
    %v573 = vmul.f32 %v305, %v565
    %v574 = vmul.f32 %v306, %v565
    %v583 = vcombine.high %v291, %v291
    %v585 = vunpack.c.l.s4 1983009808
    %v586 = vunpack.c.0.s8 %v585
    %v587 = vlaneseq
    %v588 = vshrl.u32 %v587, 7
    %v589 = vsub.s32 %v586, %v588
    %v590 = vrot.slane %v291, %v589
    %v592 = vunpack.c.l.s4 1983009808
    %v593 = vunpack.c.0.s8 %v592
    %v594 = vlaneseq
    %v595 = vshrl.u32 %v594, 7
    %v596 = vsub.s32 %v593, %v595
    %v597 = vrot.slane %v583, %v596
    %v598 = vcombine.high %v590, %v590
    %v599 = vcombine.high %v597, %v597
    %v600 = vcombine.high %v292, %v292
    %v602 = vunpack.c.l.s4 1983009808
    %v603 = vunpack.c.0.s8 %v602
    %v604 = vlaneseq
    %v605 = vshrl.u32 %v604, 7
    %v606 = vsub.s32 %v603, %v605
    %v607 = vrot.slane %v292, %v606
    %v609 = vunpack.c.l.s4 1983009808
    %v610 = vunpack.c.0.s8 %v609
    %v611 = vlaneseq
    %v612 = vshrl.u32 %v611, 7
    %v613 = vsub.s32 %v610, %v612
    %v614 = vrot.slane %v600, %v613
    %v615 = vcombine.high %v607, %v607
    %v616 = vcombine.high %v614, %v614
    %v617 = vcombine.high %v293, %v293
    %v619 = vunpack.c.l.s4 1983009808
    %v620 = vunpack.c.0.s8 %v619
    %v621 = vlaneseq
    %v622 = vshrl.u32 %v621, 7
    %v623 = vsub.s32 %v620, %v622
    %v624 = vrot.slane %v293, %v623
    %v626 = vunpack.c.l.s4 1983009808
    %v627 = vunpack.c.0.s8 %v626
    %v628 = vlaneseq
    %v629 = vshrl.u32 %v628, 7
    %v630 = vsub.s32 %v627, %v629
    %v631 = vrot.slane %v617, %v630
    %v632 = vcombine.high %v624, %v624
    %v633 = vcombine.high %v631, %v631
    %v634 = vcombine.high %v294, %v294
    %v636 = vunpack.c.l.s4 1983009808
    %v637 = vunpack.c.0.s8 %v636
    %v638 = vlaneseq
    %v639 = vshrl.u32 %v638, 7
    %v640 = vsub.s32 %v637, %v639
    %v641 = vrot.slane %v294, %v640
    %v643 = vunpack.c.l.s4 1983009808
    %v644 = vunpack.c.0.s8 %v643
    %v645 = vlaneseq
    %v646 = vshrl.u32 %v645, 7
    %v647 = vsub.s32 %v644, %v646
    %v648 = vrot.slane %v634, %v647
    %v649 = vcombine.high %v641, %v641
    %v650 = vcombine.high %v648, %v648
    %v651 = vcombine.high %v295, %v295
    %v653 = vunpack.c.l.s4 1983009808
    %v654 = vunpack.c.0.s8 %v653
    %v655 = vlaneseq
    %v656 = vshrl.u32 %v655, 7
    %v657 = vsub.s32 %v654, %v656
    %v658 = vrot.slane %v295, %v657
    %v660 = vunpack.c.l.s4 1983009808
    %v661 = vunpack.c.0.s8 %v660
    %v662 = vlaneseq
    %v663 = vshrl.u32 %v662, 7
    %v664 = vsub.s32 %v661, %v663
    %v665 = vrot.slane %v651, %v664
    %v666 = vcombine.high %v658, %v658
    %v667 = vcombine.high %v665, %v665
    %v668 = vcombine.high %v296, %v296
    %v670 = vunpack.c.l.s4 1983009808
    %v671 = vunpack.c.0.s8 %v670
    %v672 = vlaneseq
    %v673 = vshrl.u32 %v672, 7
    %v674 = vsub.s32 %v671, %v673
    %v675 = vrot.slane %v296, %v674
    %v677 = vunpack.c.l.s4 1983009808
    %v678 = vunpack.c.0.s8 %v677
    %v679 = vlaneseq
    %v680 = vshrl.u32 %v679, 7
    %v681 = vsub.s32 %v678, %v680
    %v682 = vrot.slane %v668, %v681
    %v683 = vcombine.high %v675, %v675
    %v684 = vcombine.high %v682, %v682
    %v685 = vcombine.high %v297, %v297
    %v687 = vunpack.c.l.s4 1983009808
    %v688 = vunpack.c.0.s8 %v687
    %v689 = vlaneseq
    %v690 = vshrl.u32 %v689, 7
    %v691 = vsub.s32 %v688, %v690
    %v692 = vrot.slane %v297, %v691
    %v694 = vunpack.c.l.s4 1983009808
    %v695 = vunpack.c.0.s8 %v694
    %v696 = vlaneseq
    %v697 = vshrl.u32 %v696, 7
    %v698 = vsub.s32 %v695, %v697
    %v699 = vrot.slane %v685, %v698
    %v700 = vcombine.high %v692, %v692
    %v701 = vcombine.high %v699, %v699
    %v702 = vcombine.high %v298, %v298
    %v704 = vunpack.c.l.s4 1983009808
    %v705 = vunpack.c.0.s8 %v704
    %v706 = vlaneseq
    %v707 = vshrl.u32 %v706, 7
    %v708 = vsub.s32 %v705, %v707
    %v709 = vrot.slane %v298, %v708
    %v711 = vunpack.c.l.s4 1983009808
    %v712 = vunpack.c.0.s8 %v711
    %v713 = vlaneseq
    %v714 = vshrl.u32 %v713, 7
    %v715 = vsub.s32 %v712, %v714
    %v716 = vrot.slane %v702, %v715
    %v717 = vcombine.high %v709, %v709
    %v718 = vcombine.high %v716, %v716
    %v751 = vpack.c.bf16 %v590, %v590
    %v752 = vpack.c.bf16 %v598, %v598
    %v753 = vpack.c.bf16 %v597, %v597
    %v754 = vpack.c.bf16 %v599, %v599
    %v755 = vpack.c.bf16 %v607, %v607
    %v756 = vpack.c.bf16 %v615, %v615
    %v757 = vpack.c.bf16 %v614, %v614
    %v758 = vpack.c.bf16 %v616, %v616
    %v759 = vpack.c.bf16 %v624, %v624
    %v760 = vpack.c.bf16 %v632, %v632
    %v761 = vpack.c.bf16 %v631, %v631
    %v762 = vpack.c.bf16 %v633, %v633
    %v763 = vpack.c.bf16 %v641, %v641
    %v764 = vpack.c.bf16 %v649, %v649
    %v765 = vpack.c.bf16 %v648, %v648
    %v766 = vpack.c.bf16 %v650, %v650
    %v767 = vpack.c.bf16 %v658, %v658
    %v768 = vpack.c.bf16 %v666, %v666
    %v769 = vpack.c.bf16 %v665, %v665
    %v770 = vpack.c.bf16 %v667, %v667
    %v771 = vpack.c.bf16 %v675, %v675
    %v772 = vpack.c.bf16 %v683, %v683
    %v773 = vpack.c.bf16 %v682, %v682
    %v774 = vpack.c.bf16 %v684, %v684
    %v775 = vpack.c.bf16 %v692, %v692
    %v776 = vpack.c.bf16 %v700, %v700
    %v777 = vpack.c.bf16 %v699, %v699
    %v778 = vpack.c.bf16 %v701, %v701
    %v779 = vpack.c.bf16 %v709, %v709
    %v780 = vpack.c.bf16 %v717, %v717
    %v781 = vpack.c.bf16 %v716, %v716
    %v782 = vpack.c.bf16 %v718, %v718
    %v783 = vld [vmem:[%s2] sm:$0xf]
    %v784 = vld [vmem:[%s2 + $0x4] sm:$0xf]
    %v785 = vld [vmem:[%s2 + $0x8] sm:$0xf]
    %v786 = vld [vmem:[%s2 + $0xc] sm:$0xf]
    %v787 = vld [vmem:[%s2 + $0x10] sm:$0xf]
    %v788 = vld [vmem:[%s2 + $0x14] sm:$0xf]
    %v789 = vld [vmem:[%s2 + $0x18] sm:$0xf]
    %v790 = vld [vmem:[%s2 + $0x1c] sm:$0xf]
    %v791 = vld [vmem:[%s2 + $0x20] sm:$0xf]
    %v792 = vld [vmem:[%s2 + $0x24] sm:$0xf]
    %v793 = vld [vmem:[%s2 + $0x28] sm:$0xf]
    %v794 = vld [vmem:[%s2 + $0x2c] sm:$0xf]
    %v795 = vld [vmem:[%s2 + $0x30] sm:$0xf]
    %v796 = vld [vmem:[%s2 + $0x34] sm:$0xf]
    %v797 = vld [vmem:[%s2 + $0x38] sm:$0xf]
    %v798 = vld [vmem:[%s2 + $0x3c] sm:$0xf]
    %v799 = vld [vmem:[%s2 + $0x40] sm:$0xf]
    %v800 = vld [vmem:[%s2 + $0x44] sm:$0xf]
    %v801 = vld [vmem:[%s2 + $0x48] sm:$0xf]
    %v802 = vld [vmem:[%s2 + $0x4c] sm:$0xf]
    %v803 = vld [vmem:[%s2 + $0x50] sm:$0xf]
    %v804 = vld [vmem:[%s2 + $0x54] sm:$0xf]
    %v805 = vld [vmem:[%s2 + $0x58] sm:$0xf]
    %v806 = vld [vmem:[%s2 + $0x5c] sm:$0xf]
    %v807 = vld [vmem:[%s2 + $0x60] sm:$0xf]
    %v808 = vld [vmem:[%s2 + $0x64] sm:$0xf]
    %v809 = vld [vmem:[%s2 + $0x68] sm:$0xf]
    %v810 = vld [vmem:[%s2 + $0x6c] sm:$0xf]
    %v811 = vld [vmem:[%s2 + $0x70] sm:$0xf]
    %v812 = vld [vmem:[%s2 + $0x74] sm:$0xf]
    %v813 = vld [vmem:[%s2 + $0x78] sm:$0xf]
    %v814 = vld [vmem:[%s2 + $0x7c] sm:$0xf]
    %v815 = vld [vmem:[%s2 + $0x80] sm:$0xf]
    %v816 = vld [vmem:[%s2 + $0x84] sm:$0xf]
    %v817 = vld [vmem:[%s2 + $0x88] sm:$0xf]
    %v818 = vld [vmem:[%s2 + $0x8c] sm:$0xf]
    %v819 = vld [vmem:[%s2 + $0x90] sm:$0xf]
    %v820 = vld [vmem:[%s2 + $0x94] sm:$0xf]
    %v821 = vld [vmem:[%s2 + $0x98] sm:$0xf]
    %v822 = vld [vmem:[%s2 + $0x9c] sm:$0xf]
    %v823 = vld [vmem:[%s2 + $0xa0] sm:$0xf]
    %v824 = vld [vmem:[%s2 + $0xa4] sm:$0xf]
    %v825 = vld [vmem:[%s2 + $0xa8] sm:$0xf]
    %v826 = vld [vmem:[%s2 + $0xac] sm:$0xf]
    %v827 = vld [vmem:[%s2 + $0xb0] sm:$0xf]
    %v828 = vld [vmem:[%s2 + $0xb4] sm:$0xf]
    %v829 = vld [vmem:[%s2 + $0xb8] sm:$0xf]
    %v830 = vld [vmem:[%s2 + $0xbc] sm:$0xf]
    %v831 = vld [vmem:[%s2 + $0xc0] sm:$0xf]
    %v832 = vld [vmem:[%s2 + $0xc4] sm:$0xf]
    %v833 = vld [vmem:[%s2 + $0xc8] sm:$0xf]
    %v834 = vld [vmem:[%s2 + $0xcc] sm:$0xf]
    %v835 = vld [vmem:[%s2 + $0xd0] sm:$0xf]
    %v836 = vld [vmem:[%s2 + $0xd4] sm:$0xf]
    %v837 = vld [vmem:[%s2 + $0xd8] sm:$0xf]
    %v838 = vld [vmem:[%s2 + $0xdc] sm:$0xf]
    %v839 = vld [vmem:[%s2 + $0xe0] sm:$0xf]
    %v840 = vld [vmem:[%s2 + $0xe4] sm:$0xf]
    %v841 = vld [vmem:[%s2 + $0xe8] sm:$0xf]
    %v842 = vld [vmem:[%s2 + $0xec] sm:$0xf]
    %v843 = vld [vmem:[%s2 + $0xf0] sm:$0xf]
    %v844 = vld [vmem:[%s2 + $0xf4] sm:$0xf]
    %v845 = vld [vmem:[%s2 + $0xf8] sm:$0xf]
    %v846 = vld [vmem:[%s2 + $0xfc] sm:$0xf]
    %v847 = vld [vmem:[%s2 + $0x100] sm:$0xf]
    %v848 = vld [vmem:[%s2 + $0x104] sm:$0xf]
    %v849 = vld [vmem:[%s2 + $0x108] sm:$0xf]
    %v850 = vld [vmem:[%s2 + $0x10c] sm:$0xf]
    %v851 = vld [vmem:[%s2 + $0x110] sm:$0xf]
    %v852 = vld [vmem:[%s2 + $0x114] sm:$0xf]
    %v853 = vld [vmem:[%s2 + $0x118] sm:$0xf]
    %v854 = vld [vmem:[%s2 + $0x11c] sm:$0xf]
    %v855 = vld [vmem:[%s2 + $0x120] sm:$0xf]
    %v856 = vld [vmem:[%s2 + $0x124] sm:$0xf]
    %v857 = vld [vmem:[%s2 + $0x128] sm:$0xf]
    %v858 = vld [vmem:[%s2 + $0x12c] sm:$0xf]
    %v859 = vld [vmem:[%s2 + $0x130] sm:$0xf]
    %v860 = vld [vmem:[%s2 + $0x134] sm:$0xf]
    %v861 = vld [vmem:[%s2 + $0x138] sm:$0xf]
    %v862 = vld [vmem:[%s2 + $0x13c] sm:$0xf]
    %v863 = vld [vmem:[%s2 + $0x140] sm:$0xf]
    %v864 = vld [vmem:[%s2 + $0x144] sm:$0xf]
    %v865 = vld [vmem:[%s2 + $0x148] sm:$0xf]
    %v866 = vld [vmem:[%s2 + $0x14c] sm:$0xf]
    %v867 = vld [vmem:[%s2 + $0x150] sm:$0xf]
    %v868 = vld [vmem:[%s2 + $0x154] sm:$0xf]
    %v869 = vld [vmem:[%s2 + $0x158] sm:$0xf]
    %v870 = vld [vmem:[%s2 + $0x15c] sm:$0xf]
    %v871 = vld [vmem:[%s2 + $0x160] sm:$0xf]
    %v872 = vld [vmem:[%s2 + $0x164] sm:$0xf]
    %v873 = vld [vmem:[%s2 + $0x168] sm:$0xf]
    %v874 = vld [vmem:[%s2 + $0x16c] sm:$0xf]
    %v875 = vld [vmem:[%s2 + $0x170] sm:$0xf]
    %v876 = vld [vmem:[%s2 + $0x174] sm:$0xf]
    %v877 = vld [vmem:[%s2 + $0x178] sm:$0xf]
    %v878 = vld [vmem:[%s2 + $0x17c] sm:$0xf]
    %v879 = vld [vmem:[%s2 + $0x180] sm:$0xf]
    %v880 = vld [vmem:[%s2 + $0x184] sm:$0xf]
    %v881 = vld [vmem:[%s2 + $0x188] sm:$0xf]
    %v882 = vld [vmem:[%s2 + $0x18c] sm:$0xf]
    %v883 = vld [vmem:[%s2 + $0x190] sm:$0xf]
    %v884 = vld [vmem:[%s2 + $0x194] sm:$0xf]
    %v885 = vld [vmem:[%s2 + $0x198] sm:$0xf]
    %v886 = vld [vmem:[%s2 + $0x19c] sm:$0xf]
    %v887 = vld [vmem:[%s2 + $0x1a0] sm:$0xf]
    %v888 = vld [vmem:[%s2 + $0x1a4] sm:$0xf]
    %v889 = vld [vmem:[%s2 + $0x1a8] sm:$0xf]
    %v890 = vld [vmem:[%s2 + $0x1ac] sm:$0xf]
    %v891 = vld [vmem:[%s2 + $0x1b0] sm:$0xf]
    %v892 = vld [vmem:[%s2 + $0x1b4] sm:$0xf]
    %v893 = vld [vmem:[%s2 + $0x1b8] sm:$0xf]
    %v894 = vld [vmem:[%s2 + $0x1bc] sm:$0xf]
    %v895 = vld [vmem:[%s2 + $0x1c0] sm:$0xf]
    %v896 = vld [vmem:[%s2 + $0x1c4] sm:$0xf]
    %v897 = vld [vmem:[%s2 + $0x1c8] sm:$0xf]
    %v898 = vld [vmem:[%s2 + $0x1cc] sm:$0xf]
    %v899 = vld [vmem:[%s2 + $0x1d0] sm:$0xf]
    %v900 = vld [vmem:[%s2 + $0x1d4] sm:$0xf]
    %v901 = vld [vmem:[%s2 + $0x1d8] sm:$0xf]
    %v902 = vld [vmem:[%s2 + $0x1dc] sm:$0xf]
    %v903 = vld [vmem:[%s2 + $0x1e0] sm:$0xf]
    %v904 = vld [vmem:[%s2 + $0x1e4] sm:$0xf]
    %v905 = vld [vmem:[%s2 + $0x1e8] sm:$0xf]
    %v906 = vld [vmem:[%s2 + $0x1ec] sm:$0xf]
    %v907 = vld [vmem:[%s2 + $0x1f0] sm:$0xf]
    %v908 = vld [vmem:[%s2 + $0x1f4] sm:$0xf]
    %v909 = vld [vmem:[%s2 + $0x1f8] sm:$0xf]
    %v910 = vld [vmem:[%s2 + $0x1fc] sm:$0xf]
    %v911 = vld [vmem:[%s2 + $0x200] sm:$0xf]
    %v912 = vld [vmem:[%s2 + $0x204] sm:$0xf]
    %v913 = vld [vmem:[%s2 + $0x208] sm:$0xf]
    %v914 = vld [vmem:[%s2 + $0x20c] sm:$0xf]
    %v915 = vld [vmem:[%s2 + $0x210] sm:$0xf]
    %v916 = vld [vmem:[%s2 + $0x214] sm:$0xf]
    %v917 = vld [vmem:[%s2 + $0x218] sm:$0xf]
    %v918 = vld [vmem:[%s2 + $0x21c] sm:$0xf]
    %v919 = vld [vmem:[%s2 + $0x220] sm:$0xf]
    %v920 = vld [vmem:[%s2 + $0x224] sm:$0xf]
    %v921 = vld [vmem:[%s2 + $0x228] sm:$0xf]
    %v922 = vld [vmem:[%s2 + $0x22c] sm:$0xf]
    %v923 = vld [vmem:[%s2 + $0x230] sm:$0xf]
    %v924 = vld [vmem:[%s2 + $0x234] sm:$0xf]
    %v925 = vld [vmem:[%s2 + $0x238] sm:$0xf]
    %v926 = vld [vmem:[%s2 + $0x23c] sm:$0xf]
    %v927 = vld [vmem:[%s2 + $0x240] sm:$0xf]
    %v928 = vld [vmem:[%s2 + $0x244] sm:$0xf]
    %v929 = vld [vmem:[%s2 + $0x248] sm:$0xf]
    %v930 = vld [vmem:[%s2 + $0x24c] sm:$0xf]
    %v931 = vld [vmem:[%s2 + $0x250] sm:$0xf]
    %v932 = vld [vmem:[%s2 + $0x254] sm:$0xf]
    %v933 = vld [vmem:[%s2 + $0x258] sm:$0xf]
    %v934 = vld [vmem:[%s2 + $0x25c] sm:$0xf]
    %v935 = vld [vmem:[%s2 + $0x260] sm:$0xf]
    %v936 = vld [vmem:[%s2 + $0x264] sm:$0xf]
    %v937 = vld [vmem:[%s2 + $0x268] sm:$0xf]
    %v938 = vld [vmem:[%s2 + $0x26c] sm:$0xf]
    %v939 = vld [vmem:[%s2 + $0x270] sm:$0xf]
    %v940 = vld [vmem:[%s2 + $0x274] sm:$0xf]
    %v941 = vld [vmem:[%s2 + $0x278] sm:$0xf]
    %v942 = vld [vmem:[%s2 + $0x27c] sm:$0xf]
    %v943 = vld [vmem:[%s2 + $0x280] sm:$0xf]
    %v944 = vld [vmem:[%s2 + $0x284] sm:$0xf]
    %v945 = vld [vmem:[%s2 + $0x288] sm:$0xf]
    %v946 = vld [vmem:[%s2 + $0x28c] sm:$0xf]
    %v947 = vld [vmem:[%s2 + $0x290] sm:$0xf]
    %v948 = vld [vmem:[%s2 + $0x294] sm:$0xf]
    %v949 = vld [vmem:[%s2 + $0x298] sm:$0xf]
    %v950 = vld [vmem:[%s2 + $0x29c] sm:$0xf]
    %v951 = vld [vmem:[%s2 + $0x2a0] sm:$0xf]
    %v952 = vld [vmem:[%s2 + $0x2a4] sm:$0xf]
    %v953 = vld [vmem:[%s2 + $0x2a8] sm:$0xf]
    %v954 = vld [vmem:[%s2 + $0x2ac] sm:$0xf]
    %v955 = vld [vmem:[%s2 + $0x2b0] sm:$0xf]
    %v956 = vld [vmem:[%s2 + $0x2b4] sm:$0xf]
    %v957 = vld [vmem:[%s2 + $0x2b8] sm:$0xf]
    %v958 = vld [vmem:[%s2 + $0x2bc] sm:$0xf]
    %v959 = vld [vmem:[%s2 + $0x2c0] sm:$0xf]
    %v960 = vld [vmem:[%s2 + $0x2c4] sm:$0xf]
    %v961 = vld [vmem:[%s2 + $0x2c8] sm:$0xf]
    %v962 = vld [vmem:[%s2 + $0x2cc] sm:$0xf]
    %v963 = vld [vmem:[%s2 + $0x2d0] sm:$0xf]
    %v964 = vld [vmem:[%s2 + $0x2d4] sm:$0xf]
    %v965 = vld [vmem:[%s2 + $0x2d8] sm:$0xf]
    %v966 = vld [vmem:[%s2 + $0x2dc] sm:$0xf]
    %v967 = vld [vmem:[%s2 + $0x2e0] sm:$0xf]
    %v968 = vld [vmem:[%s2 + $0x2e4] sm:$0xf]
    %v969 = vld [vmem:[%s2 + $0x2e8] sm:$0xf]
    %v970 = vld [vmem:[%s2 + $0x2ec] sm:$0xf]
    %v971 = vld [vmem:[%s2 + $0x2f0] sm:$0xf]
    %v972 = vld [vmem:[%s2 + $0x2f4] sm:$0xf]
    %v973 = vld [vmem:[%s2 + $0x2f8] sm:$0xf]
    %v974 = vld [vmem:[%s2 + $0x2fc] sm:$0xf]
    %v975 = vld [vmem:[%s2 + $0x300] sm:$0xf]
    %v976 = vld [vmem:[%s2 + $0x304] sm:$0xf]
    %v977 = vld [vmem:[%s2 + $0x308] sm:$0xf]
    %v978 = vld [vmem:[%s2 + $0x30c] sm:$0xf]
    %v979 = vld [vmem:[%s2 + $0x310] sm:$0xf]
    %v980 = vld [vmem:[%s2 + $0x314] sm:$0xf]
    %v981 = vld [vmem:[%s2 + $0x318] sm:$0xf]
    %v982 = vld [vmem:[%s2 + $0x31c] sm:$0xf]
    %v983 = vld [vmem:[%s2 + $0x320] sm:$0xf]
    %v984 = vld [vmem:[%s2 + $0x324] sm:$0xf]
    %v985 = vld [vmem:[%s2 + $0x328] sm:$0xf]
    %v986 = vld [vmem:[%s2 + $0x32c] sm:$0xf]
    %v987 = vld [vmem:[%s2 + $0x330] sm:$0xf]
    %v988 = vld [vmem:[%s2 + $0x334] sm:$0xf]
    %v989 = vld [vmem:[%s2 + $0x338] sm:$0xf]
    %v990 = vld [vmem:[%s2 + $0x33c] sm:$0xf]
    %v991 = vld [vmem:[%s2 + $0x340] sm:$0xf]
    %v992 = vld [vmem:[%s2 + $0x344] sm:$0xf]
    %v993 = vld [vmem:[%s2 + $0x348] sm:$0xf]
    %v994 = vld [vmem:[%s2 + $0x34c] sm:$0xf]
    %v995 = vld [vmem:[%s2 + $0x350] sm:$0xf]
    %v996 = vld [vmem:[%s2 + $0x354] sm:$0xf]
    %v997 = vld [vmem:[%s2 + $0x358] sm:$0xf]
    %v998 = vld [vmem:[%s2 + $0x35c] sm:$0xf]
    %v999 = vld [vmem:[%s2 + $0x360] sm:$0xf]
    %v1000 = vld [vmem:[%s2 + $0x364] sm:$0xf]
    %v1001 = vld [vmem:[%s2 + $0x368] sm:$0xf]
    %v1002 = vld [vmem:[%s2 + $0x36c] sm:$0xf]
    %v1003 = vld [vmem:[%s2 + $0x370] sm:$0xf]
    %v1004 = vld [vmem:[%s2 + $0x374] sm:$0xf]
    %v1005 = vld [vmem:[%s2 + $0x378] sm:$0xf]
    %v1006 = vld [vmem:[%s2 + $0x37c] sm:$0xf]
    %v1007 = vld [vmem:[%s2 + $0x380] sm:$0xf]
    %v1008 = vld [vmem:[%s2 + $0x384] sm:$0xf]
    %v1009 = vld [vmem:[%s2 + $0x388] sm:$0xf]
    %v1010 = vld [vmem:[%s2 + $0x38c] sm:$0xf]
    %v1011 = vld [vmem:[%s2 + $0x390] sm:$0xf]
    %v1012 = vld [vmem:[%s2 + $0x394] sm:$0xf]
    %v1013 = vld [vmem:[%s2 + $0x398] sm:$0xf]
    %v1014 = vld [vmem:[%s2 + $0x39c] sm:$0xf]
    %v1015 = vld [vmem:[%s2 + $0x3a0] sm:$0xf]
    %v1016 = vld [vmem:[%s2 + $0x3a4] sm:$0xf]
    %v1017 = vld [vmem:[%s2 + $0x3a8] sm:$0xf]
    %v1018 = vld [vmem:[%s2 + $0x3ac] sm:$0xf]
    %v1019 = vld [vmem:[%s2 + $0x3b0] sm:$0xf]
    %v1020 = vld [vmem:[%s2 + $0x3b4] sm:$0xf]
    %v1021 = vld [vmem:[%s2 + $0x3b8] sm:$0xf]
    %v1022 = vld [vmem:[%s2 + $0x3bc] sm:$0xf]
    %v1023 = vld [vmem:[%s2 + $0x3c0] sm:$0xf]
    %v1024 = vld [vmem:[%s2 + $0x3c4] sm:$0xf]
    %v1025 = vld [vmem:[%s2 + $0x3c8] sm:$0xf]
    %v1026 = vld [vmem:[%s2 + $0x3cc] sm:$0xf]
    %v1027 = vld [vmem:[%s2 + $0x3d0] sm:$0xf]
    %v1028 = vld [vmem:[%s2 + $0x3d4] sm:$0xf]
    %v1029 = vld [vmem:[%s2 + $0x3d8] sm:$0xf]
    %v1030 = vld [vmem:[%s2 + $0x3dc] sm:$0xf]
    %v1031 = vld [vmem:[%s2 + $0x3e0] sm:$0xf]
    %v1032 = vld [vmem:[%s2 + $0x3e4] sm:$0xf]
    %v1033 = vld [vmem:[%s2 + $0x3e8] sm:$0xf]
    %v1034 = vld [vmem:[%s2 + $0x3ec] sm:$0xf]
    %v1035 = vld [vmem:[%s2 + $0x3f0] sm:$0xf]
    %v1036 = vld [vmem:[%s2 + $0x3f4] sm:$0xf]
    %v1037 = vld [vmem:[%s2 + $0x3f8] sm:$0xf]
    %v1038 = vld [vmem:[%s2 + $0x3fc] sm:$0xf]
    %v1039 = vld [vmem:[%s2 + $0x400] sm:$0xf]
    %v1040 = vld [vmem:[%s2 + $0x404] sm:$0xf]
    %v1041 = vld [vmem:[%s2 + $0x408] sm:$0xf]
    %v1042 = vld [vmem:[%s2 + $0x40c] sm:$0xf]
    %v1043 = vld [vmem:[%s2 + $0x410] sm:$0xf]
    %v1044 = vld [vmem:[%s2 + $0x414] sm:$0xf]
    %v1045 = vld [vmem:[%s2 + $0x418] sm:$0xf]
    %v1046 = vld [vmem:[%s2 + $0x41c] sm:$0xf]
    %v1047 = vld [vmem:[%s2 + $0x420] sm:$0xf]
    %v1048 = vld [vmem:[%s2 + $0x424] sm:$0xf]
    %v1049 = vld [vmem:[%s2 + $0x428] sm:$0xf]
    %v1050 = vld [vmem:[%s2 + $0x42c] sm:$0xf]
    %v1051 = vld [vmem:[%s2 + $0x430] sm:$0xf]
    %v1052 = vld [vmem:[%s2 + $0x434] sm:$0xf]
    %v1053 = vld [vmem:[%s2 + $0x438] sm:$0xf]
    %v1054 = vld [vmem:[%s2 + $0x43c] sm:$0xf]
    %v1055 = vld [vmem:[%s2 + $0x440] sm:$0xf]
    %v1056 = vld [vmem:[%s2 + $0x444] sm:$0xf]
    %v1057 = vld [vmem:[%s2 + $0x448] sm:$0xf]
    %v1058 = vld [vmem:[%s2 + $0x44c] sm:$0xf]
    %v1059 = vld [vmem:[%s2 + $0x450] sm:$0xf]
    %v1060 = vld [vmem:[%s2 + $0x454] sm:$0xf]
    %v1061 = vld [vmem:[%s2 + $0x458] sm:$0xf]
    %v1062 = vld [vmem:[%s2 + $0x45c] sm:$0xf]
    %v1063 = vld [vmem:[%s2 + $0x460] sm:$0xf]
    %v1064 = vld [vmem:[%s2 + $0x464] sm:$0xf]
    %v1065 = vld [vmem:[%s2 + $0x468] sm:$0xf]
    %v1066 = vld [vmem:[%s2 + $0x46c] sm:$0xf]
    %v1067 = vld [vmem:[%s2 + $0x470] sm:$0xf]
    %v1068 = vld [vmem:[%s2 + $0x474] sm:$0xf]
    %v1069 = vld [vmem:[%s2 + $0x478] sm:$0xf]
    %v1070 = vld [vmem:[%s2 + $0x47c] sm:$0xf]
    %v1071 = vld [vmem:[%s2 + $0x480] sm:$0xf]
    %v1072 = vld [vmem:[%s2 + $0x484] sm:$0xf]
    %v1073 = vld [vmem:[%s2 + $0x488] sm:$0xf]
    %v1074 = vld [vmem:[%s2 + $0x48c] sm:$0xf]
    %v1075 = vld [vmem:[%s2 + $0x490] sm:$0xf]
    %v1076 = vld [vmem:[%s2 + $0x494] sm:$0xf]
    %v1077 = vld [vmem:[%s2 + $0x498] sm:$0xf]
    %v1078 = vld [vmem:[%s2 + $0x49c] sm:$0xf]
    %v1079 = vld [vmem:[%s2 + $0x4a0] sm:$0xf]
    %v1080 = vld [vmem:[%s2 + $0x4a4] sm:$0xf]
    %v1081 = vld [vmem:[%s2 + $0x4a8] sm:$0xf]
    %v1082 = vld [vmem:[%s2 + $0x4ac] sm:$0xf]
    %v1083 = vld [vmem:[%s2 + $0x4b0] sm:$0xf]
    %v1084 = vld [vmem:[%s2 + $0x4b4] sm:$0xf]
    %v1085 = vld [vmem:[%s2 + $0x4b8] sm:$0xf]
    %v1086 = vld [vmem:[%s2 + $0x4bc] sm:$0xf]
    %v1087 = vld [vmem:[%s2 + $0x4c0] sm:$0xf]
    %v1088 = vld [vmem:[%s2 + $0x4c4] sm:$0xf]
    %v1089 = vld [vmem:[%s2 + $0x4c8] sm:$0xf]
    %v1090 = vld [vmem:[%s2 + $0x4cc] sm:$0xf]
    %v1091 = vld [vmem:[%s2 + $0x4d0] sm:$0xf]
    %v1092 = vld [vmem:[%s2 + $0x4d4] sm:$0xf]
    %v1093 = vld [vmem:[%s2 + $0x4d8] sm:$0xf]
    %v1094 = vld [vmem:[%s2 + $0x4dc] sm:$0xf]
    %v1095 = vld [vmem:[%s2 + $0x4e0] sm:$0xf]
    %v1096 = vld [vmem:[%s2 + $0x4e4] sm:$0xf]
    %v1097 = vld [vmem:[%s2 + $0x4e8] sm:$0xf]
    %v1098 = vld [vmem:[%s2 + $0x4ec] sm:$0xf]
    %v1099 = vld [vmem:[%s2 + $0x4f0] sm:$0xf]
    %v1100 = vld [vmem:[%s2 + $0x4f4] sm:$0xf]
    %v1101 = vld [vmem:[%s2 + $0x4f8] sm:$0xf]
    %v1102 = vld [vmem:[%s2 + $0x4fc] sm:$0xf]
    %v1103 = vld [vmem:[%s2 + $0x500] sm:$0xf]
    %v1104 = vld [vmem:[%s2 + $0x504] sm:$0xf]
    %v1105 = vld [vmem:[%s2 + $0x508] sm:$0xf]
    %v1106 = vld [vmem:[%s2 + $0x50c] sm:$0xf]
    %v1107 = vld [vmem:[%s2 + $0x510] sm:$0xf]
    %v1108 = vld [vmem:[%s2 + $0x514] sm:$0xf]
    %v1109 = vld [vmem:[%s2 + $0x518] sm:$0xf]
    %v1110 = vld [vmem:[%s2 + $0x51c] sm:$0xf]
    %v1111 = vld [vmem:[%s2 + $0x520] sm:$0xf]
    %v1112 = vld [vmem:[%s2 + $0x524] sm:$0xf]
    %v1113 = vld [vmem:[%s2 + $0x528] sm:$0xf]
    %v1114 = vld [vmem:[%s2 + $0x52c] sm:$0xf]
    %v1115 = vld [vmem:[%s2 + $0x530] sm:$0xf]
    %v1116 = vld [vmem:[%s2 + $0x534] sm:$0xf]
    %v1117 = vld [vmem:[%s2 + $0x538] sm:$0xf]
    %v1118 = vld [vmem:[%s2 + $0x53c] sm:$0xf]
    %v1119 = vld [vmem:[%s2 + $0x540] sm:$0xf]
    %v1120 = vld [vmem:[%s2 + $0x544] sm:$0xf]
    %v1121 = vld [vmem:[%s2 + $0x548] sm:$0xf]
    %v1122 = vld [vmem:[%s2 + $0x54c] sm:$0xf]
    %v1123 = vld [vmem:[%s2 + $0x550] sm:$0xf]
    %v1124 = vld [vmem:[%s2 + $0x554] sm:$0xf]
    %v1125 = vld [vmem:[%s2 + $0x558] sm:$0xf]
    %v1126 = vld [vmem:[%s2 + $0x55c] sm:$0xf]
    %v1127 = vld [vmem:[%s2 + $0x560] sm:$0xf]
    %v1128 = vld [vmem:[%s2 + $0x564] sm:$0xf]
    %v1129 = vld [vmem:[%s2 + $0x568] sm:$0xf]
    %v1130 = vld [vmem:[%s2 + $0x56c] sm:$0xf]
    %v1131 = vld [vmem:[%s2 + $0x570] sm:$0xf]
    %v1132 = vld [vmem:[%s2 + $0x574] sm:$0xf]
    %v1133 = vld [vmem:[%s2 + $0x578] sm:$0xf]
    %v1134 = vld [vmem:[%s2 + $0x57c] sm:$0xf]
    %v1135 = vld [vmem:[%s2 + $0x580] sm:$0xf]
    %v1136 = vld [vmem:[%s2 + $0x584] sm:$0xf]
    %v1137 = vld [vmem:[%s2 + $0x588] sm:$0xf]
    %v1138 = vld [vmem:[%s2 + $0x58c] sm:$0xf]
    %v1139 = vld [vmem:[%s2 + $0x590] sm:$0xf]
    %v1140 = vld [vmem:[%s2 + $0x594] sm:$0xf]
    %v1141 = vld [vmem:[%s2 + $0x598] sm:$0xf]
    %v1142 = vld [vmem:[%s2 + $0x59c] sm:$0xf]
    %v1143 = vld [vmem:[%s2 + $0x5a0] sm:$0xf]
    %v1144 = vld [vmem:[%s2 + $0x5a4] sm:$0xf]
    %v1145 = vld [vmem:[%s2 + $0x5a8] sm:$0xf]
    %v1146 = vld [vmem:[%s2 + $0x5ac] sm:$0xf]
    %v1147 = vld [vmem:[%s2 + $0x5b0] sm:$0xf]
    %v1148 = vld [vmem:[%s2 + $0x5b4] sm:$0xf]
    %v1149 = vld [vmem:[%s2 + $0x5b8] sm:$0xf]
    %v1150 = vld [vmem:[%s2 + $0x5bc] sm:$0xf]
    %v1151 = vld [vmem:[%s2 + $0x5c0] sm:$0xf]
    %v1152 = vld [vmem:[%s2 + $0x5c4] sm:$0xf]
    %v1153 = vld [vmem:[%s2 + $0x5c8] sm:$0xf]
    %v1154 = vld [vmem:[%s2 + $0x5cc] sm:$0xf]
    %v1155 = vld [vmem:[%s2 + $0x5d0] sm:$0xf]
    %v1156 = vld [vmem:[%s2 + $0x5d4] sm:$0xf]
    %v1157 = vld [vmem:[%s2 + $0x5d8] sm:$0xf]
    %v1158 = vld [vmem:[%s2 + $0x5dc] sm:$0xf]
    %v1159 = vld [vmem:[%s2 + $0x5e0] sm:$0xf]
    %v1160 = vld [vmem:[%s2 + $0x5e4] sm:$0xf]
    %v1161 = vld [vmem:[%s2 + $0x5e8] sm:$0xf]
    %v1162 = vld [vmem:[%s2 + $0x5ec] sm:$0xf]
    %v1163 = vld [vmem:[%s2 + $0x5f0] sm:$0xf]
    %v1164 = vld [vmem:[%s2 + $0x5f4] sm:$0xf]
    %v1165 = vld [vmem:[%s2 + $0x5f8] sm:$0xf]
    %v1166 = vld [vmem:[%s2 + $0x5fc] sm:$0xf]
    %v1167 = vld [vmem:[%s2 + $0x600] sm:$0xf]
    %v1168 = vld [vmem:[%s2 + $0x604] sm:$0xf]
    %v1169 = vld [vmem:[%s2 + $0x608] sm:$0xf]
    %v1170 = vld [vmem:[%s2 + $0x60c] sm:$0xf]
    %v1171 = vld [vmem:[%s2 + $0x610] sm:$0xf]
    %v1172 = vld [vmem:[%s2 + $0x614] sm:$0xf]
    %v1173 = vld [vmem:[%s2 + $0x618] sm:$0xf]
    %v1174 = vld [vmem:[%s2 + $0x61c] sm:$0xf]
    %v1175 = vld [vmem:[%s2 + $0x620] sm:$0xf]
    %v1176 = vld [vmem:[%s2 + $0x624] sm:$0xf]
    %v1177 = vld [vmem:[%s2 + $0x628] sm:$0xf]
    %v1178 = vld [vmem:[%s2 + $0x62c] sm:$0xf]
    %v1179 = vld [vmem:[%s2 + $0x630] sm:$0xf]
    %v1180 = vld [vmem:[%s2 + $0x634] sm:$0xf]
    %v1181 = vld [vmem:[%s2 + $0x638] sm:$0xf]
    %v1182 = vld [vmem:[%s2 + $0x63c] sm:$0xf]
    %v1183 = vld [vmem:[%s2 + $0x640] sm:$0xf]
    %v1184 = vld [vmem:[%s2 + $0x644] sm:$0xf]
    %v1185 = vld [vmem:[%s2 + $0x648] sm:$0xf]
    %v1186 = vld [vmem:[%s2 + $0x64c] sm:$0xf]
    %v1187 = vld [vmem:[%s2 + $0x650] sm:$0xf]
    %v1188 = vld [vmem:[%s2 + $0x654] sm:$0xf]
    %v1189 = vld [vmem:[%s2 + $0x658] sm:$0xf]
    %v1190 = vld [vmem:[%s2 + $0x65c] sm:$0xf]
    %v1191 = vld [vmem:[%s2 + $0x660] sm:$0xf]
    %v1192 = vld [vmem:[%s2 + $0x664] sm:$0xf]
    %v1193 = vld [vmem:[%s2 + $0x668] sm:$0xf]
    %v1194 = vld [vmem:[%s2 + $0x66c] sm:$0xf]
    %v1195 = vld [vmem:[%s2 + $0x670] sm:$0xf]
    %v1196 = vld [vmem:[%s2 + $0x674] sm:$0xf]
    %v1197 = vld [vmem:[%s2 + $0x678] sm:$0xf]
    %v1198 = vld [vmem:[%s2 + $0x67c] sm:$0xf]
    %v1199 = vld [vmem:[%s2 + $0x680] sm:$0xf]
    %v1200 = vld [vmem:[%s2 + $0x684] sm:$0xf]
    %v1201 = vld [vmem:[%s2 + $0x688] sm:$0xf]
    %v1202 = vld [vmem:[%s2 + $0x68c] sm:$0xf]
    %v1203 = vld [vmem:[%s2 + $0x690] sm:$0xf]
    %v1204 = vld [vmem:[%s2 + $0x694] sm:$0xf]
    %v1205 = vld [vmem:[%s2 + $0x698] sm:$0xf]
    %v1206 = vld [vmem:[%s2 + $0x69c] sm:$0xf]
    %v1207 = vld [vmem:[%s2 + $0x6a0] sm:$0xf]
    %v1208 = vld [vmem:[%s2 + $0x6a4] sm:$0xf]
    %v1209 = vld [vmem:[%s2 + $0x6a8] sm:$0xf]
    %v1210 = vld [vmem:[%s2 + $0x6ac] sm:$0xf]
    %v1211 = vld [vmem:[%s2 + $0x6b0] sm:$0xf]
    %v1212 = vld [vmem:[%s2 + $0x6b4] sm:$0xf]
    %v1213 = vld [vmem:[%s2 + $0x6b8] sm:$0xf]
    %v1214 = vld [vmem:[%s2 + $0x6bc] sm:$0xf]
    %v1215 = vld [vmem:[%s2 + $0x6c0] sm:$0xf]
    %v1216 = vld [vmem:[%s2 + $0x6c4] sm:$0xf]
    %v1217 = vld [vmem:[%s2 + $0x6c8] sm:$0xf]
    %v1218 = vld [vmem:[%s2 + $0x6cc] sm:$0xf]
    %v1219 = vld [vmem:[%s2 + $0x6d0] sm:$0xf]
    %v1220 = vld [vmem:[%s2 + $0x6d4] sm:$0xf]
    %v1221 = vld [vmem:[%s2 + $0x6d8] sm:$0xf]
    %v1222 = vld [vmem:[%s2 + $0x6dc] sm:$0xf]
    %v1223 = vld [vmem:[%s2 + $0x6e0] sm:$0xf]
    %v1224 = vld [vmem:[%s2 + $0x6e4] sm:$0xf]
    %v1225 = vld [vmem:[%s2 + $0x6e8] sm:$0xf]
    %v1226 = vld [vmem:[%s2 + $0x6ec] sm:$0xf]
    %v1227 = vld [vmem:[%s2 + $0x6f0] sm:$0xf]
    %v1228 = vld [vmem:[%s2 + $0x6f4] sm:$0xf]
    %v1229 = vld [vmem:[%s2 + $0x6f8] sm:$0xf]
    %v1230 = vld [vmem:[%s2 + $0x6fc] sm:$0xf]
    %v1231 = vld [vmem:[%s2 + $0x700] sm:$0xf]
    %v1232 = vld [vmem:[%s2 + $0x704] sm:$0xf]
    %v1233 = vld [vmem:[%s2 + $0x708] sm:$0xf]
    %v1234 = vld [vmem:[%s2 + $0x70c] sm:$0xf]
    %v1235 = vld [vmem:[%s2 + $0x710] sm:$0xf]
    %v1236 = vld [vmem:[%s2 + $0x714] sm:$0xf]
    %v1237 = vld [vmem:[%s2 + $0x718] sm:$0xf]
    %v1238 = vld [vmem:[%s2 + $0x71c] sm:$0xf]
    %v1239 = vld [vmem:[%s2 + $0x720] sm:$0xf]
    %v1240 = vld [vmem:[%s2 + $0x724] sm:$0xf]
    %v1241 = vld [vmem:[%s2 + $0x728] sm:$0xf]
    %v1242 = vld [vmem:[%s2 + $0x72c] sm:$0xf]
    %v1243 = vld [vmem:[%s2 + $0x730] sm:$0xf]
    %v1244 = vld [vmem:[%s2 + $0x734] sm:$0xf]
    %v1245 = vld [vmem:[%s2 + $0x738] sm:$0xf]
    %v1246 = vld [vmem:[%s2 + $0x73c] sm:$0xf]
    %v1247 = vld [vmem:[%s2 + $0x740] sm:$0xf]
    %v1248 = vld [vmem:[%s2 + $0x744] sm:$0xf]
    %v1249 = vld [vmem:[%s2 + $0x748] sm:$0xf]
    %v1250 = vld [vmem:[%s2 + $0x74c] sm:$0xf]
    %v1251 = vld [vmem:[%s2 + $0x750] sm:$0xf]
    %v1252 = vld [vmem:[%s2 + $0x754] sm:$0xf]
    %v1253 = vld [vmem:[%s2 + $0x758] sm:$0xf]
    %v1254 = vld [vmem:[%s2 + $0x75c] sm:$0xf]
    %v1255 = vld [vmem:[%s2 + $0x760] sm:$0xf]
    %v1256 = vld [vmem:[%s2 + $0x764] sm:$0xf]
    %v1257 = vld [vmem:[%s2 + $0x768] sm:$0xf]
    %v1258 = vld [vmem:[%s2 + $0x76c] sm:$0xf]
    %v1259 = vld [vmem:[%s2 + $0x770] sm:$0xf]
    %v1260 = vld [vmem:[%s2 + $0x774] sm:$0xf]
    %v1261 = vld [vmem:[%s2 + $0x778] sm:$0xf]
    %v1262 = vld [vmem:[%s2 + $0x77c] sm:$0xf]
    %v1263 = vld [vmem:[%s2 + $0x780] sm:$0xf]
    %v1264 = vld [vmem:[%s2 + $0x784] sm:$0xf]
    %v1265 = vld [vmem:[%s2 + $0x788] sm:$0xf]
    %v1266 = vld [vmem:[%s2 + $0x78c] sm:$0xf]
    %v1267 = vld [vmem:[%s2 + $0x790] sm:$0xf]
    %v1268 = vld [vmem:[%s2 + $0x794] sm:$0xf]
    %v1269 = vld [vmem:[%s2 + $0x798] sm:$0xf]
    %v1270 = vld [vmem:[%s2 + $0x79c] sm:$0xf]
    %v1271 = vld [vmem:[%s2 + $0x7a0] sm:$0xf]
    %v1272 = vld [vmem:[%s2 + $0x7a4] sm:$0xf]
    %v1273 = vld [vmem:[%s2 + $0x7a8] sm:$0xf]
    %v1274 = vld [vmem:[%s2 + $0x7ac] sm:$0xf]
    %v1275 = vld [vmem:[%s2 + $0x7b0] sm:$0xf]
    %v1276 = vld [vmem:[%s2 + $0x7b4] sm:$0xf]
    %v1277 = vld [vmem:[%s2 + $0x7b8] sm:$0xf]
    %v1278 = vld [vmem:[%s2 + $0x7bc] sm:$0xf]
    %v1279 = vld [vmem:[%s2 + $0x7c0] sm:$0xf]
    %v1280 = vld [vmem:[%s2 + $0x7c4] sm:$0xf]
    %v1281 = vld [vmem:[%s2 + $0x7c8] sm:$0xf]
    %v1282 = vld [vmem:[%s2 + $0x7cc] sm:$0xf]
    %v1283 = vld [vmem:[%s2 + $0x7d0] sm:$0xf]
    %v1284 = vld [vmem:[%s2 + $0x7d4] sm:$0xf]
    %v1285 = vld [vmem:[%s2 + $0x7d8] sm:$0xf]
    %v1286 = vld [vmem:[%s2 + $0x7dc] sm:$0xf]
    %v1287 = vld [vmem:[%s2 + $0x7e0] sm:$0xf]
    %v1288 = vld [vmem:[%s2 + $0x7e4] sm:$0xf]
    %v1289 = vld [vmem:[%s2 + $0x7e8] sm:$0xf]
    %v1290 = vld [vmem:[%s2 + $0x7ec] sm:$0xf]
    %v1291 = vld [vmem:[%s2 + $0x7f0] sm:$0xf]
    %v1292 = vld [vmem:[%s2 + $0x7f4] sm:$0xf]
    %v1293 = vld [vmem:[%s2 + $0x7f8] sm:$0xf]
    %v1294 = vld [vmem:[%s2 + $0x7fc] sm:$0xf]
    %v1303 = vcombine.high %v567, %v567
    %v1305 = vunpack.c.l.s4 1983009808
    %v1306 = vunpack.c.0.s8 %v1305
    %v1307 = vlaneseq
    %v1308 = vshrl.u32 %v1307, 7
    %v1309 = vsub.s32 %v1306, %v1308
    %v1310 = vrot.slane %v567, %v1309
    %v1312 = vunpack.c.l.s4 1983009808
    %v1313 = vunpack.c.0.s8 %v1312
    %v1314 = vlaneseq
    %v1315 = vshrl.u32 %v1314, 7
    %v1316 = vsub.s32 %v1313, %v1315
    %v1317 = vrot.slane %v1303, %v1316
    %v1318 = vcombine.high %v1310, %v1310
    %v1319 = vcombine.high %v1317, %v1317
    %v1320 = vcombine.high %v568, %v568
    %v1322 = vunpack.c.l.s4 1983009808
    %v1323 = vunpack.c.0.s8 %v1322
    %v1324 = vlaneseq
    %v1325 = vshrl.u32 %v1324, 7
    %v1326 = vsub.s32 %v1323, %v1325
    %v1327 = vrot.slane %v568, %v1326
    %v1329 = vunpack.c.l.s4 1983009808
    %v1330 = vunpack.c.0.s8 %v1329
    %v1331 = vlaneseq
    %v1332 = vshrl.u32 %v1331, 7
    %v1333 = vsub.s32 %v1330, %v1332
    %v1334 = vrot.slane %v1320, %v1333
    %v1335 = vcombine.high %v1327, %v1327
    %v1336 = vcombine.high %v1334, %v1334
    %v1337 = vcombine.high %v569, %v569
    %v1339 = vunpack.c.l.s4 1983009808
    %v1340 = vunpack.c.0.s8 %v1339
    %v1341 = vlaneseq
    %v1342 = vshrl.u32 %v1341, 7
    %v1343 = vsub.s32 %v1340, %v1342
    %v1344 = vrot.slane %v569, %v1343
    %v1346 = vunpack.c.l.s4 1983009808
    %v1347 = vunpack.c.0.s8 %v1346
    %v1348 = vlaneseq
    %v1349 = vshrl.u32 %v1348, 7
    %v1350 = vsub.s32 %v1347, %v1349
    %v1351 = vrot.slane %v1337, %v1350
    %v1352 = vcombine.high %v1344, %v1344
    %v1353 = vcombine.high %v1351, %v1351
    %v1354 = vcombine.high %v570, %v570
    %v1356 = vunpack.c.l.s4 1983009808
    %v1357 = vunpack.c.0.s8 %v1356
    %v1358 = vlaneseq
    %v1359 = vshrl.u32 %v1358, 7
    %v1360 = vsub.s32 %v1357, %v1359
    %v1361 = vrot.slane %v570, %v1360
    %v1363 = vunpack.c.l.s4 1983009808
    %v1364 = vunpack.c.0.s8 %v1363
    %v1365 = vlaneseq
    %v1366 = vshrl.u32 %v1365, 7
    %v1367 = vsub.s32 %v1364, %v1366
    %v1368 = vrot.slane %v1354, %v1367
    %v1369 = vcombine.high %v1361, %v1361
    %v1370 = vcombine.high %v1368, %v1368
    %v1371 = vcombine.high %v571, %v571
    %v1373 = vunpack.c.l.s4 1983009808
    %v1374 = vunpack.c.0.s8 %v1373
    %v1375 = vlaneseq
    %v1376 = vshrl.u32 %v1375, 7
    %v1377 = vsub.s32 %v1374, %v1376
    %v1378 = vrot.slane %v571, %v1377
    %v1380 = vunpack.c.l.s4 1983009808
    %v1381 = vunpack.c.0.s8 %v1380
    %v1382 = vlaneseq
    %v1383 = vshrl.u32 %v1382, 7
    %v1384 = vsub.s32 %v1381, %v1383
    %v1385 = vrot.slane %v1371, %v1384
    %v1386 = vcombine.high %v1378, %v1378
    %v1387 = vcombine.high %v1385, %v1385
    %v1388 = vcombine.high %v572, %v572
    %v1390 = vunpack.c.l.s4 1983009808
    %v1391 = vunpack.c.0.s8 %v1390
    %v1392 = vlaneseq
    %v1393 = vshrl.u32 %v1392, 7
    %v1394 = vsub.s32 %v1391, %v1393
    %v1395 = vrot.slane %v572, %v1394
    %v1397 = vunpack.c.l.s4 1983009808
    %v1398 = vunpack.c.0.s8 %v1397
    %v1399 = vlaneseq
    %v1400 = vshrl.u32 %v1399, 7
    %v1401 = vsub.s32 %v1398, %v1400
    %v1402 = vrot.slane %v1388, %v1401
    %v1403 = vcombine.high %v1395, %v1395
    %v1404 = vcombine.high %v1402, %v1402
    %v1405 = vcombine.high %v573, %v573
    %v1407 = vunpack.c.l.s4 1983009808
    %v1408 = vunpack.c.0.s8 %v1407
    %v1409 = vlaneseq
    %v1410 = vshrl.u32 %v1409, 7
    %v1411 = vsub.s32 %v1408, %v1410
    %v1412 = vrot.slane %v573, %v1411
    %v1414 = vunpack.c.l.s4 1983009808
    %v1415 = vunpack.c.0.s8 %v1414
    %v1416 = vlaneseq
    %v1417 = vshrl.u32 %v1416, 7
    %v1418 = vsub.s32 %v1415, %v1417
    %v1419 = vrot.slane %v1405, %v1418
    %v1420 = vcombine.high %v1412, %v1412
    %v1421 = vcombine.high %v1419, %v1419
    %v1422 = vcombine.high %v574, %v574
    %v1424 = vunpack.c.l.s4 1983009808
    %v1425 = vunpack.c.0.s8 %v1424
    %v1426 = vlaneseq
    %v1427 = vshrl.u32 %v1426, 7
    %v1428 = vsub.s32 %v1425, %v1427
    %v1429 = vrot.slane %v574, %v1428
    %v1431 = vunpack.c.l.s4 1983009808
    %v1432 = vunpack.c.0.s8 %v1431
    %v1433 = vlaneseq
    %v1434 = vshrl.u32 %v1433, 7
    %v1435 = vsub.s32 %v1432, %v1434
    %v1436 = vrot.slane %v1422, %v1435
    %v1437 = vcombine.high %v1429, %v1429
    %v1438 = vcombine.high %v1436, %v1436
    %v1471 = vpack.c.bf16 %v1310, %v1310
    %v1472 = vpack.c.bf16 %v1318, %v1318
    %v1473 = vpack.c.bf16 %v1317, %v1317
    %v1474 = vpack.c.bf16 %v1319, %v1319
    %v1475 = vpack.c.bf16 %v1327, %v1327
    %v1476 = vpack.c.bf16 %v1335, %v1335
    %v1477 = vpack.c.bf16 %v1334, %v1334
    %v1478 = vpack.c.bf16 %v1336, %v1336
    %v1479 = vpack.c.bf16 %v1344, %v1344
    %v1480 = vpack.c.bf16 %v1352, %v1352
    %v1481 = vpack.c.bf16 %v1351, %v1351
    %v1482 = vpack.c.bf16 %v1353, %v1353
    %v1483 = vpack.c.bf16 %v1361, %v1361
    %v1484 = vpack.c.bf16 %v1369, %v1369
    %v1485 = vpack.c.bf16 %v1368, %v1368
    %v1486 = vpack.c.bf16 %v1370, %v1370
    %v1487 = vpack.c.bf16 %v1378, %v1378
    %v1488 = vpack.c.bf16 %v1386, %v1386
    %v1489 = vpack.c.bf16 %v1385, %v1385
    %v1490 = vpack.c.bf16 %v1387, %v1387
    %v1491 = vpack.c.bf16 %v1395, %v1395
    %v1492 = vpack.c.bf16 %v1403, %v1403
    %v1493 = vpack.c.bf16 %v1402, %v1402
    %v1494 = vpack.c.bf16 %v1404, %v1404
    %v1495 = vpack.c.bf16 %v1412, %v1412
    %v1496 = vpack.c.bf16 %v1420, %v1420
    %v1497 = vpack.c.bf16 %v1419, %v1419
    %v1498 = vpack.c.bf16 %v1421, %v1421
    %v1499 = vpack.c.bf16 %v1429, %v1429
    %v1500 = vpack.c.bf16 %v1437, %v1437
    %v1501 = vpack.c.bf16 %v1436, %v1436
    %v1502 = vpack.c.bf16 %v1438, %v1438
    %v1503 = vld [vmem:[%s3] sm:$0xf]
    %v1504 = vld [vmem:[%s3 + $0x4] sm:$0xf]
    %v1505 = vld [vmem:[%s3 + $0x8] sm:$0xf]
    %v1506 = vld [vmem:[%s3 + $0xc] sm:$0xf]
    %v1507 = vld [vmem:[%s3 + $0x10] sm:$0xf]
    %v1508 = vld [vmem:[%s3 + $0x14] sm:$0xf]
    %v1509 = vld [vmem:[%s3 + $0x18] sm:$0xf]
    %v1510 = vld [vmem:[%s3 + $0x1c] sm:$0xf]
    %v1511 = vld [vmem:[%s3 + $0x20] sm:$0xf]
    %v1512 = vld [vmem:[%s3 + $0x24] sm:$0xf]
    %v1513 = vld [vmem:[%s3 + $0x28] sm:$0xf]
    %v1514 = vld [vmem:[%s3 + $0x2c] sm:$0xf]
    %v1515 = vld [vmem:[%s3 + $0x30] sm:$0xf]
    %v1516 = vld [vmem:[%s3 + $0x34] sm:$0xf]
    %v1517 = vld [vmem:[%s3 + $0x38] sm:$0xf]
    %v1518 = vld [vmem:[%s3 + $0x3c] sm:$0xf]
    %v1519 = vld [vmem:[%s3 + $0x40] sm:$0xf]
    %v1520 = vld [vmem:[%s3 + $0x44] sm:$0xf]
    %v1521 = vld [vmem:[%s3 + $0x48] sm:$0xf]
    %v1522 = vld [vmem:[%s3 + $0x4c] sm:$0xf]
    %v1523 = vld [vmem:[%s3 + $0x50] sm:$0xf]
    %v1524 = vld [vmem:[%s3 + $0x54] sm:$0xf]
    %v1525 = vld [vmem:[%s3 + $0x58] sm:$0xf]
    %v1526 = vld [vmem:[%s3 + $0x5c] sm:$0xf]
    %v1527 = vld [vmem:[%s3 + $0x60] sm:$0xf]
    %v1528 = vld [vmem:[%s3 + $0x64] sm:$0xf]
    %v1529 = vld [vmem:[%s3 + $0x68] sm:$0xf]
    %v1530 = vld [vmem:[%s3 + $0x6c] sm:$0xf]
    %v1531 = vld [vmem:[%s3 + $0x70] sm:$0xf]
    %v1532 = vld [vmem:[%s3 + $0x74] sm:$0xf]
    %v1533 = vld [vmem:[%s3 + $0x78] sm:$0xf]
    %v1534 = vld [vmem:[%s3 + $0x7c] sm:$0xf]
    %v1535 = vld [vmem:[%s3 + $0x80] sm:$0xf]
    %v1536 = vld [vmem:[%s3 + $0x84] sm:$0xf]
    %v1537 = vld [vmem:[%s3 + $0x88] sm:$0xf]
    %v1538 = vld [vmem:[%s3 + $0x8c] sm:$0xf]
    %v1539 = vld [vmem:[%s3 + $0x90] sm:$0xf]
    %v1540 = vld [vmem:[%s3 + $0x94] sm:$0xf]
    %v1541 = vld [vmem:[%s3 + $0x98] sm:$0xf]
    %v1542 = vld [vmem:[%s3 + $0x9c] sm:$0xf]
    %v1543 = vld [vmem:[%s3 + $0xa0] sm:$0xf]
    %v1544 = vld [vmem:[%s3 + $0xa4] sm:$0xf]
    %v1545 = vld [vmem:[%s3 + $0xa8] sm:$0xf]
    %v1546 = vld [vmem:[%s3 + $0xac] sm:$0xf]
    %v1547 = vld [vmem:[%s3 + $0xb0] sm:$0xf]
    %v1548 = vld [vmem:[%s3 + $0xb4] sm:$0xf]
    %v1549 = vld [vmem:[%s3 + $0xb8] sm:$0xf]
    %v1550 = vld [vmem:[%s3 + $0xbc] sm:$0xf]
    %v1551 = vld [vmem:[%s3 + $0xc0] sm:$0xf]
    %v1552 = vld [vmem:[%s3 + $0xc4] sm:$0xf]
    %v1553 = vld [vmem:[%s3 + $0xc8] sm:$0xf]
    %v1554 = vld [vmem:[%s3 + $0xcc] sm:$0xf]
    %v1555 = vld [vmem:[%s3 + $0xd0] sm:$0xf]
    %v1556 = vld [vmem:[%s3 + $0xd4] sm:$0xf]
    %v1557 = vld [vmem:[%s3 + $0xd8] sm:$0xf]
    %v1558 = vld [vmem:[%s3 + $0xdc] sm:$0xf]
    %v1559 = vld [vmem:[%s3 + $0xe0] sm:$0xf]
    %v1560 = vld [vmem:[%s3 + $0xe4] sm:$0xf]
    %v1561 = vld [vmem:[%s3 + $0xe8] sm:$0xf]
    %v1562 = vld [vmem:[%s3 + $0xec] sm:$0xf]
    %v1563 = vld [vmem:[%s3 + $0xf0] sm:$0xf]
    %v1564 = vld [vmem:[%s3 + $0xf4] sm:$0xf]
    %v1565 = vld [vmem:[%s3 + $0xf8] sm:$0xf]
    %v1566 = vld [vmem:[%s3 + $0xfc] sm:$0xf]
    %v1567 = vld [vmem:[%s3 + $0x100] sm:$0xf]
    %v1568 = vld [vmem:[%s3 + $0x104] sm:$0xf]
    %v1569 = vld [vmem:[%s3 + $0x108] sm:$0xf]
    %v1570 = vld [vmem:[%s3 + $0x10c] sm:$0xf]
    %v1571 = vld [vmem:[%s3 + $0x110] sm:$0xf]
    %v1572 = vld [vmem:[%s3 + $0x114] sm:$0xf]
    %v1573 = vld [vmem:[%s3 + $0x118] sm:$0xf]
    %v1574 = vld [vmem:[%s3 + $0x11c] sm:$0xf]
    %v1575 = vld [vmem:[%s3 + $0x120] sm:$0xf]
    %v1576 = vld [vmem:[%s3 + $0x124] sm:$0xf]
    %v1577 = vld [vmem:[%s3 + $0x128] sm:$0xf]
    %v1578 = vld [vmem:[%s3 + $0x12c] sm:$0xf]
    %v1579 = vld [vmem:[%s3 + $0x130] sm:$0xf]
    %v1580 = vld [vmem:[%s3 + $0x134] sm:$0xf]
    %v1581 = vld [vmem:[%s3 + $0x138] sm:$0xf]
    %v1582 = vld [vmem:[%s3 + $0x13c] sm:$0xf]
    %v1583 = vld [vmem:[%s3 + $0x140] sm:$0xf]
    %v1584 = vld [vmem:[%s3 + $0x144] sm:$0xf]
    %v1585 = vld [vmem:[%s3 + $0x148] sm:$0xf]
    %v1586 = vld [vmem:[%s3 + $0x14c] sm:$0xf]
    %v1587 = vld [vmem:[%s3 + $0x150] sm:$0xf]
    %v1588 = vld [vmem:[%s3 + $0x154] sm:$0xf]
    %v1589 = vld [vmem:[%s3 + $0x158] sm:$0xf]
    %v1590 = vld [vmem:[%s3 + $0x15c] sm:$0xf]
    %v1591 = vld [vmem:[%s3 + $0x160] sm:$0xf]
    %v1592 = vld [vmem:[%s3 + $0x164] sm:$0xf]
    %v1593 = vld [vmem:[%s3 + $0x168] sm:$0xf]
    %v1594 = vld [vmem:[%s3 + $0x16c] sm:$0xf]
    %v1595 = vld [vmem:[%s3 + $0x170] sm:$0xf]
    %v1596 = vld [vmem:[%s3 + $0x174] sm:$0xf]
    %v1597 = vld [vmem:[%s3 + $0x178] sm:$0xf]
    %v1598 = vld [vmem:[%s3 + $0x17c] sm:$0xf]
    %v1599 = vld [vmem:[%s3 + $0x180] sm:$0xf]
    %v1600 = vld [vmem:[%s3 + $0x184] sm:$0xf]
    %v1601 = vld [vmem:[%s3 + $0x188] sm:$0xf]
    %v1602 = vld [vmem:[%s3 + $0x18c] sm:$0xf]
    %v1603 = vld [vmem:[%s3 + $0x190] sm:$0xf]
    %v1604 = vld [vmem:[%s3 + $0x194] sm:$0xf]
    %v1605 = vld [vmem:[%s3 + $0x198] sm:$0xf]
    %v1606 = vld [vmem:[%s3 + $0x19c] sm:$0xf]
    %v1607 = vld [vmem:[%s3 + $0x1a0] sm:$0xf]
    %v1608 = vld [vmem:[%s3 + $0x1a4] sm:$0xf]
    %v1609 = vld [vmem:[%s3 + $0x1a8] sm:$0xf]
    %v1610 = vld [vmem:[%s3 + $0x1ac] sm:$0xf]
    %v1611 = vld [vmem:[%s3 + $0x1b0] sm:$0xf]
    %v1612 = vld [vmem:[%s3 + $0x1b4] sm:$0xf]
    %v1613 = vld [vmem:[%s3 + $0x1b8] sm:$0xf]
    %v1614 = vld [vmem:[%s3 + $0x1bc] sm:$0xf]
    %v1615 = vld [vmem:[%s3 + $0x1c0] sm:$0xf]
    %v1616 = vld [vmem:[%s3 + $0x1c4] sm:$0xf]
    %v1617 = vld [vmem:[%s3 + $0x1c8] sm:$0xf]
    %v1618 = vld [vmem:[%s3 + $0x1cc] sm:$0xf]
    %v1619 = vld [vmem:[%s3 + $0x1d0] sm:$0xf]
    %v1620 = vld [vmem:[%s3 + $0x1d4] sm:$0xf]
    %v1621 = vld [vmem:[%s3 + $0x1d8] sm:$0xf]
    %v1622 = vld [vmem:[%s3 + $0x1dc] sm:$0xf]
    %v1623 = vld [vmem:[%s3 + $0x1e0] sm:$0xf]
    %v1624 = vld [vmem:[%s3 + $0x1e4] sm:$0xf]
    %v1625 = vld [vmem:[%s3 + $0x1e8] sm:$0xf]
    %v1626 = vld [vmem:[%s3 + $0x1ec] sm:$0xf]
    %v1627 = vld [vmem:[%s3 + $0x1f0] sm:$0xf]
    %v1628 = vld [vmem:[%s3 + $0x1f4] sm:$0xf]
    %v1629 = vld [vmem:[%s3 + $0x1f8] sm:$0xf]
    %v1630 = vld [vmem:[%s3 + $0x1fc] sm:$0xf]
    %v1631 = vld [vmem:[%s3 + $0x200] sm:$0xf]
    %v1632 = vld [vmem:[%s3 + $0x204] sm:$0xf]
    %v1633 = vld [vmem:[%s3 + $0x208] sm:$0xf]
    %v1634 = vld [vmem:[%s3 + $0x20c] sm:$0xf]
    %v1635 = vld [vmem:[%s3 + $0x210] sm:$0xf]
    %v1636 = vld [vmem:[%s3 + $0x214] sm:$0xf]
    %v1637 = vld [vmem:[%s3 + $0x218] sm:$0xf]
    %v1638 = vld [vmem:[%s3 + $0x21c] sm:$0xf]
    %v1639 = vld [vmem:[%s3 + $0x220] sm:$0xf]
    %v1640 = vld [vmem:[%s3 + $0x224] sm:$0xf]
    %v1641 = vld [vmem:[%s3 + $0x228] sm:$0xf]
    %v1642 = vld [vmem:[%s3 + $0x22c] sm:$0xf]
    %v1643 = vld [vmem:[%s3 + $0x230] sm:$0xf]
    %v1644 = vld [vmem:[%s3 + $0x234] sm:$0xf]
    %v1645 = vld [vmem:[%s3 + $0x238] sm:$0xf]
    %v1646 = vld [vmem:[%s3 + $0x23c] sm:$0xf]
    %v1647 = vld [vmem:[%s3 + $0x240] sm:$0xf]
    %v1648 = vld [vmem:[%s3 + $0x244] sm:$0xf]
    %v1649 = vld [vmem:[%s3 + $0x248] sm:$0xf]
    %v1650 = vld [vmem:[%s3 + $0x24c] sm:$0xf]
    %v1651 = vld [vmem:[%s3 + $0x250] sm:$0xf]
    %v1652 = vld [vmem:[%s3 + $0x254] sm:$0xf]
    %v1653 = vld [vmem:[%s3 + $0x258] sm:$0xf]
    %v1654 = vld [vmem:[%s3 + $0x25c] sm:$0xf]
    %v1655 = vld [vmem:[%s3 + $0x260] sm:$0xf]
    %v1656 = vld [vmem:[%s3 + $0x264] sm:$0xf]
    %v1657 = vld [vmem:[%s3 + $0x268] sm:$0xf]
    %v1658 = vld [vmem:[%s3 + $0x26c] sm:$0xf]
    %v1659 = vld [vmem:[%s3 + $0x270] sm:$0xf]
    %v1660 = vld [vmem:[%s3 + $0x274] sm:$0xf]
    %v1661 = vld [vmem:[%s3 + $0x278] sm:$0xf]
    %v1662 = vld [vmem:[%s3 + $0x27c] sm:$0xf]
    %v1663 = vld [vmem:[%s3 + $0x280] sm:$0xf]
    %v1664 = vld [vmem:[%s3 + $0x284] sm:$0xf]
    %v1665 = vld [vmem:[%s3 + $0x288] sm:$0xf]
    %v1666 = vld [vmem:[%s3 + $0x28c] sm:$0xf]
    %v1667 = vld [vmem:[%s3 + $0x290] sm:$0xf]
    %v1668 = vld [vmem:[%s3 + $0x294] sm:$0xf]
    %v1669 = vld [vmem:[%s3 + $0x298] sm:$0xf]
    %v1670 = vld [vmem:[%s3 + $0x29c] sm:$0xf]
    %v1671 = vld [vmem:[%s3 + $0x2a0] sm:$0xf]
    %v1672 = vld [vmem:[%s3 + $0x2a4] sm:$0xf]
    %v1673 = vld [vmem:[%s3 + $0x2a8] sm:$0xf]
    %v1674 = vld [vmem:[%s3 + $0x2ac] sm:$0xf]
    %v1675 = vld [vmem:[%s3 + $0x2b0] sm:$0xf]
    %v1676 = vld [vmem:[%s3 + $0x2b4] sm:$0xf]
    %v1677 = vld [vmem:[%s3 + $0x2b8] sm:$0xf]
    %v1678 = vld [vmem:[%s3 + $0x2bc] sm:$0xf]
    %v1679 = vld [vmem:[%s3 + $0x2c0] sm:$0xf]
    %v1680 = vld [vmem:[%s3 + $0x2c4] sm:$0xf]
    %v1681 = vld [vmem:[%s3 + $0x2c8] sm:$0xf]
    %v1682 = vld [vmem:[%s3 + $0x2cc] sm:$0xf]
    %v1683 = vld [vmem:[%s3 + $0x2d0] sm:$0xf]
    %v1684 = vld [vmem:[%s3 + $0x2d4] sm:$0xf]
    %v1685 = vld [vmem:[%s3 + $0x2d8] sm:$0xf]
    %v1686 = vld [vmem:[%s3 + $0x2dc] sm:$0xf]
    %v1687 = vld [vmem:[%s3 + $0x2e0] sm:$0xf]
    %v1688 = vld [vmem:[%s3 + $0x2e4] sm:$0xf]
    %v1689 = vld [vmem:[%s3 + $0x2e8] sm:$0xf]
    %v1690 = vld [vmem:[%s3 + $0x2ec] sm:$0xf]
    %v1691 = vld [vmem:[%s3 + $0x2f0] sm:$0xf]
    %v1692 = vld [vmem:[%s3 + $0x2f4] sm:$0xf]
    %v1693 = vld [vmem:[%s3 + $0x2f8] sm:$0xf]
    %v1694 = vld [vmem:[%s3 + $0x2fc] sm:$0xf]
    %v1695 = vld [vmem:[%s3 + $0x300] sm:$0xf]
    %v1696 = vld [vmem:[%s3 + $0x304] sm:$0xf]
    %v1697 = vld [vmem:[%s3 + $0x308] sm:$0xf]
    %v1698 = vld [vmem:[%s3 + $0x30c] sm:$0xf]
    %v1699 = vld [vmem:[%s3 + $0x310] sm:$0xf]
    %v1700 = vld [vmem:[%s3 + $0x314] sm:$0xf]
    %v1701 = vld [vmem:[%s3 + $0x318] sm:$0xf]
    %v1702 = vld [vmem:[%s3 + $0x31c] sm:$0xf]
    %v1703 = vld [vmem:[%s3 + $0x320] sm:$0xf]
    %v1704 = vld [vmem:[%s3 + $0x324] sm:$0xf]
    %v1705 = vld [vmem:[%s3 + $0x328] sm:$0xf]
    %v1706 = vld [vmem:[%s3 + $0x32c] sm:$0xf]
    %v1707 = vld [vmem:[%s3 + $0x330] sm:$0xf]
    %v1708 = vld [vmem:[%s3 + $0x334] sm:$0xf]
    %v1709 = vld [vmem:[%s3 + $0x338] sm:$0xf]
    %v1710 = vld [vmem:[%s3 + $0x33c] sm:$0xf]
    %v1711 = vld [vmem:[%s3 + $0x340] sm:$0xf]
    %v1712 = vld [vmem:[%s3 + $0x344] sm:$0xf]
    %v1713 = vld [vmem:[%s3 + $0x348] sm:$0xf]
    %v1714 = vld [vmem:[%s3 + $0x34c] sm:$0xf]
    %v1715 = vld [vmem:[%s3 + $0x350] sm:$0xf]
    %v1716 = vld [vmem:[%s3 + $0x354] sm:$0xf]
    %v1717 = vld [vmem:[%s3 + $0x358] sm:$0xf]
    %v1718 = vld [vmem:[%s3 + $0x35c] sm:$0xf]
    %v1719 = vld [vmem:[%s3 + $0x360] sm:$0xf]
    %v1720 = vld [vmem:[%s3 + $0x364] sm:$0xf]
    %v1721 = vld [vmem:[%s3 + $0x368] sm:$0xf]
    %v1722 = vld [vmem:[%s3 + $0x36c] sm:$0xf]
    %v1723 = vld [vmem:[%s3 + $0x370] sm:$0xf]
    %v1724 = vld [vmem:[%s3 + $0x374] sm:$0xf]
    %v1725 = vld [vmem:[%s3 + $0x378] sm:$0xf]
    %v1726 = vld [vmem:[%s3 + $0x37c] sm:$0xf]
    %v1727 = vld [vmem:[%s3 + $0x380] sm:$0xf]
    %v1728 = vld [vmem:[%s3 + $0x384] sm:$0xf]
    %v1729 = vld [vmem:[%s3 + $0x388] sm:$0xf]
    %v1730 = vld [vmem:[%s3 + $0x38c] sm:$0xf]
    %v1731 = vld [vmem:[%s3 + $0x390] sm:$0xf]
    %v1732 = vld [vmem:[%s3 + $0x394] sm:$0xf]
    %v1733 = vld [vmem:[%s3 + $0x398] sm:$0xf]
    %v1734 = vld [vmem:[%s3 + $0x39c] sm:$0xf]
    %v1735 = vld [vmem:[%s3 + $0x3a0] sm:$0xf]
    %v1736 = vld [vmem:[%s3 + $0x3a4] sm:$0xf]
    %v1737 = vld [vmem:[%s3 + $0x3a8] sm:$0xf]
    %v1738 = vld [vmem:[%s3 + $0x3ac] sm:$0xf]
    %v1739 = vld [vmem:[%s3 + $0x3b0] sm:$0xf]
    %v1740 = vld [vmem:[%s3 + $0x3b4] sm:$0xf]
    %v1741 = vld [vmem:[%s3 + $0x3b8] sm:$0xf]
    %v1742 = vld [vmem:[%s3 + $0x3bc] sm:$0xf]
    %v1743 = vld [vmem:[%s3 + $0x3c0] sm:$0xf]
    %v1744 = vld [vmem:[%s3 + $0x3c4] sm:$0xf]
    %v1745 = vld [vmem:[%s3 + $0x3c8] sm:$0xf]
    %v1746 = vld [vmem:[%s3 + $0x3cc] sm:$0xf]
    %v1747 = vld [vmem:[%s3 + $0x3d0] sm:$0xf]
    %v1748 = vld [vmem:[%s3 + $0x3d4] sm:$0xf]
    %v1749 = vld [vmem:[%s3 + $0x3d8] sm:$0xf]
    %v1750 = vld [vmem:[%s3 + $0x3dc] sm:$0xf]
    %v1751 = vld [vmem:[%s3 + $0x3e0] sm:$0xf]
    %v1752 = vld [vmem:[%s3 + $0x3e4] sm:$0xf]
    %v1753 = vld [vmem:[%s3 + $0x3e8] sm:$0xf]
    %v1754 = vld [vmem:[%s3 + $0x3ec] sm:$0xf]
    %v1755 = vld [vmem:[%s3 + $0x3f0] sm:$0xf]
    %v1756 = vld [vmem:[%s3 + $0x3f4] sm:$0xf]
    %v1757 = vld [vmem:[%s3 + $0x3f8] sm:$0xf]
    %v1758 = vld [vmem:[%s3 + $0x3fc] sm:$0xf]
    %v1759 = vld [vmem:[%s3 + $0x400] sm:$0xf]
    %v1760 = vld [vmem:[%s3 + $0x404] sm:$0xf]
    %v1761 = vld [vmem:[%s3 + $0x408] sm:$0xf]
    %v1762 = vld [vmem:[%s3 + $0x40c] sm:$0xf]
    %v1763 = vld [vmem:[%s3 + $0x410] sm:$0xf]
    %v1764 = vld [vmem:[%s3 + $0x414] sm:$0xf]
    %v1765 = vld [vmem:[%s3 + $0x418] sm:$0xf]
    %v1766 = vld [vmem:[%s3 + $0x41c] sm:$0xf]
    %v1767 = vld [vmem:[%s3 + $0x420] sm:$0xf]
    %v1768 = vld [vmem:[%s3 + $0x424] sm:$0xf]
    %v1769 = vld [vmem:[%s3 + $0x428] sm:$0xf]
    %v1770 = vld [vmem:[%s3 + $0x42c] sm:$0xf]
    %v1771 = vld [vmem:[%s3 + $0x430] sm:$0xf]
    %v1772 = vld [vmem:[%s3 + $0x434] sm:$0xf]
    %v1773 = vld [vmem:[%s3 + $0x438] sm:$0xf]
    %v1774 = vld [vmem:[%s3 + $0x43c] sm:$0xf]
    %v1775 = vld [vmem:[%s3 + $0x440] sm:$0xf]
    %v1776 = vld [vmem:[%s3 + $0x444] sm:$0xf]
    %v1777 = vld [vmem:[%s3 + $0x448] sm:$0xf]
    %v1778 = vld [vmem:[%s3 + $0x44c] sm:$0xf]
    %v1779 = vld [vmem:[%s3 + $0x450] sm:$0xf]
    %v1780 = vld [vmem:[%s3 + $0x454] sm:$0xf]
    %v1781 = vld [vmem:[%s3 + $0x458] sm:$0xf]
    %v1782 = vld [vmem:[%s3 + $0x45c] sm:$0xf]
    %v1783 = vld [vmem:[%s3 + $0x460] sm:$0xf]
    %v1784 = vld [vmem:[%s3 + $0x464] sm:$0xf]
    %v1785 = vld [vmem:[%s3 + $0x468] sm:$0xf]
    %v1786 = vld [vmem:[%s3 + $0x46c] sm:$0xf]
    %v1787 = vld [vmem:[%s3 + $0x470] sm:$0xf]
    %v1788 = vld [vmem:[%s3 + $0x474] sm:$0xf]
    %v1789 = vld [vmem:[%s3 + $0x478] sm:$0xf]
    %v1790 = vld [vmem:[%s3 + $0x47c] sm:$0xf]
    %v1791 = vld [vmem:[%s3 + $0x480] sm:$0xf]
    %v1792 = vld [vmem:[%s3 + $0x484] sm:$0xf]
    %v1793 = vld [vmem:[%s3 + $0x488] sm:$0xf]
    %v1794 = vld [vmem:[%s3 + $0x48c] sm:$0xf]
    %v1795 = vld [vmem:[%s3 + $0x490] sm:$0xf]
    %v1796 = vld [vmem:[%s3 + $0x494] sm:$0xf]
    %v1797 = vld [vmem:[%s3 + $0x498] sm:$0xf]
    %v1798 = vld [vmem:[%s3 + $0x49c] sm:$0xf]
    %v1799 = vld [vmem:[%s3 + $0x4a0] sm:$0xf]
    %v1800 = vld [vmem:[%s3 + $0x4a4] sm:$0xf]
    %v1801 = vld [vmem:[%s3 + $0x4a8] sm:$0xf]
    %v1802 = vld [vmem:[%s3 + $0x4ac] sm:$0xf]
    %v1803 = vld [vmem:[%s3 + $0x4b0] sm:$0xf]
    %v1804 = vld [vmem:[%s3 + $0x4b4] sm:$0xf]
    %v1805 = vld [vmem:[%s3 + $0x4b8] sm:$0xf]
    %v1806 = vld [vmem:[%s3 + $0x4bc] sm:$0xf]
    %v1807 = vld [vmem:[%s3 + $0x4c0] sm:$0xf]
    %v1808 = vld [vmem:[%s3 + $0x4c4] sm:$0xf]
    %v1809 = vld [vmem:[%s3 + $0x4c8] sm:$0xf]
    %v1810 = vld [vmem:[%s3 + $0x4cc] sm:$0xf]
    %v1811 = vld [vmem:[%s3 + $0x4d0] sm:$0xf]
    %v1812 = vld [vmem:[%s3 + $0x4d4] sm:$0xf]
    %v1813 = vld [vmem:[%s3 + $0x4d8] sm:$0xf]
    %v1814 = vld [vmem:[%s3 + $0x4dc] sm:$0xf]
    %v1815 = vld [vmem:[%s3 + $0x4e0] sm:$0xf]
    %v1816 = vld [vmem:[%s3 + $0x4e4] sm:$0xf]
    %v1817 = vld [vmem:[%s3 + $0x4e8] sm:$0xf]
    %v1818 = vld [vmem:[%s3 + $0x4ec] sm:$0xf]
    %v1819 = vld [vmem:[%s3 + $0x4f0] sm:$0xf]
    %v1820 = vld [vmem:[%s3 + $0x4f4] sm:$0xf]
    %v1821 = vld [vmem:[%s3 + $0x4f8] sm:$0xf]
    %v1822 = vld [vmem:[%s3 + $0x4fc] sm:$0xf]
    %v1823 = vld [vmem:[%s3 + $0x500] sm:$0xf]
    %v1824 = vld [vmem:[%s3 + $0x504] sm:$0xf]
    %v1825 = vld [vmem:[%s3 + $0x508] sm:$0xf]
    %v1826 = vld [vmem:[%s3 + $0x50c] sm:$0xf]
    %v1827 = vld [vmem:[%s3 + $0x510] sm:$0xf]
    %v1828 = vld [vmem:[%s3 + $0x514] sm:$0xf]
    %v1829 = vld [vmem:[%s3 + $0x518] sm:$0xf]
    %v1830 = vld [vmem:[%s3 + $0x51c] sm:$0xf]
    %v1831 = vld [vmem:[%s3 + $0x520] sm:$0xf]
    %v1832 = vld [vmem:[%s3 + $0x524] sm:$0xf]
    %v1833 = vld [vmem:[%s3 + $0x528] sm:$0xf]
    %v1834 = vld [vmem:[%s3 + $0x52c] sm:$0xf]
    %v1835 = vld [vmem:[%s3 + $0x530] sm:$0xf]
    %v1836 = vld [vmem:[%s3 + $0x534] sm:$0xf]
    %v1837 = vld [vmem:[%s3 + $0x538] sm:$0xf]
    %v1838 = vld [vmem:[%s3 + $0x53c] sm:$0xf]
    %v1839 = vld [vmem:[%s3 + $0x540] sm:$0xf]
    %v1840 = vld [vmem:[%s3 + $0x544] sm:$0xf]
    %v1841 = vld [vmem:[%s3 + $0x548] sm:$0xf]
    %v1842 = vld [vmem:[%s3 + $0x54c] sm:$0xf]
    %v1843 = vld [vmem:[%s3 + $0x550] sm:$0xf]
    %v1844 = vld [vmem:[%s3 + $0x554] sm:$0xf]
    %v1845 = vld [vmem:[%s3 + $0x558] sm:$0xf]
    %v1846 = vld [vmem:[%s3 + $0x55c] sm:$0xf]
    %v1847 = vld [vmem:[%s3 + $0x560] sm:$0xf]
    %v1848 = vld [vmem:[%s3 + $0x564] sm:$0xf]
    %v1849 = vld [vmem:[%s3 + $0x568] sm:$0xf]
    %v1850 = vld [vmem:[%s3 + $0x56c] sm:$0xf]
    %v1851 = vld [vmem:[%s3 + $0x570] sm:$0xf]
    %v1852 = vld [vmem:[%s3 + $0x574] sm:$0xf]
    %v1853 = vld [vmem:[%s3 + $0x578] sm:$0xf]
    %v1854 = vld [vmem:[%s3 + $0x57c] sm:$0xf]
    %v1855 = vld [vmem:[%s3 + $0x580] sm:$0xf]
    %v1856 = vld [vmem:[%s3 + $0x584] sm:$0xf]
    %v1857 = vld [vmem:[%s3 + $0x588] sm:$0xf]
    %v1858 = vld [vmem:[%s3 + $0x58c] sm:$0xf]
    %v1859 = vld [vmem:[%s3 + $0x590] sm:$0xf]
    %v1860 = vld [vmem:[%s3 + $0x594] sm:$0xf]
    %v1861 = vld [vmem:[%s3 + $0x598] sm:$0xf]
    %v1862 = vld [vmem:[%s3 + $0x59c] sm:$0xf]
    %v1863 = vld [vmem:[%s3 + $0x5a0] sm:$0xf]
    %v1864 = vld [vmem:[%s3 + $0x5a4] sm:$0xf]
    %v1865 = vld [vmem:[%s3 + $0x5a8] sm:$0xf]
    %v1866 = vld [vmem:[%s3 + $0x5ac] sm:$0xf]
    %v1867 = vld [vmem:[%s3 + $0x5b0] sm:$0xf]
    %v1868 = vld [vmem:[%s3 + $0x5b4] sm:$0xf]
    %v1869 = vld [vmem:[%s3 + $0x5b8] sm:$0xf]
    %v1870 = vld [vmem:[%s3 + $0x5bc] sm:$0xf]
    %v1871 = vld [vmem:[%s3 + $0x5c0] sm:$0xf]
    %v1872 = vld [vmem:[%s3 + $0x5c4] sm:$0xf]
    %v1873 = vld [vmem:[%s3 + $0x5c8] sm:$0xf]
    %v1874 = vld [vmem:[%s3 + $0x5cc] sm:$0xf]
    %v1875 = vld [vmem:[%s3 + $0x5d0] sm:$0xf]
    %v1876 = vld [vmem:[%s3 + $0x5d4] sm:$0xf]
    %v1877 = vld [vmem:[%s3 + $0x5d8] sm:$0xf]
    %v1878 = vld [vmem:[%s3 + $0x5dc] sm:$0xf]
    %v1879 = vld [vmem:[%s3 + $0x5e0] sm:$0xf]
    %v1880 = vld [vmem:[%s3 + $0x5e4] sm:$0xf]
    %v1881 = vld [vmem:[%s3 + $0x5e8] sm:$0xf]
    %v1882 = vld [vmem:[%s3 + $0x5ec] sm:$0xf]
    %v1883 = vld [vmem:[%s3 + $0x5f0] sm:$0xf]
    %v1884 = vld [vmem:[%s3 + $0x5f4] sm:$0xf]
    %v1885 = vld [vmem:[%s3 + $0x5f8] sm:$0xf]
    %v1886 = vld [vmem:[%s3 + $0x5fc] sm:$0xf]
    %v1887 = vld [vmem:[%s3 + $0x600] sm:$0xf]
    %v1888 = vld [vmem:[%s3 + $0x604] sm:$0xf]
    %v1889 = vld [vmem:[%s3 + $0x608] sm:$0xf]
    %v1890 = vld [vmem:[%s3 + $0x60c] sm:$0xf]
    %v1891 = vld [vmem:[%s3 + $0x610] sm:$0xf]
    %v1892 = vld [vmem:[%s3 + $0x614] sm:$0xf]
    %v1893 = vld [vmem:[%s3 + $0x618] sm:$0xf]
    %v1894 = vld [vmem:[%s3 + $0x61c] sm:$0xf]
    %v1895 = vld [vmem:[%s3 + $0x620] sm:$0xf]
    %v1896 = vld [vmem:[%s3 + $0x624] sm:$0xf]
    %v1897 = vld [vmem:[%s3 + $0x628] sm:$0xf]
    %v1898 = vld [vmem:[%s3 + $0x62c] sm:$0xf]
    %v1899 = vld [vmem:[%s3 + $0x630] sm:$0xf]
    %v1900 = vld [vmem:[%s3 + $0x634] sm:$0xf]
    %v1901 = vld [vmem:[%s3 + $0x638] sm:$0xf]
    %v1902 = vld [vmem:[%s3 + $0x63c] sm:$0xf]
    %v1903 = vld [vmem:[%s3 + $0x640] sm:$0xf]
    %v1904 = vld [vmem:[%s3 + $0x644] sm:$0xf]
    %v1905 = vld [vmem:[%s3 + $0x648] sm:$0xf]
    %v1906 = vld [vmem:[%s3 + $0x64c] sm:$0xf]
    %v1907 = vld [vmem:[%s3 + $0x650] sm:$0xf]
    %v1908 = vld [vmem:[%s3 + $0x654] sm:$0xf]
    %v1909 = vld [vmem:[%s3 + $0x658] sm:$0xf]
    %v1910 = vld [vmem:[%s3 + $0x65c] sm:$0xf]
    %v1911 = vld [vmem:[%s3 + $0x660] sm:$0xf]
    %v1912 = vld [vmem:[%s3 + $0x664] sm:$0xf]
    %v1913 = vld [vmem:[%s3 + $0x668] sm:$0xf]
    %v1914 = vld [vmem:[%s3 + $0x66c] sm:$0xf]
    %v1915 = vld [vmem:[%s3 + $0x670] sm:$0xf]
    %v1916 = vld [vmem:[%s3 + $0x674] sm:$0xf]
    %v1917 = vld [vmem:[%s3 + $0x678] sm:$0xf]
    %v1918 = vld [vmem:[%s3 + $0x67c] sm:$0xf]
    %v1919 = vld [vmem:[%s3 + $0x680] sm:$0xf]
    %v1920 = vld [vmem:[%s3 + $0x684] sm:$0xf]
    %v1921 = vld [vmem:[%s3 + $0x688] sm:$0xf]
    %v1922 = vld [vmem:[%s3 + $0x68c] sm:$0xf]
    %v1923 = vld [vmem:[%s3 + $0x690] sm:$0xf]
    %v1924 = vld [vmem:[%s3 + $0x694] sm:$0xf]
    %v1925 = vld [vmem:[%s3 + $0x698] sm:$0xf]
    %v1926 = vld [vmem:[%s3 + $0x69c] sm:$0xf]
    %v1927 = vld [vmem:[%s3 + $0x6a0] sm:$0xf]
    %v1928 = vld [vmem:[%s3 + $0x6a4] sm:$0xf]
    %v1929 = vld [vmem:[%s3 + $0x6a8] sm:$0xf]
    %v1930 = vld [vmem:[%s3 + $0x6ac] sm:$0xf]
    %v1931 = vld [vmem:[%s3 + $0x6b0] sm:$0xf]
    %v1932 = vld [vmem:[%s3 + $0x6b4] sm:$0xf]
    %v1933 = vld [vmem:[%s3 + $0x6b8] sm:$0xf]
    %v1934 = vld [vmem:[%s3 + $0x6bc] sm:$0xf]
    %v1935 = vld [vmem:[%s3 + $0x6c0] sm:$0xf]
    %v1936 = vld [vmem:[%s3 + $0x6c4] sm:$0xf]
    %v1937 = vld [vmem:[%s3 + $0x6c8] sm:$0xf]
    %v1938 = vld [vmem:[%s3 + $0x6cc] sm:$0xf]
    %v1939 = vld [vmem:[%s3 + $0x6d0] sm:$0xf]
    %v1940 = vld [vmem:[%s3 + $0x6d4] sm:$0xf]
    %v1941 = vld [vmem:[%s3 + $0x6d8] sm:$0xf]
    %v1942 = vld [vmem:[%s3 + $0x6dc] sm:$0xf]
    %v1943 = vld [vmem:[%s3 + $0x6e0] sm:$0xf]
    %v1944 = vld [vmem:[%s3 + $0x6e4] sm:$0xf]
    %v1945 = vld [vmem:[%s3 + $0x6e8] sm:$0xf]
    %v1946 = vld [vmem:[%s3 + $0x6ec] sm:$0xf]
    %v1947 = vld [vmem:[%s3 + $0x6f0] sm:$0xf]
    %v1948 = vld [vmem:[%s3 + $0x6f4] sm:$0xf]
    %v1949 = vld [vmem:[%s3 + $0x6f8] sm:$0xf]
    %v1950 = vld [vmem:[%s3 + $0x6fc] sm:$0xf]
    %v1951 = vld [vmem:[%s3 + $0x700] sm:$0xf]
    %v1952 = vld [vmem:[%s3 + $0x704] sm:$0xf]
    %v1953 = vld [vmem:[%s3 + $0x708] sm:$0xf]
    %v1954 = vld [vmem:[%s3 + $0x70c] sm:$0xf]
    %v1955 = vld [vmem:[%s3 + $0x710] sm:$0xf]
    %v1956 = vld [vmem:[%s3 + $0x714] sm:$0xf]
    %v1957 = vld [vmem:[%s3 + $0x718] sm:$0xf]
    %v1958 = vld [vmem:[%s3 + $0x71c] sm:$0xf]
    %v1959 = vld [vmem:[%s3 + $0x720] sm:$0xf]
    %v1960 = vld [vmem:[%s3 + $0x724] sm:$0xf]
    %v1961 = vld [vmem:[%s3 + $0x728] sm:$0xf]
    %v1962 = vld [vmem:[%s3 + $0x72c] sm:$0xf]
    %v1963 = vld [vmem:[%s3 + $0x730] sm:$0xf]
    %v1964 = vld [vmem:[%s3 + $0x734] sm:$0xf]
    %v1965 = vld [vmem:[%s3 + $0x738] sm:$0xf]
    %v1966 = vld [vmem:[%s3 + $0x73c] sm:$0xf]
    %v1967 = vld [vmem:[%s3 + $0x740] sm:$0xf]
    %v1968 = vld [vmem:[%s3 + $0x744] sm:$0xf]
    %v1969 = vld [vmem:[%s3 + $0x748] sm:$0xf]
    %v1970 = vld [vmem:[%s3 + $0x74c] sm:$0xf]
    %v1971 = vld [vmem:[%s3 + $0x750] sm:$0xf]
    %v1972 = vld [vmem:[%s3 + $0x754] sm:$0xf]
    %v1973 = vld [vmem:[%s3 + $0x758] sm:$0xf]
    %v1974 = vld [vmem:[%s3 + $0x75c] sm:$0xf]
    %v1975 = vld [vmem:[%s3 + $0x760] sm:$0xf]
    %v1976 = vld [vmem:[%s3 + $0x764] sm:$0xf]
    %v1977 = vld [vmem:[%s3 + $0x768] sm:$0xf]
    %v1978 = vld [vmem:[%s3 + $0x76c] sm:$0xf]
    %v1979 = vld [vmem:[%s3 + $0x770] sm:$0xf]
    %v1980 = vld [vmem:[%s3 + $0x774] sm:$0xf]
    %v1981 = vld [vmem:[%s3 + $0x778] sm:$0xf]
    %v1982 = vld [vmem:[%s3 + $0x77c] sm:$0xf]
    %v1983 = vld [vmem:[%s3 + $0x780] sm:$0xf]
    %v1984 = vld [vmem:[%s3 + $0x784] sm:$0xf]
    %v1985 = vld [vmem:[%s3 + $0x788] sm:$0xf]
    %v1986 = vld [vmem:[%s3 + $0x78c] sm:$0xf]
    %v1987 = vld [vmem:[%s3 + $0x790] sm:$0xf]
    %v1988 = vld [vmem:[%s3 + $0x794] sm:$0xf]
    %v1989 = vld [vmem:[%s3 + $0x798] sm:$0xf]
    %v1990 = vld [vmem:[%s3 + $0x79c] sm:$0xf]
    %v1991 = vld [vmem:[%s3 + $0x7a0] sm:$0xf]
    %v1992 = vld [vmem:[%s3 + $0x7a4] sm:$0xf]
    %v1993 = vld [vmem:[%s3 + $0x7a8] sm:$0xf]
    %v1994 = vld [vmem:[%s3 + $0x7ac] sm:$0xf]
    %v1995 = vld [vmem:[%s3 + $0x7b0] sm:$0xf]
    %v1996 = vld [vmem:[%s3 + $0x7b4] sm:$0xf]
    %v1997 = vld [vmem:[%s3 + $0x7b8] sm:$0xf]
    %v1998 = vld [vmem:[%s3 + $0x7bc] sm:$0xf]
    %v1999 = vld [vmem:[%s3 + $0x7c0] sm:$0xf]
    %v2000 = vld [vmem:[%s3 + $0x7c4] sm:$0xf]
    %v2001 = vld [vmem:[%s3 + $0x7c8] sm:$0xf]
    %v2002 = vld [vmem:[%s3 + $0x7cc] sm:$0xf]
    %v2003 = vld [vmem:[%s3 + $0x7d0] sm:$0xf]
    %v2004 = vld [vmem:[%s3 + $0x7d4] sm:$0xf]
    %v2005 = vld [vmem:[%s3 + $0x7d8] sm:$0xf]
    %v2006 = vld [vmem:[%s3 + $0x7dc] sm:$0xf]
    %v2007 = vld [vmem:[%s3 + $0x7e0] sm:$0xf]
    %v2008 = vld [vmem:[%s3 + $0x7e4] sm:$0xf]
    %v2009 = vld [vmem:[%s3 + $0x7e8] sm:$0xf]
    %v2010 = vld [vmem:[%s3 + $0x7ec] sm:$0xf]
    %v2011 = vld [vmem:[%s3 + $0x7f0] sm:$0xf]
    %v2012 = vld [vmem:[%s3 + $0x7f4] sm:$0xf]
    %v2013 = vld [vmem:[%s3 + $0x7f8] sm:$0xf]
    %v2014 = vld [vmem:[%s3 + $0x7fc] sm:$0xf]
    %v2527 = vunpack.c.l.b16 %v1503
    %v2528 = vunpack.c.l.b16 %v1504
    %v2529 = vunpack.c.l.b16 %v1505
    %v2530 = vunpack.c.l.b16 %v1506
    %v2531 = vunpack.c.l.b16 %v1507
    %v2532 = vunpack.c.l.b16 %v1508
    %v2533 = vunpack.c.l.b16 %v1509
    %v2534 = vunpack.c.l.b16 %v1510
    %v2535 = vunpack.c.l.b16 %v1511
    %v2536 = vunpack.c.l.b16 %v1512
    %v2537 = vunpack.c.l.b16 %v1513
    %v2538 = vunpack.c.l.b16 %v1514
    %v2539 = vunpack.c.l.b16 %v1515
    %v2540 = vunpack.c.l.b16 %v1516
    %v2541 = vunpack.c.l.b16 %v1517
    %v2542 = vunpack.c.l.b16 %v1518
    %v2543 = vunpack.c.l.b16 %v1519
    %v2544 = vunpack.c.l.b16 %v1520
    %v2545 = vunpack.c.l.b16 %v1521
    %v2546 = vunpack.c.l.b16 %v1522
    %v2547 = vunpack.c.l.b16 %v1523
    %v2548 = vunpack.c.l.b16 %v1524
    %v2549 = vunpack.c.l.b16 %v1525
    %v2550 = vunpack.c.l.b16 %v1526
    %v2551 = vunpack.c.l.b16 %v1527
    %v2552 = vunpack.c.l.b16 %v1528
    %v2553 = vunpack.c.l.b16 %v1529
    %v2554 = vunpack.c.l.b16 %v1530
    %v2555 = vunpack.c.l.b16 %v1531
    %v2556 = vunpack.c.l.b16 %v1532
    %v2557 = vunpack.c.l.b16 %v1533
    %v2558 = vunpack.c.l.b16 %v1534
    %v2559 = vunpack.c.l.b16 %v1535
    %v2560 = vunpack.c.l.b16 %v1536
    %v2561 = vunpack.c.l.b16 %v1537
    %v2562 = vunpack.c.l.b16 %v1538
    %v2563 = vunpack.c.l.b16 %v1539
    %v2564 = vunpack.c.l.b16 %v1540
    %v2565 = vunpack.c.l.b16 %v1541
    %v2566 = vunpack.c.l.b16 %v1542
    %v2567 = vunpack.c.l.b16 %v1543
    %v2568 = vunpack.c.l.b16 %v1544
    %v2569 = vunpack.c.l.b16 %v1545
    %v2570 = vunpack.c.l.b16 %v1546
    %v2571 = vunpack.c.l.b16 %v1547
    %v2572 = vunpack.c.l.b16 %v1548
    %v2573 = vunpack.c.l.b16 %v1549
    %v2574 = vunpack.c.l.b16 %v1550
    %v2575 = vunpack.c.l.b16 %v1551
    %v2576 = vunpack.c.l.b16 %v1552
    %v2577 = vunpack.c.l.b16 %v1553
    %v2578 = vunpack.c.l.b16 %v1554
    %v2579 = vunpack.c.l.b16 %v1555
    %v2580 = vunpack.c.l.b16 %v1556
    %v2581 = vunpack.c.l.b16 %v1557
    %v2582 = vunpack.c.l.b16 %v1558
    %v2583 = vunpack.c.l.b16 %v1559
    %v2584 = vunpack.c.l.b16 %v1560
    %v2585 = vunpack.c.l.b16 %v1561
    %v2586 = vunpack.c.l.b16 %v1562
    %v2587 = vunpack.c.l.b16 %v1563
    %v2588 = vunpack.c.l.b16 %v1564
    %v2589 = vunpack.c.l.b16 %v1565
    %v2590 = vunpack.c.l.b16 %v1566
    %v2591 = vunpack.c.l.b16 %v1567
    %v2592 = vunpack.c.l.b16 %v1568
    %v2593 = vunpack.c.l.b16 %v1569
    %v2594 = vunpack.c.l.b16 %v1570
    %v2595 = vunpack.c.l.b16 %v1571
    %v2596 = vunpack.c.l.b16 %v1572
    %v2597 = vunpack.c.l.b16 %v1573
    %v2598 = vunpack.c.l.b16 %v1574
    %v2599 = vunpack.c.l.b16 %v1575
    %v2600 = vunpack.c.l.b16 %v1576
    %v2601 = vunpack.c.l.b16 %v1577
    %v2602 = vunpack.c.l.b16 %v1578
    %v2603 = vunpack.c.l.b16 %v1579
    %v2604 = vunpack.c.l.b16 %v1580
    %v2605 = vunpack.c.l.b16 %v1581
    %v2606 = vunpack.c.l.b16 %v1582
    %v2607 = vunpack.c.l.b16 %v1583
    %v2608 = vunpack.c.l.b16 %v1584
    %v2609 = vunpack.c.l.b16 %v1585
    %v2610 = vunpack.c.l.b16 %v1586
    %v2611 = vunpack.c.l.b16 %v1587
    %v2612 = vunpack.c.l.b16 %v1588
    %v2613 = vunpack.c.l.b16 %v1589
    %v2614 = vunpack.c.l.b16 %v1590
    %v2615 = vunpack.c.l.b16 %v1591
    %v2616 = vunpack.c.l.b16 %v1592
    %v2617 = vunpack.c.l.b16 %v1593
    %v2618 = vunpack.c.l.b16 %v1594
    %v2619 = vunpack.c.l.b16 %v1595
    %v2620 = vunpack.c.l.b16 %v1596
    %v2621 = vunpack.c.l.b16 %v1597
    %v2622 = vunpack.c.l.b16 %v1598
    %v2623 = vunpack.c.l.b16 %v1599
    %v2624 = vunpack.c.l.b16 %v1600
    %v2625 = vunpack.c.l.b16 %v1601
    %v2626 = vunpack.c.l.b16 %v1602
    %v2627 = vunpack.c.l.b16 %v1603
    %v2628 = vunpack.c.l.b16 %v1604
    %v2629 = vunpack.c.l.b16 %v1605
    %v2630 = vunpack.c.l.b16 %v1606
    %v2631 = vunpack.c.l.b16 %v1607
    %v2632 = vunpack.c.l.b16 %v1608
    %v2633 = vunpack.c.l.b16 %v1609
    %v2634 = vunpack.c.l.b16 %v1610
    %v2635 = vunpack.c.l.b16 %v1611
    %v2636 = vunpack.c.l.b16 %v1612
    %v2637 = vunpack.c.l.b16 %v1613
    %v2638 = vunpack.c.l.b16 %v1614
    %v2639 = vunpack.c.l.b16 %v1615
    %v2640 = vunpack.c.l.b16 %v1616
    %v2641 = vunpack.c.l.b16 %v1617
    %v2642 = vunpack.c.l.b16 %v1618
    %v2643 = vunpack.c.l.b16 %v1619
    %v2644 = vunpack.c.l.b16 %v1620
    %v2645 = vunpack.c.l.b16 %v1621
    %v2646 = vunpack.c.l.b16 %v1622
    %v2647 = vunpack.c.l.b16 %v1623
    %v2648 = vunpack.c.l.b16 %v1624
    %v2649 = vunpack.c.l.b16 %v1625
    %v2650 = vunpack.c.l.b16 %v1626
    %v2651 = vunpack.c.l.b16 %v1627
    %v2652 = vunpack.c.l.b16 %v1628
    %v2653 = vunpack.c.l.b16 %v1629
    %v2654 = vunpack.c.l.b16 %v1630
    %v2655 = vunpack.c.l.b16 %v1631
    %v2656 = vunpack.c.l.b16 %v1632
    %v2657 = vunpack.c.l.b16 %v1633
    %v2658 = vunpack.c.l.b16 %v1634
    %v2659 = vunpack.c.l.b16 %v1635
    %v2660 = vunpack.c.l.b16 %v1636
    %v2661 = vunpack.c.l.b16 %v1637
    %v2662 = vunpack.c.l.b16 %v1638
    %v2663 = vunpack.c.l.b16 %v1639
    %v2664 = vunpack.c.l.b16 %v1640
    %v2665 = vunpack.c.l.b16 %v1641
    %v2666 = vunpack.c.l.b16 %v1642
    %v2667 = vunpack.c.l.b16 %v1643
    %v2668 = vunpack.c.l.b16 %v1644
    %v2669 = vunpack.c.l.b16 %v1645
    %v2670 = vunpack.c.l.b16 %v1646
    %v2671 = vunpack.c.l.b16 %v1647
    %v2672 = vunpack.c.l.b16 %v1648
    %v2673 = vunpack.c.l.b16 %v1649
    %v2674 = vunpack.c.l.b16 %v1650
    %v2675 = vunpack.c.l.b16 %v1651
    %v2676 = vunpack.c.l.b16 %v1652
    %v2677 = vunpack.c.l.b16 %v1653
    %v2678 = vunpack.c.l.b16 %v1654
    %v2679 = vunpack.c.l.b16 %v1655
    %v2680 = vunpack.c.l.b16 %v1656
    %v2681 = vunpack.c.l.b16 %v1657
    %v2682 = vunpack.c.l.b16 %v1658
    %v2683 = vunpack.c.l.b16 %v1659
    %v2684 = vunpack.c.l.b16 %v1660
    %v2685 = vunpack.c.l.b16 %v1661
    %v2686 = vunpack.c.l.b16 %v1662
    %v2687 = vunpack.c.l.b16 %v1663
    %v2688 = vunpack.c.l.b16 %v1664
    %v2689 = vunpack.c.l.b16 %v1665
    %v2690 = vunpack.c.l.b16 %v1666
    %v2691 = vunpack.c.l.b16 %v1667
    %v2692 = vunpack.c.l.b16 %v1668
    %v2693 = vunpack.c.l.b16 %v1669
    %v2694 = vunpack.c.l.b16 %v1670
    %v2695 = vunpack.c.l.b16 %v1671
    %v2696 = vunpack.c.l.b16 %v1672
    %v2697 = vunpack.c.l.b16 %v1673
    %v2698 = vunpack.c.l.b16 %v1674
    %v2699 = vunpack.c.l.b16 %v1675
    %v2700 = vunpack.c.l.b16 %v1676
    %v2701 = vunpack.c.l.b16 %v1677
    %v2702 = vunpack.c.l.b16 %v1678
    %v2703 = vunpack.c.l.b16 %v1679
    %v2704 = vunpack.c.l.b16 %v1680
    %v2705 = vunpack.c.l.b16 %v1681
    %v2706 = vunpack.c.l.b16 %v1682
    %v2707 = vunpack.c.l.b16 %v1683
    %v2708 = vunpack.c.l.b16 %v1684
    %v2709 = vunpack.c.l.b16 %v1685
    %v2710 = vunpack.c.l.b16 %v1686
    %v2711 = vunpack.c.l.b16 %v1687
    %v2712 = vunpack.c.l.b16 %v1688
    %v2713 = vunpack.c.l.b16 %v1689
    %v2714 = vunpack.c.l.b16 %v1690
    %v2715 = vunpack.c.l.b16 %v1691
    %v2716 = vunpack.c.l.b16 %v1692
    %v2717 = vunpack.c.l.b16 %v1693
    %v2718 = vunpack.c.l.b16 %v1694
    %v2719 = vunpack.c.l.b16 %v1695
    %v2720 = vunpack.c.l.b16 %v1696
    %v2721 = vunpack.c.l.b16 %v1697
    %v2722 = vunpack.c.l.b16 %v1698
    %v2723 = vunpack.c.l.b16 %v1699
    %v2724 = vunpack.c.l.b16 %v1700
    %v2725 = vunpack.c.l.b16 %v1701
    %v2726 = vunpack.c.l.b16 %v1702
    %v2727 = vunpack.c.l.b16 %v1703
    %v2728 = vunpack.c.l.b16 %v1704
    %v2729 = vunpack.c.l.b16 %v1705
    %v2730 = vunpack.c.l.b16 %v1706
    %v2731 = vunpack.c.l.b16 %v1707
    %v2732 = vunpack.c.l.b16 %v1708
    %v2733 = vunpack.c.l.b16 %v1709
    %v2734 = vunpack.c.l.b16 %v1710
    %v2735 = vunpack.c.l.b16 %v1711
    %v2736 = vunpack.c.l.b16 %v1712
    %v2737 = vunpack.c.l.b16 %v1713
    %v2738 = vunpack.c.l.b16 %v1714
    %v2739 = vunpack.c.l.b16 %v1715
    %v2740 = vunpack.c.l.b16 %v1716
    %v2741 = vunpack.c.l.b16 %v1717
    %v2742 = vunpack.c.l.b16 %v1718
    %v2743 = vunpack.c.l.b16 %v1719
    %v2744 = vunpack.c.l.b16 %v1720
    %v2745 = vunpack.c.l.b16 %v1721
    %v2746 = vunpack.c.l.b16 %v1722
    %v2747 = vunpack.c.l.b16 %v1723
    %v2748 = vunpack.c.l.b16 %v1724
    %v2749 = vunpack.c.l.b16 %v1725
    %v2750 = vunpack.c.l.b16 %v1726
    %v2751 = vunpack.c.l.b16 %v1727
    %v2752 = vunpack.c.l.b16 %v1728
    %v2753 = vunpack.c.l.b16 %v1729
    %v2754 = vunpack.c.l.b16 %v1730
    %v2755 = vunpack.c.l.b16 %v1731
    %v2756 = vunpack.c.l.b16 %v1732
    %v2757 = vunpack.c.l.b16 %v1733
    %v2758 = vunpack.c.l.b16 %v1734
    %v2759 = vunpack.c.l.b16 %v1735
    %v2760 = vunpack.c.l.b16 %v1736
    %v2761 = vunpack.c.l.b16 %v1737
    %v2762 = vunpack.c.l.b16 %v1738
    %v2763 = vunpack.c.l.b16 %v1739
    %v2764 = vunpack.c.l.b16 %v1740
    %v2765 = vunpack.c.l.b16 %v1741
    %v2766 = vunpack.c.l.b16 %v1742
    %v2767 = vunpack.c.l.b16 %v1743
    %v2768 = vunpack.c.l.b16 %v1744
    %v2769 = vunpack.c.l.b16 %v1745
    %v2770 = vunpack.c.l.b16 %v1746
    %v2771 = vunpack.c.l.b16 %v1747
    %v2772 = vunpack.c.l.b16 %v1748
    %v2773 = vunpack.c.l.b16 %v1749
    %v2774 = vunpack.c.l.b16 %v1750
    %v2775 = vunpack.c.l.b16 %v1751
    %v2776 = vunpack.c.l.b16 %v1752
    %v2777 = vunpack.c.l.b16 %v1753
    %v2778 = vunpack.c.l.b16 %v1754
    %v2779 = vunpack.c.l.b16 %v1755
    %v2780 = vunpack.c.l.b16 %v1756
    %v2781 = vunpack.c.l.b16 %v1757
    %v2782 = vunpack.c.l.b16 %v1758
    %v2783 = vunpack.c.l.b16 %v1759
    %v2784 = vunpack.c.l.b16 %v1760
    %v2785 = vunpack.c.l.b16 %v1761
    %v2786 = vunpack.c.l.b16 %v1762
    %v2787 = vunpack.c.l.b16 %v1763
    %v2788 = vunpack.c.l.b16 %v1764
    %v2789 = vunpack.c.l.b16 %v1765
    %v2790 = vunpack.c.l.b16 %v1766
    %v2791 = vunpack.c.l.b16 %v1767
    %v2792 = vunpack.c.l.b16 %v1768
    %v2793 = vunpack.c.l.b16 %v1769
    %v2794 = vunpack.c.l.b16 %v1770
    %v2795 = vunpack.c.l.b16 %v1771
    %v2796 = vunpack.c.l.b16 %v1772
    %v2797 = vunpack.c.l.b16 %v1773
    %v2798 = vunpack.c.l.b16 %v1774
    %v2799 = vunpack.c.l.b16 %v1775
    %v2800 = vunpack.c.l.b16 %v1776
    %v2801 = vunpack.c.l.b16 %v1777
    %v2802 = vunpack.c.l.b16 %v1778
    %v2803 = vunpack.c.l.b16 %v1779
    %v2804 = vunpack.c.l.b16 %v1780
    %v2805 = vunpack.c.l.b16 %v1781
    %v2806 = vunpack.c.l.b16 %v1782
    %v2807 = vunpack.c.l.b16 %v1783
    %v2808 = vunpack.c.l.b16 %v1784
    %v2809 = vunpack.c.l.b16 %v1785
    %v2810 = vunpack.c.l.b16 %v1786
    %v2811 = vunpack.c.l.b16 %v1787
    %v2812 = vunpack.c.l.b16 %v1788
    %v2813 = vunpack.c.l.b16 %v1789
    %v2814 = vunpack.c.l.b16 %v1790
    %v2815 = vunpack.c.l.b16 %v1791
    %v2816 = vunpack.c.l.b16 %v1792
    %v2817 = vunpack.c.l.b16 %v1793
    %v2818 = vunpack.c.l.b16 %v1794
    %v2819 = vunpack.c.l.b16 %v1795
    %v2820 = vunpack.c.l.b16 %v1796
    %v2821 = vunpack.c.l.b16 %v1797
    %v2822 = vunpack.c.l.b16 %v1798
    %v2823 = vunpack.c.l.b16 %v1799
    %v2824 = vunpack.c.l.b16 %v1800
    %v2825 = vunpack.c.l.b16 %v1801
    %v2826 = vunpack.c.l.b16 %v1802
    %v2827 = vunpack.c.l.b16 %v1803
    %v2828 = vunpack.c.l.b16 %v1804
    %v2829 = vunpack.c.l.b16 %v1805
    %v2830 = vunpack.c.l.b16 %v1806
    %v2831 = vunpack.c.l.b16 %v1807
    %v2832 = vunpack.c.l.b16 %v1808
    %v2833 = vunpack.c.l.b16 %v1809
    %v2834 = vunpack.c.l.b16 %v1810
    %v2835 = vunpack.c.l.b16 %v1811
    %v2836 = vunpack.c.l.b16 %v1812
    %v2837 = vunpack.c.l.b16 %v1813
    %v2838 = vunpack.c.l.b16 %v1814
    %v2839 = vunpack.c.l.b16 %v1815
    %v2840 = vunpack.c.l.b16 %v1816
    %v2841 = vunpack.c.l.b16 %v1817
    %v2842 = vunpack.c.l.b16 %v1818
    %v2843 = vunpack.c.l.b16 %v1819
    %v2844 = vunpack.c.l.b16 %v1820
    %v2845 = vunpack.c.l.b16 %v1821
    %v2846 = vunpack.c.l.b16 %v1822
    %v2847 = vunpack.c.l.b16 %v1823
    %v2848 = vunpack.c.l.b16 %v1824
    %v2849 = vunpack.c.l.b16 %v1825
    %v2850 = vunpack.c.l.b16 %v1826
    %v2851 = vunpack.c.l.b16 %v1827
    %v2852 = vunpack.c.l.b16 %v1828
    %v2853 = vunpack.c.l.b16 %v1829
    %v2854 = vunpack.c.l.b16 %v1830
    %v2855 = vunpack.c.l.b16 %v1831
    %v2856 = vunpack.c.l.b16 %v1832
    %v2857 = vunpack.c.l.b16 %v1833
    %v2858 = vunpack.c.l.b16 %v1834
    %v2859 = vunpack.c.l.b16 %v1835
    %v2860 = vunpack.c.l.b16 %v1836
    %v2861 = vunpack.c.l.b16 %v1837
    %v2862 = vunpack.c.l.b16 %v1838
    %v2863 = vunpack.c.l.b16 %v1839
    %v2864 = vunpack.c.l.b16 %v1840
    %v2865 = vunpack.c.l.b16 %v1841
    %v2866 = vunpack.c.l.b16 %v1842
    %v2867 = vunpack.c.l.b16 %v1843
    %v2868 = vunpack.c.l.b16 %v1844
    %v2869 = vunpack.c.l.b16 %v1845
    %v2870 = vunpack.c.l.b16 %v1846
    %v2871 = vunpack.c.l.b16 %v1847
    %v2872 = vunpack.c.l.b16 %v1848
    %v2873 = vunpack.c.l.b16 %v1849
    %v2874 = vunpack.c.l.b16 %v1850
    %v2875 = vunpack.c.l.b16 %v1851
    %v2876 = vunpack.c.l.b16 %v1852
    %v2877 = vunpack.c.l.b16 %v1853
    %v2878 = vunpack.c.l.b16 %v1854
    %v2879 = vunpack.c.l.b16 %v1855
    %v2880 = vunpack.c.l.b16 %v1856
    %v2881 = vunpack.c.l.b16 %v1857
    %v2882 = vunpack.c.l.b16 %v1858
    %v2883 = vunpack.c.l.b16 %v1859
    %v2884 = vunpack.c.l.b16 %v1860
    %v2885 = vunpack.c.l.b16 %v1861
    %v2886 = vunpack.c.l.b16 %v1862
    %v2887 = vunpack.c.l.b16 %v1863
    %v2888 = vunpack.c.l.b16 %v1864
    %v2889 = vunpack.c.l.b16 %v1865
    %v2890 = vunpack.c.l.b16 %v1866
    %v2891 = vunpack.c.l.b16 %v1867
    %v2892 = vunpack.c.l.b16 %v1868
    %v2893 = vunpack.c.l.b16 %v1869
    %v2894 = vunpack.c.l.b16 %v1870
    %v2895 = vunpack.c.l.b16 %v1871
    %v2896 = vunpack.c.l.b16 %v1872
    %v2897 = vunpack.c.l.b16 %v1873
    %v2898 = vunpack.c.l.b16 %v1874
    %v2899 = vunpack.c.l.b16 %v1875
    %v2900 = vunpack.c.l.b16 %v1876
    %v2901 = vunpack.c.l.b16 %v1877
    %v2902 = vunpack.c.l.b16 %v1878
    %v2903 = vunpack.c.l.b16 %v1879
    %v2904 = vunpack.c.l.b16 %v1880
    %v2905 = vunpack.c.l.b16 %v1881
    %v2906 = vunpack.c.l.b16 %v1882
    %v2907 = vunpack.c.l.b16 %v1883
    %v2908 = vunpack.c.l.b16 %v1884
    %v2909 = vunpack.c.l.b16 %v1885
    %v2910 = vunpack.c.l.b16 %v1886
    %v2911 = vunpack.c.l.b16 %v1887
    %v2912 = vunpack.c.l.b16 %v1888
    %v2913 = vunpack.c.l.b16 %v1889
    %v2914 = vunpack.c.l.b16 %v1890
    %v2915 = vunpack.c.l.b16 %v1891
    %v2916 = vunpack.c.l.b16 %v1892
    %v2917 = vunpack.c.l.b16 %v1893
    %v2918 = vunpack.c.l.b16 %v1894
    %v2919 = vunpack.c.l.b16 %v1895
    %v2920 = vunpack.c.l.b16 %v1896
    %v2921 = vunpack.c.l.b16 %v1897
    %v2922 = vunpack.c.l.b16 %v1898
    %v2923 = vunpack.c.l.b16 %v1899
    %v2924 = vunpack.c.l.b16 %v1900
    %v2925 = vunpack.c.l.b16 %v1901
    %v2926 = vunpack.c.l.b16 %v1902
    %v2927 = vunpack.c.l.b16 %v1903
    %v2928 = vunpack.c.l.b16 %v1904
    %v2929 = vunpack.c.l.b16 %v1905
    %v2930 = vunpack.c.l.b16 %v1906
    %v2931 = vunpack.c.l.b16 %v1907
    %v2932 = vunpack.c.l.b16 %v1908
    %v2933 = vunpack.c.l.b16 %v1909
    %v2934 = vunpack.c.l.b16 %v1910
    %v2935 = vunpack.c.l.b16 %v1911
    %v2936 = vunpack.c.l.b16 %v1912
    %v2937 = vunpack.c.l.b16 %v1913
    %v2938 = vunpack.c.l.b16 %v1914
    %v2939 = vunpack.c.l.b16 %v1915
    %v2940 = vunpack.c.l.b16 %v1916
    %v2941 = vunpack.c.l.b16 %v1917
    %v2942 = vunpack.c.l.b16 %v1918
    %v2943 = vunpack.c.l.b16 %v1919
    %v2944 = vunpack.c.l.b16 %v1920
    %v2945 = vunpack.c.l.b16 %v1921
    %v2946 = vunpack.c.l.b16 %v1922
    %v2947 = vunpack.c.l.b16 %v1923
    %v2948 = vunpack.c.l.b16 %v1924
    %v2949 = vunpack.c.l.b16 %v1925
    %v2950 = vunpack.c.l.b16 %v1926
    %v2951 = vunpack.c.l.b16 %v1927
    %v2952 = vunpack.c.l.b16 %v1928
    %v2953 = vunpack.c.l.b16 %v1929
    %v2954 = vunpack.c.l.b16 %v1930
    %v2955 = vunpack.c.l.b16 %v1931
    %v2956 = vunpack.c.l.b16 %v1932
    %v2957 = vunpack.c.l.b16 %v1933
    %v2958 = vunpack.c.l.b16 %v1934
    %v2959 = vunpack.c.l.b16 %v1935
    %v2960 = vunpack.c.l.b16 %v1936
    %v2961 = vunpack.c.l.b16 %v1937
    %v2962 = vunpack.c.l.b16 %v1938
    %v2963 = vunpack.c.l.b16 %v1939
    %v2964 = vunpack.c.l.b16 %v1940
    %v2965 = vunpack.c.l.b16 %v1941
    %v2966 = vunpack.c.l.b16 %v1942
    %v2967 = vunpack.c.l.b16 %v1943
    %v2968 = vunpack.c.l.b16 %v1944
    %v2969 = vunpack.c.l.b16 %v1945
    %v2970 = vunpack.c.l.b16 %v1946
    %v2971 = vunpack.c.l.b16 %v1947
    %v2972 = vunpack.c.l.b16 %v1948
    %v2973 = vunpack.c.l.b16 %v1949
    %v2974 = vunpack.c.l.b16 %v1950
    %v2975 = vunpack.c.l.b16 %v1951
    %v2976 = vunpack.c.l.b16 %v1952
    %v2977 = vunpack.c.l.b16 %v1953
    %v2978 = vunpack.c.l.b16 %v1954
    %v2979 = vunpack.c.l.b16 %v1955
    %v2980 = vunpack.c.l.b16 %v1956
    %v2981 = vunpack.c.l.b16 %v1957
    %v2982 = vunpack.c.l.b16 %v1958
    %v2983 = vunpack.c.l.b16 %v1959
    %v2984 = vunpack.c.l.b16 %v1960
    %v2985 = vunpack.c.l.b16 %v1961
    %v2986 = vunpack.c.l.b16 %v1962
    %v2987 = vunpack.c.l.b16 %v1963
    %v2988 = vunpack.c.l.b16 %v1964
    %v2989 = vunpack.c.l.b16 %v1965
    %v2990 = vunpack.c.l.b16 %v1966
    %v2991 = vunpack.c.l.b16 %v1967
    %v2992 = vunpack.c.l.b16 %v1968
    %v2993 = vunpack.c.l.b16 %v1969
    %v2994 = vunpack.c.l.b16 %v1970
    %v2995 = vunpack.c.l.b16 %v1971
    %v2996 = vunpack.c.l.b16 %v1972
    %v2997 = vunpack.c.l.b16 %v1973
    %v2998 = vunpack.c.l.b16 %v1974
    %v2999 = vunpack.c.l.b16 %v1975
    %v3000 = vunpack.c.l.b16 %v1976
    %v3001 = vunpack.c.l.b16 %v1977
    %v3002 = vunpack.c.l.b16 %v1978
    %v3003 = vunpack.c.l.b16 %v1979
    %v3004 = vunpack.c.l.b16 %v1980
    %v3005 = vunpack.c.l.b16 %v1981
    %v3006 = vunpack.c.l.b16 %v1982
    %v3007 = vunpack.c.l.b16 %v1983
    %v3008 = vunpack.c.l.b16 %v1984
    %v3009 = vunpack.c.l.b16 %v1985
    %v3010 = vunpack.c.l.b16 %v1986
    %v3011 = vunpack.c.l.b16 %v1987
    %v3012 = vunpack.c.l.b16 %v1988
    %v3013 = vunpack.c.l.b16 %v1989
    %v3014 = vunpack.c.l.b16 %v1990
    %v3015 = vunpack.c.l.b16 %v1991
    %v3016 = vunpack.c.l.b16 %v1992
    %v3017 = vunpack.c.l.b16 %v1993
    %v3018 = vunpack.c.l.b16 %v1994
    %v3019 = vunpack.c.l.b16 %v1995
    %v3020 = vunpack.c.l.b16 %v1996
    %v3021 = vunpack.c.l.b16 %v1997
    %v3022 = vunpack.c.l.b16 %v1998
    %v3023 = vunpack.c.l.b16 %v1999
    %v3024 = vunpack.c.l.b16 %v2000
    %v3025 = vunpack.c.l.b16 %v2001
    %v3026 = vunpack.c.l.b16 %v2002
    %v3027 = vunpack.c.l.b16 %v2003
    %v3028 = vunpack.c.l.b16 %v2004
    %v3029 = vunpack.c.l.b16 %v2005
    %v3030 = vunpack.c.l.b16 %v2006
    %v3031 = vunpack.c.l.b16 %v2007
    %v3032 = vunpack.c.l.b16 %v2008
    %v3033 = vunpack.c.l.b16 %v2009
    %v3034 = vunpack.c.l.b16 %v2010
    %v3035 = vunpack.c.l.b16 %v2011
    %v3036 = vunpack.c.l.b16 %v2012
    %v3037 = vunpack.c.l.b16 %v2013
    %v3038 = vunpack.c.l.b16 %v2014
    %v3039 = vpack.c.b16 %v2528, %v2527
    %v3040 = vpack.c.b16 %v2530, %v2529
    %v3041 = vpack.c.b16 %v2532, %v2531
    %v3042 = vpack.c.b16 %v2534, %v2533
    %v3043 = vpack.c.b16 %v2536, %v2535
    %v3044 = vpack.c.b16 %v2538, %v2537
    %v3045 = vpack.c.b16 %v2540, %v2539
    %v3046 = vpack.c.b16 %v2542, %v2541
    %v3047 = vpack.c.b16 %v2544, %v2543
    %v3048 = vpack.c.b16 %v2546, %v2545
    %v3049 = vpack.c.b16 %v2548, %v2547
    %v3050 = vpack.c.b16 %v2550, %v2549
    %v3051 = vpack.c.b16 %v2552, %v2551
    %v3052 = vpack.c.b16 %v2554, %v2553
    %v3053 = vpack.c.b16 %v2556, %v2555
    %v3054 = vpack.c.b16 %v2558, %v2557
    %v3055 = vpack.c.b16 %v2560, %v2559
    %v3056 = vpack.c.b16 %v2562, %v2561
    %v3057 = vpack.c.b16 %v2564, %v2563
    %v3058 = vpack.c.b16 %v2566, %v2565
    %v3059 = vpack.c.b16 %v2568, %v2567
    %v3060 = vpack.c.b16 %v2570, %v2569
    %v3061 = vpack.c.b16 %v2572, %v2571
    %v3062 = vpack.c.b16 %v2574, %v2573
    %v3063 = vpack.c.b16 %v2576, %v2575
    %v3064 = vpack.c.b16 %v2578, %v2577
    %v3065 = vpack.c.b16 %v2580, %v2579
    %v3066 = vpack.c.b16 %v2582, %v2581
    %v3067 = vpack.c.b16 %v2584, %v2583
    %v3068 = vpack.c.b16 %v2586, %v2585
    %v3069 = vpack.c.b16 %v2588, %v2587
    %v3070 = vpack.c.b16 %v2590, %v2589
    %v3071 = vpack.c.b16 %v2592, %v2591
    %v3072 = vpack.c.b16 %v2594, %v2593
    %v3073 = vpack.c.b16 %v2596, %v2595
    %v3074 = vpack.c.b16 %v2598, %v2597
    %v3075 = vpack.c.b16 %v2600, %v2599
    %v3076 = vpack.c.b16 %v2602, %v2601
    %v3077 = vpack.c.b16 %v2604, %v2603
    %v3078 = vpack.c.b16 %v2606, %v2605
    %v3079 = vpack.c.b16 %v2608, %v2607
    %v3080 = vpack.c.b16 %v2610, %v2609
    %v3081 = vpack.c.b16 %v2612, %v2611
    %v3082 = vpack.c.b16 %v2614, %v2613
    %v3083 = vpack.c.b16 %v2616, %v2615
    %v3084 = vpack.c.b16 %v2618, %v2617
    %v3085 = vpack.c.b16 %v2620, %v2619
    %v3086 = vpack.c.b16 %v2622, %v2621
    %v3087 = vpack.c.b16 %v2624, %v2623
    %v3088 = vpack.c.b16 %v2626, %v2625
    %v3089 = vpack.c.b16 %v2628, %v2627
    %v3090 = vpack.c.b16 %v2630, %v2629
    %v3091 = vpack.c.b16 %v2632, %v2631
    %v3092 = vpack.c.b16 %v2634, %v2633
    %v3093 = vpack.c.b16 %v2636, %v2635
    %v3094 = vpack.c.b16 %v2638, %v2637
    %v3095 = vpack.c.b16 %v2640, %v2639
    %v3096 = vpack.c.b16 %v2642, %v2641
    %v3097 = vpack.c.b16 %v2644, %v2643
    %v3098 = vpack.c.b16 %v2646, %v2645
    %v3099 = vpack.c.b16 %v2648, %v2647
    %v3100 = vpack.c.b16 %v2650, %v2649
    %v3101 = vpack.c.b16 %v2652, %v2651
    %v3102 = vpack.c.b16 %v2654, %v2653
    %v3103 = vpack.c.b16 %v2656, %v2655
    %v3104 = vpack.c.b16 %v2658, %v2657
    %v3105 = vpack.c.b16 %v2660, %v2659
    %v3106 = vpack.c.b16 %v2662, %v2661
    %v3107 = vpack.c.b16 %v2664, %v2663
    %v3108 = vpack.c.b16 %v2666, %v2665
    %v3109 = vpack.c.b16 %v2668, %v2667
    %v3110 = vpack.c.b16 %v2670, %v2669
    %v3111 = vpack.c.b16 %v2672, %v2671
    %v3112 = vpack.c.b16 %v2674, %v2673
    %v3113 = vpack.c.b16 %v2676, %v2675
    %v3114 = vpack.c.b16 %v2678, %v2677
    %v3115 = vpack.c.b16 %v2680, %v2679
    %v3116 = vpack.c.b16 %v2682, %v2681
    %v3117 = vpack.c.b16 %v2684, %v2683
    %v3118 = vpack.c.b16 %v2686, %v2685
    %v3119 = vpack.c.b16 %v2688, %v2687
    %v3120 = vpack.c.b16 %v2690, %v2689
    %v3121 = vpack.c.b16 %v2692, %v2691
    %v3122 = vpack.c.b16 %v2694, %v2693
    %v3123 = vpack.c.b16 %v2696, %v2695
    %v3124 = vpack.c.b16 %v2698, %v2697
    %v3125 = vpack.c.b16 %v2700, %v2699
    %v3126 = vpack.c.b16 %v2702, %v2701
    %v3127 = vpack.c.b16 %v2704, %v2703
    %v3128 = vpack.c.b16 %v2706, %v2705
    %v3129 = vpack.c.b16 %v2708, %v2707
    %v3130 = vpack.c.b16 %v2710, %v2709
    %v3131 = vpack.c.b16 %v2712, %v2711
    %v3132 = vpack.c.b16 %v2714, %v2713
    %v3133 = vpack.c.b16 %v2716, %v2715
    %v3134 = vpack.c.b16 %v2718, %v2717
    %v3135 = vpack.c.b16 %v2720, %v2719
    %v3136 = vpack.c.b16 %v2722, %v2721
    %v3137 = vpack.c.b16 %v2724, %v2723
    %v3138 = vpack.c.b16 %v2726, %v2725
    %v3139 = vpack.c.b16 %v2728, %v2727
    %v3140 = vpack.c.b16 %v2730, %v2729
    %v3141 = vpack.c.b16 %v2732, %v2731
    %v3142 = vpack.c.b16 %v2734, %v2733
    %v3143 = vpack.c.b16 %v2736, %v2735
    %v3144 = vpack.c.b16 %v2738, %v2737
    %v3145 = vpack.c.b16 %v2740, %v2739
    %v3146 = vpack.c.b16 %v2742, %v2741
    %v3147 = vpack.c.b16 %v2744, %v2743
    %v3148 = vpack.c.b16 %v2746, %v2745
    %v3149 = vpack.c.b16 %v2748, %v2747
    %v3150 = vpack.c.b16 %v2750, %v2749
    %v3151 = vpack.c.b16 %v2752, %v2751
    %v3152 = vpack.c.b16 %v2754, %v2753
    %v3153 = vpack.c.b16 %v2756, %v2755
    %v3154 = vpack.c.b16 %v2758, %v2757
    %v3155 = vpack.c.b16 %v2760, %v2759
    %v3156 = vpack.c.b16 %v2762, %v2761
    %v3157 = vpack.c.b16 %v2764, %v2763
    %v3158 = vpack.c.b16 %v2766, %v2765
    %v3159 = vpack.c.b16 %v2768, %v2767
    %v3160 = vpack.c.b16 %v2770, %v2769
    %v3161 = vpack.c.b16 %v2772, %v2771
    %v3162 = vpack.c.b16 %v2774, %v2773
    %v3163 = vpack.c.b16 %v2776, %v2775
    %v3164 = vpack.c.b16 %v2778, %v2777
    %v3165 = vpack.c.b16 %v2780, %v2779
    %v3166 = vpack.c.b16 %v2782, %v2781
    %v3167 = vpack.c.b16 %v2784, %v2783
    %v3168 = vpack.c.b16 %v2786, %v2785
    %v3169 = vpack.c.b16 %v2788, %v2787
    %v3170 = vpack.c.b16 %v2790, %v2789
    %v3171 = vpack.c.b16 %v2792, %v2791
    %v3172 = vpack.c.b16 %v2794, %v2793
    %v3173 = vpack.c.b16 %v2796, %v2795
    %v3174 = vpack.c.b16 %v2798, %v2797
    %v3175 = vpack.c.b16 %v2800, %v2799
    %v3176 = vpack.c.b16 %v2802, %v2801
    %v3177 = vpack.c.b16 %v2804, %v2803
    %v3178 = vpack.c.b16 %v2806, %v2805
    %v3179 = vpack.c.b16 %v2808, %v2807
    %v3180 = vpack.c.b16 %v2810, %v2809
    %v3181 = vpack.c.b16 %v2812, %v2811
    %v3182 = vpack.c.b16 %v2814, %v2813
    %v3183 = vpack.c.b16 %v2816, %v2815
    %v3184 = vpack.c.b16 %v2818, %v2817
    %v3185 = vpack.c.b16 %v2820, %v2819
    %v3186 = vpack.c.b16 %v2822, %v2821
    %v3187 = vpack.c.b16 %v2824, %v2823
    %v3188 = vpack.c.b16 %v2826, %v2825
    %v3189 = vpack.c.b16 %v2828, %v2827
    %v3190 = vpack.c.b16 %v2830, %v2829
    %v3191 = vpack.c.b16 %v2832, %v2831
    %v3192 = vpack.c.b16 %v2834, %v2833
    %v3193 = vpack.c.b16 %v2836, %v2835
    %v3194 = vpack.c.b16 %v2838, %v2837
    %v3195 = vpack.c.b16 %v2840, %v2839
    %v3196 = vpack.c.b16 %v2842, %v2841
    %v3197 = vpack.c.b16 %v2844, %v2843
    %v3198 = vpack.c.b16 %v2846, %v2845
    %v3199 = vpack.c.b16 %v2848, %v2847
    %v3200 = vpack.c.b16 %v2850, %v2849
    %v3201 = vpack.c.b16 %v2852, %v2851
    %v3202 = vpack.c.b16 %v2854, %v2853
    %v3203 = vpack.c.b16 %v2856, %v2855
    %v3204 = vpack.c.b16 %v2858, %v2857
    %v3205 = vpack.c.b16 %v2860, %v2859
    %v3206 = vpack.c.b16 %v2862, %v2861
    %v3207 = vpack.c.b16 %v2864, %v2863
    %v3208 = vpack.c.b16 %v2866, %v2865
    %v3209 = vpack.c.b16 %v2868, %v2867
    %v3210 = vpack.c.b16 %v2870, %v2869
    %v3211 = vpack.c.b16 %v2872, %v2871
    %v3212 = vpack.c.b16 %v2874, %v2873
    %v3213 = vpack.c.b16 %v2876, %v2875
    %v3214 = vpack.c.b16 %v2878, %v2877
    %v3215 = vpack.c.b16 %v2880, %v2879
    %v3216 = vpack.c.b16 %v2882, %v2881
    %v3217 = vpack.c.b16 %v2884, %v2883
    %v3218 = vpack.c.b16 %v2886, %v2885
    %v3219 = vpack.c.b16 %v2888, %v2887
    %v3220 = vpack.c.b16 %v2890, %v2889
    %v3221 = vpack.c.b16 %v2892, %v2891
    %v3222 = vpack.c.b16 %v2894, %v2893
    %v3223 = vpack.c.b16 %v2896, %v2895
    %v3224 = vpack.c.b16 %v2898, %v2897
    %v3225 = vpack.c.b16 %v2900, %v2899
    %v3226 = vpack.c.b16 %v2902, %v2901
    %v3227 = vpack.c.b16 %v2904, %v2903
    %v3228 = vpack.c.b16 %v2906, %v2905
    %v3229 = vpack.c.b16 %v2908, %v2907
    %v3230 = vpack.c.b16 %v2910, %v2909
    %v3231 = vpack.c.b16 %v2912, %v2911
    %v3232 = vpack.c.b16 %v2914, %v2913
    %v3233 = vpack.c.b16 %v2916, %v2915
    %v3234 = vpack.c.b16 %v2918, %v2917
    %v3235 = vpack.c.b16 %v2920, %v2919
    %v3236 = vpack.c.b16 %v2922, %v2921
    %v3237 = vpack.c.b16 %v2924, %v2923
    %v3238 = vpack.c.b16 %v2926, %v2925
    %v3239 = vpack.c.b16 %v2928, %v2927
    %v3240 = vpack.c.b16 %v2930, %v2929
    %v3241 = vpack.c.b16 %v2932, %v2931
    %v3242 = vpack.c.b16 %v2934, %v2933
    %v3243 = vpack.c.b16 %v2936, %v2935
    %v3244 = vpack.c.b16 %v2938, %v2937
    %v3245 = vpack.c.b16 %v2940, %v2939
    %v3246 = vpack.c.b16 %v2942, %v2941
    %v3247 = vpack.c.b16 %v2944, %v2943
    %v3248 = vpack.c.b16 %v2946, %v2945
    %v3249 = vpack.c.b16 %v2948, %v2947
    %v3250 = vpack.c.b16 %v2950, %v2949
    %v3251 = vpack.c.b16 %v2952, %v2951
    %v3252 = vpack.c.b16 %v2954, %v2953
    %v3253 = vpack.c.b16 %v2956, %v2955
    %v3254 = vpack.c.b16 %v2958, %v2957
    %v3255 = vpack.c.b16 %v2960, %v2959
    %v3256 = vpack.c.b16 %v2962, %v2961
    %v3257 = vpack.c.b16 %v2964, %v2963
    %v3258 = vpack.c.b16 %v2966, %v2965
    %v3259 = vpack.c.b16 %v2968, %v2967
    %v3260 = vpack.c.b16 %v2970, %v2969
    %v3261 = vpack.c.b16 %v2972, %v2971
    %v3262 = vpack.c.b16 %v2974, %v2973
    %v3263 = vpack.c.b16 %v2976, %v2975
    %v3264 = vpack.c.b16 %v2978, %v2977
    %v3265 = vpack.c.b16 %v2980, %v2979
    %v3266 = vpack.c.b16 %v2982, %v2981
    %v3267 = vpack.c.b16 %v2984, %v2983
    %v3268 = vpack.c.b16 %v2986, %v2985
    %v3269 = vpack.c.b16 %v2988, %v2987
    %v3270 = vpack.c.b16 %v2990, %v2989
    %v3271 = vpack.c.b16 %v2992, %v2991
    %v3272 = vpack.c.b16 %v2994, %v2993
    %v3273 = vpack.c.b16 %v2996, %v2995
    %v3274 = vpack.c.b16 %v2998, %v2997
    %v3275 = vpack.c.b16 %v3000, %v2999
    %v3276 = vpack.c.b16 %v3002, %v3001
    %v3277 = vpack.c.b16 %v3004, %v3003
    %v3278 = vpack.c.b16 %v3006, %v3005
    %v3279 = vpack.c.b16 %v3008, %v3007
    %v3280 = vpack.c.b16 %v3010, %v3009
    %v3281 = vpack.c.b16 %v3012, %v3011
    %v3282 = vpack.c.b16 %v3014, %v3013
    %v3283 = vpack.c.b16 %v3016, %v3015
    %v3284 = vpack.c.b16 %v3018, %v3017
    %v3285 = vpack.c.b16 %v3020, %v3019
    %v3286 = vpack.c.b16 %v3022, %v3021
    %v3287 = vpack.c.b16 %v3024, %v3023
    %v3288 = vpack.c.b16 %v3026, %v3025
    %v3289 = vpack.c.b16 %v3028, %v3027
    %v3290 = vpack.c.b16 %v3030, %v3029
    %v3291 = vpack.c.b16 %v3032, %v3031
    %v3292 = vpack.c.b16 %v3034, %v3033
    %v3293 = vpack.c.b16 %v3036, %v3035
    %v3294 = vpack.c.b16 %v3038, %v3037
    %3551 = vmatprep.subr.bf16.mxu0 0
    %3552 = vmatpush1.bf16.msra.mxu0 %v3046
    %3553 = vmatprep.subr.bf16.mxu0 0
    %3554 = vmatpush1.bf16.msra.mxu0 %v3045
    %3555 = vmatprep.subr.bf16.mxu0 0
    %3556 = vmatpush1.bf16.msra.mxu0 %v3044
    %3557 = vmatprep.subr.bf16.mxu0 0
    %3558 = vmatpush1.bf16.msra.mxu0 %v3043
    %3559 = vmatprep.subr.bf16.mxu0 0
    %3560 = vmatpush1.bf16.msra.mxu0 %v3042
    %3561 = vmatprep.subr.bf16.mxu0 0
    %3562 = vmatpush1.bf16.msra.mxu0 %v3041
    %3563 = vmatprep.subr.bf16.mxu0 0
    %3564 = vmatpush1.bf16.msra.mxu0 %v3040
    %3565 = vmatprep.subr.bf16.mxu0 0
    %3566 = vmatpush1.bf16.msra.mxu0 %v3039
    %3567 = vmatprep.subr.bf16.mxu0 0
    %3568 = vmatpush2.bf16.msra.mxu0 %v3054
    %3569 = vmatprep.subr.bf16.mxu0 0
    %3570 = vmatpush2.bf16.msra.mxu0 %v3053
    %3571 = vmatprep.subr.bf16.mxu0 0
    %3572 = vmatpush2.bf16.msra.mxu0 %v3052
    %3573 = vmatprep.subr.bf16.mxu0 0
    %3574 = vmatpush2.bf16.msra.mxu0 %v3051
    %3575 = vmatprep.subr.bf16.mxu0 0
    %3576 = vmatpush2.bf16.msra.mxu0 %v3050
    %3577 = vmatprep.subr.bf16.mxu0 0
    %3578 = vmatpush2.bf16.msra.mxu0 %v3049
    %3579 = vmatprep.subr.bf16.mxu0 0
    %3580 = vmatpush2.bf16.msra.mxu0 %v3048
    %3581 = vmatprep.subr.bf16.mxu0 0
    %3582 = vmatpush2.bf16.msra.mxu0 %v3047
    %3583 = vmatprep.mubr.bf16.mxu0 %v1472
    %3584 = vmatmul.mubr.bf16.gmra.mxu0 %v1471
    %v3585 = vpop.f32.mrf.mxu0
    %v3586 = vadd.f32 0.0, %v3585
    %v3587 = vpop.f32.mrf.mxu0
    %v3588 = vpop.f32.mrf.mxu0
    %v3589 = vpop.f32.mrf.mxu0
    %3590 = vdwg.mxu0
    %3591 = vmatprep.subr.bf16.mxu0 0
    %3592 = vmatpush1.bf16.msra.mxu0 %v3062
    %3593 = vmatprep.subr.bf16.mxu0 0
    %3594 = vmatpush1.bf16.msra.mxu0 %v3061
    %3595 = vmatprep.subr.bf16.mxu0 0
    %3596 = vmatpush1.bf16.msra.mxu0 %v3060
    %3597 = vmatprep.subr.bf16.mxu0 0
    %3598 = vmatpush1.bf16.msra.mxu0 %v3059
    %3599 = vmatprep.subr.bf16.mxu0 0
    %3600 = vmatpush1.bf16.msra.mxu0 %v3058
    %3601 = vmatprep.subr.bf16.mxu0 0
    %3602 = vmatpush1.bf16.msra.mxu0 %v3057
    %3603 = vmatprep.subr.bf16.mxu0 0
    %3604 = vmatpush1.bf16.msra.mxu0 %v3056
    %3605 = vmatprep.subr.bf16.mxu0 0
    %3606 = vmatpush1.bf16.msra.mxu0 %v3055
    %3607 = vmatprep.subr.bf16.mxu0 0
    %3608 = vmatpush2.bf16.msra.mxu0 %v3070
    %3609 = vmatprep.subr.bf16.mxu0 0
    %3610 = vmatpush2.bf16.msra.mxu0 %v3069
    %3611 = vmatprep.subr.bf16.mxu0 0
    %3612 = vmatpush2.bf16.msra.mxu0 %v3068
    %3613 = vmatprep.subr.bf16.mxu0 0
    %3614 = vmatpush2.bf16.msra.mxu0 %v3067
    %3615 = vmatprep.subr.bf16.mxu0 0
    %3616 = vmatpush2.bf16.msra.mxu0 %v3066
    %3617 = vmatprep.subr.bf16.mxu0 0
    %3618 = vmatpush2.bf16.msra.mxu0 %v3065
    %3619 = vmatprep.subr.bf16.mxu0 0
    %3620 = vmatpush2.bf16.msra.mxu0 %v3064
    %3621 = vmatprep.subr.bf16.mxu0 0
    %3622 = vmatpush2.bf16.msra.mxu0 %v3063
    %3623 = vmatprep.mubr.bf16.mxu0 %v1474
    %3624 = vmatmul.mubr.bf16.gmra.mxu0 %v1473
    %v3625 = vpop.f32.mrf.mxu0
    %v3626 = vadd.f32 %v3586, %v3625
    %v3627 = vpop.f32.mrf.mxu0
    %v3628 = vpop.f32.mrf.mxu0
    %v3629 = vpop.f32.mrf.mxu0
    %3630 = vdwg.mxu0
    %3631 = vmatprep.subr.bf16.mxu0 0
    %3632 = vmatpush1.bf16.msra.mxu0 %v3078
    %3633 = vmatprep.subr.bf16.mxu0 0
    %3634 = vmatpush1.bf16.msra.mxu0 %v3077
    %3635 = vmatprep.subr.bf16.mxu0 0
    %3636 = vmatpush1.bf16.msra.mxu0 %v3076
    %3637 = vmatprep.subr.bf16.mxu0 0
    %3638 = vmatpush1.bf16.msra.mxu0 %v3075
    %3639 = vmatprep.subr.bf16.mxu0 0
    %3640 = vmatpush1.bf16.msra.mxu0 %v3074
    %3641 = vmatprep.subr.bf16.mxu0 0
    %3642 = vmatpush1.bf16.msra.mxu0 %v3073
    %3643 = vmatprep.subr.bf16.mxu0 0
    %3644 = vmatpush1.bf16.msra.mxu0 %v3072
    %3645 = vmatprep.subr.bf16.mxu0 0
    %3646 = vmatpush1.bf16.msra.mxu0 %v3071
    %3647 = vmatprep.subr.bf16.mxu0 0
    %3648 = vmatpush2.bf16.msra.mxu0 %v3086
    %3649 = vmatprep.subr.bf16.mxu0 0
    %3650 = vmatpush2.bf16.msra.mxu0 %v3085
    %3651 = vmatprep.subr.bf16.mxu0 0
    %3652 = vmatpush2.bf16.msra.mxu0 %v3084
    %3653 = vmatprep.subr.bf16.mxu0 0
    %3654 = vmatpush2.bf16.msra.mxu0 %v3083
    %3655 = vmatprep.subr.bf16.mxu0 0
    %3656 = vmatpush2.bf16.msra.mxu0 %v3082
    %3657 = vmatprep.subr.bf16.mxu0 0
    %3658 = vmatpush2.bf16.msra.mxu0 %v3081
    %3659 = vmatprep.subr.bf16.mxu0 0
    %3660 = vmatpush2.bf16.msra.mxu0 %v3080
    %3661 = vmatprep.subr.bf16.mxu0 0
    %3662 = vmatpush2.bf16.msra.mxu0 %v3079
    %3663 = vmatprep.mubr.bf16.mxu0 %v1476
    %3664 = vmatmul.mubr.bf16.gmra.mxu0 %v1475
    %v3665 = vpop.f32.mrf.mxu0
    %v3666 = vadd.f32 %v3626, %v3665
    %v3667 = vpop.f32.mrf.mxu0
    %v3668 = vpop.f32.mrf.mxu0
    %v3669 = vpop.f32.mrf.mxu0
    %3670 = vdwg.mxu0
    %3671 = vmatprep.subr.bf16.mxu0 0
    %3672 = vmatpush1.bf16.msra.mxu0 %v3094
    %3673 = vmatprep.subr.bf16.mxu0 0
    %3674 = vmatpush1.bf16.msra.mxu0 %v3093
    %3675 = vmatprep.subr.bf16.mxu0 0
    %3676 = vmatpush1.bf16.msra.mxu0 %v3092
    %3677 = vmatprep.subr.bf16.mxu0 0
    %3678 = vmatpush1.bf16.msra.mxu0 %v3091
    %3679 = vmatprep.subr.bf16.mxu0 0
    %3680 = vmatpush1.bf16.msra.mxu0 %v3090
    %3681 = vmatprep.subr.bf16.mxu0 0
    %3682 = vmatpush1.bf16.msra.mxu0 %v3089
    %3683 = vmatprep.subr.bf16.mxu0 0
    %3684 = vmatpush1.bf16.msra.mxu0 %v3088
    %3685 = vmatprep.subr.bf16.mxu0 0
    %3686 = vmatpush1.bf16.msra.mxu0 %v3087
    %3687 = vmatprep.subr.bf16.mxu0 0
    %3688 = vmatpush2.bf16.msra.mxu0 %v3102
    %3689 = vmatprep.subr.bf16.mxu0 0
    %3690 = vmatpush2.bf16.msra.mxu0 %v3101
    %3691 = vmatprep.subr.bf16.mxu0 0
    %3692 = vmatpush2.bf16.msra.mxu0 %v3100
    %3693 = vmatprep.subr.bf16.mxu0 0
    %3694 = vmatpush2.bf16.msra.mxu0 %v3099
    %3695 = vmatprep.subr.bf16.mxu0 0
    %3696 = vmatpush2.bf16.msra.mxu0 %v3098
    %3697 = vmatprep.subr.bf16.mxu0 0
    %3698 = vmatpush2.bf16.msra.mxu0 %v3097
    %3699 = vmatprep.subr.bf16.mxu0 0
    %3700 = vmatpush2.bf16.msra.mxu0 %v3096
    %3701 = vmatprep.subr.bf16.mxu0 0
    %3702 = vmatpush2.bf16.msra.mxu0 %v3095
    %3703 = vmatprep.mubr.bf16.mxu0 %v1478
    %3704 = vmatmul.mubr.bf16.gmra.mxu0 %v1477
    %v3705 = vpop.f32.mrf.mxu0
    %v3706 = vadd.f32 %v3666, %v3705
    %v3707 = vpop.f32.mrf.mxu0
    %v3708 = vpop.f32.mrf.mxu0
    %v3709 = vpop.f32.mrf.mxu0
    %3710 = vdwg.mxu0
    %3711 = vmatprep.subr.bf16.mxu0 0
    %3712 = vmatpush1.bf16.msra.mxu0 %v3110
    %3713 = vmatprep.subr.bf16.mxu0 0
    %3714 = vmatpush1.bf16.msra.mxu0 %v3109
    %3715 = vmatprep.subr.bf16.mxu0 0
    %3716 = vmatpush1.bf16.msra.mxu0 %v3108
    %3717 = vmatprep.subr.bf16.mxu0 0
    %3718 = vmatpush1.bf16.msra.mxu0 %v3107
    %3719 = vmatprep.subr.bf16.mxu0 0
    %3720 = vmatpush1.bf16.msra.mxu0 %v3106
    %3721 = vmatprep.subr.bf16.mxu0 0
    %3722 = vmatpush1.bf16.msra.mxu0 %v3105
    %3723 = vmatprep.subr.bf16.mxu0 0
    %3724 = vmatpush1.bf16.msra.mxu0 %v3104
    %3725 = vmatprep.subr.bf16.mxu0 0
    %3726 = vmatpush1.bf16.msra.mxu0 %v3103
    %3727 = vmatprep.subr.bf16.mxu0 0
    %3728 = vmatpush2.bf16.msra.mxu0 %v3118
    %3729 = vmatprep.subr.bf16.mxu0 0
    %3730 = vmatpush2.bf16.msra.mxu0 %v3117
    %3731 = vmatprep.subr.bf16.mxu0 0
    %3732 = vmatpush2.bf16.msra.mxu0 %v3116
    %3733 = vmatprep.subr.bf16.mxu0 0
    %3734 = vmatpush2.bf16.msra.mxu0 %v3115
    %3735 = vmatprep.subr.bf16.mxu0 0
    %3736 = vmatpush2.bf16.msra.mxu0 %v3114
    %3737 = vmatprep.subr.bf16.mxu0 0
    %3738 = vmatpush2.bf16.msra.mxu0 %v3113
    %3739 = vmatprep.subr.bf16.mxu0 0
    %3740 = vmatpush2.bf16.msra.mxu0 %v3112
    %3741 = vmatprep.subr.bf16.mxu0 0
    %3742 = vmatpush2.bf16.msra.mxu0 %v3111
    %3743 = vmatprep.mubr.bf16.mxu0 %v1480
    %3744 = vmatmul.mubr.bf16.gmra.mxu0 %v1479
    %v3745 = vpop.f32.mrf.mxu0
    %v3746 = vadd.f32 %v3706, %v3745
    %v3747 = vpop.f32.mrf.mxu0
    %v3748 = vpop.f32.mrf.mxu0
    %v3749 = vpop.f32.mrf.mxu0
    %3750 = vdwg.mxu0
    %3751 = vmatprep.subr.bf16.mxu0 0
    %3752 = vmatpush1.bf16.msra.mxu0 %v3126
    %3753 = vmatprep.subr.bf16.mxu0 0
    %3754 = vmatpush1.bf16.msra.mxu0 %v3125
    %3755 = vmatprep.subr.bf16.mxu0 0
    %3756 = vmatpush1.bf16.msra.mxu0 %v3124
    %3757 = vmatprep.subr.bf16.mxu0 0
    %3758 = vmatpush1.bf16.msra.mxu0 %v3123
    %3759 = vmatprep.subr.bf16.mxu0 0
    %3760 = vmatpush1.bf16.msra.mxu0 %v3122
    %3761 = vmatprep.subr.bf16.mxu0 0
    %3762 = vmatpush1.bf16.msra.mxu0 %v3121
    %3763 = vmatprep.subr.bf16.mxu0 0
    %3764 = vmatpush1.bf16.msra.mxu0 %v3120
    %3765 = vmatprep.subr.bf16.mxu0 0
    %3766 = vmatpush1.bf16.msra.mxu0 %v3119
    %3767 = vmatprep.subr.bf16.mxu0 0
    %3768 = vmatpush2.bf16.msra.mxu0 %v3134
    %3769 = vmatprep.subr.bf16.mxu0 0
    %3770 = vmatpush2.bf16.msra.mxu0 %v3133
    %3771 = vmatprep.subr.bf16.mxu0 0
    %3772 = vmatpush2.bf16.msra.mxu0 %v3132
    %3773 = vmatprep.subr.bf16.mxu0 0
    %3774 = vmatpush2.bf16.msra.mxu0 %v3131
    %3775 = vmatprep.subr.bf16.mxu0 0
    %3776 = vmatpush2.bf16.msra.mxu0 %v3130
    %3777 = vmatprep.subr.bf16.mxu0 0
    %3778 = vmatpush2.bf16.msra.mxu0 %v3129
    %3779 = vmatprep.subr.bf16.mxu0 0
    %3780 = vmatpush2.bf16.msra.mxu0 %v3128
    %3781 = vmatprep.subr.bf16.mxu0 0
    %3782 = vmatpush2.bf16.msra.mxu0 %v3127
    %3783 = vmatprep.mubr.bf16.mxu0 %v1482
    %3784 = vmatmul.mubr.bf16.gmra.mxu0 %v1481
    %v3785 = vpop.f32.mrf.mxu0
    %v3786 = vadd.f32 %v3746, %v3785
    %v3787 = vpop.f32.mrf.mxu0
    %v3788 = vpop.f32.mrf.mxu0
    %v3789 = vpop.f32.mrf.mxu0
    %3790 = vdwg.mxu0
    %3791 = vmatprep.subr.bf16.mxu0 0
    %3792 = vmatpush1.bf16.msra.mxu0 %v3142
    %3793 = vmatprep.subr.bf16.mxu0 0
    %3794 = vmatpush1.bf16.msra.mxu0 %v3141
    %3795 = vmatprep.subr.bf16.mxu0 0
    %3796 = vmatpush1.bf16.msra.mxu0 %v3140
    %3797 = vmatprep.subr.bf16.mxu0 0
    %3798 = vmatpush1.bf16.msra.mxu0 %v3139
    %3799 = vmatprep.subr.bf16.mxu0 0
    %3800 = vmatpush1.bf16.msra.mxu0 %v3138
    %3801 = vmatprep.subr.bf16.mxu0 0
    %3802 = vmatpush1.bf16.msra.mxu0 %v3137
    %3803 = vmatprep.subr.bf16.mxu0 0
    %3804 = vmatpush1.bf16.msra.mxu0 %v3136
    %3805 = vmatprep.subr.bf16.mxu0 0
    %3806 = vmatpush1.bf16.msra.mxu0 %v3135
    %3807 = vmatprep.subr.bf16.mxu0 0
    %3808 = vmatpush2.bf16.msra.mxu0 %v3150
    %3809 = vmatprep.subr.bf16.mxu0 0
    %3810 = vmatpush2.bf16.msra.mxu0 %v3149
    %3811 = vmatprep.subr.bf16.mxu0 0
    %3812 = vmatpush2.bf16.msra.mxu0 %v3148
    %3813 = vmatprep.subr.bf16.mxu0 0
    %3814 = vmatpush2.bf16.msra.mxu0 %v3147
    %3815 = vmatprep.subr.bf16.mxu0 0
    %3816 = vmatpush2.bf16.msra.mxu0 %v3146
    %3817 = vmatprep.subr.bf16.mxu0 0
    %3818 = vmatpush2.bf16.msra.mxu0 %v3145
    %3819 = vmatprep.subr.bf16.mxu0 0
    %3820 = vmatpush2.bf16.msra.mxu0 %v3144
    %3821 = vmatprep.subr.bf16.mxu0 0
    %3822 = vmatpush2.bf16.msra.mxu0 %v3143
    %3823 = vmatprep.mubr.bf16.mxu0 %v1484
    %3824 = vmatmul.mubr.bf16.gmra.mxu0 %v1483
    %v3825 = vpop.f32.mrf.mxu0
    %v3826 = vadd.f32 %v3786, %v3825
    %v3827 = vpop.f32.mrf.mxu0
    %v3828 = vpop.f32.mrf.mxu0
    %v3829 = vpop.f32.mrf.mxu0
    %3830 = vdwg.mxu0
    %3831 = vmatprep.subr.bf16.mxu0 0
    %3832 = vmatpush1.bf16.msra.mxu0 %v3158
    %3833 = vmatprep.subr.bf16.mxu0 0
    %3834 = vmatpush1.bf16.msra.mxu0 %v3157
    %3835 = vmatprep.subr.bf16.mxu0 0
    %3836 = vmatpush1.bf16.msra.mxu0 %v3156
    %3837 = vmatprep.subr.bf16.mxu0 0
    %3838 = vmatpush1.bf16.msra.mxu0 %v3155
    %3839 = vmatprep.subr.bf16.mxu0 0
    %3840 = vmatpush1.bf16.msra.mxu0 %v3154
    %3841 = vmatprep.subr.bf16.mxu0 0
    %3842 = vmatpush1.bf16.msra.mxu0 %v3153
    %3843 = vmatprep.subr.bf16.mxu0 0
    %3844 = vmatpush1.bf16.msra.mxu0 %v3152
    %3845 = vmatprep.subr.bf16.mxu0 0
    %3846 = vmatpush1.bf16.msra.mxu0 %v3151
    %3847 = vmatprep.subr.bf16.mxu0 0
    %3848 = vmatpush2.bf16.msra.mxu0 %v3166
    %3849 = vmatprep.subr.bf16.mxu0 0
    %3850 = vmatpush2.bf16.msra.mxu0 %v3165
    %3851 = vmatprep.subr.bf16.mxu0 0
    %3852 = vmatpush2.bf16.msra.mxu0 %v3164
    %3853 = vmatprep.subr.bf16.mxu0 0
    %3854 = vmatpush2.bf16.msra.mxu0 %v3163
    %3855 = vmatprep.subr.bf16.mxu0 0
    %3856 = vmatpush2.bf16.msra.mxu0 %v3162
    %3857 = vmatprep.subr.bf16.mxu0 0
    %3858 = vmatpush2.bf16.msra.mxu0 %v3161
    %3859 = vmatprep.subr.bf16.mxu0 0
    %3860 = vmatpush2.bf16.msra.mxu0 %v3160
    %3861 = vmatprep.subr.bf16.mxu0 0
    %3862 = vmatpush2.bf16.msra.mxu0 %v3159
    %3863 = vmatprep.mubr.bf16.mxu0 %v1486
    %3864 = vmatmul.mubr.bf16.gmra.mxu0 %v1485
    %v3865 = vpop.f32.mrf.mxu0
    %v3866 = vadd.f32 %v3826, %v3865
    %v3867 = vpop.f32.mrf.mxu0
    %v3868 = vpop.f32.mrf.mxu0
    %v3869 = vpop.f32.mrf.mxu0
    %3870 = vdwg.mxu0
    %3871 = vmatprep.subr.bf16.mxu0 0
    %3872 = vmatpush1.bf16.msra.mxu0 %v3174
    %3873 = vmatprep.subr.bf16.mxu0 0
    %3874 = vmatpush1.bf16.msra.mxu0 %v3173
    %3875 = vmatprep.subr.bf16.mxu0 0
    %3876 = vmatpush1.bf16.msra.mxu0 %v3172
    %3877 = vmatprep.subr.bf16.mxu0 0
    %3878 = vmatpush1.bf16.msra.mxu0 %v3171
    %3879 = vmatprep.subr.bf16.mxu0 0
    %3880 = vmatpush1.bf16.msra.mxu0 %v3170
    %3881 = vmatprep.subr.bf16.mxu0 0
    %3882 = vmatpush1.bf16.msra.mxu0 %v3169
    %3883 = vmatprep.subr.bf16.mxu0 0
    %3884 = vmatpush1.bf16.msra.mxu0 %v3168
    %3885 = vmatprep.subr.bf16.mxu0 0
    %3886 = vmatpush1.bf16.msra.mxu0 %v3167
    %3887 = vmatprep.subr.bf16.mxu0 0
    %3888 = vmatpush2.bf16.msra.mxu0 %v3182
    %3889 = vmatprep.subr.bf16.mxu0 0
    %3890 = vmatpush2.bf16.msra.mxu0 %v3181
    %3891 = vmatprep.subr.bf16.mxu0 0
    %3892 = vmatpush2.bf16.msra.mxu0 %v3180
    %3893 = vmatprep.subr.bf16.mxu0 0
    %3894 = vmatpush2.bf16.msra.mxu0 %v3179
    %3895 = vmatprep.subr.bf16.mxu0 0
    %3896 = vmatpush2.bf16.msra.mxu0 %v3178
    %3897 = vmatprep.subr.bf16.mxu0 0
    %3898 = vmatpush2.bf16.msra.mxu0 %v3177
    %3899 = vmatprep.subr.bf16.mxu0 0
    %3900 = vmatpush2.bf16.msra.mxu0 %v3176
    %3901 = vmatprep.subr.bf16.mxu0 0
    %3902 = vmatpush2.bf16.msra.mxu0 %v3175
    %3903 = vmatprep.mubr.bf16.mxu0 %v1488
    %3904 = vmatmul.mubr.bf16.gmra.mxu0 %v1487
    %v3905 = vpop.f32.mrf.mxu0
    %v3906 = vadd.f32 %v3866, %v3905
    %v3907 = vpop.f32.mrf.mxu0
    %v3908 = vpop.f32.mrf.mxu0
    %v3909 = vpop.f32.mrf.mxu0
    %3910 = vdwg.mxu0
    %3911 = vmatprep.subr.bf16.mxu0 0
    %3912 = vmatpush1.bf16.msra.mxu0 %v3190
    %3913 = vmatprep.subr.bf16.mxu0 0
    %3914 = vmatpush1.bf16.msra.mxu0 %v3189
    %3915 = vmatprep.subr.bf16.mxu0 0
    %3916 = vmatpush1.bf16.msra.mxu0 %v3188
    %3917 = vmatprep.subr.bf16.mxu0 0
    %3918 = vmatpush1.bf16.msra.mxu0 %v3187
    %3919 = vmatprep.subr.bf16.mxu0 0
    %3920 = vmatpush1.bf16.msra.mxu0 %v3186
    %3921 = vmatprep.subr.bf16.mxu0 0
    %3922 = vmatpush1.bf16.msra.mxu0 %v3185
    %3923 = vmatprep.subr.bf16.mxu0 0
    %3924 = vmatpush1.bf16.msra.mxu0 %v3184
    %3925 = vmatprep.subr.bf16.mxu0 0
    %3926 = vmatpush1.bf16.msra.mxu0 %v3183
    %3927 = vmatprep.subr.bf16.mxu0 0
    %3928 = vmatpush2.bf16.msra.mxu0 %v3198
    %3929 = vmatprep.subr.bf16.mxu0 0
    %3930 = vmatpush2.bf16.msra.mxu0 %v3197
    %3931 = vmatprep.subr.bf16.mxu0 0
    %3932 = vmatpush2.bf16.msra.mxu0 %v3196
    %3933 = vmatprep.subr.bf16.mxu0 0
    %3934 = vmatpush2.bf16.msra.mxu0 %v3195
    %3935 = vmatprep.subr.bf16.mxu0 0
    %3936 = vmatpush2.bf16.msra.mxu0 %v3194
    %3937 = vmatprep.subr.bf16.mxu0 0
    %3938 = vmatpush2.bf16.msra.mxu0 %v3193
    %3939 = vmatprep.subr.bf16.mxu0 0
    %3940 = vmatpush2.bf16.msra.mxu0 %v3192
    %3941 = vmatprep.subr.bf16.mxu0 0
    %3942 = vmatpush2.bf16.msra.mxu0 %v3191
    %3943 = vmatprep.mubr.bf16.mxu0 %v1490
    %3944 = vmatmul.mubr.bf16.gmra.mxu0 %v1489
    %v3945 = vpop.f32.mrf.mxu0
    %v3946 = vadd.f32 %v3906, %v3945
    %v3947 = vpop.f32.mrf.mxu0
    %v3948 = vpop.f32.mrf.mxu0
    %v3949 = vpop.f32.mrf.mxu0
    %3950 = vdwg.mxu0
    %3951 = vmatprep.subr.bf16.mxu0 0
    %3952 = vmatpush1.bf16.msra.mxu0 %v3206
    %3953 = vmatprep.subr.bf16.mxu0 0
    %3954 = vmatpush1.bf16.msra.mxu0 %v3205
    %3955 = vmatprep.subr.bf16.mxu0 0
    %3956 = vmatpush1.bf16.msra.mxu0 %v3204
    %3957 = vmatprep.subr.bf16.mxu0 0
    %3958 = vmatpush1.bf16.msra.mxu0 %v3203
    %3959 = vmatprep.subr.bf16.mxu0 0
    %3960 = vmatpush1.bf16.msra.mxu0 %v3202
    %3961 = vmatprep.subr.bf16.mxu0 0
    %3962 = vmatpush1.bf16.msra.mxu0 %v3201
    %3963 = vmatprep.subr.bf16.mxu0 0
    %3964 = vmatpush1.bf16.msra.mxu0 %v3200
    %3965 = vmatprep.subr.bf16.mxu0 0
    %3966 = vmatpush1.bf16.msra.mxu0 %v3199
    %3967 = vmatprep.subr.bf16.mxu0 0
    %3968 = vmatpush2.bf16.msra.mxu0 %v3214
    %3969 = vmatprep.subr.bf16.mxu0 0
    %3970 = vmatpush2.bf16.msra.mxu0 %v3213
    %3971 = vmatprep.subr.bf16.mxu0 0
    %3972 = vmatpush2.bf16.msra.mxu0 %v3212
    %3973 = vmatprep.subr.bf16.mxu0 0
    %3974 = vmatpush2.bf16.msra.mxu0 %v3211
    %3975 = vmatprep.subr.bf16.mxu0 0
    %3976 = vmatpush2.bf16.msra.mxu0 %v3210
    %3977 = vmatprep.subr.bf16.mxu0 0
    %3978 = vmatpush2.bf16.msra.mxu0 %v3209
    %3979 = vmatprep.subr.bf16.mxu0 0
    %3980 = vmatpush2.bf16.msra.mxu0 %v3208
    %3981 = vmatprep.subr.bf16.mxu0 0
    %3982 = vmatpush2.bf16.msra.mxu0 %v3207
    %3983 = vmatprep.mubr.bf16.mxu0 %v1492
    %3984 = vmatmul.mubr.bf16.gmra.mxu0 %v1491
    %v3985 = vpop.f32.mrf.mxu0
    %v3986 = vadd.f32 %v3946, %v3985
    %v3987 = vpop.f32.mrf.mxu0
    %v3988 = vpop.f32.mrf.mxu0
    %v3989 = vpop.f32.mrf.mxu0
    %3990 = vdwg.mxu0
    %3991 = vmatprep.subr.bf16.mxu0 0
    %3992 = vmatpush1.bf16.msra.mxu0 %v3222
    %3993 = vmatprep.subr.bf16.mxu0 0
    %3994 = vmatpush1.bf16.msra.mxu0 %v3221
    %3995 = vmatprep.subr.bf16.mxu0 0
    %3996 = vmatpush1.bf16.msra.mxu0 %v3220
    %3997 = vmatprep.subr.bf16.mxu0 0
    %3998 = vmatpush1.bf16.msra.mxu0 %v3219
    %3999 = vmatprep.subr.bf16.mxu0 0
    %4000 = vmatpush1.bf16.msra.mxu0 %v3218
    %4001 = vmatprep.subr.bf16.mxu0 0
    %4002 = vmatpush1.bf16.msra.mxu0 %v3217
    %4003 = vmatprep.subr.bf16.mxu0 0
    %4004 = vmatpush1.bf16.msra.mxu0 %v3216
    %4005 = vmatprep.subr.bf16.mxu0 0
    %4006 = vmatpush1.bf16.msra.mxu0 %v3215
    %4007 = vmatprep.subr.bf16.mxu0 0
    %4008 = vmatpush2.bf16.msra.mxu0 %v3230
    %4009 = vmatprep.subr.bf16.mxu0 0
    %4010 = vmatpush2.bf16.msra.mxu0 %v3229
    %4011 = vmatprep.subr.bf16.mxu0 0
    %4012 = vmatpush2.bf16.msra.mxu0 %v3228
    %4013 = vmatprep.subr.bf16.mxu0 0
    %4014 = vmatpush2.bf16.msra.mxu0 %v3227
    %4015 = vmatprep.subr.bf16.mxu0 0
    %4016 = vmatpush2.bf16.msra.mxu0 %v3226
    %4017 = vmatprep.subr.bf16.mxu0 0
    %4018 = vmatpush2.bf16.msra.mxu0 %v3225
    %4019 = vmatprep.subr.bf16.mxu0 0
    %4020 = vmatpush2.bf16.msra.mxu0 %v3224
    %4021 = vmatprep.subr.bf16.mxu0 0
    %4022 = vmatpush2.bf16.msra.mxu0 %v3223
    %4023 = vmatprep.mubr.bf16.mxu0 %v1494
    %4024 = vmatmul.mubr.bf16.gmra.mxu0 %v1493
    %v4025 = vpop.f32.mrf.mxu0
    %v4026 = vadd.f32 %v3986, %v4025
    %v4027 = vpop.f32.mrf.mxu0
    %v4028 = vpop.f32.mrf.mxu0
    %v4029 = vpop.f32.mrf.mxu0
    %4030 = vdwg.mxu0
    %4031 = vmatprep.subr.bf16.mxu0 0
    %4032 = vmatpush1.bf16.msra.mxu0 %v3238
    %4033 = vmatprep.subr.bf16.mxu0 0
    %4034 = vmatpush1.bf16.msra.mxu0 %v3237
    %4035 = vmatprep.subr.bf16.mxu0 0
    %4036 = vmatpush1.bf16.msra.mxu0 %v3236
    %4037 = vmatprep.subr.bf16.mxu0 0
    %4038 = vmatpush1.bf16.msra.mxu0 %v3235
    %4039 = vmatprep.subr.bf16.mxu0 0
    %4040 = vmatpush1.bf16.msra.mxu0 %v3234
    %4041 = vmatprep.subr.bf16.mxu0 0
    %4042 = vmatpush1.bf16.msra.mxu0 %v3233
    %4043 = vmatprep.subr.bf16.mxu0 0
    %4044 = vmatpush1.bf16.msra.mxu0 %v3232
    %4045 = vmatprep.subr.bf16.mxu0 0
    %4046 = vmatpush1.bf16.msra.mxu0 %v3231
    %4047 = vmatprep.subr.bf16.mxu0 0
    %4048 = vmatpush2.bf16.msra.mxu0 %v3246
    %4049 = vmatprep.subr.bf16.mxu0 0
    %4050 = vmatpush2.bf16.msra.mxu0 %v3245
    %4051 = vmatprep.subr.bf16.mxu0 0
    %4052 = vmatpush2.bf16.msra.mxu0 %v3244
    %4053 = vmatprep.subr.bf16.mxu0 0
    %4054 = vmatpush2.bf16.msra.mxu0 %v3243
    %4055 = vmatprep.subr.bf16.mxu0 0
    %4056 = vmatpush2.bf16.msra.mxu0 %v3242
    %4057 = vmatprep.subr.bf16.mxu0 0
    %4058 = vmatpush2.bf16.msra.mxu0 %v3241
    %4059 = vmatprep.subr.bf16.mxu0 0
    %4060 = vmatpush2.bf16.msra.mxu0 %v3240
    %4061 = vmatprep.subr.bf16.mxu0 0
    %4062 = vmatpush2.bf16.msra.mxu0 %v3239
    %4063 = vmatprep.mubr.bf16.mxu0 %v1496
    %4064 = vmatmul.mubr.bf16.gmra.mxu0 %v1495
    %v4065 = vpop.f32.mrf.mxu0
    %v4066 = vadd.f32 %v4026, %v4065
    %v4067 = vpop.f32.mrf.mxu0
    %v4068 = vpop.f32.mrf.mxu0
    %v4069 = vpop.f32.mrf.mxu0
    %4070 = vdwg.mxu0
    %4071 = vmatprep.subr.bf16.mxu0 0
    %4072 = vmatpush1.bf16.msra.mxu0 %v3254
    %4073 = vmatprep.subr.bf16.mxu0 0
    %4074 = vmatpush1.bf16.msra.mxu0 %v3253
    %4075 = vmatprep.subr.bf16.mxu0 0
    %4076 = vmatpush1.bf16.msra.mxu0 %v3252
    %4077 = vmatprep.subr.bf16.mxu0 0
    %4078 = vmatpush1.bf16.msra.mxu0 %v3251
    %4079 = vmatprep.subr.bf16.mxu0 0
    %4080 = vmatpush1.bf16.msra.mxu0 %v3250
    %4081 = vmatprep.subr.bf16.mxu0 0
    %4082 = vmatpush1.bf16.msra.mxu0 %v3249
    %4083 = vmatprep.subr.bf16.mxu0 0
    %4084 = vmatpush1.bf16.msra.mxu0 %v3248
    %4085 = vmatprep.subr.bf16.mxu0 0
    %4086 = vmatpush1.bf16.msra.mxu0 %v3247
    %4087 = vmatprep.subr.bf16.mxu0 0
    %4088 = vmatpush2.bf16.msra.mxu0 %v3262
    %4089 = vmatprep.subr.bf16.mxu0 0
    %4090 = vmatpush2.bf16.msra.mxu0 %v3261
    %4091 = vmatprep.subr.bf16.mxu0 0
    %4092 = vmatpush2.bf16.msra.mxu0 %v3260
    %4093 = vmatprep.subr.bf16.mxu0 0
    %4094 = vmatpush2.bf16.msra.mxu0 %v3259
    %4095 = vmatprep.subr.bf16.mxu0 0
    %4096 = vmatpush2.bf16.msra.mxu0 %v3258
    %4097 = vmatprep.subr.bf16.mxu0 0
    %4098 = vmatpush2.bf16.msra.mxu0 %v3257
    %4099 = vmatprep.subr.bf16.mxu0 0
    %4100 = vmatpush2.bf16.msra.mxu0 %v3256
    %4101 = vmatprep.subr.bf16.mxu0 0
    %4102 = vmatpush2.bf16.msra.mxu0 %v3255
    %4103 = vmatprep.mubr.bf16.mxu0 %v1498
    %4104 = vmatmul.mubr.bf16.gmra.mxu0 %v1497
    %v4105 = vpop.f32.mrf.mxu0
    %v4106 = vadd.f32 %v4066, %v4105
    %v4107 = vpop.f32.mrf.mxu0
    %v4108 = vpop.f32.mrf.mxu0
    %v4109 = vpop.f32.mrf.mxu0
    %4110 = vdwg.mxu0
    %4111 = vmatprep.subr.bf16.mxu0 0
    %4112 = vmatpush1.bf16.msra.mxu0 %v3270
    %4113 = vmatprep.subr.bf16.mxu0 0
    %4114 = vmatpush1.bf16.msra.mxu0 %v3269
    %4115 = vmatprep.subr.bf16.mxu0 0
    %4116 = vmatpush1.bf16.msra.mxu0 %v3268
    %4117 = vmatprep.subr.bf16.mxu0 0
    %4118 = vmatpush1.bf16.msra.mxu0 %v3267
    %4119 = vmatprep.subr.bf16.mxu0 0
    %4120 = vmatpush1.bf16.msra.mxu0 %v3266
    %4121 = vmatprep.subr.bf16.mxu0 0
    %4122 = vmatpush1.bf16.msra.mxu0 %v3265
    %4123 = vmatprep.subr.bf16.mxu0 0
    %4124 = vmatpush1.bf16.msra.mxu0 %v3264
    %4125 = vmatprep.subr.bf16.mxu0 0
    %4126 = vmatpush1.bf16.msra.mxu0 %v3263
    %4127 = vmatprep.subr.bf16.mxu0 0
    %4128 = vmatpush2.bf16.msra.mxu0 %v3278
    %4129 = vmatprep.subr.bf16.mxu0 0
    %4130 = vmatpush2.bf16.msra.mxu0 %v3277
    %4131 = vmatprep.subr.bf16.mxu0 0
    %4132 = vmatpush2.bf16.msra.mxu0 %v3276
    %4133 = vmatprep.subr.bf16.mxu0 0
    %4134 = vmatpush2.bf16.msra.mxu0 %v3275
    %4135 = vmatprep.subr.bf16.mxu0 0
    %4136 = vmatpush2.bf16.msra.mxu0 %v3274
    %4137 = vmatprep.subr.bf16.mxu0 0
    %4138 = vmatpush2.bf16.msra.mxu0 %v3273
    %4139 = vmatprep.subr.bf16.mxu0 0
    %4140 = vmatpush2.bf16.msra.mxu0 %v3272
    %4141 = vmatprep.subr.bf16.mxu0 0
    %4142 = vmatpush2.bf16.msra.mxu0 %v3271
    %4143 = vmatprep.mubr.bf16.mxu0 %v1500
    %4144 = vmatmul.mubr.bf16.gmra.mxu0 %v1499
    %v4145 = vpop.f32.mrf.mxu0
    %v4146 = vadd.f32 %v4106, %v4145
    %v4147 = vpop.f32.mrf.mxu0
    %v4148 = vpop.f32.mrf.mxu0
    %v4149 = vpop.f32.mrf.mxu0
    %4150 = vdwg.mxu0
    %4151 = vmatprep.subr.bf16.mxu0 0
    %4152 = vmatpush1.bf16.msra.mxu0 %v3286
    %4153 = vmatprep.subr.bf16.mxu0 0
    %4154 = vmatpush1.bf16.msra.mxu0 %v3285
    %4155 = vmatprep.subr.bf16.mxu0 0
    %4156 = vmatpush1.bf16.msra.mxu0 %v3284
    %4157 = vmatprep.subr.bf16.mxu0 0
    %4158 = vmatpush1.bf16.msra.mxu0 %v3283
    %4159 = vmatprep.subr.bf16.mxu0 0
    %4160 = vmatpush1.bf16.msra.mxu0 %v3282
    %4161 = vmatprep.subr.bf16.mxu0 0
    %4162 = vmatpush1.bf16.msra.mxu0 %v3281
    %4163 = vmatprep.subr.bf16.mxu0 0
    %4164 = vmatpush1.bf16.msra.mxu0 %v3280
    %4165 = vmatprep.subr.bf16.mxu0 0
    %4166 = vmatpush1.bf16.msra.mxu0 %v3279
    %4167 = vmatprep.subr.bf16.mxu0 0
    %4168 = vmatpush2.bf16.msra.mxu0 %v3294
    %4169 = vmatprep.subr.bf16.mxu0 0
    %4170 = vmatpush2.bf16.msra.mxu0 %v3293
    %4171 = vmatprep.subr.bf16.mxu0 0
    %4172 = vmatpush2.bf16.msra.mxu0 %v3292
    %4173 = vmatprep.subr.bf16.mxu0 0
    %4174 = vmatpush2.bf16.msra.mxu0 %v3291
    %4175 = vmatprep.subr.bf16.mxu0 0
    %4176 = vmatpush2.bf16.msra.mxu0 %v3290
    %4177 = vmatprep.subr.bf16.mxu0 0
    %4178 = vmatpush2.bf16.msra.mxu0 %v3289
    %4179 = vmatprep.subr.bf16.mxu0 0
    %4180 = vmatpush2.bf16.msra.mxu0 %v3288
    %4181 = vmatprep.subr.bf16.mxu0 0
    %4182 = vmatpush2.bf16.msra.mxu0 %v3287
    %4183 = vmatprep.mubr.bf16.mxu0 %v1502
    %4184 = vmatmul.mubr.bf16.gmra.mxu0 %v1501
    %v4185 = vpop.f32.mrf.mxu0
    %v4186 = vadd.f32 %v4146, %v4185
    %v4187 = vpop.f32.mrf.mxu0
    %v4188 = vpop.f32.mrf.mxu0
    %v4189 = vpop.f32.mrf.mxu0
    %4190 = vdwg.mxu0
    %v4703 = vunpack.c.l.b16 %v783
    %v4704 = vunpack.c.l.b16 %v784
    %v4705 = vunpack.c.l.b16 %v785
    %v4706 = vunpack.c.l.b16 %v786
    %v4707 = vunpack.c.l.b16 %v787
    %v4708 = vunpack.c.l.b16 %v788
    %v4709 = vunpack.c.l.b16 %v789
    %v4710 = vunpack.c.l.b16 %v790
    %v4711 = vunpack.c.l.b16 %v791
    %v4712 = vunpack.c.l.b16 %v792
    %v4713 = vunpack.c.l.b16 %v793
    %v4714 = vunpack.c.l.b16 %v794
    %v4715 = vunpack.c.l.b16 %v795
    %v4716 = vunpack.c.l.b16 %v796
    %v4717 = vunpack.c.l.b16 %v797
    %v4718 = vunpack.c.l.b16 %v798
    %v4719 = vunpack.c.l.b16 %v799
    %v4720 = vunpack.c.l.b16 %v800
    %v4721 = vunpack.c.l.b16 %v801
    %v4722 = vunpack.c.l.b16 %v802
    %v4723 = vunpack.c.l.b16 %v803
    %v4724 = vunpack.c.l.b16 %v804
    %v4725 = vunpack.c.l.b16 %v805
    %v4726 = vunpack.c.l.b16 %v806
    %v4727 = vunpack.c.l.b16 %v807
    %v4728 = vunpack.c.l.b16 %v808
    %v4729 = vunpack.c.l.b16 %v809
    %v4730 = vunpack.c.l.b16 %v810
    %v4731 = vunpack.c.l.b16 %v811
    %v4732 = vunpack.c.l.b16 %v812
    %v4733 = vunpack.c.l.b16 %v813
    %v4734 = vunpack.c.l.b16 %v814
    %v4735 = vunpack.c.l.b16 %v815
    %v4736 = vunpack.c.l.b16 %v816
    %v4737 = vunpack.c.l.b16 %v817
    %v4738 = vunpack.c.l.b16 %v818
    %v4739 = vunpack.c.l.b16 %v819
    %v4740 = vunpack.c.l.b16 %v820
    %v4741 = vunpack.c.l.b16 %v821
    %v4742 = vunpack.c.l.b16 %v822
    %v4743 = vunpack.c.l.b16 %v823
    %v4744 = vunpack.c.l.b16 %v824
    %v4745 = vunpack.c.l.b16 %v825
    %v4746 = vunpack.c.l.b16 %v826
    %v4747 = vunpack.c.l.b16 %v827
    %v4748 = vunpack.c.l.b16 %v828
    %v4749 = vunpack.c.l.b16 %v829
    %v4750 = vunpack.c.l.b16 %v830
    %v4751 = vunpack.c.l.b16 %v831
    %v4752 = vunpack.c.l.b16 %v832
    %v4753 = vunpack.c.l.b16 %v833
    %v4754 = vunpack.c.l.b16 %v834
    %v4755 = vunpack.c.l.b16 %v835
    %v4756 = vunpack.c.l.b16 %v836
    %v4757 = vunpack.c.l.b16 %v837
    %v4758 = vunpack.c.l.b16 %v838
    %v4759 = vunpack.c.l.b16 %v839
    %v4760 = vunpack.c.l.b16 %v840
    %v4761 = vunpack.c.l.b16 %v841
    %v4762 = vunpack.c.l.b16 %v842
    %v4763 = vunpack.c.l.b16 %v843
    %v4764 = vunpack.c.l.b16 %v844
    %v4765 = vunpack.c.l.b16 %v845
    %v4766 = vunpack.c.l.b16 %v846
    %v4767 = vunpack.c.l.b16 %v847
    %v4768 = vunpack.c.l.b16 %v848
    %v4769 = vunpack.c.l.b16 %v849
    %v4770 = vunpack.c.l.b16 %v850
    %v4771 = vunpack.c.l.b16 %v851
    %v4772 = vunpack.c.l.b16 %v852
    %v4773 = vunpack.c.l.b16 %v853
    %v4774 = vunpack.c.l.b16 %v854
    %v4775 = vunpack.c.l.b16 %v855
    %v4776 = vunpack.c.l.b16 %v856
    %v4777 = vunpack.c.l.b16 %v857
    %v4778 = vunpack.c.l.b16 %v858
    %v4779 = vunpack.c.l.b16 %v859
    %v4780 = vunpack.c.l.b16 %v860
    %v4781 = vunpack.c.l.b16 %v861
    %v4782 = vunpack.c.l.b16 %v862
    %v4783 = vunpack.c.l.b16 %v863
    %v4784 = vunpack.c.l.b16 %v864
    %v4785 = vunpack.c.l.b16 %v865
    %v4786 = vunpack.c.l.b16 %v866
    %v4787 = vunpack.c.l.b16 %v867
    %v4788 = vunpack.c.l.b16 %v868
    %v4789 = vunpack.c.l.b16 %v869
    %v4790 = vunpack.c.l.b16 %v870
    %v4791 = vunpack.c.l.b16 %v871
    %v4792 = vunpack.c.l.b16 %v872
    %v4793 = vunpack.c.l.b16 %v873
    %v4794 = vunpack.c.l.b16 %v874
    %v4795 = vunpack.c.l.b16 %v875
    %v4796 = vunpack.c.l.b16 %v876
    %v4797 = vunpack.c.l.b16 %v877
    %v4798 = vunpack.c.l.b16 %v878
    %v4799 = vunpack.c.l.b16 %v879
    %v4800 = vunpack.c.l.b16 %v880
    %v4801 = vunpack.c.l.b16 %v881
    %v4802 = vunpack.c.l.b16 %v882
    %v4803 = vunpack.c.l.b16 %v883
    %v4804 = vunpack.c.l.b16 %v884
    %v4805 = vunpack.c.l.b16 %v885
    %v4806 = vunpack.c.l.b16 %v886
    %v4807 = vunpack.c.l.b16 %v887
    %v4808 = vunpack.c.l.b16 %v888
    %v4809 = vunpack.c.l.b16 %v889
    %v4810 = vunpack.c.l.b16 %v890
    %v4811 = vunpack.c.l.b16 %v891
    %v4812 = vunpack.c.l.b16 %v892
    %v4813 = vunpack.c.l.b16 %v893
    %v4814 = vunpack.c.l.b16 %v894
    %v4815 = vunpack.c.l.b16 %v895
    %v4816 = vunpack.c.l.b16 %v896
    %v4817 = vunpack.c.l.b16 %v897
    %v4818 = vunpack.c.l.b16 %v898
    %v4819 = vunpack.c.l.b16 %v899
    %v4820 = vunpack.c.l.b16 %v900
    %v4821 = vunpack.c.l.b16 %v901
    %v4822 = vunpack.c.l.b16 %v902
    %v4823 = vunpack.c.l.b16 %v903
    %v4824 = vunpack.c.l.b16 %v904
    %v4825 = vunpack.c.l.b16 %v905
    %v4826 = vunpack.c.l.b16 %v906
    %v4827 = vunpack.c.l.b16 %v907
    %v4828 = vunpack.c.l.b16 %v908
    %v4829 = vunpack.c.l.b16 %v909
    %v4830 = vunpack.c.l.b16 %v910
    %v4831 = vunpack.c.l.b16 %v911
    %v4832 = vunpack.c.l.b16 %v912
    %v4833 = vunpack.c.l.b16 %v913
    %v4834 = vunpack.c.l.b16 %v914
    %v4835 = vunpack.c.l.b16 %v915
    %v4836 = vunpack.c.l.b16 %v916
    %v4837 = vunpack.c.l.b16 %v917
    %v4838 = vunpack.c.l.b16 %v918
    %v4839 = vunpack.c.l.b16 %v919
    %v4840 = vunpack.c.l.b16 %v920
    %v4841 = vunpack.c.l.b16 %v921
    %v4842 = vunpack.c.l.b16 %v922
    %v4843 = vunpack.c.l.b16 %v923
    %v4844 = vunpack.c.l.b16 %v924
    %v4845 = vunpack.c.l.b16 %v925
    %v4846 = vunpack.c.l.b16 %v926
    %v4847 = vunpack.c.l.b16 %v927
    %v4848 = vunpack.c.l.b16 %v928
    %v4849 = vunpack.c.l.b16 %v929
    %v4850 = vunpack.c.l.b16 %v930
    %v4851 = vunpack.c.l.b16 %v931
    %v4852 = vunpack.c.l.b16 %v932
    %v4853 = vunpack.c.l.b16 %v933
    %v4854 = vunpack.c.l.b16 %v934
    %v4855 = vunpack.c.l.b16 %v935
    %v4856 = vunpack.c.l.b16 %v936
    %v4857 = vunpack.c.l.b16 %v937
    %v4858 = vunpack.c.l.b16 %v938
    %v4859 = vunpack.c.l.b16 %v939
    %v4860 = vunpack.c.l.b16 %v940
    %v4861 = vunpack.c.l.b16 %v941
    %v4862 = vunpack.c.l.b16 %v942
    %v4863 = vunpack.c.l.b16 %v943
    %v4864 = vunpack.c.l.b16 %v944
    %v4865 = vunpack.c.l.b16 %v945
    %v4866 = vunpack.c.l.b16 %v946
    %v4867 = vunpack.c.l.b16 %v947
    %v4868 = vunpack.c.l.b16 %v948
    %v4869 = vunpack.c.l.b16 %v949
    %v4870 = vunpack.c.l.b16 %v950
    %v4871 = vunpack.c.l.b16 %v951
    %v4872 = vunpack.c.l.b16 %v952
    %v4873 = vunpack.c.l.b16 %v953
    %v4874 = vunpack.c.l.b16 %v954
    %v4875 = vunpack.c.l.b16 %v955
    %v4876 = vunpack.c.l.b16 %v956
    %v4877 = vunpack.c.l.b16 %v957
    %v4878 = vunpack.c.l.b16 %v958
    %v4879 = vunpack.c.l.b16 %v959
    %v4880 = vunpack.c.l.b16 %v960
    %v4881 = vunpack.c.l.b16 %v961
    %v4882 = vunpack.c.l.b16 %v962
    %v4883 = vunpack.c.l.b16 %v963
    %v4884 = vunpack.c.l.b16 %v964
    %v4885 = vunpack.c.l.b16 %v965
    %v4886 = vunpack.c.l.b16 %v966
    %v4887 = vunpack.c.l.b16 %v967
    %v4888 = vunpack.c.l.b16 %v968
    %v4889 = vunpack.c.l.b16 %v969
    %v4890 = vunpack.c.l.b16 %v970
    %v4891 = vunpack.c.l.b16 %v971
    %v4892 = vunpack.c.l.b16 %v972
    %v4893 = vunpack.c.l.b16 %v973
    %v4894 = vunpack.c.l.b16 %v974
    %v4895 = vunpack.c.l.b16 %v975
    %v4896 = vunpack.c.l.b16 %v976
    %v4897 = vunpack.c.l.b16 %v977
    %v4898 = vunpack.c.l.b16 %v978
    %v4899 = vunpack.c.l.b16 %v979
    %v4900 = vunpack.c.l.b16 %v980
    %v4901 = vunpack.c.l.b16 %v981
    %v4902 = vunpack.c.l.b16 %v982
    %v4903 = vunpack.c.l.b16 %v983
    %v4904 = vunpack.c.l.b16 %v984
    %v4905 = vunpack.c.l.b16 %v985
    %v4906 = vunpack.c.l.b16 %v986
    %v4907 = vunpack.c.l.b16 %v987
    %v4908 = vunpack.c.l.b16 %v988
    %v4909 = vunpack.c.l.b16 %v989
    %v4910 = vunpack.c.l.b16 %v990
    %v4911 = vunpack.c.l.b16 %v991
    %v4912 = vunpack.c.l.b16 %v992
    %v4913 = vunpack.c.l.b16 %v993
    %v4914 = vunpack.c.l.b16 %v994
    %v4915 = vunpack.c.l.b16 %v995
    %v4916 = vunpack.c.l.b16 %v996
    %v4917 = vunpack.c.l.b16 %v997
    %v4918 = vunpack.c.l.b16 %v998
    %v4919 = vunpack.c.l.b16 %v999
    %v4920 = vunpack.c.l.b16 %v1000
    %v4921 = vunpack.c.l.b16 %v1001
    %v4922 = vunpack.c.l.b16 %v1002
    %v4923 = vunpack.c.l.b16 %v1003
    %v4924 = vunpack.c.l.b16 %v1004
    %v4925 = vunpack.c.l.b16 %v1005
    %v4926 = vunpack.c.l.b16 %v1006
    %v4927 = vunpack.c.l.b16 %v1007
    %v4928 = vunpack.c.l.b16 %v1008
    %v4929 = vunpack.c.l.b16 %v1009
    %v4930 = vunpack.c.l.b16 %v1010
    %v4931 = vunpack.c.l.b16 %v1011
    %v4932 = vunpack.c.l.b16 %v1012
    %v4933 = vunpack.c.l.b16 %v1013
    %v4934 = vunpack.c.l.b16 %v1014
    %v4935 = vunpack.c.l.b16 %v1015
    %v4936 = vunpack.c.l.b16 %v1016
    %v4937 = vunpack.c.l.b16 %v1017
    %v4938 = vunpack.c.l.b16 %v1018
    %v4939 = vunpack.c.l.b16 %v1019
    %v4940 = vunpack.c.l.b16 %v1020
    %v4941 = vunpack.c.l.b16 %v1021
    %v4942 = vunpack.c.l.b16 %v1022
    %v4943 = vunpack.c.l.b16 %v1023
    %v4944 = vunpack.c.l.b16 %v1024
    %v4945 = vunpack.c.l.b16 %v1025
    %v4946 = vunpack.c.l.b16 %v1026
    %v4947 = vunpack.c.l.b16 %v1027
    %v4948 = vunpack.c.l.b16 %v1028
    %v4949 = vunpack.c.l.b16 %v1029
    %v4950 = vunpack.c.l.b16 %v1030
    %v4951 = vunpack.c.l.b16 %v1031
    %v4952 = vunpack.c.l.b16 %v1032
    %v4953 = vunpack.c.l.b16 %v1033
    %v4954 = vunpack.c.l.b16 %v1034
    %v4955 = vunpack.c.l.b16 %v1035
    %v4956 = vunpack.c.l.b16 %v1036
    %v4957 = vunpack.c.l.b16 %v1037
    %v4958 = vunpack.c.l.b16 %v1038
    %v4959 = vunpack.c.l.b16 %v1039
    %v4960 = vunpack.c.l.b16 %v1040
    %v4961 = vunpack.c.l.b16 %v1041
    %v4962 = vunpack.c.l.b16 %v1042
    %v4963 = vunpack.c.l.b16 %v1043
    %v4964 = vunpack.c.l.b16 %v1044
    %v4965 = vunpack.c.l.b16 %v1045
    %v4966 = vunpack.c.l.b16 %v1046
    %v4967 = vunpack.c.l.b16 %v1047
    %v4968 = vunpack.c.l.b16 %v1048
    %v4969 = vunpack.c.l.b16 %v1049
    %v4970 = vunpack.c.l.b16 %v1050
    %v4971 = vunpack.c.l.b16 %v1051
    %v4972 = vunpack.c.l.b16 %v1052
    %v4973 = vunpack.c.l.b16 %v1053
    %v4974 = vunpack.c.l.b16 %v1054
    %v4975 = vunpack.c.l.b16 %v1055
    %v4976 = vunpack.c.l.b16 %v1056
    %v4977 = vunpack.c.l.b16 %v1057
    %v4978 = vunpack.c.l.b16 %v1058
    %v4979 = vunpack.c.l.b16 %v1059
    %v4980 = vunpack.c.l.b16 %v1060
    %v4981 = vunpack.c.l.b16 %v1061
    %v4982 = vunpack.c.l.b16 %v1062
    %v4983 = vunpack.c.l.b16 %v1063
    %v4984 = vunpack.c.l.b16 %v1064
    %v4985 = vunpack.c.l.b16 %v1065
    %v4986 = vunpack.c.l.b16 %v1066
    %v4987 = vunpack.c.l.b16 %v1067
    %v4988 = vunpack.c.l.b16 %v1068
    %v4989 = vunpack.c.l.b16 %v1069
    %v4990 = vunpack.c.l.b16 %v1070
    %v4991 = vunpack.c.l.b16 %v1071
    %v4992 = vunpack.c.l.b16 %v1072
    %v4993 = vunpack.c.l.b16 %v1073
    %v4994 = vunpack.c.l.b16 %v1074
    %v4995 = vunpack.c.l.b16 %v1075
    %v4996 = vunpack.c.l.b16 %v1076
    %v4997 = vunpack.c.l.b16 %v1077
    %v4998 = vunpack.c.l.b16 %v1078
    %v4999 = vunpack.c.l.b16 %v1079
    %v5000 = vunpack.c.l.b16 %v1080
    %v5001 = vunpack.c.l.b16 %v1081
    %v5002 = vunpack.c.l.b16 %v1082
    %v5003 = vunpack.c.l.b16 %v1083
    %v5004 = vunpack.c.l.b16 %v1084
    %v5005 = vunpack.c.l.b16 %v1085
    %v5006 = vunpack.c.l.b16 %v1086
    %v5007 = vunpack.c.l.b16 %v1087
    %v5008 = vunpack.c.l.b16 %v1088
    %v5009 = vunpack.c.l.b16 %v1089
    %v5010 = vunpack.c.l.b16 %v1090
    %v5011 = vunpack.c.l.b16 %v1091
    %v5012 = vunpack.c.l.b16 %v1092
    %v5013 = vunpack.c.l.b16 %v1093
    %v5014 = vunpack.c.l.b16 %v1094
    %v5015 = vunpack.c.l.b16 %v1095
    %v5016 = vunpack.c.l.b16 %v1096
    %v5017 = vunpack.c.l.b16 %v1097
    %v5018 = vunpack.c.l.b16 %v1098
    %v5019 = vunpack.c.l.b16 %v1099
    %v5020 = vunpack.c.l.b16 %v1100
    %v5021 = vunpack.c.l.b16 %v1101
    %v5022 = vunpack.c.l.b16 %v1102
    %v5023 = vunpack.c.l.b16 %v1103
    %v5024 = vunpack.c.l.b16 %v1104
    %v5025 = vunpack.c.l.b16 %v1105
    %v5026 = vunpack.c.l.b16 %v1106
    %v5027 = vunpack.c.l.b16 %v1107
    %v5028 = vunpack.c.l.b16 %v1108
    %v5029 = vunpack.c.l.b16 %v1109
    %v5030 = vunpack.c.l.b16 %v1110
    %v5031 = vunpack.c.l.b16 %v1111
    %v5032 = vunpack.c.l.b16 %v1112
    %v5033 = vunpack.c.l.b16 %v1113
    %v5034 = vunpack.c.l.b16 %v1114
    %v5035 = vunpack.c.l.b16 %v1115
    %v5036 = vunpack.c.l.b16 %v1116
    %v5037 = vunpack.c.l.b16 %v1117
    %v5038 = vunpack.c.l.b16 %v1118
    %v5039 = vunpack.c.l.b16 %v1119
    %v5040 = vunpack.c.l.b16 %v1120
    %v5041 = vunpack.c.l.b16 %v1121
    %v5042 = vunpack.c.l.b16 %v1122
    %v5043 = vunpack.c.l.b16 %v1123
    %v5044 = vunpack.c.l.b16 %v1124
    %v5045 = vunpack.c.l.b16 %v1125
    %v5046 = vunpack.c.l.b16 %v1126
    %v5047 = vunpack.c.l.b16 %v1127
    %v5048 = vunpack.c.l.b16 %v1128
    %v5049 = vunpack.c.l.b16 %v1129
    %v5050 = vunpack.c.l.b16 %v1130
    %v5051 = vunpack.c.l.b16 %v1131
    %v5052 = vunpack.c.l.b16 %v1132
    %v5053 = vunpack.c.l.b16 %v1133
    %v5054 = vunpack.c.l.b16 %v1134
    %v5055 = vunpack.c.l.b16 %v1135
    %v5056 = vunpack.c.l.b16 %v1136
    %v5057 = vunpack.c.l.b16 %v1137
    %v5058 = vunpack.c.l.b16 %v1138
    %v5059 = vunpack.c.l.b16 %v1139
    %v5060 = vunpack.c.l.b16 %v1140
    %v5061 = vunpack.c.l.b16 %v1141
    %v5062 = vunpack.c.l.b16 %v1142
    %v5063 = vunpack.c.l.b16 %v1143
    %v5064 = vunpack.c.l.b16 %v1144
    %v5065 = vunpack.c.l.b16 %v1145
    %v5066 = vunpack.c.l.b16 %v1146
    %v5067 = vunpack.c.l.b16 %v1147
    %v5068 = vunpack.c.l.b16 %v1148
    %v5069 = vunpack.c.l.b16 %v1149
    %v5070 = vunpack.c.l.b16 %v1150
    %v5071 = vunpack.c.l.b16 %v1151
    %v5072 = vunpack.c.l.b16 %v1152
    %v5073 = vunpack.c.l.b16 %v1153
    %v5074 = vunpack.c.l.b16 %v1154
    %v5075 = vunpack.c.l.b16 %v1155
    %v5076 = vunpack.c.l.b16 %v1156
    %v5077 = vunpack.c.l.b16 %v1157
    %v5078 = vunpack.c.l.b16 %v1158
    %v5079 = vunpack.c.l.b16 %v1159
    %v5080 = vunpack.c.l.b16 %v1160
    %v5081 = vunpack.c.l.b16 %v1161
    %v5082 = vunpack.c.l.b16 %v1162
    %v5083 = vunpack.c.l.b16 %v1163
    %v5084 = vunpack.c.l.b16 %v1164
    %v5085 = vunpack.c.l.b16 %v1165
    %v5086 = vunpack.c.l.b16 %v1166
    %v5087 = vunpack.c.l.b16 %v1167
    %v5088 = vunpack.c.l.b16 %v1168
    %v5089 = vunpack.c.l.b16 %v1169
    %v5090 = vunpack.c.l.b16 %v1170
    %v5091 = vunpack.c.l.b16 %v1171
    %v5092 = vunpack.c.l.b16 %v1172
    %v5093 = vunpack.c.l.b16 %v1173
    %v5094 = vunpack.c.l.b16 %v1174
    %v5095 = vunpack.c.l.b16 %v1175
    %v5096 = vunpack.c.l.b16 %v1176
    %v5097 = vunpack.c.l.b16 %v1177
    %v5098 = vunpack.c.l.b16 %v1178
    %v5099 = vunpack.c.l.b16 %v1179
    %v5100 = vunpack.c.l.b16 %v1180
    %v5101 = vunpack.c.l.b16 %v1181
    %v5102 = vunpack.c.l.b16 %v1182
    %v5103 = vunpack.c.l.b16 %v1183
    %v5104 = vunpack.c.l.b16 %v1184
    %v5105 = vunpack.c.l.b16 %v1185
    %v5106 = vunpack.c.l.b16 %v1186
    %v5107 = vunpack.c.l.b16 %v1187
    %v5108 = vunpack.c.l.b16 %v1188
    %v5109 = vunpack.c.l.b16 %v1189
    %v5110 = vunpack.c.l.b16 %v1190
    %v5111 = vunpack.c.l.b16 %v1191
    %v5112 = vunpack.c.l.b16 %v1192
    %v5113 = vunpack.c.l.b16 %v1193
    %v5114 = vunpack.c.l.b16 %v1194
    %v5115 = vunpack.c.l.b16 %v1195
    %v5116 = vunpack.c.l.b16 %v1196
    %v5117 = vunpack.c.l.b16 %v1197
    %v5118 = vunpack.c.l.b16 %v1198
    %v5119 = vunpack.c.l.b16 %v1199
    %v5120 = vunpack.c.l.b16 %v1200
    %v5121 = vunpack.c.l.b16 %v1201
    %v5122 = vunpack.c.l.b16 %v1202
    %v5123 = vunpack.c.l.b16 %v1203
    %v5124 = vunpack.c.l.b16 %v1204
    %v5125 = vunpack.c.l.b16 %v1205
    %v5126 = vunpack.c.l.b16 %v1206
    %v5127 = vunpack.c.l.b16 %v1207
    %v5128 = vunpack.c.l.b16 %v1208
    %v5129 = vunpack.c.l.b16 %v1209
    %v5130 = vunpack.c.l.b16 %v1210
    %v5131 = vunpack.c.l.b16 %v1211
    %v5132 = vunpack.c.l.b16 %v1212
    %v5133 = vunpack.c.l.b16 %v1213
    %v5134 = vunpack.c.l.b16 %v1214
    %v5135 = vunpack.c.l.b16 %v1215
    %v5136 = vunpack.c.l.b16 %v1216
    %v5137 = vunpack.c.l.b16 %v1217
    %v5138 = vunpack.c.l.b16 %v1218
    %v5139 = vunpack.c.l.b16 %v1219
    %v5140 = vunpack.c.l.b16 %v1220
    %v5141 = vunpack.c.l.b16 %v1221
    %v5142 = vunpack.c.l.b16 %v1222
    %v5143 = vunpack.c.l.b16 %v1223
    %v5144 = vunpack.c.l.b16 %v1224
    %v5145 = vunpack.c.l.b16 %v1225
    %v5146 = vunpack.c.l.b16 %v1226
    %v5147 = vunpack.c.l.b16 %v1227
    %v5148 = vunpack.c.l.b16 %v1228
    %v5149 = vunpack.c.l.b16 %v1229
    %v5150 = vunpack.c.l.b16 %v1230
    %v5151 = vunpack.c.l.b16 %v1231
    %v5152 = vunpack.c.l.b16 %v1232
    %v5153 = vunpack.c.l.b16 %v1233
    %v5154 = vunpack.c.l.b16 %v1234
    %v5155 = vunpack.c.l.b16 %v1235
    %v5156 = vunpack.c.l.b16 %v1236
    %v5157 = vunpack.c.l.b16 %v1237
    %v5158 = vunpack.c.l.b16 %v1238
    %v5159 = vunpack.c.l.b16 %v1239
    %v5160 = vunpack.c.l.b16 %v1240
    %v5161 = vunpack.c.l.b16 %v1241
    %v5162 = vunpack.c.l.b16 %v1242
    %v5163 = vunpack.c.l.b16 %v1243
    %v5164 = vunpack.c.l.b16 %v1244
    %v5165 = vunpack.c.l.b16 %v1245
    %v5166 = vunpack.c.l.b16 %v1246
    %v5167 = vunpack.c.l.b16 %v1247
    %v5168 = vunpack.c.l.b16 %v1248
    %v5169 = vunpack.c.l.b16 %v1249
    %v5170 = vunpack.c.l.b16 %v1250
    %v5171 = vunpack.c.l.b16 %v1251
    %v5172 = vunpack.c.l.b16 %v1252
    %v5173 = vunpack.c.l.b16 %v1253
    %v5174 = vunpack.c.l.b16 %v1254
    %v5175 = vunpack.c.l.b16 %v1255
    %v5176 = vunpack.c.l.b16 %v1256
    %v5177 = vunpack.c.l.b16 %v1257
    %v5178 = vunpack.c.l.b16 %v1258
    %v5179 = vunpack.c.l.b16 %v1259
    %v5180 = vunpack.c.l.b16 %v1260
    %v5181 = vunpack.c.l.b16 %v1261
    %v5182 = vunpack.c.l.b16 %v1262
    %v5183 = vunpack.c.l.b16 %v1263
    %v5184 = vunpack.c.l.b16 %v1264
    %v5185 = vunpack.c.l.b16 %v1265
    %v5186 = vunpack.c.l.b16 %v1266
    %v5187 = vunpack.c.l.b16 %v1267
    %v5188 = vunpack.c.l.b16 %v1268
    %v5189 = vunpack.c.l.b16 %v1269
    %v5190 = vunpack.c.l.b16 %v1270
    %v5191 = vunpack.c.l.b16 %v1271
    %v5192 = vunpack.c.l.b16 %v1272
    %v5193 = vunpack.c.l.b16 %v1273
    %v5194 = vunpack.c.l.b16 %v1274
    %v5195 = vunpack.c.l.b16 %v1275
    %v5196 = vunpack.c.l.b16 %v1276
    %v5197 = vunpack.c.l.b16 %v1277
    %v5198 = vunpack.c.l.b16 %v1278
    %v5199 = vunpack.c.l.b16 %v1279
    %v5200 = vunpack.c.l.b16 %v1280
    %v5201 = vunpack.c.l.b16 %v1281
    %v5202 = vunpack.c.l.b16 %v1282
    %v5203 = vunpack.c.l.b16 %v1283
    %v5204 = vunpack.c.l.b16 %v1284
    %v5205 = vunpack.c.l.b16 %v1285
    %v5206 = vunpack.c.l.b16 %v1286
    %v5207 = vunpack.c.l.b16 %v1287
    %v5208 = vunpack.c.l.b16 %v1288
    %v5209 = vunpack.c.l.b16 %v1289
    %v5210 = vunpack.c.l.b16 %v1290
    %v5211 = vunpack.c.l.b16 %v1291
    %v5212 = vunpack.c.l.b16 %v1292
    %v5213 = vunpack.c.l.b16 %v1293
    %v5214 = vunpack.c.l.b16 %v1294
    %v5215 = vpack.c.b16 %v4704, %v4703
    %v5216 = vpack.c.b16 %v4706, %v4705
    %v5217 = vpack.c.b16 %v4708, %v4707
    %v5218 = vpack.c.b16 %v4710, %v4709
    %v5219 = vpack.c.b16 %v4712, %v4711
    %v5220 = vpack.c.b16 %v4714, %v4713
    %v5221 = vpack.c.b16 %v4716, %v4715
    %v5222 = vpack.c.b16 %v4718, %v4717
    %v5223 = vpack.c.b16 %v4720, %v4719
    %v5224 = vpack.c.b16 %v4722, %v4721
    %v5225 = vpack.c.b16 %v4724, %v4723
    %v5226 = vpack.c.b16 %v4726, %v4725
    %v5227 = vpack.c.b16 %v4728, %v4727
    %v5228 = vpack.c.b16 %v4730, %v4729
    %v5229 = vpack.c.b16 %v4732, %v4731
    %v5230 = vpack.c.b16 %v4734, %v4733
    %v5231 = vpack.c.b16 %v4736, %v4735
    %v5232 = vpack.c.b16 %v4738, %v4737
    %v5233 = vpack.c.b16 %v4740, %v4739
    %v5234 = vpack.c.b16 %v4742, %v4741
    %v5235 = vpack.c.b16 %v4744, %v4743
    %v5236 = vpack.c.b16 %v4746, %v4745
    %v5237 = vpack.c.b16 %v4748, %v4747
    %v5238 = vpack.c.b16 %v4750, %v4749
    %v5239 = vpack.c.b16 %v4752, %v4751
    %v5240 = vpack.c.b16 %v4754, %v4753
    %v5241 = vpack.c.b16 %v4756, %v4755
    %v5242 = vpack.c.b16 %v4758, %v4757
    %v5243 = vpack.c.b16 %v4760, %v4759
    %v5244 = vpack.c.b16 %v4762, %v4761
    %v5245 = vpack.c.b16 %v4764, %v4763
    %v5246 = vpack.c.b16 %v4766, %v4765
    %v5247 = vpack.c.b16 %v4768, %v4767
    %v5248 = vpack.c.b16 %v4770, %v4769
    %v5249 = vpack.c.b16 %v4772, %v4771
    %v5250 = vpack.c.b16 %v4774, %v4773
    %v5251 = vpack.c.b16 %v4776, %v4775
    %v5252 = vpack.c.b16 %v4778, %v4777
    %v5253 = vpack.c.b16 %v4780, %v4779
    %v5254 = vpack.c.b16 %v4782, %v4781
    %v5255 = vpack.c.b16 %v4784, %v4783
    %v5256 = vpack.c.b16 %v4786, %v4785
    %v5257 = vpack.c.b16 %v4788, %v4787
    %v5258 = vpack.c.b16 %v4790, %v4789
    %v5259 = vpack.c.b16 %v4792, %v4791
    %v5260 = vpack.c.b16 %v4794, %v4793
    %v5261 = vpack.c.b16 %v4796, %v4795
    %v5262 = vpack.c.b16 %v4798, %v4797
    %v5263 = vpack.c.b16 %v4800, %v4799
    %v5264 = vpack.c.b16 %v4802, %v4801
    %v5265 = vpack.c.b16 %v4804, %v4803
    %v5266 = vpack.c.b16 %v4806, %v4805
    %v5267 = vpack.c.b16 %v4808, %v4807
    %v5268 = vpack.c.b16 %v4810, %v4809
    %v5269 = vpack.c.b16 %v4812, %v4811
    %v5270 = vpack.c.b16 %v4814, %v4813
    %v5271 = vpack.c.b16 %v4816, %v4815
    %v5272 = vpack.c.b16 %v4818, %v4817
    %v5273 = vpack.c.b16 %v4820, %v4819
    %v5274 = vpack.c.b16 %v4822, %v4821
    %v5275 = vpack.c.b16 %v4824, %v4823
    %v5276 = vpack.c.b16 %v4826, %v4825
    %v5277 = vpack.c.b16 %v4828, %v4827
    %v5278 = vpack.c.b16 %v4830, %v4829
    %v5279 = vpack.c.b16 %v4832, %v4831
    %v5280 = vpack.c.b16 %v4834, %v4833
    %v5281 = vpack.c.b16 %v4836, %v4835
    %v5282 = vpack.c.b16 %v4838, %v4837
    %v5283 = vpack.c.b16 %v4840, %v4839
    %v5284 = vpack.c.b16 %v4842, %v4841
    %v5285 = vpack.c.b16 %v4844, %v4843
    %v5286 = vpack.c.b16 %v4846, %v4845
    %v5287 = vpack.c.b16 %v4848, %v4847
    %v5288 = vpack.c.b16 %v4850, %v4849
    %v5289 = vpack.c.b16 %v4852, %v4851
    %v5290 = vpack.c.b16 %v4854, %v4853
    %v5291 = vpack.c.b16 %v4856, %v4855
    %v5292 = vpack.c.b16 %v4858, %v4857
    %v5293 = vpack.c.b16 %v4860, %v4859
    %v5294 = vpack.c.b16 %v4862, %v4861
    %v5295 = vpack.c.b16 %v4864, %v4863
    %v5296 = vpack.c.b16 %v4866, %v4865
    %v5297 = vpack.c.b16 %v4868, %v4867
    %v5298 = vpack.c.b16 %v4870, %v4869
    %v5299 = vpack.c.b16 %v4872, %v4871
    %v5300 = vpack.c.b16 %v4874, %v4873
    %v5301 = vpack.c.b16 %v4876, %v4875
    %v5302 = vpack.c.b16 %v4878, %v4877
    %v5303 = vpack.c.b16 %v4880, %v4879
    %v5304 = vpack.c.b16 %v4882, %v4881
    %v5305 = vpack.c.b16 %v4884, %v4883
    %v5306 = vpack.c.b16 %v4886, %v4885
    %v5307 = vpack.c.b16 %v4888, %v4887
    %v5308 = vpack.c.b16 %v4890, %v4889
    %v5309 = vpack.c.b16 %v4892, %v4891
    %v5310 = vpack.c.b16 %v4894, %v4893
    %v5311 = vpack.c.b16 %v4896, %v4895
    %v5312 = vpack.c.b16 %v4898, %v4897
    %v5313 = vpack.c.b16 %v4900, %v4899
    %v5314 = vpack.c.b16 %v4902, %v4901
    %v5315 = vpack.c.b16 %v4904, %v4903
    %v5316 = vpack.c.b16 %v4906, %v4905
    %v5317 = vpack.c.b16 %v4908, %v4907
    %v5318 = vpack.c.b16 %v4910, %v4909
    %v5319 = vpack.c.b16 %v4912, %v4911
    %v5320 = vpack.c.b16 %v4914, %v4913
    %v5321 = vpack.c.b16 %v4916, %v4915
    %v5322 = vpack.c.b16 %v4918, %v4917
    %v5323 = vpack.c.b16 %v4920, %v4919
    %v5324 = vpack.c.b16 %v4922, %v4921
    %v5325 = vpack.c.b16 %v4924, %v4923
    %v5326 = vpack.c.b16 %v4926, %v4925
    %v5327 = vpack.c.b16 %v4928, %v4927
    %v5328 = vpack.c.b16 %v4930, %v4929
    %v5329 = vpack.c.b16 %v4932, %v4931
    %v5330 = vpack.c.b16 %v4934, %v4933
    %v5331 = vpack.c.b16 %v4936, %v4935
    %v5332 = vpack.c.b16 %v4938, %v4937
    %v5333 = vpack.c.b16 %v4940, %v4939
    %v5334 = vpack.c.b16 %v4942, %v4941
    %v5335 = vpack.c.b16 %v4944, %v4943
    %v5336 = vpack.c.b16 %v4946, %v4945
    %v5337 = vpack.c.b16 %v4948, %v4947
    %v5338 = vpack.c.b16 %v4950, %v4949
    %v5339 = vpack.c.b16 %v4952, %v4951
    %v5340 = vpack.c.b16 %v4954, %v4953
    %v5341 = vpack.c.b16 %v4956, %v4955
    %v5342 = vpack.c.b16 %v4958, %v4957
    %v5343 = vpack.c.b16 %v4960, %v4959
    %v5344 = vpack.c.b16 %v4962, %v4961
    %v5345 = vpack.c.b16 %v4964, %v4963
    %v5346 = vpack.c.b16 %v4966, %v4965
    %v5347 = vpack.c.b16 %v4968, %v4967
    %v5348 = vpack.c.b16 %v4970, %v4969
    %v5349 = vpack.c.b16 %v4972, %v4971
    %v5350 = vpack.c.b16 %v4974, %v4973
    %v5351 = vpack.c.b16 %v4976, %v4975
    %v5352 = vpack.c.b16 %v4978, %v4977
    %v5353 = vpack.c.b16 %v4980, %v4979
    %v5354 = vpack.c.b16 %v4982, %v4981
    %v5355 = vpack.c.b16 %v4984, %v4983
    %v5356 = vpack.c.b16 %v4986, %v4985
    %v5357 = vpack.c.b16 %v4988, %v4987
    %v5358 = vpack.c.b16 %v4990, %v4989
    %v5359 = vpack.c.b16 %v4992, %v4991
    %v5360 = vpack.c.b16 %v4994, %v4993
    %v5361 = vpack.c.b16 %v4996, %v4995
    %v5362 = vpack.c.b16 %v4998, %v4997
    %v5363 = vpack.c.b16 %v5000, %v4999
    %v5364 = vpack.c.b16 %v5002, %v5001
    %v5365 = vpack.c.b16 %v5004, %v5003
    %v5366 = vpack.c.b16 %v5006, %v5005
    %v5367 = vpack.c.b16 %v5008, %v5007
    %v5368 = vpack.c.b16 %v5010, %v5009
    %v5369 = vpack.c.b16 %v5012, %v5011
    %v5370 = vpack.c.b16 %v5014, %v5013
    %v5371 = vpack.c.b16 %v5016, %v5015
    %v5372 = vpack.c.b16 %v5018, %v5017
    %v5373 = vpack.c.b16 %v5020, %v5019
    %v5374 = vpack.c.b16 %v5022, %v5021
    %v5375 = vpack.c.b16 %v5024, %v5023
    %v5376 = vpack.c.b16 %v5026, %v5025
    %v5377 = vpack.c.b16 %v5028, %v5027
    %v5378 = vpack.c.b16 %v5030, %v5029
    %v5379 = vpack.c.b16 %v5032, %v5031
    %v5380 = vpack.c.b16 %v5034, %v5033
    %v5381 = vpack.c.b16 %v5036, %v5035
    %v5382 = vpack.c.b16 %v5038, %v5037
    %v5383 = vpack.c.b16 %v5040, %v5039
    %v5384 = vpack.c.b16 %v5042, %v5041
    %v5385 = vpack.c.b16 %v5044, %v5043
    %v5386 = vpack.c.b16 %v5046, %v5045
    %v5387 = vpack.c.b16 %v5048, %v5047
    %v5388 = vpack.c.b16 %v5050, %v5049
    %v5389 = vpack.c.b16 %v5052, %v5051
    %v5390 = vpack.c.b16 %v5054, %v5053
    %v5391 = vpack.c.b16 %v5056, %v5055
    %v5392 = vpack.c.b16 %v5058, %v5057
    %v5393 = vpack.c.b16 %v5060, %v5059
    %v5394 = vpack.c.b16 %v5062, %v5061
    %v5395 = vpack.c.b16 %v5064, %v5063
    %v5396 = vpack.c.b16 %v5066, %v5065
    %v5397 = vpack.c.b16 %v5068, %v5067
    %v5398 = vpack.c.b16 %v5070, %v5069
    %v5399 = vpack.c.b16 %v5072, %v5071
    %v5400 = vpack.c.b16 %v5074, %v5073
    %v5401 = vpack.c.b16 %v5076, %v5075
    %v5402 = vpack.c.b16 %v5078, %v5077
    %v5403 = vpack.c.b16 %v5080, %v5079
    %v5404 = vpack.c.b16 %v5082, %v5081
    %v5405 = vpack.c.b16 %v5084, %v5083
    %v5406 = vpack.c.b16 %v5086, %v5085
    %v5407 = vpack.c.b16 %v5088, %v5087
    %v5408 = vpack.c.b16 %v5090, %v5089
    %v5409 = vpack.c.b16 %v5092, %v5091
    %v5410 = vpack.c.b16 %v5094, %v5093
    %v5411 = vpack.c.b16 %v5096, %v5095
    %v5412 = vpack.c.b16 %v5098, %v5097
    %v5413 = vpack.c.b16 %v5100, %v5099
    %v5414 = vpack.c.b16 %v5102, %v5101
    %v5415 = vpack.c.b16 %v5104, %v5103
    %v5416 = vpack.c.b16 %v5106, %v5105
    %v5417 = vpack.c.b16 %v5108, %v5107
    %v5418 = vpack.c.b16 %v5110, %v5109
    %v5419 = vpack.c.b16 %v5112, %v5111
    %v5420 = vpack.c.b16 %v5114, %v5113
    %v5421 = vpack.c.b16 %v5116, %v5115
    %v5422 = vpack.c.b16 %v5118, %v5117
    %v5423 = vpack.c.b16 %v5120, %v5119
    %v5424 = vpack.c.b16 %v5122, %v5121
    %v5425 = vpack.c.b16 %v5124, %v5123
    %v5426 = vpack.c.b16 %v5126, %v5125
    %v5427 = vpack.c.b16 %v5128, %v5127
    %v5428 = vpack.c.b16 %v5130, %v5129
    %v5429 = vpack.c.b16 %v5132, %v5131
    %v5430 = vpack.c.b16 %v5134, %v5133
    %v5431 = vpack.c.b16 %v5136, %v5135
    %v5432 = vpack.c.b16 %v5138, %v5137
    %v5433 = vpack.c.b16 %v5140, %v5139
    %v5434 = vpack.c.b16 %v5142, %v5141
    %v5435 = vpack.c.b16 %v5144, %v5143
    %v5436 = vpack.c.b16 %v5146, %v5145
    %v5437 = vpack.c.b16 %v5148, %v5147
    %v5438 = vpack.c.b16 %v5150, %v5149
    %v5439 = vpack.c.b16 %v5152, %v5151
    %v5440 = vpack.c.b16 %v5154, %v5153
    %v5441 = vpack.c.b16 %v5156, %v5155
    %v5442 = vpack.c.b16 %v5158, %v5157
    %v5443 = vpack.c.b16 %v5160, %v5159
    %v5444 = vpack.c.b16 %v5162, %v5161
    %v5445 = vpack.c.b16 %v5164, %v5163
    %v5446 = vpack.c.b16 %v5166, %v5165
    %v5447 = vpack.c.b16 %v5168, %v5167
    %v5448 = vpack.c.b16 %v5170, %v5169
    %v5449 = vpack.c.b16 %v5172, %v5171
    %v5450 = vpack.c.b16 %v5174, %v5173
    %v5451 = vpack.c.b16 %v5176, %v5175
    %v5452 = vpack.c.b16 %v5178, %v5177
    %v5453 = vpack.c.b16 %v5180, %v5179
    %v5454 = vpack.c.b16 %v5182, %v5181
    %v5455 = vpack.c.b16 %v5184, %v5183
    %v5456 = vpack.c.b16 %v5186, %v5185
    %v5457 = vpack.c.b16 %v5188, %v5187
    %v5458 = vpack.c.b16 %v5190, %v5189
    %v5459 = vpack.c.b16 %v5192, %v5191
    %v5460 = vpack.c.b16 %v5194, %v5193
    %v5461 = vpack.c.b16 %v5196, %v5195
    %v5462 = vpack.c.b16 %v5198, %v5197
    %v5463 = vpack.c.b16 %v5200, %v5199
    %v5464 = vpack.c.b16 %v5202, %v5201
    %v5465 = vpack.c.b16 %v5204, %v5203
    %v5466 = vpack.c.b16 %v5206, %v5205
    %v5467 = vpack.c.b16 %v5208, %v5207
    %v5468 = vpack.c.b16 %v5210, %v5209
    %v5469 = vpack.c.b16 %v5212, %v5211
    %v5470 = vpack.c.b16 %v5214, %v5213
    %5727 = vmatprep.subr.bf16.mxu0 0
    %5728 = vmatpush1.bf16.msra.mxu0 %v5222
    %5729 = vmatprep.subr.bf16.mxu0 0
    %5730 = vmatpush1.bf16.msra.mxu0 %v5221
    %5731 = vmatprep.subr.bf16.mxu0 0
    %5732 = vmatpush1.bf16.msra.mxu0 %v5220
    %5733 = vmatprep.subr.bf16.mxu0 0
    %5734 = vmatpush1.bf16.msra.mxu0 %v5219
    %5735 = vmatprep.subr.bf16.mxu0 0
    %5736 = vmatpush1.bf16.msra.mxu0 %v5218
    %5737 = vmatprep.subr.bf16.mxu0 0
    %5738 = vmatpush1.bf16.msra.mxu0 %v5217
    %5739 = vmatprep.subr.bf16.mxu0 0
    %5740 = vmatpush1.bf16.msra.mxu0 %v5216
    %5741 = vmatprep.subr.bf16.mxu0 0
    %5742 = vmatpush1.bf16.msra.mxu0 %v5215
    %5743 = vmatprep.subr.bf16.mxu0 0
    %5744 = vmatpush2.bf16.msra.mxu0 %v5230
    %5745 = vmatprep.subr.bf16.mxu0 0
    %5746 = vmatpush2.bf16.msra.mxu0 %v5229
    %5747 = vmatprep.subr.bf16.mxu0 0
    %5748 = vmatpush2.bf16.msra.mxu0 %v5228
    %5749 = vmatprep.subr.bf16.mxu0 0
    %5750 = vmatpush2.bf16.msra.mxu0 %v5227
    %5751 = vmatprep.subr.bf16.mxu0 0
    %5752 = vmatpush2.bf16.msra.mxu0 %v5226
    %5753 = vmatprep.subr.bf16.mxu0 0
    %5754 = vmatpush2.bf16.msra.mxu0 %v5225
    %5755 = vmatprep.subr.bf16.mxu0 0
    %5756 = vmatpush2.bf16.msra.mxu0 %v5224
    %5757 = vmatprep.subr.bf16.mxu0 0
    %5758 = vmatpush2.bf16.msra.mxu0 %v5223
    %5759 = vmatprep.mubr.bf16.mxu0 %v752
    %5760 = vmatmul.mubr.bf16.gmra.mxu0 %v751
    %v5761 = vpop.f32.mrf.mxu0
    %v5762 = vadd.f32 %v4186, %v5761
    %v5763 = vpop.f32.mrf.mxu0
    %v5764 = vpop.f32.mrf.mxu0
    %v5765 = vpop.f32.mrf.mxu0
    %5766 = vdwg.mxu0
    %5767 = vmatprep.subr.bf16.mxu0 0
    %5768 = vmatpush1.bf16.msra.mxu0 %v5238
    %5769 = vmatprep.subr.bf16.mxu0 0
    %5770 = vmatpush1.bf16.msra.mxu0 %v5237
    %5771 = vmatprep.subr.bf16.mxu0 0
    %5772 = vmatpush1.bf16.msra.mxu0 %v5236
    %5773 = vmatprep.subr.bf16.mxu0 0
    %5774 = vmatpush1.bf16.msra.mxu0 %v5235
    %5775 = vmatprep.subr.bf16.mxu0 0
    %5776 = vmatpush1.bf16.msra.mxu0 %v5234
    %5777 = vmatprep.subr.bf16.mxu0 0
    %5778 = vmatpush1.bf16.msra.mxu0 %v5233
    %5779 = vmatprep.subr.bf16.mxu0 0
    %5780 = vmatpush1.bf16.msra.mxu0 %v5232
    %5781 = vmatprep.subr.bf16.mxu0 0
    %5782 = vmatpush1.bf16.msra.mxu0 %v5231
    %5783 = vmatprep.subr.bf16.mxu0 0
    %5784 = vmatpush2.bf16.msra.mxu0 %v5246
    %5785 = vmatprep.subr.bf16.mxu0 0
    %5786 = vmatpush2.bf16.msra.mxu0 %v5245
    %5787 = vmatprep.subr.bf16.mxu0 0
    %5788 = vmatpush2.bf16.msra.mxu0 %v5244
    %5789 = vmatprep.subr.bf16.mxu0 0
    %5790 = vmatpush2.bf16.msra.mxu0 %v5243
    %5791 = vmatprep.subr.bf16.mxu0 0
    %5792 = vmatpush2.bf16.msra.mxu0 %v5242
    %5793 = vmatprep.subr.bf16.mxu0 0
    %5794 = vmatpush2.bf16.msra.mxu0 %v5241
    %5795 = vmatprep.subr.bf16.mxu0 0
    %5796 = vmatpush2.bf16.msra.mxu0 %v5240
    %5797 = vmatprep.subr.bf16.mxu0 0
    %5798 = vmatpush2.bf16.msra.mxu0 %v5239
    %5799 = vmatprep.mubr.bf16.mxu0 %v754
    %5800 = vmatmul.mubr.bf16.gmra.mxu0 %v753
    %v5801 = vpop.f32.mrf.mxu0
    %v5802 = vadd.f32 %v5762, %v5801
    %v5803 = vpop.f32.mrf.mxu0
    %v5804 = vpop.f32.mrf.mxu0
    %v5805 = vpop.f32.mrf.mxu0
    %5806 = vdwg.mxu0
    %5807 = vmatprep.subr.bf16.mxu0 0
    %5808 = vmatpush1.bf16.msra.mxu0 %v5254
    %5809 = vmatprep.subr.bf16.mxu0 0
    %5810 = vmatpush1.bf16.msra.mxu0 %v5253
    %5811 = vmatprep.subr.bf16.mxu0 0
    %5812 = vmatpush1.bf16.msra.mxu0 %v5252
    %5813 = vmatprep.subr.bf16.mxu0 0
    %5814 = vmatpush1.bf16.msra.mxu0 %v5251
    %5815 = vmatprep.subr.bf16.mxu0 0
    %5816 = vmatpush1.bf16.msra.mxu0 %v5250
    %5817 = vmatprep.subr.bf16.mxu0 0
    %5818 = vmatpush1.bf16.msra.mxu0 %v5249
    %5819 = vmatprep.subr.bf16.mxu0 0
    %5820 = vmatpush1.bf16.msra.mxu0 %v5248
    %5821 = vmatprep.subr.bf16.mxu0 0
    %5822 = vmatpush1.bf16.msra.mxu0 %v5247
    %5823 = vmatprep.subr.bf16.mxu0 0
    %5824 = vmatpush2.bf16.msra.mxu0 %v5262
    %5825 = vmatprep.subr.bf16.mxu0 0
    %5826 = vmatpush2.bf16.msra.mxu0 %v5261
    %5827 = vmatprep.subr.bf16.mxu0 0
    %5828 = vmatpush2.bf16.msra.mxu0 %v5260
    %5829 = vmatprep.subr.bf16.mxu0 0
    %5830 = vmatpush2.bf16.msra.mxu0 %v5259
    %5831 = vmatprep.subr.bf16.mxu0 0
    %5832 = vmatpush2.bf16.msra.mxu0 %v5258
    %5833 = vmatprep.subr.bf16.mxu0 0
    %5834 = vmatpush2.bf16.msra.mxu0 %v5257
    %5835 = vmatprep.subr.bf16.mxu0 0
    %5836 = vmatpush2.bf16.msra.mxu0 %v5256
    %5837 = vmatprep.subr.bf16.mxu0 0
    %5838 = vmatpush2.bf16.msra.mxu0 %v5255
    %5839 = vmatprep.mubr.bf16.mxu0 %v756
    %5840 = vmatmul.mubr.bf16.gmra.mxu0 %v755
    %v5841 = vpop.f32.mrf.mxu0
    %v5842 = vadd.f32 %v5802, %v5841
    %v5843 = vpop.f32.mrf.mxu0
    %v5844 = vpop.f32.mrf.mxu0
    %v5845 = vpop.f32.mrf.mxu0
    %5846 = vdwg.mxu0
    %5847 = vmatprep.subr.bf16.mxu0 0
    %5848 = vmatpush1.bf16.msra.mxu0 %v5270
    %5849 = vmatprep.subr.bf16.mxu0 0
    %5850 = vmatpush1.bf16.msra.mxu0 %v5269
    %5851 = vmatprep.subr.bf16.mxu0 0
    %5852 = vmatpush1.bf16.msra.mxu0 %v5268
    %5853 = vmatprep.subr.bf16.mxu0 0
    %5854 = vmatpush1.bf16.msra.mxu0 %v5267
    %5855 = vmatprep.subr.bf16.mxu0 0
    %5856 = vmatpush1.bf16.msra.mxu0 %v5266
    %5857 = vmatprep.subr.bf16.mxu0 0
    %5858 = vmatpush1.bf16.msra.mxu0 %v5265
    %5859 = vmatprep.subr.bf16.mxu0 0
    %5860 = vmatpush1.bf16.msra.mxu0 %v5264
    %5861 = vmatprep.subr.bf16.mxu0 0
    %5862 = vmatpush1.bf16.msra.mxu0 %v5263
    %5863 = vmatprep.subr.bf16.mxu0 0
    %5864 = vmatpush2.bf16.msra.mxu0 %v5278
    %5865 = vmatprep.subr.bf16.mxu0 0
    %5866 = vmatpush2.bf16.msra.mxu0 %v5277
    %5867 = vmatprep.subr.bf16.mxu0 0
    %5868 = vmatpush2.bf16.msra.mxu0 %v5276
    %5869 = vmatprep.subr.bf16.mxu0 0
    %5870 = vmatpush2.bf16.msra.mxu0 %v5275
    %5871 = vmatprep.subr.bf16.mxu0 0
    %5872 = vmatpush2.bf16.msra.mxu0 %v5274
    %5873 = vmatprep.subr.bf16.mxu0 0
    %5874 = vmatpush2.bf16.msra.mxu0 %v5273
    %5875 = vmatprep.subr.bf16.mxu0 0
    %5876 = vmatpush2.bf16.msra.mxu0 %v5272
    %5877 = vmatprep.subr.bf16.mxu0 0
    %5878 = vmatpush2.bf16.msra.mxu0 %v5271
    %5879 = vmatprep.mubr.bf16.mxu0 %v758
    %5880 = vmatmul.mubr.bf16.gmra.mxu0 %v757
    %v5881 = vpop.f32.mrf.mxu0
    %v5882 = vadd.f32 %v5842, %v5881
    %v5883 = vpop.f32.mrf.mxu0
    %v5884 = vpop.f32.mrf.mxu0
    %v5885 = vpop.f32.mrf.mxu0
    %5886 = vdwg.mxu0
    %5887 = vmatprep.subr.bf16.mxu0 0
    %5888 = vmatpush1.bf16.msra.mxu0 %v5286
    %5889 = vmatprep.subr.bf16.mxu0 0
    %5890 = vmatpush1.bf16.msra.mxu0 %v5285
    %5891 = vmatprep.subr.bf16.mxu0 0
    %5892 = vmatpush1.bf16.msra.mxu0 %v5284
    %5893 = vmatprep.subr.bf16.mxu0 0
    %5894 = vmatpush1.bf16.msra.mxu0 %v5283
    %5895 = vmatprep.subr.bf16.mxu0 0
    %5896 = vmatpush1.bf16.msra.mxu0 %v5282
    %5897 = vmatprep.subr.bf16.mxu0 0
    %5898 = vmatpush1.bf16.msra.mxu0 %v5281
    %5899 = vmatprep.subr.bf16.mxu0 0
    %5900 = vmatpush1.bf16.msra.mxu0 %v5280
    %5901 = vmatprep.subr.bf16.mxu0 0
    %5902 = vmatpush1.bf16.msra.mxu0 %v5279
    %5903 = vmatprep.subr.bf16.mxu0 0
    %5904 = vmatpush2.bf16.msra.mxu0 %v5294
    %5905 = vmatprep.subr.bf16.mxu0 0
    %5906 = vmatpush2.bf16.msra.mxu0 %v5293
    %5907 = vmatprep.subr.bf16.mxu0 0
    %5908 = vmatpush2.bf16.msra.mxu0 %v5292
    %5909 = vmatprep.subr.bf16.mxu0 0
    %5910 = vmatpush2.bf16.msra.mxu0 %v5291
    %5911 = vmatprep.subr.bf16.mxu0 0
    %5912 = vmatpush2.bf16.msra.mxu0 %v5290
    %5913 = vmatprep.subr.bf16.mxu0 0
    %5914 = vmatpush2.bf16.msra.mxu0 %v5289
    %5915 = vmatprep.subr.bf16.mxu0 0
    %5916 = vmatpush2.bf16.msra.mxu0 %v5288
    %5917 = vmatprep.subr.bf16.mxu0 0
    %5918 = vmatpush2.bf16.msra.mxu0 %v5287
    %5919 = vmatprep.mubr.bf16.mxu0 %v760
    %5920 = vmatmul.mubr.bf16.gmra.mxu0 %v759
    %v5921 = vpop.f32.mrf.mxu0
    %v5922 = vadd.f32 %v5882, %v5921
    %v5923 = vpop.f32.mrf.mxu0
    %v5924 = vpop.f32.mrf.mxu0
    %v5925 = vpop.f32.mrf.mxu0
    %5926 = vdwg.mxu0
    %5927 = vmatprep.subr.bf16.mxu0 0
    %5928 = vmatpush1.bf16.msra.mxu0 %v5302
    %5929 = vmatprep.subr.bf16.mxu0 0
    %5930 = vmatpush1.bf16.msra.mxu0 %v5301
    %5931 = vmatprep.subr.bf16.mxu0 0
    %5932 = vmatpush1.bf16.msra.mxu0 %v5300
    %5933 = vmatprep.subr.bf16.mxu0 0
    %5934 = vmatpush1.bf16.msra.mxu0 %v5299
    %5935 = vmatprep.subr.bf16.mxu0 0
    %5936 = vmatpush1.bf16.msra.mxu0 %v5298
    %5937 = vmatprep.subr.bf16.mxu0 0
    %5938 = vmatpush1.bf16.msra.mxu0 %v5297
    %5939 = vmatprep.subr.bf16.mxu0 0
    %5940 = vmatpush1.bf16.msra.mxu0 %v5296
    %5941 = vmatprep.subr.bf16.mxu0 0
    %5942 = vmatpush1.bf16.msra.mxu0 %v5295
    %5943 = vmatprep.subr.bf16.mxu0 0
    %5944 = vmatpush2.bf16.msra.mxu0 %v5310
    %5945 = vmatprep.subr.bf16.mxu0 0
    %5946 = vmatpush2.bf16.msra.mxu0 %v5309
    %5947 = vmatprep.subr.bf16.mxu0 0
    %5948 = vmatpush2.bf16.msra.mxu0 %v5308
    %5949 = vmatprep.subr.bf16.mxu0 0
    %5950 = vmatpush2.bf16.msra.mxu0 %v5307
    %5951 = vmatprep.subr.bf16.mxu0 0
    %5952 = vmatpush2.bf16.msra.mxu0 %v5306
    %5953 = vmatprep.subr.bf16.mxu0 0
    %5954 = vmatpush2.bf16.msra.mxu0 %v5305
    %5955 = vmatprep.subr.bf16.mxu0 0
    %5956 = vmatpush2.bf16.msra.mxu0 %v5304
    %5957 = vmatprep.subr.bf16.mxu0 0
    %5958 = vmatpush2.bf16.msra.mxu0 %v5303
    %5959 = vmatprep.mubr.bf16.mxu0 %v762
    %5960 = vmatmul.mubr.bf16.gmra.mxu0 %v761
    %v5961 = vpop.f32.mrf.mxu0
    %v5962 = vadd.f32 %v5922, %v5961
    %v5963 = vpop.f32.mrf.mxu0
    %v5964 = vpop.f32.mrf.mxu0
    %v5965 = vpop.f32.mrf.mxu0
    %5966 = vdwg.mxu0
    %5967 = vmatprep.subr.bf16.mxu0 0
    %5968 = vmatpush1.bf16.msra.mxu0 %v5318
    %5969 = vmatprep.subr.bf16.mxu0 0
    %5970 = vmatpush1.bf16.msra.mxu0 %v5317
    %5971 = vmatprep.subr.bf16.mxu0 0
    %5972 = vmatpush1.bf16.msra.mxu0 %v5316
    %5973 = vmatprep.subr.bf16.mxu0 0
    %5974 = vmatpush1.bf16.msra.mxu0 %v5315
    %5975 = vmatprep.subr.bf16.mxu0 0
    %5976 = vmatpush1.bf16.msra.mxu0 %v5314
    %5977 = vmatprep.subr.bf16.mxu0 0
    %5978 = vmatpush1.bf16.msra.mxu0 %v5313
    %5979 = vmatprep.subr.bf16.mxu0 0
    %5980 = vmatpush1.bf16.msra.mxu0 %v5312
    %5981 = vmatprep.subr.bf16.mxu0 0
    %5982 = vmatpush1.bf16.msra.mxu0 %v5311
    %5983 = vmatprep.subr.bf16.mxu0 0
    %5984 = vmatpush2.bf16.msra.mxu0 %v5326
    %5985 = vmatprep.subr.bf16.mxu0 0
    %5986 = vmatpush2.bf16.msra.mxu0 %v5325
    %5987 = vmatprep.subr.bf16.mxu0 0
    %5988 = vmatpush2.bf16.msra.mxu0 %v5324
    %5989 = vmatprep.subr.bf16.mxu0 0
    %5990 = vmatpush2.bf16.msra.mxu0 %v5323
    %5991 = vmatprep.subr.bf16.mxu0 0
    %5992 = vmatpush2.bf16.msra.mxu0 %v5322
    %5993 = vmatprep.subr.bf16.mxu0 0
    %5994 = vmatpush2.bf16.msra.mxu0 %v5321
    %5995 = vmatprep.subr.bf16.mxu0 0
    %5996 = vmatpush2.bf16.msra.mxu0 %v5320
    %5997 = vmatprep.subr.bf16.mxu0 0
    %5998 = vmatpush2.bf16.msra.mxu0 %v5319
    %5999 = vmatprep.mubr.bf16.mxu0 %v764
    %6000 = vmatmul.mubr.bf16.gmra.mxu0 %v763
    %v6001 = vpop.f32.mrf.mxu0
    %v6002 = vadd.f32 %v5962, %v6001
    %v6003 = vpop.f32.mrf.mxu0
    %v6004 = vpop.f32.mrf.mxu0
    %v6005 = vpop.f32.mrf.mxu0
    %6006 = vdwg.mxu0
    %6007 = vmatprep.subr.bf16.mxu0 0
    %6008 = vmatpush1.bf16.msra.mxu0 %v5334
    %6009 = vmatprep.subr.bf16.mxu0 0
    %6010 = vmatpush1.bf16.msra.mxu0 %v5333
    %6011 = vmatprep.subr.bf16.mxu0 0
    %6012 = vmatpush1.bf16.msra.mxu0 %v5332
    %6013 = vmatprep.subr.bf16.mxu0 0
    %6014 = vmatpush1.bf16.msra.mxu0 %v5331
    %6015 = vmatprep.subr.bf16.mxu0 0
    %6016 = vmatpush1.bf16.msra.mxu0 %v5330
    %6017 = vmatprep.subr.bf16.mxu0 0
    %6018 = vmatpush1.bf16.msra.mxu0 %v5329
    %6019 = vmatprep.subr.bf16.mxu0 0
    %6020 = vmatpush1.bf16.msra.mxu0 %v5328
    %6021 = vmatprep.subr.bf16.mxu0 0
    %6022 = vmatpush1.bf16.msra.mxu0 %v5327
    %6023 = vmatprep.subr.bf16.mxu0 0
    %6024 = vmatpush2.bf16.msra.mxu0 %v5342
    %6025 = vmatprep.subr.bf16.mxu0 0
    %6026 = vmatpush2.bf16.msra.mxu0 %v5341
    %6027 = vmatprep.subr.bf16.mxu0 0
    %6028 = vmatpush2.bf16.msra.mxu0 %v5340
    %6029 = vmatprep.subr.bf16.mxu0 0
    %6030 = vmatpush2.bf16.msra.mxu0 %v5339
    %6031 = vmatprep.subr.bf16.mxu0 0
    %6032 = vmatpush2.bf16.msra.mxu0 %v5338
    %6033 = vmatprep.subr.bf16.mxu0 0
    %6034 = vmatpush2.bf16.msra.mxu0 %v5337
    %6035 = vmatprep.subr.bf16.mxu0 0
    %6036 = vmatpush2.bf16.msra.mxu0 %v5336
    %6037 = vmatprep.subr.bf16.mxu0 0
    %6038 = vmatpush2.bf16.msra.mxu0 %v5335
    %6039 = vmatprep.mubr.bf16.mxu0 %v766
    %6040 = vmatmul.mubr.bf16.gmra.mxu0 %v765
    %v6041 = vpop.f32.mrf.mxu0
    %v6042 = vadd.f32 %v6002, %v6041
    %v6043 = vpop.f32.mrf.mxu0
    %v6044 = vpop.f32.mrf.mxu0
    %v6045 = vpop.f32.mrf.mxu0
    %6046 = vdwg.mxu0
    %6047 = vmatprep.subr.bf16.mxu0 0
    %6048 = vmatpush1.bf16.msra.mxu0 %v5350
    %6049 = vmatprep.subr.bf16.mxu0 0
    %6050 = vmatpush1.bf16.msra.mxu0 %v5349
    %6051 = vmatprep.subr.bf16.mxu0 0
    %6052 = vmatpush1.bf16.msra.mxu0 %v5348
    %6053 = vmatprep.subr.bf16.mxu0 0
    %6054 = vmatpush1.bf16.msra.mxu0 %v5347
    %6055 = vmatprep.subr.bf16.mxu0 0
    %6056 = vmatpush1.bf16.msra.mxu0 %v5346
    %6057 = vmatprep.subr.bf16.mxu0 0
    %6058 = vmatpush1.bf16.msra.mxu0 %v5345
    %6059 = vmatprep.subr.bf16.mxu0 0
    %6060 = vmatpush1.bf16.msra.mxu0 %v5344
    %6061 = vmatprep.subr.bf16.mxu0 0
    %6062 = vmatpush1.bf16.msra.mxu0 %v5343
    %6063 = vmatprep.subr.bf16.mxu0 0
    %6064 = vmatpush2.bf16.msra.mxu0 %v5358
    %6065 = vmatprep.subr.bf16.mxu0 0
    %6066 = vmatpush2.bf16.msra.mxu0 %v5357
    %6067 = vmatprep.subr.bf16.mxu0 0
    %6068 = vmatpush2.bf16.msra.mxu0 %v5356
    %6069 = vmatprep.subr.bf16.mxu0 0
    %6070 = vmatpush2.bf16.msra.mxu0 %v5355
    %6071 = vmatprep.subr.bf16.mxu0 0
    %6072 = vmatpush2.bf16.msra.mxu0 %v5354
    %6073 = vmatprep.subr.bf16.mxu0 0
    %6074 = vmatpush2.bf16.msra.mxu0 %v5353
    %6075 = vmatprep.subr.bf16.mxu0 0
    %6076 = vmatpush2.bf16.msra.mxu0 %v5352
    %6077 = vmatprep.subr.bf16.mxu0 0
    %6078 = vmatpush2.bf16.msra.mxu0 %v5351
    %6079 = vmatprep.mubr.bf16.mxu0 %v768
    %6080 = vmatmul.mubr.bf16.gmra.mxu0 %v767
    %v6081 = vpop.f32.mrf.mxu0
    %v6082 = vadd.f32 %v6042, %v6081
    %v6083 = vpop.f32.mrf.mxu0
    %v6084 = vpop.f32.mrf.mxu0
    %v6085 = vpop.f32.mrf.mxu0
    %6086 = vdwg.mxu0
    %6087 = vmatprep.subr.bf16.mxu0 0
    %6088 = vmatpush1.bf16.msra.mxu0 %v5366
    %6089 = vmatprep.subr.bf16.mxu0 0
    %6090 = vmatpush1.bf16.msra.mxu0 %v5365
    %6091 = vmatprep.subr.bf16.mxu0 0
    %6092 = vmatpush1.bf16.msra.mxu0 %v5364
    %6093 = vmatprep.subr.bf16.mxu0 0
    %6094 = vmatpush1.bf16.msra.mxu0 %v5363
    %6095 = vmatprep.subr.bf16.mxu0 0
    %6096 = vmatpush1.bf16.msra.mxu0 %v5362
    %6097 = vmatprep.subr.bf16.mxu0 0
    %6098 = vmatpush1.bf16.msra.mxu0 %v5361
    %6099 = vmatprep.subr.bf16.mxu0 0
    %6100 = vmatpush1.bf16.msra.mxu0 %v5360
    %6101 = vmatprep.subr.bf16.mxu0 0
    %6102 = vmatpush1.bf16.msra.mxu0 %v5359
    %6103 = vmatprep.subr.bf16.mxu0 0
    %6104 = vmatpush2.bf16.msra.mxu0 %v5374
    %6105 = vmatprep.subr.bf16.mxu0 0
    %6106 = vmatpush2.bf16.msra.mxu0 %v5373
    %6107 = vmatprep.subr.bf16.mxu0 0
    %6108 = vmatpush2.bf16.msra.mxu0 %v5372
    %6109 = vmatprep.subr.bf16.mxu0 0
    %6110 = vmatpush2.bf16.msra.mxu0 %v5371
    %6111 = vmatprep.subr.bf16.mxu0 0
    %6112 = vmatpush2.bf16.msra.mxu0 %v5370
    %6113 = vmatprep.subr.bf16.mxu0 0
    %6114 = vmatpush2.bf16.msra.mxu0 %v5369
    %6115 = vmatprep.subr.bf16.mxu0 0
    %6116 = vmatpush2.bf16.msra.mxu0 %v5368
    %6117 = vmatprep.subr.bf16.mxu0 0
    %6118 = vmatpush2.bf16.msra.mxu0 %v5367
    %6119 = vmatprep.mubr.bf16.mxu0 %v770
    %6120 = vmatmul.mubr.bf16.gmra.mxu0 %v769
    %v6121 = vpop.f32.mrf.mxu0
    %v6122 = vadd.f32 %v6082, %v6121
    %v6123 = vpop.f32.mrf.mxu0
    %v6124 = vpop.f32.mrf.mxu0
    %v6125 = vpop.f32.mrf.mxu0
    %6126 = vdwg.mxu0
    %6127 = vmatprep.subr.bf16.mxu0 0
    %6128 = vmatpush1.bf16.msra.mxu0 %v5382
    %6129 = vmatprep.subr.bf16.mxu0 0
    %6130 = vmatpush1.bf16.msra.mxu0 %v5381
    %6131 = vmatprep.subr.bf16.mxu0 0
    %6132 = vmatpush1.bf16.msra.mxu0 %v5380
    %6133 = vmatprep.subr.bf16.mxu0 0
    %6134 = vmatpush1.bf16.msra.mxu0 %v5379
    %6135 = vmatprep.subr.bf16.mxu0 0
    %6136 = vmatpush1.bf16.msra.mxu0 %v5378
    %6137 = vmatprep.subr.bf16.mxu0 0
    %6138 = vmatpush1.bf16.msra.mxu0 %v5377
    %6139 = vmatprep.subr.bf16.mxu0 0
    %6140 = vmatpush1.bf16.msra.mxu0 %v5376
    %6141 = vmatprep.subr.bf16.mxu0 0
    %6142 = vmatpush1.bf16.msra.mxu0 %v5375
    %6143 = vmatprep.subr.bf16.mxu0 0
    %6144 = vmatpush2.bf16.msra.mxu0 %v5390
    %6145 = vmatprep.subr.bf16.mxu0 0
    %6146 = vmatpush2.bf16.msra.mxu0 %v5389
    %6147 = vmatprep.subr.bf16.mxu0 0
    %6148 = vmatpush2.bf16.msra.mxu0 %v5388
    %6149 = vmatprep.subr.bf16.mxu0 0
    %6150 = vmatpush2.bf16.msra.mxu0 %v5387
    %6151 = vmatprep.subr.bf16.mxu0 0
    %6152 = vmatpush2.bf16.msra.mxu0 %v5386
    %6153 = vmatprep.subr.bf16.mxu0 0
    %6154 = vmatpush2.bf16.msra.mxu0 %v5385
    %6155 = vmatprep.subr.bf16.mxu0 0
    %6156 = vmatpush2.bf16.msra.mxu0 %v5384
    %6157 = vmatprep.subr.bf16.mxu0 0
    %6158 = vmatpush2.bf16.msra.mxu0 %v5383
    %6159 = vmatprep.mubr.bf16.mxu0 %v772
    %6160 = vmatmul.mubr.bf16.gmra.mxu0 %v771
    %v6161 = vpop.f32.mrf.mxu0
    %v6162 = vadd.f32 %v6122, %v6161
    %v6163 = vpop.f32.mrf.mxu0
    %v6164 = vpop.f32.mrf.mxu0
    %v6165 = vpop.f32.mrf.mxu0
    %6166 = vdwg.mxu0
    %6167 = vmatprep.subr.bf16.mxu0 0
    %6168 = vmatpush1.bf16.msra.mxu0 %v5398
    %6169 = vmatprep.subr.bf16.mxu0 0
    %6170 = vmatpush1.bf16.msra.mxu0 %v5397
    %6171 = vmatprep.subr.bf16.mxu0 0
    %6172 = vmatpush1.bf16.msra.mxu0 %v5396
    %6173 = vmatprep.subr.bf16.mxu0 0
    %6174 = vmatpush1.bf16.msra.mxu0 %v5395
    %6175 = vmatprep.subr.bf16.mxu0 0
    %6176 = vmatpush1.bf16.msra.mxu0 %v5394
    %6177 = vmatprep.subr.bf16.mxu0 0
    %6178 = vmatpush1.bf16.msra.mxu0 %v5393
    %6179 = vmatprep.subr.bf16.mxu0 0
    %6180 = vmatpush1.bf16.msra.mxu0 %v5392
    %6181 = vmatprep.subr.bf16.mxu0 0
    %6182 = vmatpush1.bf16.msra.mxu0 %v5391
    %6183 = vmatprep.subr.bf16.mxu0 0
    %6184 = vmatpush2.bf16.msra.mxu0 %v5406
    %6185 = vmatprep.subr.bf16.mxu0 0
    %6186 = vmatpush2.bf16.msra.mxu0 %v5405
    %6187 = vmatprep.subr.bf16.mxu0 0
    %6188 = vmatpush2.bf16.msra.mxu0 %v5404
    %6189 = vmatprep.subr.bf16.mxu0 0
    %6190 = vmatpush2.bf16.msra.mxu0 %v5403
    %6191 = vmatprep.subr.bf16.mxu0 0
    %6192 = vmatpush2.bf16.msra.mxu0 %v5402
    %6193 = vmatprep.subr.bf16.mxu0 0
    %6194 = vmatpush2.bf16.msra.mxu0 %v5401
    %6195 = vmatprep.subr.bf16.mxu0 0
    %6196 = vmatpush2.bf16.msra.mxu0 %v5400
    %6197 = vmatprep.subr.bf16.mxu0 0
    %6198 = vmatpush2.bf16.msra.mxu0 %v5399
    %6199 = vmatprep.mubr.bf16.mxu0 %v774
    %6200 = vmatmul.mubr.bf16.gmra.mxu0 %v773
    %v6201 = vpop.f32.mrf.mxu0
    %v6202 = vadd.f32 %v6162, %v6201
    %v6203 = vpop.f32.mrf.mxu0
    %v6204 = vpop.f32.mrf.mxu0
    %v6205 = vpop.f32.mrf.mxu0
    %6206 = vdwg.mxu0
    %6207 = vmatprep.subr.bf16.mxu0 0
    %6208 = vmatpush1.bf16.msra.mxu0 %v5414
    %6209 = vmatprep.subr.bf16.mxu0 0
    %6210 = vmatpush1.bf16.msra.mxu0 %v5413
    %6211 = vmatprep.subr.bf16.mxu0 0
    %6212 = vmatpush1.bf16.msra.mxu0 %v5412
    %6213 = vmatprep.subr.bf16.mxu0 0
    %6214 = vmatpush1.bf16.msra.mxu0 %v5411
    %6215 = vmatprep.subr.bf16.mxu0 0
    %6216 = vmatpush1.bf16.msra.mxu0 %v5410
    %6217 = vmatprep.subr.bf16.mxu0 0
    %6218 = vmatpush1.bf16.msra.mxu0 %v5409
    %6219 = vmatprep.subr.bf16.mxu0 0
    %6220 = vmatpush1.bf16.msra.mxu0 %v5408
    %6221 = vmatprep.subr.bf16.mxu0 0
    %6222 = vmatpush1.bf16.msra.mxu0 %v5407
    %6223 = vmatprep.subr.bf16.mxu0 0
    %6224 = vmatpush2.bf16.msra.mxu0 %v5422
    %6225 = vmatprep.subr.bf16.mxu0 0
    %6226 = vmatpush2.bf16.msra.mxu0 %v5421
    %6227 = vmatprep.subr.bf16.mxu0 0
    %6228 = vmatpush2.bf16.msra.mxu0 %v5420
    %6229 = vmatprep.subr.bf16.mxu0 0
    %6230 = vmatpush2.bf16.msra.mxu0 %v5419
    %6231 = vmatprep.subr.bf16.mxu0 0
    %6232 = vmatpush2.bf16.msra.mxu0 %v5418
    %6233 = vmatprep.subr.bf16.mxu0 0
    %6234 = vmatpush2.bf16.msra.mxu0 %v5417
    %6235 = vmatprep.subr.bf16.mxu0 0
    %6236 = vmatpush2.bf16.msra.mxu0 %v5416
    %6237 = vmatprep.subr.bf16.mxu0 0
    %6238 = vmatpush2.bf16.msra.mxu0 %v5415
    %6239 = vmatprep.mubr.bf16.mxu0 %v776
    %6240 = vmatmul.mubr.bf16.gmra.mxu0 %v775
    %v6241 = vpop.f32.mrf.mxu0
    %v6242 = vadd.f32 %v6202, %v6241
    %v6243 = vpop.f32.mrf.mxu0
    %v6244 = vpop.f32.mrf.mxu0
    %v6245 = vpop.f32.mrf.mxu0
    %6246 = vdwg.mxu0
    %6247 = vmatprep.subr.bf16.mxu0 0
    %6248 = vmatpush1.bf16.msra.mxu0 %v5430
    %6249 = vmatprep.subr.bf16.mxu0 0
    %6250 = vmatpush1.bf16.msra.mxu0 %v5429
    %6251 = vmatprep.subr.bf16.mxu0 0
    %6252 = vmatpush1.bf16.msra.mxu0 %v5428
    %6253 = vmatprep.subr.bf16.mxu0 0
    %6254 = vmatpush1.bf16.msra.mxu0 %v5427
    %6255 = vmatprep.subr.bf16.mxu0 0
    %6256 = vmatpush1.bf16.msra.mxu0 %v5426
    %6257 = vmatprep.subr.bf16.mxu0 0
    %6258 = vmatpush1.bf16.msra.mxu0 %v5425
    %6259 = vmatprep.subr.bf16.mxu0 0
    %6260 = vmatpush1.bf16.msra.mxu0 %v5424
    %6261 = vmatprep.subr.bf16.mxu0 0
    %6262 = vmatpush1.bf16.msra.mxu0 %v5423
    %6263 = vmatprep.subr.bf16.mxu0 0
    %6264 = vmatpush2.bf16.msra.mxu0 %v5438
    %6265 = vmatprep.subr.bf16.mxu0 0
    %6266 = vmatpush2.bf16.msra.mxu0 %v5437
    %6267 = vmatprep.subr.bf16.mxu0 0
    %6268 = vmatpush2.bf16.msra.mxu0 %v5436
    %6269 = vmatprep.subr.bf16.mxu0 0
    %6270 = vmatpush2.bf16.msra.mxu0 %v5435
    %6271 = vmatprep.subr.bf16.mxu0 0
    %6272 = vmatpush2.bf16.msra.mxu0 %v5434
    %6273 = vmatprep.subr.bf16.mxu0 0
    %6274 = vmatpush2.bf16.msra.mxu0 %v5433
    %6275 = vmatprep.subr.bf16.mxu0 0
    %6276 = vmatpush2.bf16.msra.mxu0 %v5432
    %6277 = vmatprep.subr.bf16.mxu0 0
    %6278 = vmatpush2.bf16.msra.mxu0 %v5431
    %6279 = vmatprep.mubr.bf16.mxu0 %v778
    %6280 = vmatmul.mubr.bf16.gmra.mxu0 %v777
    %v6281 = vpop.f32.mrf.mxu0
    %v6282 = vadd.f32 %v6242, %v6281
    %v6283 = vpop.f32.mrf.mxu0
    %v6284 = vpop.f32.mrf.mxu0
    %v6285 = vpop.f32.mrf.mxu0
    %6286 = vdwg.mxu0
    %6287 = vmatprep.subr.bf16.mxu0 0
    %6288 = vmatpush1.bf16.msra.mxu0 %v5446
    %6289 = vmatprep.subr.bf16.mxu0 0
    %6290 = vmatpush1.bf16.msra.mxu0 %v5445
    %6291 = vmatprep.subr.bf16.mxu0 0
    %6292 = vmatpush1.bf16.msra.mxu0 %v5444
    %6293 = vmatprep.subr.bf16.mxu0 0
    %6294 = vmatpush1.bf16.msra.mxu0 %v5443
    %6295 = vmatprep.subr.bf16.mxu0 0
    %6296 = vmatpush1.bf16.msra.mxu0 %v5442
    %6297 = vmatprep.subr.bf16.mxu0 0
    %6298 = vmatpush1.bf16.msra.mxu0 %v5441
    %6299 = vmatprep.subr.bf16.mxu0 0
    %6300 = vmatpush1.bf16.msra.mxu0 %v5440
    %6301 = vmatprep.subr.bf16.mxu0 0
    %6302 = vmatpush1.bf16.msra.mxu0 %v5439
    %6303 = vmatprep.subr.bf16.mxu0 0
    %6304 = vmatpush2.bf16.msra.mxu0 %v5454
    %6305 = vmatprep.subr.bf16.mxu0 0
    %6306 = vmatpush2.bf16.msra.mxu0 %v5453
    %6307 = vmatprep.subr.bf16.mxu0 0
    %6308 = vmatpush2.bf16.msra.mxu0 %v5452
    %6309 = vmatprep.subr.bf16.mxu0 0
    %6310 = vmatpush2.bf16.msra.mxu0 %v5451
    %6311 = vmatprep.subr.bf16.mxu0 0
    %6312 = vmatpush2.bf16.msra.mxu0 %v5450
    %6313 = vmatprep.subr.bf16.mxu0 0
    %6314 = vmatpush2.bf16.msra.mxu0 %v5449
    %6315 = vmatprep.subr.bf16.mxu0 0
    %6316 = vmatpush2.bf16.msra.mxu0 %v5448
    %6317 = vmatprep.subr.bf16.mxu0 0
    %6318 = vmatpush2.bf16.msra.mxu0 %v5447
    %6319 = vmatprep.mubr.bf16.mxu0 %v780
    %6320 = vmatmul.mubr.bf16.gmra.mxu0 %v779
    %v6321 = vpop.f32.mrf.mxu0
    %v6322 = vadd.f32 %v6282, %v6321
    %v6323 = vpop.f32.mrf.mxu0
    %v6324 = vpop.f32.mrf.mxu0
    %v6325 = vpop.f32.mrf.mxu0
    %6326 = vdwg.mxu0
    %6327 = vmatprep.subr.bf16.mxu0 0
    %6328 = vmatpush1.bf16.msra.mxu0 %v5462
    %6329 = vmatprep.subr.bf16.mxu0 0
    %6330 = vmatpush1.bf16.msra.mxu0 %v5461
    %6331 = vmatprep.subr.bf16.mxu0 0
    %6332 = vmatpush1.bf16.msra.mxu0 %v5460
    %6333 = vmatprep.subr.bf16.mxu0 0
    %6334 = vmatpush1.bf16.msra.mxu0 %v5459
    %6335 = vmatprep.subr.bf16.mxu0 0
    %6336 = vmatpush1.bf16.msra.mxu0 %v5458
    %6337 = vmatprep.subr.bf16.mxu0 0
    %6338 = vmatpush1.bf16.msra.mxu0 %v5457
    %6339 = vmatprep.subr.bf16.mxu0 0
    %6340 = vmatpush1.bf16.msra.mxu0 %v5456
    %6341 = vmatprep.subr.bf16.mxu0 0
    %6342 = vmatpush1.bf16.msra.mxu0 %v5455
    %6343 = vmatprep.subr.bf16.mxu0 0
    %6344 = vmatpush2.bf16.msra.mxu0 %v5470
    %6345 = vmatprep.subr.bf16.mxu0 0
    %6346 = vmatpush2.bf16.msra.mxu0 %v5469
    %6347 = vmatprep.subr.bf16.mxu0 0
    %6348 = vmatpush2.bf16.msra.mxu0 %v5468
    %6349 = vmatprep.subr.bf16.mxu0 0
    %6350 = vmatpush2.bf16.msra.mxu0 %v5467
    %6351 = vmatprep.subr.bf16.mxu0 0
    %6352 = vmatpush2.bf16.msra.mxu0 %v5466
    %6353 = vmatprep.subr.bf16.mxu0 0
    %6354 = vmatpush2.bf16.msra.mxu0 %v5465
    %6355 = vmatprep.subr.bf16.mxu0 0
    %6356 = vmatpush2.bf16.msra.mxu0 %v5464
    %6357 = vmatprep.subr.bf16.mxu0 0
    %6358 = vmatpush2.bf16.msra.mxu0 %v5463
    %6359 = vmatprep.mubr.bf16.mxu0 %v782
    %6360 = vmatmul.mubr.bf16.gmra.mxu0 %v781
    %v6361 = vpop.f32.mrf.mxu0
    %v6362 = vadd.f32 %v6322, %v6361
    %v6363 = vpop.f32.mrf.mxu0
    %v6364 = vpop.f32.mrf.mxu0
    %v6365 = vpop.f32.mrf.mxu0
    %6366 = vdwg.mxu0
    %v6367 = vld [vmem:[%s4] sm:$0x1]
    %v6369 = vlaneseq
    %v6370 = vshrl.u32 %v6369, 7
    %v6371 = vsub.s32 0, %v6370
    %v6372 = vrot.slane %v6367, %v6371
    %v6374 = vadd.f32 %v6362, %v6372
    %v6375 = vmul.f32 %v6374, %v6374
    %v6376 = vsel %vm214, %v6375, 0.0
    %6377 = vadd.xlane.f32.xlu0 %v6376
    %v6378 = vpop.xlane.xlu0 %6377
    %v6379 = vmax.f32 %v6378, 1e-24
    %v6380 = vrsqrt.pop %v6379
    %v6381 = vmul.f32 %v6374, %v6380
    %6382 = vst [vmem:[#allocation2] sm:$0x3] %v6381
    // Predicated region
    $region22: #{forward.5} parent=1 // pred_check
      _
    $region23: #{forward.5} parent=1 // pred_check_branch
      %6384 = sbr.rel (0) target = $region25
    $region24: #{forward.5} parent=1 // pred_region
      %s6386 = ssub.s32 32, 32
      %6387 = vsyncadd [#allocation3], %s6386
      %s6389 = sshll.u32 [#allocation2], 4
      %s6390 = int_to_ptr.vmem [resolvable:$true] %s6389
      %6392 = dma.vmem_to_hbm [thread:$0]  %s6390, 32, %s5, [#allocation3]
    $region25: #{forward.5} parent=1 // pred_fallthru
      _
    // Predicated region
    $region26: #{forward.5} parent=1 // pred_check
      _
    $region27: #{forward.5} parent=1 // pred_check_branch
      %6394 = sbr.rel (0) target = $region29
    $region28: #{forward.5} parent=1 // pred_region
      %6395 = dma.done [#allocation3], 32
    $region29: #{forward.5} parent=1 // pred_fallthru
      _
    %6396 = vsyncpa [#allocation3], 1

</llo_original>
